<compile_context>
chip_gen: v7x
topology: tpu7x:2x2x1
jax: 0.10.0
libtpu: 0.0.40
codegen_flags: <defaults>
</compile_context>

<pallas_src>
import functools

import jax
import jax.numpy as jnp
from jax.experimental import pallas as pl
from jax.experimental.pallas import tpu as pltpu


# ----------------------------- helpers --------------------------------------

def _round_up(x, m):
    return m * pl.cdiv(x, m)


def _pick_row_tile(Ho, Wo, max_rows):
    """Largest divisor of Ho <= max_rows with sublane-aligned (rows*Wo)."""
    for d in range(min(Ho, max_rows), 0, -1):
        if Ho % d == 0 and ((d * Wo) % 8 == 0 or d == Ho):
            return d
    return Ho


def _load_sample(x_ref, n, m_ref, is_ref):
    """Load one sample's phase-decomposed row tile; optionally apply the
    zero-preserving per-channel normalization (hoisted out of the tap loop)."""
    xn = x_ref[n, 0]                                   # (s*s, Ht_in, Wph, Cx)
    if m_ref is not None:
        xf = xn.astype(jnp.float32)
        xn = jnp.where(xf == 0.0, 0.0, (xf - m_ref[...]) * is_ref[...])
    return xn.astype(jnp.bfloat16)


# ------------------------------ direct conv ---------------------------------

def _conv_kernel_fused(x_ref, w_ref, b_ref, *rest, kh, kw, stride, Ht, Wo,
                       relu, fuse_norm, nb):
    """One row tile of `nb` samples per grid step.

    kh*kw taps are folded into the contraction: build an in-VMEM im2col LHS
    (nb*Ht*Wo, kh*kw*Cx) from lane-aligned (Cx % 128 == 0) shifted patches and
    contract against w_ref (kh*kw*Cx, Co_p) in a single MXU matmul.
    """
    if fuse_norm:
        m_ref, is_ref, o_ref = rest
    else:
        (o_ref,) = rest
        m_ref = is_ref = None
    Cx = x_ref.shape[-1]
    Co_p = o_ref.shape[-1]

    rows = []
    for n in range(nb):
        xn = _load_sample(x_ref, n, m_ref, is_ref)
        taps = []
        for dh in range(kh):
            for dw in range(kw):
                phase = (dh % stride) * stride + (dw % stride)
                oh, ow = dh // stride, dw // stride
                taps.append(
                    xn[phase, oh:oh + Ht, ow:ow + Wo, :].reshape(Ht * Wo, Cx))
        rows.append(taps[0] if len(taps) == 1
                    else jnp.concatenate(taps, axis=-1))
    lhs = rows[0] if nb == 1 else jnp.concatenate(rows, axis=0)
    acc = jnp.dot(lhs, w_ref[...],
                  preferred_element_type=jnp.float32) + b_ref[...]
    if relu:
        acc = jnp.maximum(acc, 0.0)
    o_ref[...] = acc.reshape(nb, Ht * Wo, Co_p).astype(o_ref.dtype)


def _conv_kernel_taps(x_ref, w_ref, b_ref, *rest, kh, kw, stride, Ht, Wo,
                      relu, fuse_norm, nb):
    """Fallback for lane-unaligned input channels (3-channel stem only):
    per-tap (Ht*Wo, Cx) x (Cx, Co_p) accumulation in f32."""
    if fuse_norm:
        m_ref, is_ref, o_ref = rest
    else:
        (o_ref,) = rest
        m_ref = is_ref = None
    Cx = x_ref.shape[-1]
    Co_p = o_ref.shape[-1]

    for n in range(nb):
        xn = _load_sample(x_ref, n, m_ref, is_ref)
        acc = jnp.broadcast_to(b_ref[...], (Ht * Wo, Co_p))
        for dh in range(kh):
            for dw in range(kw):
                phase = (dh % stride) * stride + (dw % stride)
                oh, ow = dh // stride, dw // stride
                patch = xn[phase, oh:oh + Ht, ow:ow + Wo, :].reshape(Ht * Wo, Cx)
                acc = acc + jnp.dot(patch, w_ref[dh * kw + dw],
                                    preferred_element_type=jnp.float32)
        if relu:
            acc = jnp.maximum(acc, 0.0)
        o_ref[n] = acc.astype(o_ref.dtype)


def conv2d(x_nhwc, w_oihw, b, *, stride=1, padding=0, relu=False, norm=None,
           max_row_tile=8, samples_per_step=None, out_dtype=jnp.bfloat16):
    """NHWC conv.  Returns (N, Ho, Wo, Co_p) with Co_p = round_up(Cout, 128)
    (lane-dense stores; padded output channels are exactly zero).  The input
    may carry more channels than the weight's Cin - the extra, zero-valued
    channels get zero weight rows, so the result is exact."""
    N, H, W, Cx = x_nhwc.shape
    Cout, Cin, kh, kw = w_oihw.shape
    assert kh == kw and Cin <= Cx
    s, p, k = stride, padding, kh
    Ho = (H + 2 * p - k) // s + 1
    Wo = (W + 2 * p - k) // s + 1
    Co_p = _round_up(Cout, 128)

    # Small-spatial layers: batch samples per step so matmul M >= 128 rows and
    # the ~0.35us per-grid-step overhead is amortized.
    nb = (N if Ho * Wo < 128 else 1) if samples_per_step is None \
        else samples_per_step
    assert N % nb == 0

    # Spatial zero-pad, rounded up so the stride-phase decomposition is exact.
    Hp, Wp = H + 2 * p, W + 2 * p
    Hp2, Wp2 = s * pl.cdiv(Hp, s), s * pl.cdiv(Wp, s)
    xp = jnp.pad(x_nhwc, ((0, 0), (p, p + Hp2 - Hp), (p, p + Wp2 - Wp), (0, 0)))
    Hph, Wph = Hp2 // s, Wp2 // s
    if s == 1:
        xs = xp[:, None]                               # (N, 1, Hp, Wp, Cx)
    else:                                              # space-to-batch
        xs = (xp.reshape(N, Hph, s, Wph, s, Cx)
                .transpose(0, 2, 4, 1, 3, 5)
                .reshape(N, s * s, Hph, Wph, Cx))
    ss = s * s

    # Output-row tiling with (k-1)//s halo rows replicated host-side (fused by
    # XLA into the pad/space-to-batch materialization above).
    halo = (k - 1) // s
    Ht = _pick_row_tile(Ho, Wo, max_row_tile)
    n_tiles = Ho // Ht
    Ht_in = Ht + halo
    if n_tiles == 1:
        xt = xs[:, None, :, :Ht_in]
    else:
        xt = jnp.stack([xs[:, :, i * Ht:i * Ht + Ht_in]
                        for i in range(n_tiles)], axis=1)
    # xt: (N, n_tiles, ss, Ht_in, Wph, Cx)

    # Weights: (Cout, Cin, kh, kw) -> bf16, Cin padded to Cx, Cout to Co_p.
    wt = jnp.transpose(w_oihw, (2, 3, 1, 0))           # (kh, kw, Cin, Cout)
    wt = jnp.pad(wt, ((0, 0), (0, 0), (0, Cx - Cin), (0, Co_p - Cout)))
    fused = (Cx % 128 == 0)
    if fused:
        wt = wt.reshape(kh * kw * Cx, Co_p).astype(jnp.bfloat16)
        w_spec = pl.BlockSpec((kh * kw * Cx, Co_p), lambda ni, ti: (0, 0))
        kern = _conv_kernel_fused
    else:
        wt = wt.reshape(kh * kw, Cx, Co_p).astype(jnp.bfloat16)
        w_spec = pl.BlockSpec((kh * kw, Cx, Co_p), lambda ni, ti: (0, 0, 0))
        kern = _conv_kernel_taps
    bp = jnp.pad(b.astype(jnp.float32), (0, Co_p - Cout)).reshape(1, Co_p)

    extra_in, extra_specs = [], []
    if norm is not None:
        mean, inv_std = norm
        extra_in = [
            jnp.pad(mean.astype(jnp.float32),
                    (0, Cx - mean.shape[0])).reshape(1, Cx),
            jnp.pad(inv_std.astype(jnp.float32),
                    (0, Cx - inv_std.shape[0])).reshape(1, Cx),
        ]
        extra_specs = [pl.BlockSpec((1, Cx), lambda ni, ti: (0, 0)),
                       pl.BlockSpec((1, Cx), lambda ni, ti: (0, 0))]

    out = pl.pallas_call(
        functools.partial(kern, kh=kh, kw=kw, stride=s, Ht=Ht, Wo=Wo,
                          relu=relu, fuse_norm=norm is not None, nb=nb),
        out_shape=jax.ShapeDtypeStruct((N, Ho * Wo, Co_p), out_dtype),
        grid_spec=pltpu.PrefetchScalarGridSpec(
            num_scalar_prefetch=0,
            grid=(N // nb, n_tiles),
            in_specs=[
                pl.BlockSpec((nb, 1, ss, Ht_in, Wph, Cx),
                             lambda ni, ti: (ni, ti, 0, 0, 0, 0)),
                w_spec,
                pl.BlockSpec((1, Co_p), lambda ni, ti: (0, 0)),
                *extra_specs,
            ],
            out_specs=pl.BlockSpec((nb, Ht * Wo, Co_p),
                                   lambda ni, ti: (ni, ti, 0)),
        ),
        compiler_params=pltpu.CompilerParams(
            dimension_semantics=("parallel", "parallel"),
            # demo blocks are tiny; at production resolutions sweep this with
            # max_row_tile (64-100 MiB on v5e/v6e, <=48 MiB on v7x).
            vmem_limit_bytes=32 * 1024 * 1024),
    )(xt, wt, bp, *extra_in)
    return out.reshape(N, Ho, Wo, Co_p)


# --------------------------- bilinear upsampling ----------------------------

def _bilinear_kernel(x_ref, b_ref, o_ref):
    # x: (M, h*w) bf16, b: (h*w, Ho*Wo_p) bf16 separable operator,
    # o: (M, Ho*Wo_p) f32 -- a single lane-dense MXU matmul.
    o_ref[...] = jnp.dot(x_ref[...], b_ref[...],
                         preferred_element_type=jnp.float32)


def _bilinear_matrix(out_size, in_size):
    """Row-stochastic (out, in) matrix replicating F.interpolate bilinear,
    align_corners=False."""
    i = jnp.arange(out_size, dtype=jnp.float32)
    src = (i + 0.5) * (in_size / out_size) - 0.5
    src = jnp.clip(src, 0.0, None)
    i0 = jnp.clip(jnp.floor(src).astype(jnp.int32), 0, in_size - 1)
    i1 = jnp.clip(i0 + 1, 0, in_size - 1)
    lam = src - i0.astype(jnp.float32)
    return (jax.nn.one_hot(i0, in_size, dtype=jnp.float32) * (1.0 - lam)[:, None]
            + jax.nn.one_hot(i1, in_size, dtype=jnp.float32) * lam[:, None])


def bilinear_upsample_rows(x, out_hw):
    """x: (M, h, w) -> (M, Ho, Wo) f32; per-row bilinear (align_corners=False).
    Height x width resample is collapsed into one (h*w, Ho*Wo_p) operator."""
    M, h, w = x.shape
    Ho, Wo = out_hw
    Wo_p = _round_up(Wo, 128)
    Mp = _round_up(M, 8)
    wh = _bilinear_matrix(Ho, h)                          # (Ho, h)
    ww = _bilinear_matrix(Wo, w)                          # (Wo, w)
    bop = jnp.einsum('Ii,Jj->ijIJ', wh, ww)               # (h, w, Ho, Wo)
    bop = jnp.pad(bop, ((0, 0), (0, 0), (0, 0), (0, Wo_p - Wo)))
    bop = bop.reshape(h * w, Ho * Wo_p).astype(jnp.bfloat16)
    xf = jnp.pad(x.reshape(M, h * w).astype(jnp.bfloat16),
                 ((0, Mp - M), (0, 0)))
    # TODO(synk): tile the row axis (grid) for very large N*C; one step keeps
    # the operator resident and is enough at these sizes.
    out = pl.pallas_call(
        _bilinear_kernel,
        out_shape=jax.ShapeDtypeStruct((Mp, Ho * Wo_p), jnp.float32),
        grid_spec=pltpu.PrefetchScalarGridSpec(
            num_scalar_prefetch=0, grid=(1,),
            in_specs=[pl.BlockSpec((Mp, h * w), lambda i: (0, 0)),
                      pl.BlockSpec((h * w, Ho * Wo_p), lambda i: (0, 0))],
            out_specs=pl.BlockSpec((Mp, Ho * Wo_p), lambda i: (0, 0))),
        compiler_params=pltpu.CompilerParams(
            dimension_semantics=("arbitrary",),
            vmem_limit_bytes=32 * 1024 * 1024),
    )(xf, bop)
    return out[:M].reshape(M, Ho, Wo_p)[:, :, :Wo]


# ------------------------------- parameters ---------------------------------

def _init_conv(key, cout, cin, k):
    wkey, bkey = jax.random.split(key)
    fan_in = cin * k * k
    w = jax.random.normal(wkey, (cout, cin, k, k), jnp.float32) / jnp.sqrt(
        jnp.float32(fan_in))
    b = jax.random.normal(bkey, (cout,), jnp.float32) * 0.01
    return w, b


def init_params(key, num_classes):
    ks = jax.random.split(key, 8)
    return {
        'stem':      _init_conv(ks[0], 16, 3, 3),     # stride 2
        'layer1':    _init_conv(ks[1], 32, 16, 3),    # -> 'features'
        'layer_out': _init_conv(ks[2], 64, 32, 3),    # stride 2 -> 'out'
        'layer_aux': _init_conv(ks[3], 48, 32, 3),    # stride 2 -> 'aux'
        'cls0':      _init_conv(ks[4], 32, 64, 3),
        'cls1':      _init_conv(ks[5], num_classes, 32, 1),
        'aux0':      _init_conv(ks[6], 32, 48, 3),
        'aux1':      _init_conv(ks[7], num_classes, 32, 1),
    }


# -------------------------------- forward -----------------------------------

def ddn_fcos3d_forward(params, images):
    """images: (N, 3, H, W) NCHW -> dict(features, logits, aux) in NCHW."""
    # pretrained-path preprocess constants; fused into the stem conv kernel
    # (zero-preserving, exactly like the reference's mask/normalize/restore).
    mean = jnp.array([0.485, 0.456, 0.406], jnp.float32)
    inv_std = 1.0 / jnp.array([0.229, 0.224, 0.225], jnp.float32)

    # NCHW -> NHWC (channels on the lane axis for the conv kernels)
    x = jnp.transpose(images.astype(jnp.float32), (0, 2, 3, 1))

    # backbone (reduced stand-in with the same return-layer structure)
    x = conv2d(x, *params['stem'], stride=2, padding=1, relu=True,
               norm=(mean, inv_std))
    feats_p = conv2d(x, *params['layer1'], stride=1, padding=1, relu=True)       # 'features'
    out_f = conv2d(feats_p, *params['layer_out'], stride=2, padding=1, relu=True)  # 'out'
    aux_f = conv2d(feats_p, *params['layer_aux'], stride=2, padding=1, relu=True)  # 'aux'
    feat_hw = feats_p.shape[1:3]
    num_classes = params['cls1'][0].shape[0]
    feat_c = params['layer1'][0].shape[0]
    N = images.shape[0]

    # classifier / aux-classifier heads
    c = conv2d(out_f, *params['cls0'], stride=1, padding=1, relu=True)
    c = conv2d(c, *params['cls1'], stride=1, padding=0, relu=False)
    a = conv2d(aux_f, *params['aux0'], stride=1, padding=1, relu=True)
    a = conv2d(a, *params['aux1'], stride=1, padding=0, relu=False)

    # merge the logits and aux upsamples into ONE bilinear kernel call
    hc, wc = c.shape[1:3]
    heads = jnp.stack([c[..., :num_classes], a[..., :num_classes]], axis=0)
    heads = jnp.transpose(heads, (0, 1, 4, 2, 3)).reshape(
        2 * N * num_classes, hc, wc)
    up = bilinear_upsample_rows(heads, feat_hw)
    up = up.reshape(2, N, num_classes, feat_hw[0], feat_hw[1])
    logits, aux = up[0], up[1]

    features = jnp.transpose(feats_p[..., :feat_c], (0, 3, 1, 2)).astype(
        jnp.float32)
    return {'features': features, 'logits': logits, 'aux': aux}


# --------------------------------- main --------------------------------------

if __name__ == "__main__":
    key = jax.random.PRNGKey(0)
    pkey, ikey, mkey = jax.random.split(key, 3)

    num_classes = 10
    N, H, W = 2, 32, 32

    params = init_params(pkey, num_classes)

    images = jax.random.uniform(ikey, (N, 3, H, W), jnp.float32)
    # zero out some pixels to exercise the mask-preserving normalization
    zero_mask = jax.random.bernoulli(mkey, 0.1, (N, 1, H, W))
    images = jnp.where(zero_mask, 0.0, images)

    fwd = jax.jit(functools.partial(ddn_fcos3d_forward, params))
    result = fwd(images)
    jax.block_until_ready(result)

    assert result['features'].shape == (N, 32, 16, 16)
    assert result['logits'].shape == (N, num_classes, 16, 16)
    assert result['aux'].shape == (N, num_classes, 16, 16)
    assert all(bool(jnp.all(jnp.isfinite(v))) for v in result.values())

    print("KERNEL_OK")
</pallas_src>

<mosaic_0001>
module attributes {stable_mosaic.version = 11 : i64} {
  func.func @_conv_kernel_taps(%arg0: i32, %arg1: i32, %arg2: memref<1x1x4x9x17x3xf32, #tpu.memory_space<vmem>>, %arg3: memref<9x3x128xbf16, #tpu.memory_space<vmem>>, %arg4: memref<1x128xf32, #tpu.memory_space<vmem>>, %arg5: memref<1x3xf32, #tpu.memory_space<vmem>>, %arg6: memref<1x3xf32, #tpu.memory_space<vmem>>, %arg7: memref<1x128x128xbf16, #tpu.memory_space<vmem>>) attributes {dimension_semantics = [#tpu.dimension_semantics<parallel>, #tpu.dimension_semantics<parallel>], iteration_bounds = array<i64: 2, 2>, scalar_prefetch = 0 : i64, scratch_operands = 0 : i64, tpu.core_type = #tpu.core_type<tc>, window_params = [{transform_indices = @transform_0, window_bounds = array<i64: 1, 1, 4, 9, 17, 3>}, {pipeline_mode = #tpu.pipeline_mode<synchronous>, transform_indices = @transform_1, window_bounds = array<i64: 9, 3, 128>}, {pipeline_mode = #tpu.pipeline_mode<synchronous>, transform_indices = @transform_2, window_bounds = array<i64: 1, 128>}, {pipeline_mode = #tpu.pipeline_mode<synchronous>, transform_indices = @transform_3, window_bounds = array<i64: 1, 3>}, {pipeline_mode = #tpu.pipeline_mode<synchronous>, transform_indices = @transform_4, window_bounds = array<i64: 1, 3>}, {transform_indices = @transform_5, window_bounds = array<i64: 1, 128, 128>}]} {
    %c0 = arith.constant 0 : index
    %c0_0 = arith.constant 0 : index
    %c0_1 = arith.constant 0 : index
    %c0_2 = arith.constant 0 : index
    %c0_3 = arith.constant 0 : index
    %c0_4 = arith.constant 0 : index
    %0 = vector.load %arg2[%c0, %c0_0, %c0_1, %c0_2, %c0_3, %c0_4] : memref<1x1x4x9x17x3xf32, #tpu.memory_space<vmem>>, vector<1x1x4x9x17x3xf32>
    %1 = vector.shape_cast %0 : vector<1x1x4x9x17x3xf32> to vector<4x9x17x3xf32>
    %cst = arith.constant 0.000000e+00 : f32
    %2 = vector.broadcast %cst : f32 to vector<4x9x17x3xf32>
    %3 = arith.cmpf oeq, %1, %2 : vector<4x9x17x3xf32>
    %c0_5 = arith.constant 0 : index
    %c0_6 = arith.constant 0 : index
    %4 = vector.load %arg5[%c0_5, %c0_6] : memref<1x3xf32, #tpu.memory_space<vmem>>, vector<1x3xf32>
    %5 = vector.shape_cast %4 : vector<1x3xf32> to vector<1x1x1x3xf32>
    %6 = vector.broadcast %5 : vector<1x1x1x3xf32> to vector<4x9x17x3xf32>
    %7 = arith.subf %1, %6 : vector<4x9x17x3xf32>
    %c0_7 = arith.constant 0 : index
    %c0_8 = arith.constant 0 : index
    %8 = vector.load %arg6[%c0_7, %c0_8] : memref<1x3xf32, #tpu.memory_space<vmem>>, vector<1x3xf32>
    %9 = vector.shape_cast %8 : vector<1x3xf32> to vector<1x1x1x3xf32>
    %10 = vector.broadcast %9 : vector<1x1x1x3xf32> to vector<4x9x17x3xf32>
    %11 = arith.mulf %7, %10 : vector<4x9x17x3xf32>
    %cst_9 = arith.constant 0.000000e+00 : f32
    %12 = vector.broadcast %cst_9 : f32 to vector<4x9x17x3xf32>
    %13 = arith.select %3, %12, %11 : vector<4x9x17x3xi1>, vector<4x9x17x3xf32>
    %14 = arith.truncf %13 : vector<4x9x17x3xf32> to vector<4x9x17x3xbf16>
    %c0_10 = arith.constant 0 : index
    %c0_11 = arith.constant 0 : index
    %15 = vector.load %arg4[%c0_10, %c0_11] : memref<1x128xf32, #tpu.memory_space<vmem>>, vector<1x128xf32>
    %16 = vector.shape_cast %15 : vector<1x128xf32> to vector<1x128xf32>
    %17 = vector.broadcast %16 : vector<1x128xf32> to vector<128x128xf32>
    %18 = vector.extract_strided_slice %14 {offsets = [0, 0, 0, 0], sizes = [1, 8, 16, 3], strides = [1, 1, 1, 1]} : vector<4x9x17x3xbf16> to vector<1x8x16x3xbf16>
    %19 = vector.shape_cast %18 : vector<1x8x16x3xbf16> to vector<8x16x3xbf16>
    %20 = vector.shape_cast %19 : vector<8x16x3xbf16> to vector<128x3xbf16>
    %c0_12 = arith.constant 0 : index
    %c0_13 = arith.constant 0 : index
    %c0_14 = arith.constant 0 : index
    %21 = vector.load %arg3[%c0_12, %c0_13, %c0_14] : memref<9x3x128xbf16, #tpu.memory_space<vmem>>, vector<1x3x128xbf16>
    %22 = vector.shape_cast %21 : vector<1x3x128xbf16> to vector<3x128xbf16>
    %cst_15 = arith.constant dense<0.000000e+00> : vector<128x128xf32>
    %23 = tpu.matmul %20, %22, %cst_15 {dimension_numbers = #tpu.dot_dimension_numbers<[1], [0], [0], [1], [0, 0, 1, 1], [], []>} : vector<128x3xbf16>, vector<3x128xbf16>, vector<128x128xf32> -> vector<128x128xf32>
    %24 = arith.addf %17, %23 : vector<128x128xf32>
    %25 = vector.extract_strided_slice %14 {offsets = [1, 0, 0, 0], sizes = [1, 8, 16, 3], strides = [1, 1, 1, 1]} : vector<4x9x17x3xbf16> to vector<1x8x16x3xbf16>
    %26 = vector.shape_cast %25 : vector<1x8x16x3xbf16> to vector<8x16x3xbf16>
    %27 = vector.shape_cast %26 : vector<8x16x3xbf16> to vector<128x3xbf16>
    %c1 = arith.constant 1 : index
    %c0_16 = arith.constant 0 : index
    %c0_17 = arith.constant 0 : index
    %28 = vector.load %arg3[%c1, %c0_16, %c0_17] : memref<9x3x128xbf16, #tpu.memory_space<vmem>>, vector<1x3x128xbf16>
    %29 = vector.shape_cast %28 : vector<1x3x128xbf16> to vector<3x128xbf16>
    %cst_18 = arith.constant dense<0.000000e+00> : vector<128x128xf32>
    %30 = tpu.matmul %27, %29, %cst_18 {dimension_numbers = #tpu.dot_dimension_numbers<[1], [0], [0], [1], [0, 0, 1, 1], [], []>} : vector<128x3xbf16>, vector<3x128xbf16>, vector<128x128xf32> -> vector<128x128xf32>
    %31 = arith.addf %24, %30 : vector<128x128xf32>
    %32 = vector.extract_strided_slice %14 {offsets = [0, 0, 1, 0], sizes = [1, 8, 16, 3], strides = [1, 1, 1, 1]} : vector<4x9x17x3xbf16> to vector<1x8x16x3xbf16>
    %33 = vector.shape_cast %32 : vector<1x8x16x3xbf16> to vector<8x16x3xbf16>
    %34 = vector.shape_cast %33 : vector<8x16x3xbf16> to vector<128x3xbf16>
    %c2 = arith.constant 2 : index
    %c0_19 = arith.constant 0 : index
    %c0_20 = arith.constant 0 : index
    %35 = vector.load %arg3[%c2, %c0_19, %c0_20] : memref<9x3x128xbf16, #tpu.memory_space<vmem>>, vector<1x3x128xbf16>
    %36 = vector.shape_cast %35 : vector<1x3x128xbf16> to vector<3x128xbf16>
    %cst_21 = arith.constant dense<0.000000e+00> : vector<128x128xf32>
    %37 = tpu.matmul %34, %36, %cst_21 {dimension_numbers = #tpu.dot_dimension_numbers<[1], [0], [0], [1], [0, 0, 1, 1], [], []>} : vector<128x3xbf16>, vector<3x128xbf16>, vector<128x128xf32> -> vector<128x128xf32>
    %38 = arith.addf %31, %37 : vector<128x128xf32>
    %39 = vector.extract_strided_slice %14 {offsets = [2, 0, 0, 0], sizes = [1, 8, 16, 3], strides = [1, 1, 1, 1]} : vector<4x9x17x3xbf16> to vector<1x8x16x3xbf16>
    %40 = vector.shape_cast %39 : vector<1x8x16x3xbf16> to vector<8x16x3xbf16>
    %41 = vector.shape_cast %40 : vector<8x16x3xbf16> to vector<128x3xbf16>
    %c3 = arith.constant 3 : index
    %c0_22 = arith.constant 0 : index
    %c0_23 = arith.constant 0 : index
    %42 = vector.load %arg3[%c3, %c0_22, %c0_23] : memref<9x3x128xbf16, #tpu.memory_space<vmem>>, vector<1x3x128xbf16>
    %43 = vector.shape_cast %42 : vector<1x3x128xbf16> to vector<3x128xbf16>
    %cst_24 = arith.constant dense<0.000000e+00> : vector<128x128xf32>
    %44 = tpu.matmul %41, %43, %cst_24 {dimension_numbers = #tpu.dot_dimension_numbers<[1], [0], [0], [1], [0, 0, 1, 1], [], []>} : vector<128x3xbf16>, vector<3x128xbf16>, vector<128x128xf32> -> vector<128x128xf32>
    %45 = arith.addf %38, %44 : vector<128x128xf32>
    %46 = vector.extract_strided_slice %14 {offsets = [3, 0, 0, 0], sizes = [1, 8, 16, 3], strides = [1, 1, 1, 1]} : vector<4x9x17x3xbf16> to vector<1x8x16x3xbf16>
    %47 = vector.shape_cast %46 : vector<1x8x16x3xbf16> to vector<8x16x3xbf16>
    %48 = vector.shape_cast %47 : vector<8x16x3xbf16> to vector<128x3xbf16>
    %c4 = arith.constant 4 : index
    %c0_25 = arith.constant 0 : index
    %c0_26 = arith.constant 0 : index
    %49 = vector.load %arg3[%c4, %c0_25, %c0_26] : memref<9x3x128xbf16, #tpu.memory_space<vmem>>, vector<1x3x128xbf16>
    %50 = vector.shape_cast %49 : vector<1x3x128xbf16> to vector<3x128xbf16>
    %cst_27 = arith.constant dense<0.000000e+00> : vector<128x128xf32>
    %51 = tpu.matmul %48, %50, %cst_27 {dimension_numbers = #tpu.dot_dimension_numbers<[1], [0], [0], [1], [0, 0, 1, 1], [], []>} : vector<128x3xbf16>, vector<3x128xbf16>, vector<128x128xf32> -> vector<128x128xf32>
    %52 = arith.addf %45, %51 : vector<128x128xf32>
    %53 = vector.extract_strided_slice %14 {offsets = [2, 0, 1, 0], sizes = [1, 8, 16, 3], strides = [1, 1, 1, 1]} : vector<4x9x17x3xbf16> to vector<1x8x16x3xbf16>
    %54 = vector.shape_cast %53 : vector<1x8x16x3xbf16> to vector<8x16x3xbf16>
    %55 = vector.shape_cast %54 : vector<8x16x3xbf16> to vector<128x3xbf16>
    %c5 = arith.constant 5 : index
    %c0_28 = arith.constant 0 : index
    %c0_29 = arith.constant 0 : index
    %56 = vector.load %arg3[%c5, %c0_28, %c0_29] : memref<9x3x128xbf16, #tpu.memory_space<vmem>>, vector<1x3x128xbf16>
    %57 = vector.shape_cast %56 : vector<1x3x128xbf16> to vector<3x128xbf16>
    %cst_30 = arith.constant dense<0.000000e+00> : vector<128x128xf32>
    %58 = tpu.matmul %55, %57, %cst_30 {dimension_numbers = #tpu.dot_dimension_numbers<[1], [0], [0], [1], [0, 0, 1, 1], [], []>} : vector<128x3xbf16>, vector<3x128xbf16>, vector<128x128xf32> -> vector<128x128xf32>
    %59 = arith.addf %52, %58 : vector<128x128xf32>
    %60 = vector.extract_strided_slice %14 {offsets = [0, 1, 0, 0], sizes = [1, 8, 16, 3], strides = [1, 1, 1, 1]} : vector<4x9x17x3xbf16> to vector<1x8x16x3xbf16>
    %61 = vector.shape_cast %60 : vector<1x8x16x3xbf16> to vector<8x16x3xbf16>
    %62 = vector.shape_cast %61 : vector<8x16x3xbf16> to vector<128x3xbf16>
    %c6 = arith.constant 6 : index
    %c0_31 = arith.constant 0 : index
    %c0_32 = arith.constant 0 : index
    %63 = vector.load %arg3[%c6, %c0_31, %c0_32] : memref<9x3x128xbf16, #tpu.memory_space<vmem>>, vector<1x3x128xbf16>
    %64 = vector.shape_cast %63 : vector<1x3x128xbf16> to vector<3x128xbf16>
    %cst_33 = arith.constant dense<0.000000e+00> : vector<128x128xf32>
    %65 = tpu.matmul %62, %64, %cst_33 {dimension_numbers = #tpu.dot_dimension_numbers<[1], [0], [0], [1], [0, 0, 1, 1], [], []>} : vector<128x3xbf16>, vector<3x128xbf16>, vector<128x128xf32> -> vector<128x128xf32>
    %66 = arith.addf %59, %65 : vector<128x128xf32>
    %67 = vector.extract_strided_slice %14 {offsets = [1, 1, 0, 0], sizes = [1, 8, 16, 3], strides = [1, 1, 1, 1]} : vector<4x9x17x3xbf16> to vector<1x8x16x3xbf16>
    %68 = vector.shape_cast %67 : vector<1x8x16x3xbf16> to vector<8x16x3xbf16>
    %69 = vector.shape_cast %68 : vector<8x16x3xbf16> to vector<128x3xbf16>
    %c7 = arith.constant 7 : index
    %c0_34 = arith.constant 0 : index
    %c0_35 = arith.constant 0 : index
    %70 = vector.load %arg3[%c7, %c0_34, %c0_35] : memref<9x3x128xbf16, #tpu.memory_space<vmem>>, vector<1x3x128xbf16>
    %71 = vector.shape_cast %70 : vector<1x3x128xbf16> to vector<3x128xbf16>
    %cst_36 = arith.constant dense<0.000000e+00> : vector<128x128xf32>
    %72 = tpu.matmul %69, %71, %cst_36 {dimension_numbers = #tpu.dot_dimension_numbers<[1], [0], [0], [1], [0, 0, 1, 1], [], []>} : vector<128x3xbf16>, vector<3x128xbf16>, vector<128x128xf32> -> vector<128x128xf32>
    %73 = arith.addf %66, %72 : vector<128x128xf32>
    %74 = vector.extract_strided_slice %14 {offsets = [0, 1, 1, 0], sizes = [1, 8, 16, 3], strides = [1, 1, 1, 1]} : vector<4x9x17x3xbf16> to vector<1x8x16x3xbf16>
    %75 = vector.shape_cast %74 : vector<1x8x16x3xbf16> to vector<8x16x3xbf16>
    %76 = vector.shape_cast %75 : vector<8x16x3xbf16> to vector<128x3xbf16>
    %c8 = arith.constant 8 : index
    %c0_37 = arith.constant 0 : index
    %c0_38 = arith.constant 0 : index
    %77 = vector.load %arg3[%c8, %c0_37, %c0_38] : memref<9x3x128xbf16, #tpu.memory_space<vmem>>, vector<1x3x128xbf16>
    %78 = vector.shape_cast %77 : vector<1x3x128xbf16> to vector<3x128xbf16>
    %cst_39 = arith.constant dense<0.000000e+00> : vector<128x128xf32>
    %79 = tpu.matmul %76, %78, %cst_39 {dimension_numbers = #tpu.dot_dimension_numbers<[1], [0], [0], [1], [0, 0, 1, 1], [], []>} : vector<128x3xbf16>, vector<3x128xbf16>, vector<128x128xf32> -> vector<128x128xf32>
    %80 = arith.addf %73, %79 : vector<128x128xf32>
    %cst_40 = arith.constant 0.000000e+00 : f32
    %81 = vector.broadcast %cst_40 : f32 to vector<128x128xf32>
    %82 = arith.maximumf %80, %81 : vector<128x128xf32>
    %83 = arith.truncf %82 : vector<128x128xf32> to vector<128x128xbf16>
    %c0_41 = arith.constant 0 : index
    %c0_42 = arith.constant 0 : index
    %c0_43 = arith.constant 0 : index
    %84 = vector.load %arg7[%c0_41, %c0_42, %c0_43] : memref<1x128x128xbf16, #tpu.memory_space<vmem>>, vector<1x128x128xbf16>
    %85 = vector.shape_cast %84 : vector<1x128x128xbf16> to vector<128x128xbf16>
    %86 = vector.shape_cast %83 : vector<128x128xbf16> to vector<1x128x128xbf16>
    tpu.vector_store %arg7[%c0_41, %c0_42, %c0_43], %86 {strides = array<i32>} : memref<1x128x128xbf16, #tpu.memory_space<vmem>>, vector<1x128x128xbf16>,
    return
  }
  func.func @transform_0(%arg0: i32, %arg1: i32) -> (i32, i32, i32, i32, i32, i32) {
    %c0_i32 = arith.constant 0 : i32
    %c0_i32_0 = arith.constant 0 : i32
    %c0_i32_1 = arith.constant 0 : i32
    %c0_i32_2 = arith.constant 0 : i32
    %c0_i32_3 = arith.constant 0 : i32
    return %arg0, %arg1, %c0_i32, %c0_i32_0, %c0_i32_1, %c0_i32_2 : i32, i32, i32, i32, i32, i32
  }
  func.func @transform_1(%arg0: i32, %arg1: i32) -> (i32, i32, i32) {
    %c0_i32 = arith.constant 0 : i32
    %c0_i32_0 = arith.constant 0 : i32
    %c0_i32_1 = arith.constant 0 : i32
    %c0_i32_2 = arith.constant 0 : i32
    return %c0_i32, %c0_i32_0, %c0_i32_1 : i32, i32, i32
  }
  func.func @transform_2(%arg0: i32, %arg1: i32) -> (i32, i32) {
    %c0_i32 = arith.constant 0 : i32
    %c0_i32_0 = arith.constant 0 : i32
    %c0_i32_1 = arith.constant 0 : i32
    return %c0_i32, %c0_i32_0 : i32, i32
  }
  func.func @transform_3(%arg0: i32, %arg1: i32) -> (i32, i32) {
    %c0_i32 = arith.constant 0 : i32
    %c0_i32_0 = arith.constant 0 : i32
    %c0_i32_1 = arith.constant 0 : i32
    return %c0_i32, %c0_i32_0 : i32, i32
  }
  func.func @transform_4(%arg0: i32, %arg1: i32) -> (i32, i32) {
    %c0_i32 = arith.constant 0 : i32
    %c0_i32_0 = arith.constant 0 : i32
    %c0_i32_1 = arith.constant 0 : i32
    return %c0_i32, %c0_i32_0 : i32, i32
  }
  func.func @transform_5(%arg0: i32, %arg1: i32) -> (i32, i32, i32) {
    %c0_i32 = arith.constant 0 : i32
    %c0_i32_0 = arith.constant 0 : i32
    return %arg0, %arg1, %c0_i32 : i32, i32, i32
  }
}

module attributes {stable_mosaic.version = 11 : i64} {
  func.func @_conv_kernel_fused(%arg0: i32, %arg1: i32, %arg2: memref<1x1x1x10x18x128xbf16, #tpu.memory_space<vmem>>, %arg3: memref<1152x128xbf16, #tpu.memory_space<vmem>>, %arg4: memref<1x128xf32, #tpu.memory_space<vmem>>, %arg5: memref<1x128x128xbf16, #tpu.memory_space<vmem>>) attributes {dimension_semantics = [#tpu.dimension_semantics<parallel>, #tpu.dimension_semantics<parallel>], iteration_bounds = array<i64: 2, 2>, scalar_prefetch = 0 : i64, scratch_operands = 0 : i64, tpu.core_type = #tpu.core_type<tc>, window_params = [{transform_indices = @transform_0, window_bounds = array<i64: 1, 1, 1, 10, 18, 128>}, {pipeline_mode = #tpu.pipeline_mode<synchronous>, transform_indices = @transform_1, window_bounds = array<i64: 1152, 128>}, {pipeline_mode = #tpu.pipeline_mode<synchronous>, transform_indices = @transform_2, window_bounds = array<i64: 1, 128>}, {transform_indices = @transform_3, window_bounds = array<i64: 1, 128, 128>}]} {
    %c0 = arith.constant 0 : index
    %c0_0 = arith.constant 0 : index
    %c0_1 = arith.constant 0 : index
    %c0_2 = arith.constant 0 : index
    %c0_3 = arith.constant 0 : index
    %c0_4 = arith.constant 0 : index
    %0 = vector.load %arg2[%c0, %c0_0, %c0_1, %c0_2, %c0_3, %c0_4] : memref<1x1x1x10x18x128xbf16, #tpu.memory_space<vmem>>, vector<1x1x1x10x18x128xbf16>
    %1 = vector.shape_cast %0 : vector<1x1x1x10x18x128xbf16> to vector<1x10x18x128xbf16>
    %2 = vector.extract_strided_slice %1 {offsets = [0, 0, 0, 0], sizes = [1, 8, 16, 128], strides = [1, 1, 1, 1]} : vector<1x10x18x128xbf16> to vector<1x8x16x128xbf16>
    %3 = vector.shape_cast %2 : vector<1x8x16x128xbf16> to vector<8x16x128xbf16>
    %4 = vector.shape_cast %3 : vector<8x16x128xbf16> to vector<128x128xbf16>
    %5 = vector.extract_strided_slice %1 {offsets = [0, 0, 1, 0], sizes = [1, 8, 16, 128], strides = [1, 1, 1, 1]} : vector<1x10x18x128xbf16> to vector<1x8x16x128xbf16>
    %6 = vector.shape_cast %5 : vector<1x8x16x128xbf16> to vector<8x16x128xbf16>
    %7 = vector.shape_cast %6 : vector<8x16x128xbf16> to vector<128x128xbf16>
    %8 = vector.extract_strided_slice %1 {offsets = [0, 0, 2, 0], sizes = [1, 8, 16, 128], strides = [1, 1, 1, 1]} : vector<1x10x18x128xbf16> to vector<1x8x16x128xbf16>
    %9 = vector.shape_cast %8 : vector<1x8x16x128xbf16> to vector<8x16x128xbf16>
    %10 = vector.shape_cast %9 : vector<8x16x128xbf16> to vector<128x128xbf16>
    %11 = vector.extract_strided_slice %1 {offsets = [0, 1, 0, 0], sizes = [1, 8, 16, 128], strides = [1, 1, 1, 1]} : vector<1x10x18x128xbf16> to vector<1x8x16x128xbf16>
    %12 = vector.shape_cast %11 : vector<1x8x16x128xbf16> to vector<8x16x128xbf16>
    %13 = vector.shape_cast %12 : vector<8x16x128xbf16> to vector<128x128xbf16>
    %14 = vector.extract_strided_slice %1 {offsets = [0, 1, 1, 0], sizes = [1, 8, 16, 128], strides = [1, 1, 1, 1]} : vector<1x10x18x128xbf16> to vector<1x8x16x128xbf16>
    %15 = vector.shape_cast %14 : vector<1x8x16x128xbf16> to vector<8x16x128xbf16>
    %16 = vector.shape_cast %15 : vector<8x16x128xbf16> to vector<128x128xbf16>
    %17 = vector.extract_strided_slice %1 {offsets = [0, 1, 2, 0], sizes = [1, 8, 16, 128], strides = [1, 1, 1, 1]} : vector<1x10x18x128xbf16> to vector<1x8x16x128xbf16>
    %18 = vector.shape_cast %17 : vector<1x8x16x128xbf16> to vector<8x16x128xbf16>
    %19 = vector.shape_cast %18 : vector<8x16x128xbf16> to vector<128x128xbf16>
    %20 = vector.extract_strided_slice %1 {offsets = [0, 2, 0, 0], sizes = [1, 8, 16, 128], strides = [1, 1, 1, 1]} : vector<1x10x18x128xbf16> to vector<1x8x16x128xbf16>
    %21 = vector.shape_cast %20 : vector<1x8x16x128xbf16> to vector<8x16x128xbf16>
    %22 = vector.shape_cast %21 : vector<8x16x128xbf16> to vector<128x128xbf16>
    %23 = vector.extract_strided_slice %1 {offsets = [0, 2, 1, 0], sizes = [1, 8, 16, 128], strides = [1, 1, 1, 1]} : vector<1x10x18x128xbf16> to vector<1x8x16x128xbf16>
    %24 = vector.shape_cast %23 : vector<1x8x16x128xbf16> to vector<8x16x128xbf16>
    %25 = vector.shape_cast %24 : vector<8x16x128xbf16> to vector<128x128xbf16>
    %26 = vector.extract_strided_slice %1 {offsets = [0, 2, 2, 0], sizes = [1, 8, 16, 128], strides = [1, 1, 1, 1]} : vector<1x10x18x128xbf16> to vector<1x8x16x128xbf16>
    %27 = vector.shape_cast %26 : vector<1x8x16x128xbf16> to vector<8x16x128xbf16>
    %28 = vector.shape_cast %27 : vector<8x16x128xbf16> to vector<128x128xbf16>
    %29 = tpu.concatenate %4, %7, %10, %13, %16, %19, %22, %25, %28 in 1 : vector<128x128xbf16>, vector<128x128xbf16>, vector<128x128xbf16>, vector<128x128xbf16>, vector<128x128xbf16>, vector<128x128xbf16>, vector<128x128xbf16>, vector<128x128xbf16>, vector<128x128xbf16> -> vector<128x1152xbf16>
    %c0_5 = arith.constant 0 : index
    %c0_6 = arith.constant 0 : index
    %30 = vector.load %arg3[%c0_5, %c0_6] : memref<1152x128xbf16, #tpu.memory_space<vmem>>, vector<1152x128xbf16>
    %cst = arith.constant dense<0.000000e+00> : vector<128x128xf32>
    %31 = tpu.matmul %29, %30, %cst {dimension_numbers = #tpu.dot_dimension_numbers<[1], [0], [0], [1], [0, 0, 1, 1], [], []>} : vector<128x1152xbf16>, vector<1152x128xbf16>, vector<128x128xf32> -> vector<128x128xf32>
    %c0_7 = arith.constant 0 : index
    %c0_8 = arith.constant 0 : index
    %32 = vector.load %arg4[%c0_7, %c0_8] : memref<1x128xf32, #tpu.memory_space<vmem>>, vector<1x128xf32>
    %33 = vector.broadcast %32 : vector<1x128xf32> to vector<128x128xf32>
    %34 = arith.addf %31, %33 : vector<128x128xf32>
    %cst_9 = arith.constant 0.000000e+00 : f32
    %35 = vector.broadcast %cst_9 : f32 to vector<128x128xf32>
    %36 = arith.maximumf %34, %35 : vector<128x128xf32>
    %37 = vector.shape_cast %36 : vector<128x128xf32> to vector<1x128x128xf32>
    %38 = arith.truncf %37 : vector<1x128x128xf32> to vector<1x128x128xbf16>
    %c0_10 = arith.constant 0 : index
    %c0_11 = arith.constant 0 : index
    %c0_12 = arith.constant 0 : index
    %39 = vector.load %arg5[%c0_10, %c0_11, %c0_12] : memref<1x128x128xbf16, #tpu.memory_space<vmem>>, vector<1x128x128xbf16>
    tpu.vector_store %arg5[%c0_10, %c0_11, %c0_12], %38 {strides = array<i32>} : memref<1x128x128xbf16, #tpu.memory_space<vmem>>, vector<1x128x128xbf16>,
    return
  }
  func.func @transform_0(%arg0: i32, %arg1: i32) -> (i32, i32, i32, i32, i32, i32) {
    %c0_i32 = arith.constant 0 : i32
    %c0_i32_0 = arith.constant 0 : i32
    %c0_i32_1 = arith.constant 0 : i32
    %c0_i32_2 = arith.constant 0 : i32
    %c0_i32_3 = arith.constant 0 : i32
    return %arg0, %arg1, %c0_i32, %c0_i32_0, %c0_i32_1, %c0_i32_2 : i32, i32, i32, i32, i32, i32
  }
  func.func @transform_1(%arg0: i32, %arg1: i32) -> (i32, i32) {
    %c0_i32 = arith.constant 0 : i32
    %c0_i32_0 = arith.constant 0 : i32
    %c0_i32_1 = arith.constant 0 : i32
    return %c0_i32, %c0_i32_0 : i32, i32
  }
  func.func @transform_2(%arg0: i32, %arg1: i32) -> (i32, i32) {
    %c0_i32 = arith.constant 0 : i32
    %c0_i32_0 = arith.constant 0 : i32
    %c0_i32_1 = arith.constant 0 : i32
    return %c0_i32, %c0_i32_0 : i32, i32
  }
  func.func @transform_3(%arg0: i32, %arg1: i32) -> (i32, i32, i32) {
    %c0_i32 = arith.constant 0 : i32
    %c0_i32_0 = arith.constant 0 : i32
    return %arg0, %arg1, %c0_i32 : i32, i32, i32
  }
}

module attributes {stable_mosaic.version = 11 : i64} {
  func.func @_conv_kernel_fused(%arg0: i32, %arg1: i32, %arg2: memref<2x1x4x9x9x128xbf16, #tpu.memory_space<vmem>>, %arg3: memref<1152x128xbf16, #tpu.memory_space<vmem>>, %arg4: memref<1x128xf32, #tpu.memory_space<vmem>>, %arg5: memref<2x64x128xbf16, #tpu.memory_space<vmem>>) attributes {dimension_semantics = [#tpu.dimension_semantics<parallel>, #tpu.dimension_semantics<parallel>], iteration_bounds = array<i64: 1, 1>, scalar_prefetch = 0 : i64, scratch_operands = 0 : i64, tpu.core_type = #tpu.core_type<tc>, window_params = [{transform_indices = @transform_0, window_bounds = array<i64: 2, 1, 4, 9, 9, 128>}, {pipeline_mode = #tpu.pipeline_mode<synchronous>, transform_indices = @transform_1, window_bounds = array<i64: 1152, 128>}, {pipeline_mode = #tpu.pipeline_mode<synchronous>, transform_indices = @transform_2, window_bounds = array<i64: 1, 128>}, {transform_indices = @transform_3, window_bounds = array<i64: 2, 64, 128>}]} {
    %c0 = arith.constant 0 : index
    %c0_0 = arith.constant 0 : index
    %c0_1 = arith.constant 0 : index
    %c0_2 = arith.constant 0 : index
    %c0_3 = arith.constant 0 : index
    %c0_4 = arith.constant 0 : index
    %0 = vector.load %arg2[%c0, %c0_0, %c0_1, %c0_2, %c0_3, %c0_4] : memref<2x1x4x9x9x128xbf16, #tpu.memory_space<vmem>>, vector<1x1x4x9x9x128xbf16>
    %1 = vector.shape_cast %0 : vector<1x1x4x9x9x128xbf16> to vector<4x9x9x128xbf16>
    %2 = vector.extract_strided_slice %1 {offsets = [0, 0, 0, 0], sizes = [1, 8, 8, 128], strides = [1, 1, 1, 1]} : vector<4x9x9x128xbf16> to vector<1x8x8x128xbf16>
    %3 = vector.shape_cast %2 : vector<1x8x8x128xbf16> to vector<8x8x128xbf16>
    %4 = vector.shape_cast %3 : vector<8x8x128xbf16> to vector<64x128xbf16>
    %5 = vector.extract_strided_slice %1 {offsets = [1, 0, 0, 0], sizes = [1, 8, 8, 128], strides = [1, 1, 1, 1]} : vector<4x9x9x128xbf16> to vector<1x8x8x128xbf16>
    %6 = vector.shape_cast %5 : vector<1x8x8x128xbf16> to vector<8x8x128xbf16>
    %7 = vector.shape_cast %6 : vector<8x8x128xbf16> to vector<64x128xbf16>
    %8 = vector.extract_strided_slice %1 {offsets = [0, 0, 1, 0], sizes = [1, 8, 8, 128], strides = [1, 1, 1, 1]} : vector<4x9x9x128xbf16> to vector<1x8x8x128xbf16>
    %9 = vector.shape_cast %8 : vector<1x8x8x128xbf16> to vector<8x8x128xbf16>
    %10 = vector.shape_cast %9 : vector<8x8x128xbf16> to vector<64x128xbf16>
    %11 = vector.extract_strided_slice %1 {offsets = [2, 0, 0, 0], sizes = [1, 8, 8, 128], strides = [1, 1, 1, 1]} : vector<4x9x9x128xbf16> to vector<1x8x8x128xbf16>
    %12 = vector.shape_cast %11 : vector<1x8x8x128xbf16> to vector<8x8x128xbf16>
    %13 = vector.shape_cast %12 : vector<8x8x128xbf16> to vector<64x128xbf16>
    %14 = vector.extract_strided_slice %1 {offsets = [3, 0, 0, 0], sizes = [1, 8, 8, 128], strides = [1, 1, 1, 1]} : vector<4x9x9x128xbf16> to vector<1x8x8x128xbf16>
    %15 = vector.shape_cast %14 : vector<1x8x8x128xbf16> to vector<8x8x128xbf16>
    %16 = vector.shape_cast %15 : vector<8x8x128xbf16> to vector<64x128xbf16>
    %17 = vector.extract_strided_slice %1 {offsets = [2, 0, 1, 0], sizes = [1, 8, 8, 128], strides = [1, 1, 1, 1]} : vector<4x9x9x128xbf16> to vector<1x8x8x128xbf16>
    %18 = vector.shape_cast %17 : vector<1x8x8x128xbf16> to vector<8x8x128xbf16>
    %19 = vector.shape_cast %18 : vector<8x8x128xbf16> to vector<64x128xbf16>
    %20 = vector.extract_strided_slice %1 {offsets = [0, 1, 0, 0], sizes = [1, 8, 8, 128], strides = [1, 1, 1, 1]} : vector<4x9x9x128xbf16> to vector<1x8x8x128xbf16>
    %21 = vector.shape_cast %20 : vector<1x8x8x128xbf16> to vector<8x8x128xbf16>
    %22 = vector.shape_cast %21 : vector<8x8x128xbf16> to vector<64x128xbf16>
    %23 = vector.extract_strided_slice %1 {offsets = [1, 1, 0, 0], sizes = [1, 8, 8, 128], strides = [1, 1, 1, 1]} : vector<4x9x9x128xbf16> to vector<1x8x8x128xbf16>
    %24 = vector.shape_cast %23 : vector<1x8x8x128xbf16> to vector<8x8x128xbf16>
    %25 = vector.shape_cast %24 : vector<8x8x128xbf16> to vector<64x128xbf16>
    %26 = vector.extract_strided_slice %1 {offsets = [0, 1, 1, 0], sizes = [1, 8, 8, 128], strides = [1, 1, 1, 1]} : vector<4x9x9x128xbf16> to vector<1x8x8x128xbf16>
    %27 = vector.shape_cast %26 : vector<1x8x8x128xbf16> to vector<8x8x128xbf16>
    %28 = vector.shape_cast %27 : vector<8x8x128xbf16> to vector<64x128xbf16>
    %29 = tpu.concatenate %4, %7, %10, %13, %16, %19, %22, %25, %28 in 1 : vector<64x128xbf16>, vector<64x128xbf16>, vector<64x128xbf16>, vector<64x128xbf16>, vector<64x128xbf16>, vector<64x128xbf16>, vector<64x128xbf16>, vector<64x128xbf16>, vector<64x128xbf16> -> vector<64x1152xbf16>
    %c1 = arith.constant 1 : index
    %c0_5 = arith.constant 0 : index
    %c0_6 = arith.constant 0 : index
    %c0_7 = arith.constant 0 : index
    %c0_8 = arith.constant 0 : index
    %c0_9 = arith.constant 0 : index
    %30 = vector.load %arg2[%c1, %c0_5, %c0_6, %c0_7, %c0_8, %c0_9] : memref<2x1x4x9x9x128xbf16, #tpu.memory_space<vmem>>, vector<1x1x4x9x9x128xbf16>
    %31 = vector.shape_cast %30 : vector<1x1x4x9x9x128xbf16> to vector<4x9x9x128xbf16>
    %32 = vector.extract_strided_slice %31 {offsets = [0, 0, 0, 0], sizes = [1, 8, 8, 128], strides = [1, 1, 1, 1]} : vector<4x9x9x128xbf16> to vector<1x8x8x128xbf16>
    %33 = vector.shape_cast %32 : vector<1x8x8x128xbf16> to vector<8x8x128xbf16>
    %34 = vector.shape_cast %33 : vector<8x8x128xbf16> to vector<64x128xbf16>
    %35 = vector.extract_strided_slice %31 {offsets = [1, 0, 0, 0], sizes = [1, 8, 8, 128], strides = [1, 1, 1, 1]} : vector<4x9x9x128xbf16> to vector<1x8x8x128xbf16>
    %36 = vector.shape_cast %35 : vector<1x8x8x128xbf16> to vector<8x8x128xbf16>
    %37 = vector.shape_cast %36 : vector<8x8x128xbf16> to vector<64x128xbf16>
    %38 = vector.extract_strided_slice %31 {offsets = [0, 0, 1, 0], sizes = [1, 8, 8, 128], strides = [1, 1, 1, 1]} : vector<4x9x9x128xbf16> to vector<1x8x8x128xbf16>
    %39 = vector.shape_cast %38 : vector<1x8x8x128xbf16> to vector<8x8x128xbf16>
    %40 = vector.shape_cast %39 : vector<8x8x128xbf16> to vector<64x128xbf16>
    %41 = vector.extract_strided_slice %31 {offsets = [2, 0, 0, 0], sizes = [1, 8, 8, 128], strides = [1, 1, 1, 1]} : vector<4x9x9x128xbf16> to vector<1x8x8x128xbf16>
    %42 = vector.shape_cast %41 : vector<1x8x8x128xbf16> to vector<8x8x128xbf16>
    %43 = vector.shape_cast %42 : vector<8x8x128xbf16> to vector<64x128xbf16>
    %44 = vector.extract_strided_slice %31 {offsets = [3, 0, 0, 0], sizes = [1, 8, 8, 128], strides = [1, 1, 1, 1]} : vector<4x9x9x128xbf16> to vector<1x8x8x128xbf16>
    %45 = vector.shape_cast %44 : vector<1x8x8x128xbf16> to vector<8x8x128xbf16>
    %46 = vector.shape_cast %45 : vector<8x8x128xbf16> to vector<64x128xbf16>
    %47 = vector.extract_strided_slice %31 {offsets = [2, 0, 1, 0], sizes = [1, 8, 8, 128], strides = [1, 1, 1, 1]} : vector<4x9x9x128xbf16> to vector<1x8x8x128xbf16>
    %48 = vector.shape_cast %47 : vector<1x8x8x128xbf16> to vector<8x8x128xbf16>
    %49 = vector.shape_cast %48 : vector<8x8x128xbf16> to vector<64x128xbf16>
    %50 = vector.extract_strided_slice %31 {offsets = [0, 1, 0, 0], sizes = [1, 8, 8, 128], strides = [1, 1, 1, 1]} : vector<4x9x9x128xbf16> to vector<1x8x8x128xbf16>
    %51 = vector.shape_cast %50 : vector<1x8x8x128xbf16> to vector<8x8x128xbf16>
    %52 = vector.shape_cast %51 : vector<8x8x128xbf16> to vector<64x128xbf16>
    %53 = vector.extract_strided_slice %31 {offsets = [1, 1, 0, 0], sizes = [1, 8, 8, 128], strides = [1, 1, 1, 1]} : vector<4x9x9x128xbf16> to vector<1x8x8x128xbf16>
    %54 = vector.shape_cast %53 : vector<1x8x8x128xbf16> to vector<8x8x128xbf16>
    %55 = vector.shape_cast %54 : vector<8x8x128xbf16> to vector<64x128xbf16>
    %56 = vector.extract_strided_slice %31 {offsets = [0, 1, 1, 0], sizes = [1, 8, 8, 128], strides = [1, 1, 1, 1]} : vector<4x9x9x128xbf16> to vector<1x8x8x128xbf16>
    %57 = vector.shape_cast %56 : vector<1x8x8x128xbf16> to vector<8x8x128xbf16>
    %58 = vector.shape_cast %57 : vector<8x8x128xbf16> to vector<64x128xbf16>
    %59 = tpu.concatenate %34, %37, %40, %43, %46, %49, %52, %55, %58 in 1 : vector<64x128xbf16>, vector<64x128xbf16>, vector<64x128xbf16>, vector<64x128xbf16>, vector<64x128xbf16>, vector<64x128xbf16>, vector<64x128xbf16>, vector<64x128xbf16>, vector<64x128xbf16> -> vector<64x1152xbf16>
    %60 = tpu.concatenate %29, %59 in 0 : vector<64x1152xbf16>, vector<64x1152xbf16> -> vector<128x1152xbf16>
    %c0_10 = arith.constant 0 : index
    %c0_11 = arith.constant 0 : index
    %61 = vector.load %arg3[%c0_10, %c0_11] : memref<1152x128xbf16, #tpu.memory_space<vmem>>, vector<1152x128xbf16>
    %cst = arith.constant dense<0.000000e+00> : vector<128x128xf32>
    %62 = tpu.matmul %60, %61, %cst {dimension_numbers = #tpu.dot_dimension_numbers<[1], [0], [0], [1], [0, 0, 1, 1], [], []>} : vector<128x1152xbf16>, vector<1152x128xbf16>, vector<128x128xf32> -> vector<128x128xf32>
    %c0_12 = arith.constant 0 : index
    %c0_13 = arith.constant 0 : index
    %63 = vector.load %arg4[%c0_12, %c0_13] : memref<1x128xf32, #tpu.memory_space<vmem>>, vector<1x128xf32>
    %64 = vector.broadcast %63 : vector<1x128xf32> to vector<128x128xf32>
    %65 = arith.addf %62, %64 : vector<128x128xf32>
    %cst_14 = arith.constant 0.000000e+00 : f32
    %66 = vector.broadcast %cst_14 : f32 to vector<128x128xf32>
    %67 = arith.maximumf %65, %66 : vector<128x128xf32>
    %68 = vector.shape_cast %67 : vector<128x128xf32> to vector<2x64x128xf32>
    %69 = arith.truncf %68 : vector<2x64x128xf32> to vector<2x64x128xbf16>
    %c0_15 = arith.constant 0 : index
    %c0_16 = arith.constant 0 : index
    %c0_17 = arith.constant 0 : index
    %70 = vector.load %arg5[%c0_15, %c0_16, %c0_17] : memref<2x64x128xbf16, #tpu.memory_space<vmem>>, vector<2x64x128xbf16>
    tpu.vector_store %arg5[%c0_15, %c0_16, %c0_17], %69 {strides = array<i32>} : memref<2x64x128xbf16, #tpu.memory_space<vmem>>, vector<2x64x128xbf16>,
    return
  }
  func.func @transform_0(%arg0: i32, %arg1: i32) -> (i32, i32, i32, i32, i32, i32) {
    %c0_i32 = arith.constant 0 : i32
    %c0_i32_0 = arith.constant 0 : i32
    %c0_i32_1 = arith.constant 0 : i32
    %c0_i32_2 = arith.constant 0 : i32
    %c0_i32_3 = arith.constant 0 : i32
    return %arg0, %arg1, %c0_i32, %c0_i32_0, %c0_i32_1, %c0_i32_2 : i32, i32, i32, i32, i32, i32
  }
  func.func @transform_1(%arg0: i32, %arg1: i32) -> (i32, i32) {
    %c0_i32 = arith.constant 0 : i32
    %c0_i32_0 = arith.constant 0 : i32
    %c0_i32_1 = arith.constant 0 : i32
    return %c0_i32, %c0_i32_0 : i32, i32
  }
  func.func @transform_2(%arg0: i32, %arg1: i32) -> (i32, i32) {
    %c0_i32 = arith.constant 0 : i32
    %c0_i32_0 = arith.constant 0 : i32
    %c0_i32_1 = arith.constant 0 : i32
    return %c0_i32, %c0_i32_0 : i32, i32
  }
  func.func @transform_3(%arg0: i32, %arg1: i32) -> (i32, i32, i32) {
    %c0_i32 = arith.constant 0 : i32
    %c0_i32_0 = arith.constant 0 : i32
    return %arg0, %arg1, %c0_i32 : i32, i32, i32
  }
}

module attributes {stable_mosaic.version = 11 : i64} {
  func.func @_conv_kernel_fused(%arg0: i32, %arg1: i32, %arg2: memref<2x1x1x8x8x128xbf16, #tpu.memory_space<vmem>>, %arg3: memref<128x128xbf16, #tpu.memory_space<vmem>>, %arg4: memref<1x128xf32, #tpu.memory_space<vmem>>, %arg5: memref<2x64x128xbf16, #tpu.memory_space<vmem>>) attributes {dimension_semantics = [#tpu.dimension_semantics<parallel>, #tpu.dimension_semantics<parallel>], iteration_bounds = array<i64: 1, 1>, scalar_prefetch = 0 : i64, scratch_operands = 0 : i64, tpu.core_type = #tpu.core_type<tc>, window_params = [{transform_indices = @transform_0, window_bounds = array<i64: 2, 1, 1, 8, 8, 128>}, {pipeline_mode = #tpu.pipeline_mode<synchronous>, transform_indices = @transform_1, window_bounds = array<i64: 128, 128>}, {pipeline_mode = #tpu.pipeline_mode<synchronous>, transform_indices = @transform_2, window_bounds = array<i64: 1, 128>}, {transform_indices = @transform_3, window_bounds = array<i64: 2, 64, 128>}]} {
    %c0 = arith.constant 0 : index
    %c0_0 = arith.constant 0 : index
    %c0_1 = arith.constant 0 : index
    %c0_2 = arith.constant 0 : index
    %c0_3 = arith.constant 0 : index
    %c0_4 = arith.constant 0 : index
    %0 = vector.load %arg2[%c0, %c0_0, %c0_1, %c0_2, %c0_3, %c0_4] : memref<2x1x1x8x8x128xbf16, #tpu.memory_space<vmem>>, vector<1x1x1x8x8x128xbf16>
    %1 = vector.shape_cast %0 : vector<1x1x1x8x8x128xbf16> to vector<1x8x8x128xbf16>
    %2 = vector.shape_cast %1 : vector<1x8x8x128xbf16> to vector<8x8x128xbf16>
    %3 = vector.shape_cast %2 : vector<8x8x128xbf16> to vector<64x128xbf16>
    %c1 = arith.constant 1 : index
    %c0_5 = arith.constant 0 : index
    %c0_6 = arith.constant 0 : index
    %c0_7 = arith.constant 0 : index
    %c0_8 = arith.constant 0 : index
    %c0_9 = arith.constant 0 : index
    %4 = vector.load %arg2[%c1, %c0_5, %c0_6, %c0_7, %c0_8, %c0_9] : memref<2x1x1x8x8x128xbf16, #tpu.memory_space<vmem>>, vector<1x1x1x8x8x128xbf16>
    %5 = vector.shape_cast %4 : vector<1x1x1x8x8x128xbf16> to vector<1x8x8x128xbf16>
    %6 = vector.shape_cast %5 : vector<1x8x8x128xbf16> to vector<8x8x128xbf16>
    %7 = vector.shape_cast %6 : vector<8x8x128xbf16> to vector<64x128xbf16>
    %8 = tpu.concatenate %3, %7 in 0 : vector<64x128xbf16>, vector<64x128xbf16> -> vector<128x128xbf16>
    %c0_10 = arith.constant 0 : index
    %c0_11 = arith.constant 0 : index
    %9 = vector.load %arg3[%c0_10, %c0_11] : memref<128x128xbf16, #tpu.memory_space<vmem>>, vector<128x128xbf16>
    %cst = arith.constant dense<0.000000e+00> : vector<128x128xf32>
    %10 = tpu.matmul %8, %9, %cst {dimension_numbers = #tpu.dot_dimension_numbers<[1], [0], [0], [1], [0, 0, 1, 1], [], []>} : vector<128x128xbf16>, vector<128x128xbf16>, vector<128x128xf32> -> vector<128x128xf32>
    %c0_12 = arith.constant 0 : index
    %c0_13 = arith.constant 0 : index
    %11 = vector.load %arg4[%c0_12, %c0_13] : memref<1x128xf32, #tpu.memory_space<vmem>>, vector<1x128xf32>
    %12 = vector.broadcast %11 : vector<1x128xf32> to vector<128x128xf32>
    %13 = arith.addf %10, %12 : vector<128x128xf32>
    %14 = vector.shape_cast %13 : vector<128x128xf32> to vector<2x64x128xf32>
    %15 = arith.truncf %14 : vector<2x64x128xf32> to vector<2x64x128xbf16>
    %c0_14 = arith.constant 0 : index
    %c0_15 = arith.constant 0 : index
    %c0_16 = arith.constant 0 : index
    %16 = vector.load %arg5[%c0_14, %c0_15, %c0_16] : memref<2x64x128xbf16, #tpu.memory_space<vmem>>, vector<2x64x128xbf16>
    tpu.vector_store %arg5[%c0_14, %c0_15, %c0_16], %15 {strides = array<i32>} : memref<2x64x128xbf16, #tpu.memory_space<vmem>>, vector<2x64x128xbf16>,
    return
  }
  func.func @transform_0(%arg0: i32, %arg1: i32) -> (i32, i32, i32, i32, i32, i32) {
    %c0_i32 = arith.constant 0 : i32
    %c0_i32_0 = arith.constant 0 : i32
    %c0_i32_1 = arith.constant 0 : i32
    %c0_i32_2 = arith.constant 0 : i32
    %c0_i32_3 = arith.constant 0 : i32
    return %arg0, %arg1, %c0_i32, %c0_i32_0, %c0_i32_1, %c0_i32_2 : i32, i32, i32, i32, i32, i32
  }
  func.func @transform_1(%arg0: i32, %arg1: i32) -> (i32, i32) {
    %c0_i32 = arith.constant 0 : i32
    %c0_i32_0 = arith.constant 0 : i32
    %c0_i32_1 = arith.constant 0 : i32
    return %c0_i32, %c0_i32_0 : i32, i32
  }
  func.func @transform_2(%arg0: i32, %arg1: i32) -> (i32, i32) {
    %c0_i32 = arith.constant 0 : i32
    %c0_i32_0 = arith.constant 0 : i32
    %c0_i32_1 = arith.constant 0 : i32
    return %c0_i32, %c0_i32_0 : i32, i32
  }
  func.func @transform_3(%arg0: i32, %arg1: i32) -> (i32, i32, i32) {
    %c0_i32 = arith.constant 0 : i32
    %c0_i32_0 = arith.constant 0 : i32
    return %arg0, %arg1, %c0_i32 : i32, i32, i32
  }
}

module attributes {stable_mosaic.version = 11 : i64} {
  func.func @_conv_kernel_fused(%arg0: i32, %arg1: i32, %arg2: memref<2x1x1x10x10x128xbf16, #tpu.memory_space<vmem>>, %arg3: memref<1152x128xbf16, #tpu.memory_space<vmem>>, %arg4: memref<1x128xf32, #tpu.memory_space<vmem>>, %arg5: memref<2x64x128xbf16, #tpu.memory_space<vmem>>) attributes {dimension_semantics = [#tpu.dimension_semantics<parallel>, #tpu.dimension_semantics<parallel>], iteration_bounds = array<i64: 1, 1>, scalar_prefetch = 0 : i64, scratch_operands = 0 : i64, tpu.core_type = #tpu.core_type<tc>, window_params = [{transform_indices = @transform_0, window_bounds = array<i64: 2, 1, 1, 10, 10, 128>}, {pipeline_mode = #tpu.pipeline_mode<synchronous>, transform_indices = @transform_1, window_bounds = array<i64: 1152, 128>}, {pipeline_mode = #tpu.pipeline_mode<synchronous>, transform_indices = @transform_2, window_bounds = array<i64: 1, 128>}, {transform_indices = @transform_3, window_bounds = array<i64: 2, 64, 128>}]} {
    %c0 = arith.constant 0 : index
    %c0_0 = arith.constant 0 : index
    %c0_1 = arith.constant 0 : index
    %c0_2 = arith.constant 0 : index
    %c0_3 = arith.constant 0 : index
    %c0_4 = arith.constant 0 : index
    %0 = vector.load %arg2[%c0, %c0_0, %c0_1, %c0_2, %c0_3, %c0_4] : memref<2x1x1x10x10x128xbf16, #tpu.memory_space<vmem>>, vector<1x1x1x10x10x128xbf16>
    %1 = vector.shape_cast %0 : vector<1x1x1x10x10x128xbf16> to vector<1x10x10x128xbf16>
    %2 = vector.extract_strided_slice %1 {offsets = [0, 0, 0, 0], sizes = [1, 8, 8, 128], strides = [1, 1, 1, 1]} : vector<1x10x10x128xbf16> to vector<1x8x8x128xbf16>
    %3 = vector.shape_cast %2 : vector<1x8x8x128xbf16> to vector<8x8x128xbf16>
    %4 = vector.shape_cast %3 : vector<8x8x128xbf16> to vector<64x128xbf16>
    %5 = vector.extract_strided_slice %1 {offsets = [0, 0, 1, 0], sizes = [1, 8, 8, 128], strides = [1, 1, 1, 1]} : vector<1x10x10x128xbf16> to vector<1x8x8x128xbf16>
    %6 = vector.shape_cast %5 : vector<1x8x8x128xbf16> to vector<8x8x128xbf16>
    %7 = vector.shape_cast %6 : vector<8x8x128xbf16> to vector<64x128xbf16>
    %8 = vector.extract_strided_slice %1 {offsets = [0, 0, 2, 0], sizes = [1, 8, 8, 128], strides = [1, 1, 1, 1]} : vector<1x10x10x128xbf16> to vector<1x8x8x128xbf16>
    %9 = vector.shape_cast %8 : vector<1x8x8x128xbf16> to vector<8x8x128xbf16>
    %10 = vector.shape_cast %9 : vector<8x8x128xbf16> to vector<64x128xbf16>
    %11 = vector.extract_strided_slice %1 {offsets = [0, 1, 0, 0], sizes = [1, 8, 8, 128], strides = [1, 1, 1, 1]} : vector<1x10x10x128xbf16> to vector<1x8x8x128xbf16>
    %12 = vector.shape_cast %11 : vector<1x8x8x128xbf16> to vector<8x8x128xbf16>
    %13 = vector.shape_cast %12 : vector<8x8x128xbf16> to vector<64x128xbf16>
    %14 = vector.extract_strided_slice %1 {offsets = [0, 1, 1, 0], sizes = [1, 8, 8, 128], strides = [1, 1, 1, 1]} : vector<1x10x10x128xbf16> to vector<1x8x8x128xbf16>
    %15 = vector.shape_cast %14 : vector<1x8x8x128xbf16> to vector<8x8x128xbf16>
    %16 = vector.shape_cast %15 : vector<8x8x128xbf16> to vector<64x128xbf16>
    %17 = vector.extract_strided_slice %1 {offsets = [0, 1, 2, 0], sizes = [1, 8, 8, 128], strides = [1, 1, 1, 1]} : vector<1x10x10x128xbf16> to vector<1x8x8x128xbf16>
    %18 = vector.shape_cast %17 : vector<1x8x8x128xbf16> to vector<8x8x128xbf16>
    %19 = vector.shape_cast %18 : vector<8x8x128xbf16> to vector<64x128xbf16>
    %20 = vector.extract_strided_slice %1 {offsets = [0, 2, 0, 0], sizes = [1, 8, 8, 128], strides = [1, 1, 1, 1]} : vector<1x10x10x128xbf16> to vector<1x8x8x128xbf16>
    %21 = vector.shape_cast %20 : vector<1x8x8x128xbf16> to vector<8x8x128xbf16>
    %22 = vector.shape_cast %21 : vector<8x8x128xbf16> to vector<64x128xbf16>
    %23 = vector.extract_strided_slice %1 {offsets = [0, 2, 1, 0], sizes = [1, 8, 8, 128], strides = [1, 1, 1, 1]} : vector<1x10x10x128xbf16> to vector<1x8x8x128xbf16>
    %24 = vector.shape_cast %23 : vector<1x8x8x128xbf16> to vector<8x8x128xbf16>
    %25 = vector.shape_cast %24 : vector<8x8x128xbf16> to vector<64x128xbf16>
    %26 = vector.extract_strided_slice %1 {offsets = [0, 2, 2, 0], sizes = [1, 8, 8, 128], strides = [1, 1, 1, 1]} : vector<1x10x10x128xbf16> to vector<1x8x8x128xbf16>
    %27 = vector.shape_cast %26 : vector<1x8x8x128xbf16> to vector<8x8x128xbf16>
    %28 = vector.shape_cast %27 : vector<8x8x128xbf16> to vector<64x128xbf16>
    %29 = tpu.concatenate %4, %7, %10, %13, %16, %19, %22, %25, %28 in 1 : vector<64x128xbf16>, vector<64x128xbf16>, vector<64x128xbf16>, vector<64x128xbf16>, vector<64x128xbf16>, vector<64x128xbf16>, vector<64x128xbf16>, vector<64x128xbf16>, vector<64x128xbf16> -> vector<64x1152xbf16>
    %c1 = arith.constant 1 : index
    %c0_5 = arith.constant 0 : index
    %c0_6 = arith.constant 0 : index
    %c0_7 = arith.constant 0 : index
    %c0_8 = arith.constant 0 : index
    %c0_9 = arith.constant 0 : index
    %30 = vector.load %arg2[%c1, %c0_5, %c0_6, %c0_7, %c0_8, %c0_9] : memref<2x1x1x10x10x128xbf16, #tpu.memory_space<vmem>>, vector<1x1x1x10x10x128xbf16>
    %31 = vector.shape_cast %30 : vector<1x1x1x10x10x128xbf16> to vector<1x10x10x128xbf16>
    %32 = vector.extract_strided_slice %31 {offsets = [0, 0, 0, 0], sizes = [1, 8, 8, 128], strides = [1, 1, 1, 1]} : vector<1x10x10x128xbf16> to vector<1x8x8x128xbf16>
    %33 = vector.shape_cast %32 : vector<1x8x8x128xbf16> to vector<8x8x128xbf16>
    %34 = vector.shape_cast %33 : vector<8x8x128xbf16> to vector<64x128xbf16>
    %35 = vector.extract_strided_slice %31 {offsets = [0, 0, 1, 0], sizes = [1, 8, 8, 128], strides = [1, 1, 1, 1]} : vector<1x10x10x128xbf16> to vector<1x8x8x128xbf16>
    %36 = vector.shape_cast %35 : vector<1x8x8x128xbf16> to vector<8x8x128xbf16>
    %37 = vector.shape_cast %36 : vector<8x8x128xbf16> to vector<64x128xbf16>
    %38 = vector.extract_strided_slice %31 {offsets = [0, 0, 2, 0], sizes = [1, 8, 8, 128], strides = [1, 1, 1, 1]} : vector<1x10x10x128xbf16> to vector<1x8x8x128xbf16>
    %39 = vector.shape_cast %38 : vector<1x8x8x128xbf16> to vector<8x8x128xbf16>
    %40 = vector.shape_cast %39 : vector<8x8x128xbf16> to vector<64x128xbf16>
    %41 = vector.extract_strided_slice %31 {offsets = [0, 1, 0, 0], sizes = [1, 8, 8, 128], strides = [1, 1, 1, 1]} : vector<1x10x10x128xbf16> to vector<1x8x8x128xbf16>
    %42 = vector.shape_cast %41 : vector<1x8x8x128xbf16> to vector<8x8x128xbf16>
    %43 = vector.shape_cast %42 : vector<8x8x128xbf16> to vector<64x128xbf16>
    %44 = vector.extract_strided_slice %31 {offsets = [0, 1, 1, 0], sizes = [1, 8, 8, 128], strides = [1, 1, 1, 1]} : vector<1x10x10x128xbf16> to vector<1x8x8x128xbf16>
    %45 = vector.shape_cast %44 : vector<1x8x8x128xbf16> to vector<8x8x128xbf16>
    %46 = vector.shape_cast %45 : vector<8x8x128xbf16> to vector<64x128xbf16>
    %47 = vector.extract_strided_slice %31 {offsets = [0, 1, 2, 0], sizes = [1, 8, 8, 128], strides = [1, 1, 1, 1]} : vector<1x10x10x128xbf16> to vector<1x8x8x128xbf16>
    %48 = vector.shape_cast %47 : vector<1x8x8x128xbf16> to vector<8x8x128xbf16>
    %49 = vector.shape_cast %48 : vector<8x8x128xbf16> to vector<64x128xbf16>
    %50 = vector.extract_strided_slice %31 {offsets = [0, 2, 0, 0], sizes = [1, 8, 8, 128], strides = [1, 1, 1, 1]} : vector<1x10x10x128xbf16> to vector<1x8x8x128xbf16>
    %51 = vector.shape_cast %50 : vector<1x8x8x128xbf16> to vector<8x8x128xbf16>
    %52 = vector.shape_cast %51 : vector<8x8x128xbf16> to vector<64x128xbf16>
    %53 = vector.extract_strided_slice %31 {offsets = [0, 2, 1, 0], sizes = [1, 8, 8, 128], strides = [1, 1, 1, 1]} : vector<1x10x10x128xbf16> to vector<1x8x8x128xbf16>
    %54 = vector.shape_cast %53 : vector<1x8x8x128xbf16> to vector<8x8x128xbf16>
    %55 = vector.shape_cast %54 : vector<8x8x128xbf16> to vector<64x128xbf16>
    %56 = vector.extract_strided_slice %31 {offsets = [0, 2, 2, 0], sizes = [1, 8, 8, 128], strides = [1, 1, 1, 1]} : vector<1x10x10x128xbf16> to vector<1x8x8x128xbf16>
    %57 = vector.shape_cast %56 : vector<1x8x8x128xbf16> to vector<8x8x128xbf16>
    %58 = vector.shape_cast %57 : vector<8x8x128xbf16> to vector<64x128xbf16>
    %59 = tpu.concatenate %34, %37, %40, %43, %46, %49, %52, %55, %58 in 1 : vector<64x128xbf16>, vector<64x128xbf16>, vector<64x128xbf16>, vector<64x128xbf16>, vector<64x128xbf16>, vector<64x128xbf16>, vector<64x128xbf16>, vector<64x128xbf16>, vector<64x128xbf16> -> vector<64x1152xbf16>
    %60 = tpu.concatenate %29, %59 in 0 : vector<64x1152xbf16>, vector<64x1152xbf16> -> vector<128x1152xbf16>
    %c0_10 = arith.constant 0 : index
    %c0_11 = arith.constant 0 : index
    %61 = vector.load %arg3[%c0_10, %c0_11] : memref<1152x128xbf16, #tpu.memory_space<vmem>>, vector<1152x128xbf16>
    %cst = arith.constant dense<0.000000e+00> : vector<128x128xf32>
    %62 = tpu.matmul %60, %61, %cst {dimension_numbers = #tpu.dot_dimension_numbers<[1], [0], [0], [1], [0, 0, 1, 1], [], []>} : vector<128x1152xbf16>, vector<1152x128xbf16>, vector<128x128xf32> -> vector<128x128xf32>
    %c0_12 = arith.constant 0 : index
    %c0_13 = arith.constant 0 : index
    %63 = vector.load %arg4[%c0_12, %c0_13] : memref<1x128xf32, #tpu.memory_space<vmem>>, vector<1x128xf32>
    %64 = vector.broadcast %63 : vector<1x128xf32> to vector<128x128xf32>
    %65 = arith.addf %62, %64 : vector<128x128xf32>
    %cst_14 = arith.constant 0.000000e+00 : f32
    %66 = vector.broadcast %cst_14 : f32 to vector<128x128xf32>
    %67 = arith.maximumf %65, %66 : vector<128x128xf32>
    %68 = vector.shape_cast %67 : vector<128x128xf32> to vector<2x64x128xf32>
    %69 = arith.truncf %68 : vector<2x64x128xf32> to vector<2x64x128xbf16>
    %c0_15 = arith.constant 0 : index
    %c0_16 = arith.constant 0 : index
    %c0_17 = arith.constant 0 : index
    %70 = vector.load %arg5[%c0_15, %c0_16, %c0_17] : memref<2x64x128xbf16, #tpu.memory_space<vmem>>, vector<2x64x128xbf16>
    tpu.vector_store %arg5[%c0_15, %c0_16, %c0_17], %69 {strides = array<i32>} : memref<2x64x128xbf16, #tpu.memory_space<vmem>>, vector<2x64x128xbf16>,
    return
  }
  func.func @transform_0(%arg0: i32, %arg1: i32) -> (i32, i32, i32, i32, i32, i32) {
    %c0_i32 = arith.constant 0 : i32
    %c0_i32_0 = arith.constant 0 : i32
    %c0_i32_1 = arith.constant 0 : i32
    %c0_i32_2 = arith.constant 0 : i32
    %c0_i32_3 = arith.constant 0 : i32
    return %arg0, %arg1, %c0_i32, %c0_i32_0, %c0_i32_1, %c0_i32_2 : i32, i32, i32, i32, i32, i32
  }
  func.func @transform_1(%arg0: i32, %arg1: i32) -> (i32, i32) {
    %c0_i32 = arith.constant 0 : i32
    %c0_i32_0 = arith.constant 0 : i32
    %c0_i32_1 = arith.constant 0 : i32
    return %c0_i32, %c0_i32_0 : i32, i32
  }
  func.func @transform_2(%arg0: i32, %arg1: i32) -> (i32, i32) {
    %c0_i32 = arith.constant 0 : i32
    %c0_i32_0 = arith.constant 0 : i32
    %c0_i32_1 = arith.constant 0 : i32
    return %c0_i32, %c0_i32_0 : i32, i32
  }
  func.func @transform_3(%arg0: i32, %arg1: i32) -> (i32, i32, i32) {
    %c0_i32 = arith.constant 0 : i32
    %c0_i32_0 = arith.constant 0 : i32
    return %arg0, %arg1, %c0_i32 : i32, i32, i32
  }
}

module attributes {stable_mosaic.version = 11 : i64} {
  func.func @_bilinear_kernel(%arg0: i32, %arg1: memref<40x64xbf16, #tpu.memory_space<vmem>>, %arg2: memref<64x2048xbf16, #tpu.memory_space<vmem>>, %arg3: memref<40x2048xf32, #tpu.memory_space<vmem>>) attributes {dimension_semantics = [#tpu.dimension_semantics<arbitrary>], iteration_bounds = array<i64: 1>, scalar_prefetch = 0 : i64, scratch_operands = 0 : i64, tpu.core_type = #tpu.core_type<tc>, window_params = [{pipeline_mode = #tpu.pipeline_mode<synchronous>, transform_indices = @transform_0, window_bounds = array<i64: 40, 64>}, {pipeline_mode = #tpu.pipeline_mode<synchronous>, transform_indices = @transform_1, window_bounds = array<i64: 64, 2048>}, {pipeline_mode = #tpu.pipeline_mode<synchronous>, transform_indices = @transform_2, window_bounds = array<i64: 40, 2048>}]} {
    %c0 = arith.constant 0 : index
    %c0_0 = arith.constant 0 : index
    %0 = vector.load %arg1[%c0, %c0_0] : memref<40x64xbf16, #tpu.memory_space<vmem>>, vector<40x64xbf16>
    %c0_1 = arith.constant 0 : index
    %c0_2 = arith.constant 0 : index
    %1 = vector.load %arg2[%c0_1, %c0_2] : memref<64x2048xbf16, #tpu.memory_space<vmem>>, vector<64x2048xbf16>
    %cst = arith.constant dense<0.000000e+00> : vector<40x2048xf32>
    %2 = tpu.matmul %0, %1, %cst {dimension_numbers = #tpu.dot_dimension_numbers<[1], [0], [0], [1], [0, 0, 1, 1], [], []>} : vector<40x64xbf16>, vector<64x2048xbf16>, vector<40x2048xf32> -> vector<40x2048xf32>
    %c0_3 = arith.constant 0 : index
    %c0_4 = arith.constant 0 : index
    %3 = vector.load %arg3[%c0_3, %c0_4] : memref<40x2048xf32, #tpu.memory_space<vmem>>, vector<40x2048xf32>
    tpu.vector_store %arg3[%c0_3, %c0_4], %2 {strides = array<i32>} : memref<40x2048xf32, #tpu.memory_space<vmem>>, vector<40x2048xf32>,
    return
  }
  func.func @transform_0(%arg0: i32) -> (i32, i32) {
    %c0_i32 = arith.constant 0 : i32
    %c0_i32_0 = arith.constant 0 : i32
    %c0_i32_1 = arith.constant 0 : i32
    return %c0_i32, %c0_i32_0 : i32, i32
  }
  func.func @transform_1(%arg0: i32) -> (i32, i32) {
    %c0_i32 = arith.constant 0 : i32
    %c0_i32_0 = arith.constant 0 : i32
    %c0_i32_1 = arith.constant 0 : i32
    return %c0_i32, %c0_i32_0 : i32, i32
  }
  func.func @transform_2(%arg0: i32) -> (i32, i32) {
    %c0_i32 = arith.constant 0 : i32
    %c0_i32_0 = arith.constant 0 : i32
    %c0_i32_1 = arith.constant 0 : i32
    return %c0_i32, %c0_i32_0 : i32, i32
  }
}

</mosaic_0001>

<llo_original>
// kernel: ddn_fcos3d_forward.9
$region0: #{ddn_fcos3d_forward.9}
  #allocation0 [shape = 'u32[]', space=smem, size = 0x4, offset = 0x4, fixed_abs, tag = 'smem constant byte address 0x4 - core index']
  #allocation1 [shape = 'u32[144,128]{1,0:T(1,128)}', space=vmem, size = 0x12000, scoped, tag = 'internal scratch']
  %s0 = inlined_call_operand.vmem [shape: f32[2,2,4,9,17,3], index: 0, kind: input, shape index: {}]
  %s1 = inlined_call_operand.vmem [shape: bf16[9,3,128], index: 1, kind: input, shape index: {}]
  %s2 = inlined_call_operand.vmem [shape: f32[1,128], index: 2, kind: input, shape index: {}]
  %s3 = inlined_call_operand.vmem [shape: f32[1,3], index: 3, kind: input, shape index: {}]
  %s4 = inlined_call_operand.vmem [shape: f32[1,3], index: 4, kind: input, shape index: {}]
  %s5 = inlined_call_operand.vmem [shape: bf16[2,256,128], index: 5, kind: output, shape index: {}]
  %s6 = sld [smem:[#allocation0]]
  $region53: #{ddn_fcos3d_forward.9} parent=0
    _
  %s8 = ssub.s32 1, %s6
  %s9 = scalar_select 0, %s8, %s6
  loop: start=0, step=1, limit=6
  $region2: #{ddn_fcos3d_forward.9} parent=0 // loop_pre_header
    _
  $region3: #{ddn_fcos3d_forward.9} parent=0 // loop_header
    %s11 = sphi 0, %s15
    %p12 = scmp.ge.s32.totalorder %s11, 6
    %s18 = sphi 0, %s30
    %s19 = sphi 0, %s26
    %s20 = sphi 0, %s18
    %s21 = sphi 0, %s19
    %s22 = sphi 0, %s20
    %s23 = sphi 0, %s21
    %s35 = sphi 0, %s37
    %s38 = sphi 0, %s35
    %s39 = sphi 0, %s38
    %s55 = sphi 0, %s39
    %s59 = sphi 0, %s59
    %s61 = sphi 0, %s59
    %s62 = sphi 0, %s61
    %s76 = sphi 0, %s62
    %s80 = sphi 0, %s80
    %s82 = sphi 0, %s80
    %s83 = sphi 0, %s82
    %s97 = sphi 0, %s83
    %s101 = sphi 0, %s101
    %s103 = sphi 0, %s101
    %s104 = sphi 0, %s103
    %s118 = sphi 0, %s104
    %s122 = sphi 0, %s122
    %s124 = sphi 0, %s122
    %s125 = sphi 0, %s124
    %s139 = sphi 0, %s125
    %s147 = sphi 0, %s149
    %s150 = sphi 0, %s147
    %s151 = sphi 0, %s150
    %s167 = sphi 0, %s151
  $region4: #{ddn_fcos3d_forward.9} parent=0 // loop_header_branch
    %14 = sbr.rel (%p12) target = $region8
  $region5: #{ddn_fcos3d_forward.9} parent=0 // loop_body
    %s16 = ssub.s32 %s11, 1
    %s17 = ssub.s32 %s11, 2
    %s24 = sadd.s32 1, %s19
    %p25 = scmp.ge.s32.totalorder %s24, 2
    %s26 = scalar_select %p25, 0, %s24
    %s27 = sadd.s32 1, %s18
    %s28 = scalar_select %p25, %s27, %s18
    %p29 = scmp.ge.s32.totalorder %s28, 2
    %s30 = scalar_select %p29, 0, %s28
    %s31 = ssub.s32 %s18, %s30
    %s32 = ssub.s32 %s19, %s26
    %s33 = sor.u32 %s31, %s32
    %p34 = scmp.eq.s32.totalorder %s33, 0
    %s36 = sadd.s32 %s35, 1
    %s37 = scalar_select %p34, %s35, %s36
    %p40 = pneg %p34
    %p41 = scmp.eq.s32.totalorder %s11, 3
    %p42 = por %p40, %p41
    %p43 = scmp.ne.s32.totalorder %s35, %s38
    %p44 = scmp.eq.s32.totalorder %s11, 0
    %p45 = por %p43, %p44
    %p46 = scmp.ne.s32.totalorder %s35, %s38
    %p47 = scmp.eq.s32.totalorder %s16, 3
    %p48 = por %p46, %p47
    %p49 = scmp.ne.s32.totalorder %s38, %s39
    %p50 = scmp.eq.s32.totalorder %s16, 0
    %p51 = por %p49, %p50
    %p52 = scmp.ne.s32.totalorder %s38, %s39
    %p53 = scmp.eq.s32.totalorder %s17, 3
    %p54 = por %p52, %p53
    %p56 = scmp.ne.s32.totalorder %s39, %s55
    %p57 = scmp.eq.s32.totalorder %s17, 0
    %p58 = por %p56, %p57
    %s60 = sadd.s32 %s59, 1
    %p63 = scmp.eq.s32.totalorder %s11, 3
    %p64 = scmp.ne.s32.totalorder %s59, %s61
    %p65 = scmp.eq.s32.totalorder %s11, 0
    %p66 = por %p64, %p65
    %p67 = scmp.ne.s32.totalorder %s59, %s61
    %p68 = scmp.eq.s32.totalorder %s16, 3
    %p69 = por %p67, %p68
    %p70 = scmp.ne.s32.totalorder %s61, %s62
    %p71 = scmp.eq.s32.totalorder %s16, 0
    %p72 = por %p70, %p71
    %p73 = scmp.ne.s32.totalorder %s61, %s62
    %p74 = scmp.eq.s32.totalorder %s17, 3
    %p75 = por %p73, %p74
    %p77 = scmp.ne.s32.totalorder %s62, %s76
    %p78 = scmp.eq.s32.totalorder %s17, 0
    %p79 = por %p77, %p78
    %s81 = sadd.s32 %s80, 1
    %p84 = scmp.eq.s32.totalorder %s11, 3
    %p85 = scmp.ne.s32.totalorder %s80, %s82
    %p86 = scmp.eq.s32.totalorder %s11, 0
    %p87 = por %p85, %p86
    %p88 = scmp.ne.s32.totalorder %s80, %s82
    %p89 = scmp.eq.s32.totalorder %s16, 3
    %p90 = por %p88, %p89
    %p91 = scmp.ne.s32.totalorder %s82, %s83
    %p92 = scmp.eq.s32.totalorder %s16, 0
    %p93 = por %p91, %p92
    %p94 = scmp.ne.s32.totalorder %s82, %s83
    %p95 = scmp.eq.s32.totalorder %s17, 3
    %p96 = por %p94, %p95
    %p98 = scmp.ne.s32.totalorder %s83, %s97
    %p99 = scmp.eq.s32.totalorder %s17, 0
    %p100 = por %p98, %p99
    %s102 = sadd.s32 %s101, 1
    %p105 = scmp.eq.s32.totalorder %s11, 3
    %p106 = scmp.ne.s32.totalorder %s101, %s103
    %p107 = scmp.eq.s32.totalorder %s11, 0
    %p108 = por %p106, %p107
    %p109 = scmp.ne.s32.totalorder %s101, %s103
    %p110 = scmp.eq.s32.totalorder %s16, 3
    %p111 = por %p109, %p110
    %p112 = scmp.ne.s32.totalorder %s103, %s104
    %p113 = scmp.eq.s32.totalorder %s16, 0
    %p114 = por %p112, %p113
    %p115 = scmp.ne.s32.totalorder %s103, %s104
    %p116 = scmp.eq.s32.totalorder %s17, 3
    %p117 = por %p115, %p116
    %p119 = scmp.ne.s32.totalorder %s104, %s118
    %p120 = scmp.eq.s32.totalorder %s17, 0
    %p121 = por %p119, %p120
    %s123 = sadd.s32 %s122, 1
    %p126 = scmp.eq.s32.totalorder %s11, 3
    %p127 = scmp.ne.s32.totalorder %s122, %s124
    %p128 = scmp.eq.s32.totalorder %s11, 0
    %p129 = por %p127, %p128
    %p130 = scmp.ne.s32.totalorder %s122, %s124
    %p131 = scmp.eq.s32.totalorder %s16, 3
    %p132 = por %p130, %p131
    %p133 = scmp.ne.s32.totalorder %s124, %s125
    %p134 = scmp.eq.s32.totalorder %s16, 0
    %p135 = por %p133, %p134
    %p136 = scmp.ne.s32.totalorder %s124, %s125
    %p137 = scmp.eq.s32.totalorder %s17, 3
    %p138 = por %p136, %p137
    %p140 = scmp.ne.s32.totalorder %s125, %s139
    %p141 = scmp.eq.s32.totalorder %s17, 0
    %p142 = por %p140, %p141
    %s143 = ssub.s32 %s18, %s30
    %s144 = ssub.s32 %s19, %s26
    %s145 = sor.u32 %s143, %s144
    %p146 = scmp.eq.s32.totalorder %s145, 0
    %s148 = sadd.s32 %s147, 1
    %s149 = scalar_select %p146, %s147, %s148
    %p152 = pneg %p146
    %p153 = scmp.eq.s32.totalorder %s11, 3
    %p154 = por %p152, %p153
    %p155 = scmp.ne.s32.totalorder %s147, %s150
    %p156 = scmp.eq.s32.totalorder %s11, 0
    %p157 = por %p155, %p156
    %p158 = scmp.ne.s32.totalorder %s147, %s150
    %p159 = scmp.eq.s32.totalorder %s16, 3
    %p160 = por %p158, %p159
    %p161 = scmp.ne.s32.totalorder %s150, %s151
    %p162 = scmp.eq.s32.totalorder %s16, 0
    %p163 = por %p161, %p162
    %p164 = scmp.ne.s32.totalorder %s150, %s151
    %p165 = scmp.eq.s32.totalorder %s17, 3
    %p166 = por %p164, %p165
    %p168 = scmp.ne.s32.totalorder %s151, %s167
    %p169 = scmp.eq.s32.totalorder %s17, 0
    %p170 = por %p168, %p169
    %p171 = scmp.le.s32.totalorder 1, %s11
    %p172 = scmp.lt.s32.totalorder %s11, 5
    %p173 = pnand %p171, %p172
    %p174 = pneg %p173
    // Predicated region
    $region9: #{ddn_fcos3d_forward.9} parent=5 // pred_check
      _
    $region10: #{ddn_fcos3d_forward.9} parent=5 // pred_check_branch
      %176 = sbr.rel (%p173) target = $region12
    $region11: #{ddn_fcos3d_forward.9} parent=5 // pred_region
      %s177 = ssub.s32 %s11, 1
      // Predicated region
      $region13: #{ddn_fcos3d_forward.9} parent=11 // pred_check
        %p178 = pneg %p72
      $region14: #{ddn_fcos3d_forward.9} parent=11 // pred_check_branch
        %180 = sbr.rel (%p178) target = $region16
      $region15: #{ddn_fcos3d_forward.9} parent=11 // pred_region
        _
      $region16: #{ddn_fcos3d_forward.9} parent=11 // pred_fallthru
        _
      // Predicated region
      $region17: #{ddn_fcos3d_forward.9} parent=11 // pred_check
        %p181 = pneg %p93
      $region18: #{ddn_fcos3d_forward.9} parent=11 // pred_check_branch
        %183 = sbr.rel (%p181) target = $region20
      $region19: #{ddn_fcos3d_forward.9} parent=11 // pred_region
        _
      $region20: #{ddn_fcos3d_forward.9} parent=11 // pred_fallthru
        _
      // Predicated region
      $region21: #{ddn_fcos3d_forward.9} parent=11 // pred_check
        %p184 = pneg %p114
      $region22: #{ddn_fcos3d_forward.9} parent=11 // pred_check_branch
        %186 = sbr.rel (%p184) target = $region24
      $region23: #{ddn_fcos3d_forward.9} parent=11 // pred_region
        _
      $region24: #{ddn_fcos3d_forward.9} parent=11 // pred_fallthru
        _
      // Predicated region
      $region25: #{ddn_fcos3d_forward.9} parent=11 // pred_check
        %p187 = pneg %p135
      $region26: #{ddn_fcos3d_forward.9} parent=11 // pred_check_branch
        %189 = sbr.rel (%p187) target = $region28
      $region27: #{ddn_fcos3d_forward.9} parent=11 // pred_region
        _
      $region28: #{ddn_fcos3d_forward.9} parent=11 // pred_fallthru
        _
    $region12: #{ddn_fcos3d_forward.9} parent=5 // pred_fallthru
      _
    %p190 = scmp.lt.s32.totalorder %s11, 4
    // Predicated region
    $region29: #{ddn_fcos3d_forward.9} parent=5 // pred_check
      %p191 = pneg %p190
    $region30: #{ddn_fcos3d_forward.9} parent=5 // pred_check_branch
      %193 = sbr.rel (%p191) target = $region32
    $region31: #{ddn_fcos3d_forward.9} parent=5 // pred_region
      // Predicated region
      $region33: #{ddn_fcos3d_forward.9} parent=31 // pred_check
        %p194 = pneg %p45
      $region34: #{ddn_fcos3d_forward.9} parent=31 // pred_check_branch
        %196 = sbr.rel (%p194) target = $region36
      $region35: #{ddn_fcos3d_forward.9} parent=31 // pred_region
        %p197 = scmp.lt.s32.totalorder %s18, 1
        %s198 = scalar_select %p197, %s18, 1
        %p199 = scmp.lt.s32.totalorder %s19, 1
        %s200 = scalar_select %p199, %s19, 1
        %s201 = smul.addr %s200, 108
        %s202 = smul.addr %s198, 216
        %s203 = sadd.s32 %s201, %s202
        %s204 = smul.addr %s203, 8
        %s205 = scalar_lea.vmem %s0, %s204
      $region36: #{ddn_fcos3d_forward.9} parent=31 // pred_fallthru
        _
    $region32: #{ddn_fcos3d_forward.9} parent=5 // pred_fallthru
      _
    %p206 = scmp.le.s32.totalorder 1, %s11
    %p207 = scmp.lt.s32.totalorder %s11, 5
    %p208 = pnand %p206, %p207
    %p209 = pneg %p208
    // Predicated region
    $region37: #{ddn_fcos3d_forward.9} parent=5 // pred_check
      _
    $region38: #{ddn_fcos3d_forward.9} parent=5 // pred_check_branch
      %211 = sbr.rel (%p208) target = $region40
    $region39: #{ddn_fcos3d_forward.9} parent=5 // pred_region
      %s212 = ssub.s32 %s11, 1
      %p213 = scmp.lt.s32.totalorder %s20, 1
      %s214 = scalar_select %p213, %s20, 1
      %p215 = scmp.lt.s32.totalorder %s21, 1
      %s216 = scalar_select %p215, %s21, 1
      %s217 = smul.addr %s216, 108
      %s218 = smul.addr %s214, 216
      %s219 = sadd.s32 %s217, %s218
      %s220 = smul.addr %s219, 8
      %s221 = scalar_lea.vmem %s0, %s220
      %p222 = pneg %p51
      %p223 = pneg %p48
      %p224 = pneg %p72
      %p225 = pneg %p69
      %p226 = pneg %p93
      %p227 = pneg %p90
      %p228 = pneg %p114
      %p229 = pneg %p111
      %p230 = pneg %p135
      %p231 = pneg %p132
      %p232 = pneg %p163
      %p233 = pneg %p160
      %s234 = smul.u32 16, %s21
      %p235 = scmp.lt.s32.totalorder %s20, 1
      %s236 = scalar_select %p235, %s20, 1
      %p237 = scmp.lt.s32.totalorder %s234, 31
      %s238 = scalar_select %p237, %s234, 31
      %s239 = smul.addr %s236, 32
      %s240 = sadd.s32 %s238, %s239
      %s241 = smul.addr %s240, 4
      %s242 = scalar_lea.vmem %s5, %s241
      %p243 = scmp.lt.s32.totalorder %s20, 1
      %s244 = scalar_select %p243, %s20, 1
      %p245 = scmp.lt.s32.totalorder %s21, 1
      %s246 = scalar_select %p245, %s21, 1
      %s247 = smul.addr %s246, 108
      %s248 = smul.addr %s244, 216
      %s249 = sadd.s32 %s247, %s248
      %s250 = smul.addr %s249, 8
      %s251 = scalar_lea.vmem %s0, %s250
      %s252 = smul.u32 16, %s21
      %p253 = scmp.lt.s32.totalorder %s20, 1
      %s254 = scalar_select %p253, %s20, 1
      %p255 = scmp.lt.s32.totalorder %s252, 31
      %s256 = scalar_select %p255, %s252, 31
      %s257 = smul.addr %s254, 32
      %s258 = sadd.s32 %s256, %s257
      %s259 = smul.addr %s258, 4
      %s260 = scalar_lea.vmem %s5, %s259
      %s261 = smul.u32 16, %s21
      %v263 = vld [vmem:[%s251] sm:$0xff]
      %v264 = vld [vmem:[%s251 + $0x8] sm:$0xff]
      %v265 = vld [vmem:[%s251 + $0x10] sm:$0x1]
      %v266 = vld [vmem:[%s251 + $0x18] sm:$0xff]
      %v267 = vld [vmem:[%s251 + $0x20] sm:$0xff]
      %v268 = vld [vmem:[%s251 + $0x28] sm:$0x1]
      %v269 = vld [vmem:[%s251 + $0x30] sm:$0xff]
      %v270 = vld [vmem:[%s251 + $0x38] sm:$0xff]
      %v271 = vld [vmem:[%s251 + $0x40] sm:$0x1]
      %v272 = vld [vmem:[%s251 + $0x48] sm:$0xff]
      %v273 = vld [vmem:[%s251 + $0x50] sm:$0xff]
      %v274 = vld [vmem:[%s251 + $0x58] sm:$0x1]
      %v275 = vld [vmem:[%s251 + $0x60] sm:$0xff]
      %v276 = vld [vmem:[%s251 + $0x68] sm:$0xff]
      %v277 = vld [vmem:[%s251 + $0x70] sm:$0x1]
      %v278 = vld [vmem:[%s251 + $0x78] sm:$0xff]
      %v279 = vld [vmem:[%s251 + $0x80] sm:$0xff]
      %v280 = vld [vmem:[%s251 + $0x88] sm:$0x1]
      %v281 = vld [vmem:[%s251 + $0x90] sm:$0xff]
      %v282 = vld [vmem:[%s251 + $0x98] sm:$0xff]
      %v283 = vld [vmem:[%s251 + $0xa0] sm:$0x1]
      %v284 = vld [vmem:[%s251 + $0xa8] sm:$0xff]
      %v285 = vld [vmem:[%s251 + $0xb0] sm:$0xff]
      %v286 = vld [vmem:[%s251 + $0xb8] sm:$0x1]
      %v287 = vld [vmem:[%s251 + $0xc0] sm:$0xff]
      %v288 = vld [vmem:[%s251 + $0xc8] sm:$0xff]
      %v289 = vld [vmem:[%s251 + $0xd0] sm:$0x1]
      %v290 = vld [vmem:[%s251 + $0xd8] sm:$0xff]
      %v291 = vld [vmem:[%s251 + $0xe0] sm:$0xff]
      %v292 = vld [vmem:[%s251 + $0xf0] sm:$0xff]
      %v293 = vld [vmem:[%s251 + $0xf8] sm:$0xff]
      %v294 = vld [vmem:[%s251 + $0x108] sm:$0xff]
      %v295 = vld [vmem:[%s251 + $0x110] sm:$0xff]
      %v296 = vld [vmem:[%s251 + $0x120] sm:$0xff]
      %v297 = vld [vmem:[%s251 + $0x128] sm:$0xff]
      %v298 = vld [vmem:[%s251 + $0x138] sm:$0xff]
      %v299 = vld [vmem:[%s251 + $0x140] sm:$0xff]
      %v300 = vld [vmem:[%s251 + $0x150] sm:$0xff]
      %v301 = vld [vmem:[%s251 + $0x158] sm:$0xff]
      %v302 = vld [vmem:[%s251 + $0x168] sm:$0xff]
      %v303 = vld [vmem:[%s251 + $0x170] sm:$0xff]
      %v304 = vld [vmem:[%s251 + $0x180] sm:$0xff]
      %v305 = vld [vmem:[%s251 + $0x188] sm:$0xff]
      %v306 = vld [vmem:[%s251 + $0x198] sm:$0xff]
      %v307 = vld [vmem:[%s251 + $0x1a0] sm:$0xff]
      %v308 = vld [vmem:[%s251 + $0x1b0] sm:$0xff]
      %v309 = vld [vmem:[%s251 + $0x1b8] sm:$0xff]
      %v310 = vld [vmem:[%s251 + $0x1c0] sm:$0x1]
      %v311 = vld [vmem:[%s251 + $0x1c8] sm:$0xff]
      %v312 = vld [vmem:[%s251 + $0x1d0] sm:$0xff]
      %v313 = vld [vmem:[%s251 + $0x1d8] sm:$0x1]
      %v314 = vld [vmem:[%s251 + $0x1e0] sm:$0xff]
      %v315 = vld [vmem:[%s251 + $0x1e8] sm:$0xff]
      %v316 = vld [vmem:[%s251 + $0x1f0] sm:$0x1]
      %v317 = vld [vmem:[%s251 + $0x1f8] sm:$0xff]
      %v318 = vld [vmem:[%s251 + $0x200] sm:$0xff]
      %v319 = vld [vmem:[%s251 + $0x208] sm:$0x1]
      %v320 = vld [vmem:[%s251 + $0x210] sm:$0xff]
      %v321 = vld [vmem:[%s251 + $0x218] sm:$0xff]
      %v322 = vld [vmem:[%s251 + $0x220] sm:$0x1]
      %v323 = vld [vmem:[%s251 + $0x228] sm:$0xff]
      %v324 = vld [vmem:[%s251 + $0x230] sm:$0xff]
      %v325 = vld [vmem:[%s251 + $0x238] sm:$0x1]
      %v326 = vld [vmem:[%s251 + $0x240] sm:$0xff]
      %v327 = vld [vmem:[%s251 + $0x248] sm:$0xff]
      %v328 = vld [vmem:[%s251 + $0x250] sm:$0x1]
      %v329 = vld [vmem:[%s251 + $0x258] sm:$0xff]
      %v330 = vld [vmem:[%s251 + $0x260] sm:$0xff]
      %v331 = vld [vmem:[%s251 + $0x268] sm:$0x1]
      %v332 = vld [vmem:[%s251 + $0x288] sm:$0xff]
      %v333 = vld [vmem:[%s251 + $0x290] sm:$0xff]
      %v334 = vld [vmem:[%s251 + $0x2a0] sm:$0xff]
      %v335 = vld [vmem:[%s251 + $0x2a8] sm:$0xff]
      %v336 = vld [vmem:[%s251 + $0x2b8] sm:$0xff]
      %v337 = vld [vmem:[%s251 + $0x2c0] sm:$0xff]
      %v338 = vld [vmem:[%s251 + $0x2d0] sm:$0xff]
      %v339 = vld [vmem:[%s251 + $0x2d8] sm:$0xff]
      %v340 = vld [vmem:[%s251 + $0x2e8] sm:$0xff]
      %v341 = vld [vmem:[%s251 + $0x2f0] sm:$0xff]
      %v342 = vld [vmem:[%s251 + $0x300] sm:$0xff]
      %v343 = vld [vmem:[%s251 + $0x308] sm:$0xff]
      %v344 = vld [vmem:[%s251 + $0x318] sm:$0xff]
      %v345 = vld [vmem:[%s251 + $0x320] sm:$0xff]
      %v346 = vld [vmem:[%s251 + $0x330] sm:$0xff]
      %v347 = vld [vmem:[%s251 + $0x338] sm:$0xff]
      %vm348 = vcmp.eq.f32.partialorder %v263, 0.0
      %vm349 = vcmp.eq.f32.partialorder %v264, 0.0
      %vm350 = vcmp.eq.f32.partialorder %v265, 0.0
      %vm351 = vcmp.eq.f32.partialorder %v266, 0.0
      %vm352 = vcmp.eq.f32.partialorder %v267, 0.0
      %vm353 = vcmp.eq.f32.partialorder %v268, 0.0
      %vm354 = vcmp.eq.f32.partialorder %v269, 0.0
      %vm355 = vcmp.eq.f32.partialorder %v270, 0.0
      %vm356 = vcmp.eq.f32.partialorder %v271, 0.0
      %vm357 = vcmp.eq.f32.partialorder %v272, 0.0
      %vm358 = vcmp.eq.f32.partialorder %v273, 0.0
      %vm359 = vcmp.eq.f32.partialorder %v274, 0.0
      %vm360 = vcmp.eq.f32.partialorder %v275, 0.0
      %vm361 = vcmp.eq.f32.partialorder %v276, 0.0
      %vm362 = vcmp.eq.f32.partialorder %v277, 0.0
      %vm363 = vcmp.eq.f32.partialorder %v278, 0.0
      %vm364 = vcmp.eq.f32.partialorder %v279, 0.0
      %vm365 = vcmp.eq.f32.partialorder %v280, 0.0
      %vm366 = vcmp.eq.f32.partialorder %v281, 0.0
      %vm367 = vcmp.eq.f32.partialorder %v282, 0.0
      %vm368 = vcmp.eq.f32.partialorder %v283, 0.0
      %vm369 = vcmp.eq.f32.partialorder %v284, 0.0
      %vm370 = vcmp.eq.f32.partialorder %v285, 0.0
      %vm371 = vcmp.eq.f32.partialorder %v286, 0.0
      %vm372 = vcmp.eq.f32.partialorder %v287, 0.0
      %vm373 = vcmp.eq.f32.partialorder %v288, 0.0
      %vm374 = vcmp.eq.f32.partialorder %v289, 0.0
      %vm375 = vcmp.eq.f32.partialorder %v290, 0.0
      %vm376 = vcmp.eq.f32.partialorder %v291, 0.0
      %vm377 = vcmp.eq.f32.partialorder %v292, 0.0
      %vm378 = vcmp.eq.f32.partialorder %v293, 0.0
      %vm379 = vcmp.eq.f32.partialorder %v294, 0.0
      %vm380 = vcmp.eq.f32.partialorder %v295, 0.0
      %vm381 = vcmp.eq.f32.partialorder %v296, 0.0
      %vm382 = vcmp.eq.f32.partialorder %v297, 0.0
      %vm383 = vcmp.eq.f32.partialorder %v298, 0.0
      %vm384 = vcmp.eq.f32.partialorder %v299, 0.0
      %vm385 = vcmp.eq.f32.partialorder %v300, 0.0
      %vm386 = vcmp.eq.f32.partialorder %v301, 0.0
      %vm387 = vcmp.eq.f32.partialorder %v302, 0.0
      %vm388 = vcmp.eq.f32.partialorder %v303, 0.0
      %vm389 = vcmp.eq.f32.partialorder %v304, 0.0
      %vm390 = vcmp.eq.f32.partialorder %v305, 0.0
      %vm391 = vcmp.eq.f32.partialorder %v306, 0.0
      %vm392 = vcmp.eq.f32.partialorder %v307, 0.0
      %vm393 = vcmp.eq.f32.partialorder %v308, 0.0
      %vm394 = vcmp.eq.f32.partialorder %v309, 0.0
      %vm395 = vcmp.eq.f32.partialorder %v310, 0.0
      %vm396 = vcmp.eq.f32.partialorder %v311, 0.0
      %vm397 = vcmp.eq.f32.partialorder %v312, 0.0
      %vm398 = vcmp.eq.f32.partialorder %v313, 0.0
      %vm399 = vcmp.eq.f32.partialorder %v314, 0.0
      %vm400 = vcmp.eq.f32.partialorder %v315, 0.0
      %vm401 = vcmp.eq.f32.partialorder %v316, 0.0
      %vm402 = vcmp.eq.f32.partialorder %v317, 0.0
      %vm403 = vcmp.eq.f32.partialorder %v318, 0.0
      %vm404 = vcmp.eq.f32.partialorder %v319, 0.0
      %vm405 = vcmp.eq.f32.partialorder %v320, 0.0
      %vm406 = vcmp.eq.f32.partialorder %v321, 0.0
      %vm407 = vcmp.eq.f32.partialorder %v322, 0.0
      %vm408 = vcmp.eq.f32.partialorder %v323, 0.0
      %vm409 = vcmp.eq.f32.partialorder %v324, 0.0
      %vm410 = vcmp.eq.f32.partialorder %v325, 0.0
      %vm411 = vcmp.eq.f32.partialorder %v326, 0.0
      %vm412 = vcmp.eq.f32.partialorder %v327, 0.0
      %vm413 = vcmp.eq.f32.partialorder %v328, 0.0
      %vm414 = vcmp.eq.f32.partialorder %v329, 0.0
      %vm415 = vcmp.eq.f32.partialorder %v330, 0.0
      %vm416 = vcmp.eq.f32.partialorder %v331, 0.0
      %vm417 = vcmp.eq.f32.partialorder %v332, 0.0
      %vm418 = vcmp.eq.f32.partialorder %v333, 0.0
      %vm419 = vcmp.eq.f32.partialorder %v334, 0.0
      %vm420 = vcmp.eq.f32.partialorder %v335, 0.0
      %vm421 = vcmp.eq.f32.partialorder %v336, 0.0
      %vm422 = vcmp.eq.f32.partialorder %v337, 0.0
      %vm423 = vcmp.eq.f32.partialorder %v338, 0.0
      %vm424 = vcmp.eq.f32.partialorder %v339, 0.0
      %vm425 = vcmp.eq.f32.partialorder %v340, 0.0
      %vm426 = vcmp.eq.f32.partialorder %v341, 0.0
      %vm427 = vcmp.eq.f32.partialorder %v342, 0.0
      %vm428 = vcmp.eq.f32.partialorder %v343, 0.0
      %vm429 = vcmp.eq.f32.partialorder %v344, 0.0
      %vm430 = vcmp.eq.f32.partialorder %v345, 0.0
      %vm431 = vcmp.eq.f32.partialorder %v346, 0.0
      %vm432 = vcmp.eq.f32.partialorder %v347, 0.0
      %v433 = vld [vmem:[%s3] sm:$0x1]
      %v435 = vlaneseq
      %v436 = vshrl.u32 %v435, 7
      %v437 = vsub.s32 0, %v436
      %v438 = vrot.slane %v433, %v437
      %v440 = vsub.f32 %v263, %v438
      %v441 = vsub.f32 %v264, %v438
      %v442 = vsub.f32 %v265, %v438
      %v443 = vsub.f32 %v266, %v438
      %v444 = vsub.f32 %v267, %v438
      %v445 = vsub.f32 %v268, %v438
      %v446 = vsub.f32 %v269, %v438
      %v447 = vsub.f32 %v270, %v438
      %v448 = vsub.f32 %v271, %v438
      %v449 = vsub.f32 %v272, %v438
      %v450 = vsub.f32 %v273, %v438
      %v451 = vsub.f32 %v274, %v438
      %v452 = vsub.f32 %v275, %v438
      %v453 = vsub.f32 %v276, %v438
      %v454 = vsub.f32 %v277, %v438
      %v455 = vsub.f32 %v278, %v438
      %v456 = vsub.f32 %v279, %v438
      %v457 = vsub.f32 %v280, %v438
      %v458 = vsub.f32 %v281, %v438
      %v459 = vsub.f32 %v282, %v438
      %v460 = vsub.f32 %v283, %v438
      %v461 = vsub.f32 %v284, %v438
      %v462 = vsub.f32 %v285, %v438
      %v463 = vsub.f32 %v286, %v438
      %v464 = vsub.f32 %v287, %v438
      %v465 = vsub.f32 %v288, %v438
      %v466 = vsub.f32 %v289, %v438
      %v467 = vsub.f32 %v290, %v438
      %v468 = vsub.f32 %v291, %v438
      %v469 = vsub.f32 %v292, %v438
      %v470 = vsub.f32 %v293, %v438
      %v471 = vsub.f32 %v294, %v438
      %v472 = vsub.f32 %v295, %v438
      %v473 = vsub.f32 %v296, %v438
      %v474 = vsub.f32 %v297, %v438
      %v475 = vsub.f32 %v298, %v438
      %v476 = vsub.f32 %v299, %v438
      %v477 = vsub.f32 %v300, %v438
      %v478 = vsub.f32 %v301, %v438
      %v479 = vsub.f32 %v302, %v438
      %v480 = vsub.f32 %v303, %v438
      %v481 = vsub.f32 %v304, %v438
      %v482 = vsub.f32 %v305, %v438
      %v483 = vsub.f32 %v306, %v438
      %v484 = vsub.f32 %v307, %v438
      %v485 = vsub.f32 %v308, %v438
      %v486 = vsub.f32 %v309, %v438
      %v487 = vsub.f32 %v310, %v438
      %v488 = vsub.f32 %v311, %v438
      %v489 = vsub.f32 %v312, %v438
      %v490 = vsub.f32 %v313, %v438
      %v491 = vsub.f32 %v314, %v438
      %v492 = vsub.f32 %v315, %v438
      %v493 = vsub.f32 %v316, %v438
      %v494 = vsub.f32 %v317, %v438
      %v495 = vsub.f32 %v318, %v438
      %v496 = vsub.f32 %v319, %v438
      %v497 = vsub.f32 %v320, %v438
      %v498 = vsub.f32 %v321, %v438
      %v499 = vsub.f32 %v322, %v438
      %v500 = vsub.f32 %v323, %v438
      %v501 = vsub.f32 %v324, %v438
      %v502 = vsub.f32 %v325, %v438
      %v503 = vsub.f32 %v326, %v438
      %v504 = vsub.f32 %v327, %v438
      %v505 = vsub.f32 %v328, %v438
      %v506 = vsub.f32 %v329, %v438
      %v507 = vsub.f32 %v330, %v438
      %v508 = vsub.f32 %v331, %v438
      %v509 = vsub.f32 %v332, %v438
      %v510 = vsub.f32 %v333, %v438
      %v511 = vsub.f32 %v334, %v438
      %v512 = vsub.f32 %v335, %v438
      %v513 = vsub.f32 %v336, %v438
      %v514 = vsub.f32 %v337, %v438
      %v515 = vsub.f32 %v338, %v438
      %v516 = vsub.f32 %v339, %v438
      %v517 = vsub.f32 %v340, %v438
      %v518 = vsub.f32 %v341, %v438
      %v519 = vsub.f32 %v342, %v438
      %v520 = vsub.f32 %v343, %v438
      %v521 = vsub.f32 %v344, %v438
      %v522 = vsub.f32 %v345, %v438
      %v523 = vsub.f32 %v346, %v438
      %v524 = vsub.f32 %v347, %v438
      %v525 = vld [vmem:[%s4] sm:$0x1]
      %v527 = vlaneseq
      %v528 = vshrl.u32 %v527, 7
      %v529 = vsub.s32 0, %v528
      %v530 = vrot.slane %v525, %v529
      %v532 = vmul.f32 %v440, %v530
      %v533 = vmul.f32 %v441, %v530
      %v534 = vmul.f32 %v442, %v530
      %v535 = vmul.f32 %v443, %v530
      %v536 = vmul.f32 %v444, %v530
      %v537 = vmul.f32 %v445, %v530
      %v538 = vmul.f32 %v446, %v530
      %v539 = vmul.f32 %v447, %v530
      %v540 = vmul.f32 %v448, %v530
      %v541 = vmul.f32 %v449, %v530
      %v542 = vmul.f32 %v450, %v530
      %v543 = vmul.f32 %v451, %v530
      %v544 = vmul.f32 %v452, %v530
      %v545 = vmul.f32 %v453, %v530
      %v546 = vmul.f32 %v454, %v530
      %v547 = vmul.f32 %v455, %v530
      %v548 = vmul.f32 %v456, %v530
      %v549 = vmul.f32 %v457, %v530
      %v550 = vmul.f32 %v458, %v530
      %v551 = vmul.f32 %v459, %v530
      %v552 = vmul.f32 %v460, %v530
      %v553 = vmul.f32 %v461, %v530
      %v554 = vmul.f32 %v462, %v530
      %v555 = vmul.f32 %v463, %v530
      %v556 = vmul.f32 %v464, %v530
      %v557 = vmul.f32 %v465, %v530
      %v558 = vmul.f32 %v466, %v530
      %v559 = vmul.f32 %v467, %v530
      %v560 = vmul.f32 %v468, %v530
      %v561 = vmul.f32 %v469, %v530
      %v562 = vmul.f32 %v470, %v530
      %v563 = vmul.f32 %v471, %v530
      %v564 = vmul.f32 %v472, %v530
      %v565 = vmul.f32 %v473, %v530
      %v566 = vmul.f32 %v474, %v530
      %v567 = vmul.f32 %v475, %v530
      %v568 = vmul.f32 %v476, %v530
      %v569 = vmul.f32 %v477, %v530
      %v570 = vmul.f32 %v478, %v530
      %v571 = vmul.f32 %v479, %v530
      %v572 = vmul.f32 %v480, %v530
      %v573 = vmul.f32 %v481, %v530
      %v574 = vmul.f32 %v482, %v530
      %v575 = vmul.f32 %v483, %v530
      %v576 = vmul.f32 %v484, %v530
      %v577 = vmul.f32 %v485, %v530
      %v578 = vmul.f32 %v486, %v530
      %v579 = vmul.f32 %v487, %v530
      %v580 = vmul.f32 %v488, %v530
      %v581 = vmul.f32 %v489, %v530
      %v582 = vmul.f32 %v490, %v530
      %v583 = vmul.f32 %v491, %v530
      %v584 = vmul.f32 %v492, %v530
      %v585 = vmul.f32 %v493, %v530
      %v586 = vmul.f32 %v494, %v530
      %v587 = vmul.f32 %v495, %v530
      %v588 = vmul.f32 %v496, %v530
      %v589 = vmul.f32 %v497, %v530
      %v590 = vmul.f32 %v498, %v530
      %v591 = vmul.f32 %v499, %v530
      %v592 = vmul.f32 %v500, %v530
      %v593 = vmul.f32 %v501, %v530
      %v594 = vmul.f32 %v502, %v530
      %v595 = vmul.f32 %v503, %v530
      %v596 = vmul.f32 %v504, %v530
      %v597 = vmul.f32 %v505, %v530
      %v598 = vmul.f32 %v506, %v530
      %v599 = vmul.f32 %v507, %v530
      %v600 = vmul.f32 %v508, %v530
      %v601 = vmul.f32 %v509, %v530
      %v602 = vmul.f32 %v510, %v530
      %v603 = vmul.f32 %v511, %v530
      %v604 = vmul.f32 %v512, %v530
      %v605 = vmul.f32 %v513, %v530
      %v606 = vmul.f32 %v514, %v530
      %v607 = vmul.f32 %v515, %v530
      %v608 = vmul.f32 %v516, %v530
      %v609 = vmul.f32 %v517, %v530
      %v610 = vmul.f32 %v518, %v530
      %v611 = vmul.f32 %v519, %v530
      %v612 = vmul.f32 %v520, %v530
      %v613 = vmul.f32 %v521, %v530
      %v614 = vmul.f32 %v522, %v530
      %v615 = vmul.f32 %v523, %v530
      %v616 = vmul.f32 %v524, %v530
      %v617 = vsel %vm348, 0.0, %v532
      %v618 = vsel %vm349, 0.0, %v533
      %v619 = vsel %vm350, 0.0, %v534
      %v620 = vsel %vm351, 0.0, %v535
      %v621 = vsel %vm352, 0.0, %v536
      %v622 = vsel %vm353, 0.0, %v537
      %v623 = vsel %vm354, 0.0, %v538
      %v624 = vsel %vm355, 0.0, %v539
      %v625 = vsel %vm356, 0.0, %v540
      %v626 = vsel %vm357, 0.0, %v541
      %v627 = vsel %vm358, 0.0, %v542
      %v628 = vsel %vm359, 0.0, %v543
      %v629 = vsel %vm360, 0.0, %v544
      %v630 = vsel %vm361, 0.0, %v545
      %v631 = vsel %vm362, 0.0, %v546
      %v632 = vsel %vm363, 0.0, %v547
      %v633 = vsel %vm364, 0.0, %v548
      %v634 = vsel %vm365, 0.0, %v549
      %v635 = vsel %vm366, 0.0, %v550
      %v636 = vsel %vm367, 0.0, %v551
      %v637 = vsel %vm368, 0.0, %v552
      %v638 = vsel %vm369, 0.0, %v553
      %v639 = vsel %vm370, 0.0, %v554
      %v640 = vsel %vm371, 0.0, %v555
      %v641 = vsel %vm372, 0.0, %v556
      %v642 = vsel %vm373, 0.0, %v557
      %v643 = vsel %vm374, 0.0, %v558
      %v644 = vsel %vm375, 0.0, %v559
      %v645 = vsel %vm376, 0.0, %v560
      %v646 = vsel %vm377, 0.0, %v561
      %v647 = vsel %vm378, 0.0, %v562
      %v648 = vsel %vm379, 0.0, %v563
      %v649 = vsel %vm380, 0.0, %v564
      %v650 = vsel %vm381, 0.0, %v565
      %v651 = vsel %vm382, 0.0, %v566
      %v652 = vsel %vm383, 0.0, %v567
      %v653 = vsel %vm384, 0.0, %v568
      %v654 = vsel %vm385, 0.0, %v569
      %v655 = vsel %vm386, 0.0, %v570
      %v656 = vsel %vm387, 0.0, %v571
      %v657 = vsel %vm388, 0.0, %v572
      %v658 = vsel %vm389, 0.0, %v573
      %v659 = vsel %vm390, 0.0, %v574
      %v660 = vsel %vm391, 0.0, %v575
      %v661 = vsel %vm392, 0.0, %v576
      %v662 = vsel %vm393, 0.0, %v577
      %v663 = vsel %vm394, 0.0, %v578
      %v664 = vsel %vm395, 0.0, %v579
      %v665 = vsel %vm396, 0.0, %v580
      %v666 = vsel %vm397, 0.0, %v581
      %v667 = vsel %vm398, 0.0, %v582
      %v668 = vsel %vm399, 0.0, %v583
      %v669 = vsel %vm400, 0.0, %v584
      %v670 = vsel %vm401, 0.0, %v585
      %v671 = vsel %vm402, 0.0, %v586
      %v672 = vsel %vm403, 0.0, %v587
      %v673 = vsel %vm404, 0.0, %v588
      %v674 = vsel %vm405, 0.0, %v589
      %v675 = vsel %vm406, 0.0, %v590
      %v676 = vsel %vm407, 0.0, %v591
      %v677 = vsel %vm408, 0.0, %v592
      %v678 = vsel %vm409, 0.0, %v593
      %v679 = vsel %vm410, 0.0, %v594
      %v680 = vsel %vm411, 0.0, %v595
      %v681 = vsel %vm412, 0.0, %v596
      %v682 = vsel %vm413, 0.0, %v597
      %v683 = vsel %vm414, 0.0, %v598
      %v684 = vsel %vm415, 0.0, %v599
      %v685 = vsel %vm416, 0.0, %v600
      %v686 = vsel %vm417, 0.0, %v601
      %v687 = vsel %vm418, 0.0, %v602
      %v688 = vsel %vm419, 0.0, %v603
      %v689 = vsel %vm420, 0.0, %v604
      %v690 = vsel %vm421, 0.0, %v605
      %v691 = vsel %vm422, 0.0, %v606
      %v692 = vsel %vm423, 0.0, %v607
      %v693 = vsel %vm424, 0.0, %v608
      %v694 = vsel %vm425, 0.0, %v609
      %v695 = vsel %vm426, 0.0, %v610
      %v696 = vsel %vm427, 0.0, %v611
      %v697 = vsel %vm428, 0.0, %v612
      %v698 = vsel %vm429, 0.0, %v613
      %v699 = vsel %vm430, 0.0, %v614
      %v700 = vsel %vm431, 0.0, %v615
      %v701 = vsel %vm432, 0.0, %v616
      %v702 = vpack.c.bf16 %v618, %v617
      %v703 = vpack.c.bf16 %v619, %v619
      %v704 = vpack.c.bf16 %v621, %v620
      %v705 = vpack.c.bf16 %v622, %v622
      %v706 = vpack.c.bf16 %v624, %v623
      %v707 = vpack.c.bf16 %v625, %v625
      %v708 = vpack.c.bf16 %v627, %v626
      %v709 = vpack.c.bf16 %v628, %v628
      %v710 = vpack.c.bf16 %v630, %v629
      %v711 = vpack.c.bf16 %v631, %v631
      %v712 = vpack.c.bf16 %v633, %v632
      %v713 = vpack.c.bf16 %v634, %v634
      %v714 = vpack.c.bf16 %v636, %v635
      %v715 = vpack.c.bf16 %v637, %v637
      %v716 = vpack.c.bf16 %v639, %v638
      %v717 = vpack.c.bf16 %v640, %v640
      %v718 = vpack.c.bf16 %v642, %v641
      %v719 = vpack.c.bf16 %v643, %v643
      %v720 = vpack.c.bf16 %v645, %v644
      %v721 = vpack.c.bf16 %v647, %v646
      %v722 = vpack.c.bf16 %v649, %v648
      %v723 = vpack.c.bf16 %v651, %v650
      %v724 = vpack.c.bf16 %v653, %v652
      %v725 = vpack.c.bf16 %v655, %v654
      %v726 = vpack.c.bf16 %v657, %v656
      %v727 = vpack.c.bf16 %v659, %v658
      %v728 = vpack.c.bf16 %v661, %v660
      %v729 = vpack.c.bf16 %v663, %v662
      %v730 = vpack.c.bf16 %v664, %v664
      %v731 = vpack.c.bf16 %v666, %v665
      %v732 = vpack.c.bf16 %v667, %v667
      %v733 = vpack.c.bf16 %v669, %v668
      %v734 = vpack.c.bf16 %v670, %v670
      %v735 = vpack.c.bf16 %v672, %v671
      %v736 = vpack.c.bf16 %v673, %v673
      %v737 = vpack.c.bf16 %v675, %v674
      %v738 = vpack.c.bf16 %v676, %v676
      %v739 = vpack.c.bf16 %v678, %v677
      %v740 = vpack.c.bf16 %v679, %v679
      %v741 = vpack.c.bf16 %v681, %v680
      %v742 = vpack.c.bf16 %v682, %v682
      %v743 = vpack.c.bf16 %v684, %v683
      %v744 = vpack.c.bf16 %v685, %v685
      %v745 = vpack.c.bf16 %v687, %v686
      %v746 = vpack.c.bf16 %v689, %v688
      %v747 = vpack.c.bf16 %v691, %v690
      %v748 = vpack.c.bf16 %v693, %v692
      %v749 = vpack.c.bf16 %v695, %v694
      %v750 = vpack.c.bf16 %v697, %v696
      %v751 = vpack.c.bf16 %v699, %v698
      %v752 = vpack.c.bf16 %v701, %v700
      %v753 = vld [vmem:[%s2] sm:$0x1]
      %v755 = vlaneseq
      %v756 = vshrl.u32 %v755, 7
      %v757 = vsub.s32 0, %v756
      %v758 = vrot.slane %v753, %v757
      %v760 = vld [vmem:[%s1] sm:$0x3]
      %vm761 = vcmask 23552
      %v763 = vsel %vm761, %v702, 0
      %v766 = vsel %vm761, %v704, 0
      %v769 = vsel %vm761, %v706, 0
      %v772 = vsel %vm761, %v708, 0
      %v775 = vsel %vm761, %v710, 0
      %v778 = vsel %vm761, %v712, 0
      %v781 = vsel %vm761, %v714, 0
      %v784 = vsel %vm761, %v716, 0
      %vm786 = vcmask 1040384
      %vm787 = vcmask 1041408
      %v788 = vsel %vm786, 4294967295, 65535
      %v789 = vsel %vm787, %v788, 0
      %v791 = vand.u32 %v760, %v789
      %793 = vmatprep.subr.bf16.mxu0 0
      %794 = vmatpush1.bf16.msra.mxu0 %v791
      %795 = vmatprep.subr.bf16.mxu0 0
      %796 = vmatpush1.bf16.msra.mxu0 0
      %797 = vmatprep.subr.bf16.mxu0 0
      %798 = vmatpush1.bf16.msra.mxu0 0
      %799 = vmatprep.subr.bf16.mxu0 0
      %800 = vmatpush1.bf16.msra.mxu0 0
      %801 = vmatprep.subr.bf16.mxu0 0
      %802 = vmatpush1.bf16.msra.mxu0 0
      %803 = vmatprep.subr.bf16.mxu0 0
      %804 = vmatpush1.bf16.msra.mxu0 0
      %805 = vmatprep.subr.bf16.mxu0 0
      %806 = vmatpush1.bf16.msra.mxu0 0
      %807 = vmatprep.subr.bf16.mxu0 0
      %808 = vmatpush1.bf16.msra.mxu0 0
      %809 = vmatprep.subr.bf16.mxu0 0
      %810 = vmatpush1.bf16.msra.mxu0 0
      %811 = vmatprep.subr.bf16.mxu0 0
      %812 = vmatpush1.bf16.msra.mxu0 0
      %813 = vmatprep.subr.bf16.mxu0 0
      %814 = vmatpush1.bf16.msra.mxu0 0
      %815 = vmatprep.subr.bf16.mxu0 0
      %816 = vmatpush1.bf16.msra.mxu0 0
      %817 = vmatprep.subr.bf16.mxu0 0
      %818 = vmatpush1.bf16.msra.mxu0 0
      %819 = vmatprep.subr.bf16.mxu0 0
      %820 = vmatpush1.bf16.msra.mxu0 0
      %821 = vmatprep.subr.bf16.mxu0 0
      %822 = vmatpush1.bf16.msra.mxu0 0
      %823 = vmatprep.subr.bf16.mxu0 0
      %824 = vmatpush1.bf16.msra.mxu0 0
      %825 = vmatprep.mubr.bf16.mxu0 0
      %826 = vmatmul.mubr.bf16.gmra.mrb[0].mxu0 %v763
      %v827 = vpop.f32.mrb[0].mxu0
      %v828 = vadd.f32 0.0, %v827
      %v829 = vpop.f32.mrb[0].mxu0
      %v830 = vpop.f32.mrb[0].mxu0
      %v831 = vadd.f32 0.0, %v830
      %v832 = vpop.f32.mrb[0].mxu0
      %833 = vmatprep.mubr.bf16.mxu0 0
      %834 = vmatmul.mubr.bf16.gmra.mrb[0].mxu0 %v766
      %v835 = vpop.f32.mrb[0].mxu0
      %v836 = vadd.f32 0.0, %v835
      %v837 = vpop.f32.mrb[0].mxu0
      %v838 = vpop.f32.mrb[0].mxu0
      %v839 = vadd.f32 0.0, %v838
      %v840 = vpop.f32.mrb[0].mxu0
      %841 = vmatprep.mubr.bf16.mxu0 0
      %842 = vmatmul.mubr.bf16.gmra.mrb[0].mxu0 %v769
      %v843 = vpop.f32.mrb[0].mxu0
      %v844 = vadd.f32 0.0, %v843
      %v845 = vpop.f32.mrb[0].mxu0
      %v846 = vpop.f32.mrb[0].mxu0
      %v847 = vadd.f32 0.0, %v846
      %v848 = vpop.f32.mrb[0].mxu0
      %849 = vmatprep.mubr.bf16.mxu0 0
      %850 = vmatmul.mubr.bf16.gmra.mrb[0].mxu0 %v772
      %v851 = vpop.f32.mrb[0].mxu0
      %v852 = vadd.f32 0.0, %v851
      %v853 = vpop.f32.mrb[0].mxu0
      %v854 = vpop.f32.mrb[0].mxu0
      %v855 = vadd.f32 0.0, %v854
      %v856 = vpop.f32.mrb[0].mxu0
      %857 = vmatprep.mubr.bf16.mxu0 0
      %858 = vmatmul.mubr.bf16.gmra.mrb[0].mxu0 %v775
      %v859 = vpop.f32.mrb[0].mxu0
      %v860 = vadd.f32 0.0, %v859
      %v861 = vpop.f32.mrb[0].mxu0
      %v862 = vpop.f32.mrb[0].mxu0
      %v863 = vadd.f32 0.0, %v862
      %v864 = vpop.f32.mrb[0].mxu0
      %865 = vmatprep.mubr.bf16.mxu0 0
      %866 = vmatmul.mubr.bf16.gmra.mrb[0].mxu0 %v778
      %v867 = vpop.f32.mrb[0].mxu0
      %v868 = vadd.f32 0.0, %v867
      %v869 = vpop.f32.mrb[0].mxu0
      %v870 = vpop.f32.mrb[0].mxu0
      %v871 = vadd.f32 0.0, %v870
      %v872 = vpop.f32.mrb[0].mxu0
      %873 = vmatprep.mubr.bf16.mxu0 0
      %874 = vmatmul.mubr.bf16.gmra.mrb[0].mxu0 %v781
      %v875 = vpop.f32.mrb[0].mxu0
      %v876 = vadd.f32 0.0, %v875
      %v877 = vpop.f32.mrb[0].mxu0
      %v878 = vpop.f32.mrb[0].mxu0
      %v879 = vadd.f32 0.0, %v878
      %v880 = vpop.f32.mrb[0].mxu0
      %881 = vmatprep.mubr.bf16.mxu0 0
      %882 = vmatmul.mubr.bf16.gmra.mrb[0].mxu0 %v784
      %v883 = vpop.f32.mrb[0].mxu0
      %v884 = vadd.f32 0.0, %v883
      %v885 = vpop.f32.mrb[0].mxu0
      %v886 = vpop.f32.mrb[0].mxu0
      %v887 = vadd.f32 0.0, %v886
      %v888 = vpop.f32.mrb[0].mxu0
      %889 = vdwg.mxu0
      %v890 = vadd.f32 %v758, %v828
      %v891 = vadd.f32 %v758, %v831
      %v892 = vadd.f32 %v758, %v836
      %v893 = vadd.f32 %v758, %v839
      %v894 = vadd.f32 %v758, %v844
      %v895 = vadd.f32 %v758, %v847
      %v896 = vadd.f32 %v758, %v852
      %v897 = vadd.f32 %v758, %v855
      %v898 = vadd.f32 %v758, %v860
      %v899 = vadd.f32 %v758, %v863
      %v900 = vadd.f32 %v758, %v868
      %v901 = vadd.f32 %v758, %v871
      %v902 = vadd.f32 %v758, %v876
      %v903 = vadd.f32 %v758, %v879
      %v904 = vadd.f32 %v758, %v884
      %v905 = vadd.f32 %v758, %v887
      %s906 = scalar_lea.vmem %s1, 2
      %v907 = vld [vmem:[%s906] sm:$0x3]
      %v909 = vsel %vm761, %v720, 0
      %v912 = vsel %vm761, %v721, 0
      %v915 = vsel %vm761, %v722, 0
      %v918 = vsel %vm761, %v723, 0
      %v921 = vsel %vm761, %v724, 0
      %v924 = vsel %vm761, %v725, 0
      %v927 = vsel %vm761, %v726, 0
      %v930 = vsel %vm761, %v727, 0
      %v933 = vand.u32 %v907, %v789
      %935 = vmatprep.subr.bf16.mxu0 0
      %936 = vmatpush1.bf16.msra.mxu0 %v933
      %937 = vmatprep.subr.bf16.mxu0 0
      %938 = vmatpush1.bf16.msra.mxu0 0
      %939 = vmatprep.subr.bf16.mxu0 0
      %940 = vmatpush1.bf16.msra.mxu0 0
      %941 = vmatprep.subr.bf16.mxu0 0
      %942 = vmatpush1.bf16.msra.mxu0 0
      %943 = vmatprep.subr.bf16.mxu0 0
      %944 = vmatpush1.bf16.msra.mxu0 0
      %945 = vmatprep.subr.bf16.mxu0 0
      %946 = vmatpush1.bf16.msra.mxu0 0
      %947 = vmatprep.subr.bf16.mxu0 0
      %948 = vmatpush1.bf16.msra.mxu0 0
      %949 = vmatprep.subr.bf16.mxu0 0
      %950 = vmatpush1.bf16.msra.mxu0 0
      %951 = vmatprep.subr.bf16.mxu0 0
      %952 = vmatpush1.bf16.msra.mxu0 0
      %953 = vmatprep.subr.bf16.mxu0 0
      %954 = vmatpush1.bf16.msra.mxu0 0
      %955 = vmatprep.subr.bf16.mxu0 0
      %956 = vmatpush1.bf16.msra.mxu0 0
      %957 = vmatprep.subr.bf16.mxu0 0
      %958 = vmatpush1.bf16.msra.mxu0 0
      %959 = vmatprep.subr.bf16.mxu0 0
      %960 = vmatpush1.bf16.msra.mxu0 0
      %961 = vmatprep.subr.bf16.mxu0 0
      %962 = vmatpush1.bf16.msra.mxu0 0
      %963 = vmatprep.subr.bf16.mxu0 0
      %964 = vmatpush1.bf16.msra.mxu0 0
      %965 = vmatprep.subr.bf16.mxu0 0
      %966 = vmatpush1.bf16.msra.mxu0 0
      %967 = vmatprep.mubr.bf16.mxu0 0
      %968 = vmatmul.mubr.bf16.gmra.mrb[0].mxu0 %v909
      %v969 = vpop.f32.mrb[0].mxu0
      %v970 = vadd.f32 0.0, %v969
      %v971 = vpop.f32.mrb[0].mxu0
      %v972 = vpop.f32.mrb[0].mxu0
      %v973 = vadd.f32 0.0, %v972
      %v974 = vpop.f32.mrb[0].mxu0
      %975 = vmatprep.mubr.bf16.mxu0 0
      %976 = vmatmul.mubr.bf16.gmra.mrb[0].mxu0 %v912
      %v977 = vpop.f32.mrb[0].mxu0
      %v978 = vadd.f32 0.0, %v977
      %v979 = vpop.f32.mrb[0].mxu0
      %v980 = vpop.f32.mrb[0].mxu0
      %v981 = vadd.f32 0.0, %v980
      %v982 = vpop.f32.mrb[0].mxu0
      %983 = vmatprep.mubr.bf16.mxu0 0
      %984 = vmatmul.mubr.bf16.gmra.mrb[0].mxu0 %v915
      %v985 = vpop.f32.mrb[0].mxu0
      %v986 = vadd.f32 0.0, %v985
      %v987 = vpop.f32.mrb[0].mxu0
      %v988 = vpop.f32.mrb[0].mxu0
      %v989 = vadd.f32 0.0, %v988
      %v990 = vpop.f32.mrb[0].mxu0
      %991 = vmatprep.mubr.bf16.mxu0 0
      %992 = vmatmul.mubr.bf16.gmra.mrb[0].mxu0 %v918
      %v993 = vpop.f32.mrb[0].mxu0
      %v994 = vadd.f32 0.0, %v993
      %v995 = vpop.f32.mrb[0].mxu0
      %v996 = vpop.f32.mrb[0].mxu0
      %v997 = vadd.f32 0.0, %v996
      %v998 = vpop.f32.mrb[0].mxu0
      %999 = vmatprep.mubr.bf16.mxu0 0
      %1000 = vmatmul.mubr.bf16.gmra.mrb[0].mxu0 %v921
      %v1001 = vpop.f32.mrb[0].mxu0
      %v1002 = vadd.f32 0.0, %v1001
      %v1003 = vpop.f32.mrb[0].mxu0
      %v1004 = vpop.f32.mrb[0].mxu0
      %v1005 = vadd.f32 0.0, %v1004
      %v1006 = vpop.f32.mrb[0].mxu0
      %1007 = vmatprep.mubr.bf16.mxu0 0
      %1008 = vmatmul.mubr.bf16.gmra.mrb[0].mxu0 %v924
      %v1009 = vpop.f32.mrb[0].mxu0
      %v1010 = vadd.f32 0.0, %v1009
      %v1011 = vpop.f32.mrb[0].mxu0
      %v1012 = vpop.f32.mrb[0].mxu0
      %v1013 = vadd.f32 0.0, %v1012
      %v1014 = vpop.f32.mrb[0].mxu0
      %1015 = vmatprep.mubr.bf16.mxu0 0
      %1016 = vmatmul.mubr.bf16.gmra.mrb[0].mxu0 %v927
      %v1017 = vpop.f32.mrb[0].mxu0
      %v1018 = vadd.f32 0.0, %v1017
      %v1019 = vpop.f32.mrb[0].mxu0
      %v1020 = vpop.f32.mrb[0].mxu0
      %v1021 = vadd.f32 0.0, %v1020
      %v1022 = vpop.f32.mrb[0].mxu0
      %1023 = vmatprep.mubr.bf16.mxu0 0
      %1024 = vmatmul.mubr.bf16.gmra.mrb[0].mxu0 %v930
      %v1025 = vpop.f32.mrb[0].mxu0
      %v1026 = vadd.f32 0.0, %v1025
      %v1027 = vpop.f32.mrb[0].mxu0
      %v1028 = vpop.f32.mrb[0].mxu0
      %v1029 = vadd.f32 0.0, %v1028
      %v1030 = vpop.f32.mrb[0].mxu0
      %1031 = vdwg.mxu0
      %v1032 = vadd.f32 %v890, %v970
      %v1033 = vadd.f32 %v891, %v973
      %v1034 = vadd.f32 %v892, %v978
      %v1035 = vadd.f32 %v893, %v981
      %v1036 = vadd.f32 %v894, %v986
      %v1037 = vadd.f32 %v895, %v989
      %v1038 = vadd.f32 %v896, %v994
      %v1039 = vadd.f32 %v897, %v997
      %v1040 = vadd.f32 %v898, %v1002
      %v1041 = vadd.f32 %v899, %v1005
      %v1042 = vadd.f32 %v900, %v1010
      %v1043 = vadd.f32 %v901, %v1013
      %v1044 = vadd.f32 %v902, %v1018
      %v1045 = vadd.f32 %v903, %v1021
      %v1046 = vadd.f32 %v904, %v1026
      %v1047 = vadd.f32 %v905, %v1029
      %vm1048 = vsmask.f32 7424
      %v1049 = vshrl.u32 %v702, 16
      %v1051 = vshll.u32 %v702, 16
      %v1053 = vrot.slane %v1051, 1
      %v1054 = vor.u32 %v1049, %v1053
      %v1056 = vshll.u32 %v703, 16
      %v1058 = vrot.slane %v1056, 1
      %v1059 = vsel %vm1048, %v1054, %v1058
      %v1060 = vshrl.u32 %v704, 16
      %v1062 = vshll.u32 %v704, 16
      %v1064 = vrot.slane %v1062, 1
      %v1065 = vor.u32 %v1060, %v1064
      %v1067 = vshll.u32 %v705, 16
      %v1069 = vrot.slane %v1067, 1
      %v1070 = vsel %vm1048, %v1065, %v1069
      %v1071 = vshrl.u32 %v706, 16
      %v1073 = vshll.u32 %v706, 16
      %v1075 = vrot.slane %v1073, 1
      %v1076 = vor.u32 %v1071, %v1075
      %v1078 = vshll.u32 %v707, 16
      %v1080 = vrot.slane %v1078, 1
      %v1081 = vsel %vm1048, %v1076, %v1080
      %v1082 = vshrl.u32 %v708, 16
      %v1084 = vshll.u32 %v708, 16
      %v1086 = vrot.slane %v1084, 1
      %v1087 = vor.u32 %v1082, %v1086
      %v1089 = vshll.u32 %v709, 16
      %v1091 = vrot.slane %v1089, 1
      %v1092 = vsel %vm1048, %v1087, %v1091
      %v1093 = vshrl.u32 %v710, 16
      %v1095 = vshll.u32 %v710, 16
      %v1097 = vrot.slane %v1095, 1
      %v1098 = vor.u32 %v1093, %v1097
      %v1100 = vshll.u32 %v711, 16
      %v1102 = vrot.slane %v1100, 1
      %v1103 = vsel %vm1048, %v1098, %v1102
      %v1104 = vshrl.u32 %v712, 16
      %v1106 = vshll.u32 %v712, 16
      %v1108 = vrot.slane %v1106, 1
      %v1109 = vor.u32 %v1104, %v1108
      %v1111 = vshll.u32 %v713, 16
      %v1113 = vrot.slane %v1111, 1
      %v1114 = vsel %vm1048, %v1109, %v1113
      %v1115 = vshrl.u32 %v714, 16
      %v1117 = vshll.u32 %v714, 16
      %v1119 = vrot.slane %v1117, 1
      %v1120 = vor.u32 %v1115, %v1119
      %v1122 = vshll.u32 %v715, 16
      %v1124 = vrot.slane %v1122, 1
      %v1125 = vsel %vm1048, %v1120, %v1124
      %v1126 = vshrl.u32 %v716, 16
      %v1128 = vshll.u32 %v716, 16
      %v1130 = vrot.slane %v1128, 1
      %v1131 = vor.u32 %v1126, %v1130
      %v1133 = vshll.u32 %v717, 16
      %v1135 = vrot.slane %v1133, 1
      %v1136 = vsel %vm1048, %v1131, %v1135
      %s1137 = scalar_lea.vmem %s1, 4
      %v1138 = vld [vmem:[%s1137] sm:$0x3]
      %v1140 = vsel %vm761, %v1059, 0
      %v1143 = vsel %vm761, %v1070, 0
      %v1146 = vsel %vm761, %v1081, 0
      %v1149 = vsel %vm761, %v1092, 0
      %v1152 = vsel %vm761, %v1103, 0
      %v1155 = vsel %vm761, %v1114, 0
      %v1158 = vsel %vm761, %v1125, 0
      %v1161 = vsel %vm761, %v1136, 0
      %v1164 = vand.u32 %v1138, %v789
      %1166 = vmatprep.subr.bf16.mxu0 0
      %1167 = vmatpush1.bf16.msra.mxu0 %v1164
      %1168 = vmatprep.subr.bf16.mxu0 0
      %1169 = vmatpush1.bf16.msra.mxu0 0
      %1170 = vmatprep.subr.bf16.mxu0 0
      %1171 = vmatpush1.bf16.msra.mxu0 0
      %1172 = vmatprep.subr.bf16.mxu0 0
      %1173 = vmatpush1.bf16.msra.mxu0 0
      %1174 = vmatprep.subr.bf16.mxu0 0
      %1175 = vmatpush1.bf16.msra.mxu0 0
      %1176 = vmatprep.subr.bf16.mxu0 0
      %1177 = vmatpush1.bf16.msra.mxu0 0
      %1178 = vmatprep.subr.bf16.mxu0 0
      %1179 = vmatpush1.bf16.msra.mxu0 0
      %1180 = vmatprep.subr.bf16.mxu0 0
      %1181 = vmatpush1.bf16.msra.mxu0 0
      %1182 = vmatprep.subr.bf16.mxu0 0
      %1183 = vmatpush1.bf16.msra.mxu0 0
      %1184 = vmatprep.subr.bf16.mxu0 0
      %1185 = vmatpush1.bf16.msra.mxu0 0
      %1186 = vmatprep.subr.bf16.mxu0 0
      %1187 = vmatpush1.bf16.msra.mxu0 0
      %1188 = vmatprep.subr.bf16.mxu0 0
      %1189 = vmatpush1.bf16.msra.mxu0 0
      %1190 = vmatprep.subr.bf16.mxu0 0
      %1191 = vmatpush1.bf16.msra.mxu0 0
      %1192 = vmatprep.subr.bf16.mxu0 0
      %1193 = vmatpush1.bf16.msra.mxu0 0
      %1194 = vmatprep.subr.bf16.mxu0 0
      %1195 = vmatpush1.bf16.msra.mxu0 0
      %1196 = vmatprep.subr.bf16.mxu0 0
      %1197 = vmatpush1.bf16.msra.mxu0 0
      %1198 = vmatprep.mubr.bf16.mxu0 0
      %1199 = vmatmul.mubr.bf16.gmra.mrb[0].mxu0 %v1140
      %v1200 = vpop.f32.mrb[0].mxu0
      %v1201 = vadd.f32 0.0, %v1200
      %v1202 = vpop.f32.mrb[0].mxu0
      %v1203 = vpop.f32.mrb[0].mxu0
      %v1204 = vadd.f32 0.0, %v1203
      %v1205 = vpop.f32.mrb[0].mxu0
      %1206 = vmatprep.mubr.bf16.mxu0 0
      %1207 = vmatmul.mubr.bf16.gmra.mrb[0].mxu0 %v1143
      %v1208 = vpop.f32.mrb[0].mxu0
      %v1209 = vadd.f32 0.0, %v1208
      %v1210 = vpop.f32.mrb[0].mxu0
      %v1211 = vpop.f32.mrb[0].mxu0
      %v1212 = vadd.f32 0.0, %v1211
      %v1213 = vpop.f32.mrb[0].mxu0
      %1214 = vmatprep.mubr.bf16.mxu0 0
      %1215 = vmatmul.mubr.bf16.gmra.mrb[0].mxu0 %v1146
      %v1216 = vpop.f32.mrb[0].mxu0
      %v1217 = vadd.f32 0.0, %v1216
      %v1218 = vpop.f32.mrb[0].mxu0
      %v1219 = vpop.f32.mrb[0].mxu0
      %v1220 = vadd.f32 0.0, %v1219
      %v1221 = vpop.f32.mrb[0].mxu0
      %1222 = vmatprep.mubr.bf16.mxu0 0
      %1223 = vmatmul.mubr.bf16.gmra.mrb[0].mxu0 %v1149
      %v1224 = vpop.f32.mrb[0].mxu0
      %v1225 = vadd.f32 0.0, %v1224
      %v1226 = vpop.f32.mrb[0].mxu0
      %v1227 = vpop.f32.mrb[0].mxu0
      %v1228 = vadd.f32 0.0, %v1227
      %v1229 = vpop.f32.mrb[0].mxu0
      %1230 = vmatprep.mubr.bf16.mxu0 0
      %1231 = vmatmul.mubr.bf16.gmra.mrb[0].mxu0 %v1152
      %v1232 = vpop.f32.mrb[0].mxu0
      %v1233 = vadd.f32 0.0, %v1232
      %v1234 = vpop.f32.mrb[0].mxu0
      %v1235 = vpop.f32.mrb[0].mxu0
      %v1236 = vadd.f32 0.0, %v1235
      %v1237 = vpop.f32.mrb[0].mxu0
      %1238 = vmatprep.mubr.bf16.mxu0 0
      %1239 = vmatmul.mubr.bf16.gmra.mrb[0].mxu0 %v1155
      %v1240 = vpop.f32.mrb[0].mxu0
      %v1241 = vadd.f32 0.0, %v1240
      %v1242 = vpop.f32.mrb[0].mxu0
      %v1243 = vpop.f32.mrb[0].mxu0
      %v1244 = vadd.f32 0.0, %v1243
      %v1245 = vpop.f32.mrb[0].mxu0
      %1246 = vmatprep.mubr.bf16.mxu0 0
      %1247 = vmatmul.mubr.bf16.gmra.mrb[0].mxu0 %v1158
      %v1248 = vpop.f32.mrb[0].mxu0
      %v1249 = vadd.f32 0.0, %v1248
      %v1250 = vpop.f32.mrb[0].mxu0
      %v1251 = vpop.f32.mrb[0].mxu0
      %v1252 = vadd.f32 0.0, %v1251
      %v1253 = vpop.f32.mrb[0].mxu0
      %1254 = vmatprep.mubr.bf16.mxu0 0
      %1255 = vmatmul.mubr.bf16.gmra.mrb[0].mxu0 %v1161
      %v1256 = vpop.f32.mrb[0].mxu0
      %v1257 = vadd.f32 0.0, %v1256
      %v1258 = vpop.f32.mrb[0].mxu0
      %v1259 = vpop.f32.mrb[0].mxu0
      %v1260 = vadd.f32 0.0, %v1259
      %v1261 = vpop.f32.mrb[0].mxu0
      %1262 = vdwg.mxu0
      %v1263 = vadd.f32 %v1032, %v1201
      %v1264 = vadd.f32 %v1033, %v1204
      %v1265 = vadd.f32 %v1034, %v1209
      %v1266 = vadd.f32 %v1035, %v1212
      %v1267 = vadd.f32 %v1036, %v1217
      %v1268 = vadd.f32 %v1037, %v1220
      %v1269 = vadd.f32 %v1038, %v1225
      %v1270 = vadd.f32 %v1039, %v1228
      %v1271 = vadd.f32 %v1040, %v1233
      %v1272 = vadd.f32 %v1041, %v1236
      %v1273 = vadd.f32 %v1042, %v1241
      %v1274 = vadd.f32 %v1043, %v1244
      %v1275 = vadd.f32 %v1044, %v1249
      %v1276 = vadd.f32 %v1045, %v1252
      %v1277 = vadd.f32 %v1046, %v1257
      %v1278 = vadd.f32 %v1047, %v1260
      %s1279 = scalar_lea.vmem %s1, 6
      %v1280 = vld [vmem:[%s1279] sm:$0x3]
      %v1282 = vsel %vm761, %v729, 0
      %v1285 = vsel %vm761, %v731, 0
      %v1288 = vsel %vm761, %v733, 0
      %v1291 = vsel %vm761, %v735, 0
      %v1294 = vsel %vm761, %v737, 0
      %v1297 = vsel %vm761, %v739, 0
      %v1300 = vsel %vm761, %v741, 0
      %v1303 = vsel %vm761, %v743, 0
      %v1306 = vand.u32 %v1280, %v789
      %1308 = vmatprep.subr.bf16.mxu0 0
      %1309 = vmatpush1.bf16.msra.mxu0 %v1306
      %1310 = vmatprep.subr.bf16.mxu0 0
      %1311 = vmatpush1.bf16.msra.mxu0 0
      %1312 = vmatprep.subr.bf16.mxu0 0
      %1313 = vmatpush1.bf16.msra.mxu0 0
      %1314 = vmatprep.subr.bf16.mxu0 0
      %1315 = vmatpush1.bf16.msra.mxu0 0
      %1316 = vmatprep.subr.bf16.mxu0 0
      %1317 = vmatpush1.bf16.msra.mxu0 0
      %1318 = vmatprep.subr.bf16.mxu0 0
      %1319 = vmatpush1.bf16.msra.mxu0 0
      %1320 = vmatprep.subr.bf16.mxu0 0
      %1321 = vmatpush1.bf16.msra.mxu0 0
      %1322 = vmatprep.subr.bf16.mxu0 0
      %1323 = vmatpush1.bf16.msra.mxu0 0
      %1324 = vmatprep.subr.bf16.mxu0 0
      %1325 = vmatpush1.bf16.msra.mxu0 0
      %1326 = vmatprep.subr.bf16.mxu0 0
      %1327 = vmatpush1.bf16.msra.mxu0 0
      %1328 = vmatprep.subr.bf16.mxu0 0
      %1329 = vmatpush1.bf16.msra.mxu0 0
      %1330 = vmatprep.subr.bf16.mxu0 0
      %1331 = vmatpush1.bf16.msra.mxu0 0
      %1332 = vmatprep.subr.bf16.mxu0 0
      %1333 = vmatpush1.bf16.msra.mxu0 0
      %1334 = vmatprep.subr.bf16.mxu0 0
      %1335 = vmatpush1.bf16.msra.mxu0 0
      %1336 = vmatprep.subr.bf16.mxu0 0
      %1337 = vmatpush1.bf16.msra.mxu0 0
      %1338 = vmatprep.subr.bf16.mxu0 0
      %1339 = vmatpush1.bf16.msra.mxu0 0
      %1340 = vmatprep.mubr.bf16.mxu0 0
      %1341 = vmatmul.mubr.bf16.gmra.mrb[0].mxu0 %v1282
      %v1342 = vpop.f32.mrb[0].mxu0
      %v1343 = vadd.f32 0.0, %v1342
      %v1344 = vpop.f32.mrb[0].mxu0
      %v1345 = vpop.f32.mrb[0].mxu0
      %v1346 = vadd.f32 0.0, %v1345
      %v1347 = vpop.f32.mrb[0].mxu0
      %1348 = vmatprep.mubr.bf16.mxu0 0
      %1349 = vmatmul.mubr.bf16.gmra.mrb[0].mxu0 %v1285
      %v1350 = vpop.f32.mrb[0].mxu0
      %v1351 = vadd.f32 0.0, %v1350
      %v1352 = vpop.f32.mrb[0].mxu0
      %v1353 = vpop.f32.mrb[0].mxu0
      %v1354 = vadd.f32 0.0, %v1353
      %v1355 = vpop.f32.mrb[0].mxu0
      %1356 = vmatprep.mubr.bf16.mxu0 0
      %1357 = vmatmul.mubr.bf16.gmra.mrb[0].mxu0 %v1288
      %v1358 = vpop.f32.mrb[0].mxu0
      %v1359 = vadd.f32 0.0, %v1358
      %v1360 = vpop.f32.mrb[0].mxu0
      %v1361 = vpop.f32.mrb[0].mxu0
      %v1362 = vadd.f32 0.0, %v1361
      %v1363 = vpop.f32.mrb[0].mxu0
      %1364 = vmatprep.mubr.bf16.mxu0 0
      %1365 = vmatmul.mubr.bf16.gmra.mrb[0].mxu0 %v1291
      %v1366 = vpop.f32.mrb[0].mxu0
      %v1367 = vadd.f32 0.0, %v1366
      %v1368 = vpop.f32.mrb[0].mxu0
      %v1369 = vpop.f32.mrb[0].mxu0
      %v1370 = vadd.f32 0.0, %v1369
      %v1371 = vpop.f32.mrb[0].mxu0
      %1372 = vmatprep.mubr.bf16.mxu0 0
      %1373 = vmatmul.mubr.bf16.gmra.mrb[0].mxu0 %v1294
      %v1374 = vpop.f32.mrb[0].mxu0
      %v1375 = vadd.f32 0.0, %v1374
      %v1376 = vpop.f32.mrb[0].mxu0
      %v1377 = vpop.f32.mrb[0].mxu0
      %v1378 = vadd.f32 0.0, %v1377
      %v1379 = vpop.f32.mrb[0].mxu0
      %1380 = vmatprep.mubr.bf16.mxu0 0
      %1381 = vmatmul.mubr.bf16.gmra.mrb[0].mxu0 %v1297
      %v1382 = vpop.f32.mrb[0].mxu0
      %v1383 = vadd.f32 0.0, %v1382
      %v1384 = vpop.f32.mrb[0].mxu0
      %v1385 = vpop.f32.mrb[0].mxu0
      %v1386 = vadd.f32 0.0, %v1385
      %v1387 = vpop.f32.mrb[0].mxu0
      %1388 = vmatprep.mubr.bf16.mxu0 0
      %1389 = vmatmul.mubr.bf16.gmra.mrb[0].mxu0 %v1300
      %v1390 = vpop.f32.mrb[0].mxu0
      %v1391 = vadd.f32 0.0, %v1390
      %v1392 = vpop.f32.mrb[0].mxu0
      %v1393 = vpop.f32.mrb[0].mxu0
      %v1394 = vadd.f32 0.0, %v1393
      %v1395 = vpop.f32.mrb[0].mxu0
      %1396 = vmatprep.mubr.bf16.mxu0 0
      %1397 = vmatmul.mubr.bf16.gmra.mrb[0].mxu0 %v1303
      %v1398 = vpop.f32.mrb[0].mxu0
      %v1399 = vadd.f32 0.0, %v1398
      %v1400 = vpop.f32.mrb[0].mxu0
      %v1401 = vpop.f32.mrb[0].mxu0
      %v1402 = vadd.f32 0.0, %v1401
      %v1403 = vpop.f32.mrb[0].mxu0
      %1404 = vdwg.mxu0
      %v1405 = vadd.f32 %v1263, %v1343
      %v1406 = vadd.f32 %v1264, %v1346
      %v1407 = vadd.f32 %v1265, %v1351
      %v1408 = vadd.f32 %v1266, %v1354
      %v1409 = vadd.f32 %v1267, %v1359
      %v1410 = vadd.f32 %v1268, %v1362
      %v1411 = vadd.f32 %v1269, %v1367
      %v1412 = vadd.f32 %v1270, %v1370
      %v1413 = vadd.f32 %v1271, %v1375
      %v1414 = vadd.f32 %v1272, %v1378
      %v1415 = vadd.f32 %v1273, %v1383
      %v1416 = vadd.f32 %v1274, %v1386
      %v1417 = vadd.f32 %v1275, %v1391
      %v1418 = vadd.f32 %v1276, %v1394
      %v1419 = vadd.f32 %v1277, %v1399
      %v1420 = vadd.f32 %v1278, %v1402
      %s1421 = scalar_lea.vmem %s1, 8
      %v1422 = vld [vmem:[%s1421] sm:$0x3]
      %v1424 = vsel %vm761, %v745, 0
      %v1427 = vsel %vm761, %v746, 0
      %v1430 = vsel %vm761, %v747, 0
      %v1433 = vsel %vm761, %v748, 0
      %v1436 = vsel %vm761, %v749, 0
      %v1439 = vsel %vm761, %v750, 0
      %v1442 = vsel %vm761, %v751, 0
      %v1445 = vsel %vm761, %v752, 0
      %v1448 = vand.u32 %v1422, %v789
      %1450 = vmatprep.subr.bf16.mxu0 0
      %1451 = vmatpush1.bf16.msra.mxu0 %v1448
      %1452 = vmatprep.subr.bf16.mxu0 0
      %1453 = vmatpush1.bf16.msra.mxu0 0
      %1454 = vmatprep.subr.bf16.mxu0 0
      %1455 = vmatpush1.bf16.msra.mxu0 0
      %1456 = vmatprep.subr.bf16.mxu0 0
      %1457 = vmatpush1.bf16.msra.mxu0 0
      %1458 = vmatprep.subr.bf16.mxu0 0
      %1459 = vmatpush1.bf16.msra.mxu0 0
      %1460 = vmatprep.subr.bf16.mxu0 0
      %1461 = vmatpush1.bf16.msra.mxu0 0
      %1462 = vmatprep.subr.bf16.mxu0 0
      %1463 = vmatpush1.bf16.msra.mxu0 0
      %1464 = vmatprep.subr.bf16.mxu0 0
      %1465 = vmatpush1.bf16.msra.mxu0 0
      %1466 = vmatprep.subr.bf16.mxu0 0
      %1467 = vmatpush1.bf16.msra.mxu0 0
      %1468 = vmatprep.subr.bf16.mxu0 0
      %1469 = vmatpush1.bf16.msra.mxu0 0
      %1470 = vmatprep.subr.bf16.mxu0 0
      %1471 = vmatpush1.bf16.msra.mxu0 0
      %1472 = vmatprep.subr.bf16.mxu0 0
      %1473 = vmatpush1.bf16.msra.mxu0 0
      %1474 = vmatprep.subr.bf16.mxu0 0
      %1475 = vmatpush1.bf16.msra.mxu0 0
      %1476 = vmatprep.subr.bf16.mxu0 0
      %1477 = vmatpush1.bf16.msra.mxu0 0
      %1478 = vmatprep.subr.bf16.mxu0 0
      %1479 = vmatpush1.bf16.msra.mxu0 0
      %1480 = vmatprep.subr.bf16.mxu0 0
      %1481 = vmatpush1.bf16.msra.mxu0 0
      %1482 = vmatprep.mubr.bf16.mxu0 0
      %1483 = vmatmul.mubr.bf16.gmra.mrb[0].mxu0 %v1424
      %v1484 = vpop.f32.mrb[0].mxu0
      %v1485 = vadd.f32 0.0, %v1484
      %v1486 = vpop.f32.mrb[0].mxu0
      %v1487 = vpop.f32.mrb[0].mxu0
      %v1488 = vadd.f32 0.0, %v1487
      %v1489 = vpop.f32.mrb[0].mxu0
      %1490 = vmatprep.mubr.bf16.mxu0 0
      %1491 = vmatmul.mubr.bf16.gmra.mrb[0].mxu0 %v1427
      %v1492 = vpop.f32.mrb[0].mxu0
      %v1493 = vadd.f32 0.0, %v1492
      %v1494 = vpop.f32.mrb[0].mxu0
      %v1495 = vpop.f32.mrb[0].mxu0
      %v1496 = vadd.f32 0.0, %v1495
      %v1497 = vpop.f32.mrb[0].mxu0
      %1498 = vmatprep.mubr.bf16.mxu0 0
      %1499 = vmatmul.mubr.bf16.gmra.mrb[0].mxu0 %v1430
      %v1500 = vpop.f32.mrb[0].mxu0
      %v1501 = vadd.f32 0.0, %v1500
      %v1502 = vpop.f32.mrb[0].mxu0
      %v1503 = vpop.f32.mrb[0].mxu0
      %v1504 = vadd.f32 0.0, %v1503
      %v1505 = vpop.f32.mrb[0].mxu0
      %1506 = vmatprep.mubr.bf16.mxu0 0
      %1507 = vmatmul.mubr.bf16.gmra.mrb[0].mxu0 %v1433
      %v1508 = vpop.f32.mrb[0].mxu0
      %v1509 = vadd.f32 0.0, %v1508
      %v1510 = vpop.f32.mrb[0].mxu0
      %v1511 = vpop.f32.mrb[0].mxu0
      %v1512 = vadd.f32 0.0, %v1511
      %v1513 = vpop.f32.mrb[0].mxu0
      %1514 = vmatprep.mubr.bf16.mxu0 0
      %1515 = vmatmul.mubr.bf16.gmra.mrb[0].mxu0 %v1436
      %v1516 = vpop.f32.mrb[0].mxu0
      %v1517 = vadd.f32 0.0, %v1516
      %v1518 = vpop.f32.mrb[0].mxu0
      %v1519 = vpop.f32.mrb[0].mxu0
      %v1520 = vadd.f32 0.0, %v1519
      %v1521 = vpop.f32.mrb[0].mxu0
      %1522 = vmatprep.mubr.bf16.mxu0 0
      %1523 = vmatmul.mubr.bf16.gmra.mrb[0].mxu0 %v1439
      %v1524 = vpop.f32.mrb[0].mxu0
      %v1525 = vadd.f32 0.0, %v1524
      %v1526 = vpop.f32.mrb[0].mxu0
      %v1527 = vpop.f32.mrb[0].mxu0
      %v1528 = vadd.f32 0.0, %v1527
      %v1529 = vpop.f32.mrb[0].mxu0
      %1530 = vmatprep.mubr.bf16.mxu0 0
      %1531 = vmatmul.mubr.bf16.gmra.mrb[0].mxu0 %v1442
      %v1532 = vpop.f32.mrb[0].mxu0
      %v1533 = vadd.f32 0.0, %v1532
      %v1534 = vpop.f32.mrb[0].mxu0
      %v1535 = vpop.f32.mrb[0].mxu0
      %v1536 = vadd.f32 0.0, %v1535
      %v1537 = vpop.f32.mrb[0].mxu0
      %1538 = vmatprep.mubr.bf16.mxu0 0
      %1539 = vmatmul.mubr.bf16.gmra.mrb[0].mxu0 %v1445
      %v1540 = vpop.f32.mrb[0].mxu0
      %v1541 = vadd.f32 0.0, %v1540
      %v1542 = vpop.f32.mrb[0].mxu0
      %v1543 = vpop.f32.mrb[0].mxu0
      %v1544 = vadd.f32 0.0, %v1543
      %v1545 = vpop.f32.mrb[0].mxu0
      %1546 = vdwg.mxu0
      %v1547 = vadd.f32 %v1405, %v1485
      %v1548 = vadd.f32 %v1406, %v1488
      %v1549 = vadd.f32 %v1407, %v1493
      %v1550 = vadd.f32 %v1408, %v1496
      %v1551 = vadd.f32 %v1409, %v1501
      %v1552 = vadd.f32 %v1410, %v1504
      %v1553 = vadd.f32 %v1411, %v1509
      %v1554 = vadd.f32 %v1412, %v1512
      %v1555 = vadd.f32 %v1413, %v1517
      %v1556 = vadd.f32 %v1414, %v1520
      %v1557 = vadd.f32 %v1415, %v1525
      %v1558 = vadd.f32 %v1416, %v1528
      %v1559 = vadd.f32 %v1417, %v1533
      %v1560 = vadd.f32 %v1418, %v1536
      %v1561 = vadd.f32 %v1419, %v1541
      %v1562 = vadd.f32 %v1420, %v1544
      %v1563 = vshrl.u32 %v729, 16
      %v1565 = vshll.u32 %v729, 16
      %v1567 = vrot.slane %v1565, 1
      %v1568 = vor.u32 %v1563, %v1567
      %v1570 = vshll.u32 %v730, 16
      %v1572 = vrot.slane %v1570, 1
      %v1573 = vsel %vm1048, %v1568, %v1572
      %v1574 = vshrl.u32 %v731, 16
      %v1576 = vshll.u32 %v731, 16
      %v1578 = vrot.slane %v1576, 1
      %v1579 = vor.u32 %v1574, %v1578
      %v1581 = vshll.u32 %v732, 16
      %v1583 = vrot.slane %v1581, 1
      %v1584 = vsel %vm1048, %v1579, %v1583
      %v1585 = vshrl.u32 %v733, 16
      %v1587 = vshll.u32 %v733, 16
      %v1589 = vrot.slane %v1587, 1
      %v1590 = vor.u32 %v1585, %v1589
      %v1592 = vshll.u32 %v734, 16
      %v1594 = vrot.slane %v1592, 1
      %v1595 = vsel %vm1048, %v1590, %v1594
      %v1596 = vshrl.u32 %v735, 16
      %v1598 = vshll.u32 %v735, 16
      %v1600 = vrot.slane %v1598, 1
      %v1601 = vor.u32 %v1596, %v1600
      %v1603 = vshll.u32 %v736, 16
      %v1605 = vrot.slane %v1603, 1
      %v1606 = vsel %vm1048, %v1601, %v1605
      %v1607 = vshrl.u32 %v737, 16
      %v1609 = vshll.u32 %v737, 16
      %v1611 = vrot.slane %v1609, 1
      %v1612 = vor.u32 %v1607, %v1611
      %v1614 = vshll.u32 %v738, 16
      %v1616 = vrot.slane %v1614, 1
      %v1617 = vsel %vm1048, %v1612, %v1616
      %v1618 = vshrl.u32 %v739, 16
      %v1620 = vshll.u32 %v739, 16
      %v1622 = vrot.slane %v1620, 1
      %v1623 = vor.u32 %v1618, %v1622
      %v1625 = vshll.u32 %v740, 16
      %v1627 = vrot.slane %v1625, 1
      %v1628 = vsel %vm1048, %v1623, %v1627
      %v1629 = vshrl.u32 %v741, 16
      %v1631 = vshll.u32 %v741, 16
      %v1633 = vrot.slane %v1631, 1
      %v1634 = vor.u32 %v1629, %v1633
      %v1636 = vshll.u32 %v742, 16
      %v1638 = vrot.slane %v1636, 1
      %v1639 = vsel %vm1048, %v1634, %v1638
      %v1640 = vshrl.u32 %v743, 16
      %v1642 = vshll.u32 %v743, 16
      %v1644 = vrot.slane %v1642, 1
      %v1645 = vor.u32 %v1640, %v1644
      %v1647 = vshll.u32 %v744, 16
      %v1649 = vrot.slane %v1647, 1
      %v1650 = vsel %vm1048, %v1645, %v1649
      %s1651 = scalar_lea.vmem %s1, 10
      %v1652 = vld [vmem:[%s1651] sm:$0x3]
      %v1654 = vsel %vm761, %v1573, 0
      %v1657 = vsel %vm761, %v1584, 0
      %v1660 = vsel %vm761, %v1595, 0
      %v1663 = vsel %vm761, %v1606, 0
      %v1666 = vsel %vm761, %v1617, 0
      %v1669 = vsel %vm761, %v1628, 0
      %v1672 = vsel %vm761, %v1639, 0
      %v1675 = vsel %vm761, %v1650, 0
      %v1678 = vand.u32 %v1652, %v789
      %1680 = vmatprep.subr.bf16.mxu0 0
      %1681 = vmatpush1.bf16.msra.mxu0 %v1678
      %1682 = vmatprep.subr.bf16.mxu0 0
      %1683 = vmatpush1.bf16.msra.mxu0 0
      %1684 = vmatprep.subr.bf16.mxu0 0
      %1685 = vmatpush1.bf16.msra.mxu0 0
      %1686 = vmatprep.subr.bf16.mxu0 0
      %1687 = vmatpush1.bf16.msra.mxu0 0
      %1688 = vmatprep.subr.bf16.mxu0 0
      %1689 = vmatpush1.bf16.msra.mxu0 0
      %1690 = vmatprep.subr.bf16.mxu0 0
      %1691 = vmatpush1.bf16.msra.mxu0 0
      %1692 = vmatprep.subr.bf16.mxu0 0
      %1693 = vmatpush1.bf16.msra.mxu0 0
      %1694 = vmatprep.subr.bf16.mxu0 0
      %1695 = vmatpush1.bf16.msra.mxu0 0
      %1696 = vmatprep.subr.bf16.mxu0 0
      %1697 = vmatpush1.bf16.msra.mxu0 0
      %1698 = vmatprep.subr.bf16.mxu0 0
      %1699 = vmatpush1.bf16.msra.mxu0 0
      %1700 = vmatprep.subr.bf16.mxu0 0
      %1701 = vmatpush1.bf16.msra.mxu0 0
      %1702 = vmatprep.subr.bf16.mxu0 0
      %1703 = vmatpush1.bf16.msra.mxu0 0
      %1704 = vmatprep.subr.bf16.mxu0 0
      %1705 = vmatpush1.bf16.msra.mxu0 0
      %1706 = vmatprep.subr.bf16.mxu0 0
      %1707 = vmatpush1.bf16.msra.mxu0 0
      %1708 = vmatprep.subr.bf16.mxu0 0
      %1709 = vmatpush1.bf16.msra.mxu0 0
      %1710 = vmatprep.subr.bf16.mxu0 0
      %1711 = vmatpush1.bf16.msra.mxu0 0
      %1712 = vmatprep.mubr.bf16.mxu0 0
      %1713 = vmatmul.mubr.bf16.gmra.mrb[0].mxu0 %v1654
      %v1714 = vpop.f32.mrb[0].mxu0
      %v1715 = vadd.f32 0.0, %v1714
      %v1716 = vpop.f32.mrb[0].mxu0
      %v1717 = vpop.f32.mrb[0].mxu0
      %v1718 = vadd.f32 0.0, %v1717
      %v1719 = vpop.f32.mrb[0].mxu0
      %1720 = vmatprep.mubr.bf16.mxu0 0
      %1721 = vmatmul.mubr.bf16.gmra.mrb[0].mxu0 %v1657
      %v1722 = vpop.f32.mrb[0].mxu0
      %v1723 = vadd.f32 0.0, %v1722
      %v1724 = vpop.f32.mrb[0].mxu0
      %v1725 = vpop.f32.mrb[0].mxu0
      %v1726 = vadd.f32 0.0, %v1725
      %v1727 = vpop.f32.mrb[0].mxu0
      %1728 = vmatprep.mubr.bf16.mxu0 0
      %1729 = vmatmul.mubr.bf16.gmra.mrb[0].mxu0 %v1660
      %v1730 = vpop.f32.mrb[0].mxu0
      %v1731 = vadd.f32 0.0, %v1730
      %v1732 = vpop.f32.mrb[0].mxu0
      %v1733 = vpop.f32.mrb[0].mxu0
      %v1734 = vadd.f32 0.0, %v1733
      %v1735 = vpop.f32.mrb[0].mxu0
      %1736 = vmatprep.mubr.bf16.mxu0 0
      %1737 = vmatmul.mubr.bf16.gmra.mrb[0].mxu0 %v1663
      %v1738 = vpop.f32.mrb[0].mxu0
      %v1739 = vadd.f32 0.0, %v1738
      %v1740 = vpop.f32.mrb[0].mxu0
      %v1741 = vpop.f32.mrb[0].mxu0
      %v1742 = vadd.f32 0.0, %v1741
      %v1743 = vpop.f32.mrb[0].mxu0
      %1744 = vmatprep.mubr.bf16.mxu0 0
      %1745 = vmatmul.mubr.bf16.gmra.mrb[0].mxu0 %v1666
      %v1746 = vpop.f32.mrb[0].mxu0
      %v1747 = vadd.f32 0.0, %v1746
      %v1748 = vpop.f32.mrb[0].mxu0
      %v1749 = vpop.f32.mrb[0].mxu0
      %v1750 = vadd.f32 0.0, %v1749
      %v1751 = vpop.f32.mrb[0].mxu0
      %1752 = vmatprep.mubr.bf16.mxu0 0
      %1753 = vmatmul.mubr.bf16.gmra.mrb[0].mxu0 %v1669
      %v1754 = vpop.f32.mrb[0].mxu0
      %v1755 = vadd.f32 0.0, %v1754
      %v1756 = vpop.f32.mrb[0].mxu0
      %v1757 = vpop.f32.mrb[0].mxu0
      %v1758 = vadd.f32 0.0, %v1757
      %v1759 = vpop.f32.mrb[0].mxu0
      %1760 = vmatprep.mubr.bf16.mxu0 0
      %1761 = vmatmul.mubr.bf16.gmra.mrb[0].mxu0 %v1672
      %v1762 = vpop.f32.mrb[0].mxu0
      %v1763 = vadd.f32 0.0, %v1762
      %v1764 = vpop.f32.mrb[0].mxu0
      %v1765 = vpop.f32.mrb[0].mxu0
      %v1766 = vadd.f32 0.0, %v1765
      %v1767 = vpop.f32.mrb[0].mxu0
      %1768 = vmatprep.mubr.bf16.mxu0 0
      %1769 = vmatmul.mubr.bf16.gmra.mrb[0].mxu0 %v1675
      %v1770 = vpop.f32.mrb[0].mxu0
      %v1771 = vadd.f32 0.0, %v1770
      %v1772 = vpop.f32.mrb[0].mxu0
      %v1773 = vpop.f32.mrb[0].mxu0
      %v1774 = vadd.f32 0.0, %v1773
      %v1775 = vpop.f32.mrb[0].mxu0
      %1776 = vdwg.mxu0
      %v1777 = vadd.f32 %v1547, %v1715
      %v1778 = vadd.f32 %v1548, %v1718
      %v1779 = vadd.f32 %v1549, %v1723
      %v1780 = vadd.f32 %v1550, %v1726
      %v1781 = vadd.f32 %v1551, %v1731
      %v1782 = vadd.f32 %v1552, %v1734
      %v1783 = vadd.f32 %v1553, %v1739
      %v1784 = vadd.f32 %v1554, %v1742
      %v1785 = vadd.f32 %v1555, %v1747
      %v1786 = vadd.f32 %v1556, %v1750
      %v1787 = vadd.f32 %v1557, %v1755
      %v1788 = vadd.f32 %v1558, %v1758
      %v1789 = vadd.f32 %v1559, %v1763
      %v1790 = vadd.f32 %v1560, %v1766
      %v1791 = vadd.f32 %v1561, %v1771
      %v1792 = vadd.f32 %v1562, %v1774
      %s1793 = scalar_lea.vmem %s1, 12
      %v1794 = vld [vmem:[%s1793] sm:$0x3]
      %v1796 = vsel %vm761, %v718, 0
      %v1799 = vand.u32 %v1794, %v789
      %1801 = vmatprep.subr.bf16.mxu0 0
      %1802 = vmatpush1.bf16.msra.mxu0 %v1799
      %1803 = vmatprep.subr.bf16.mxu0 0
      %1804 = vmatpush1.bf16.msra.mxu0 0
      %1805 = vmatprep.subr.bf16.mxu0 0
      %1806 = vmatpush1.bf16.msra.mxu0 0
      %1807 = vmatprep.subr.bf16.mxu0 0
      %1808 = vmatpush1.bf16.msra.mxu0 0
      %1809 = vmatprep.subr.bf16.mxu0 0
      %1810 = vmatpush1.bf16.msra.mxu0 0
      %1811 = vmatprep.subr.bf16.mxu0 0
      %1812 = vmatpush1.bf16.msra.mxu0 0
      %1813 = vmatprep.subr.bf16.mxu0 0
      %1814 = vmatpush1.bf16.msra.mxu0 0
      %1815 = vmatprep.subr.bf16.mxu0 0
      %1816 = vmatpush1.bf16.msra.mxu0 0
      %1817 = vmatprep.subr.bf16.mxu0 0
      %1818 = vmatpush1.bf16.msra.mxu0 0
      %1819 = vmatprep.subr.bf16.mxu0 0
      %1820 = vmatpush1.bf16.msra.mxu0 0
      %1821 = vmatprep.subr.bf16.mxu0 0
      %1822 = vmatpush1.bf16.msra.mxu0 0
      %1823 = vmatprep.subr.bf16.mxu0 0
      %1824 = vmatpush1.bf16.msra.mxu0 0
      %1825 = vmatprep.subr.bf16.mxu0 0
      %1826 = vmatpush1.bf16.msra.mxu0 0
      %1827 = vmatprep.subr.bf16.mxu0 0
      %1828 = vmatpush1.bf16.msra.mxu0 0
      %1829 = vmatprep.subr.bf16.mxu0 0
      %1830 = vmatpush1.bf16.msra.mxu0 0
      %1831 = vmatprep.subr.bf16.mxu0 0
      %1832 = vmatpush1.bf16.msra.mxu0 0
      %1833 = vmatprep.mubr.bf16.mxu0 0
      %1834 = vmatmul.mubr.bf16.gmra.mrb[0].mxu0 %v766
      %v1835 = vpop.f32.mrb[0].mxu0
      %v1836 = vadd.f32 0.0, %v1835
      %v1837 = vpop.f32.mrb[0].mxu0
      %v1838 = vpop.f32.mrb[0].mxu0
      %v1839 = vadd.f32 0.0, %v1838
      %v1840 = vpop.f32.mrb[0].mxu0
      %1841 = vmatprep.mubr.bf16.mxu0 0
      %1842 = vmatmul.mubr.bf16.gmra.mrb[0].mxu0 %v769
      %v1843 = vpop.f32.mrb[0].mxu0
      %v1844 = vadd.f32 0.0, %v1843
      %v1845 = vpop.f32.mrb[0].mxu0
      %v1846 = vpop.f32.mrb[0].mxu0
      %v1847 = vadd.f32 0.0, %v1846
      %v1848 = vpop.f32.mrb[0].mxu0
      %1849 = vmatprep.mubr.bf16.mxu0 0
      %1850 = vmatmul.mubr.bf16.gmra.mrb[0].mxu0 %v772
      %v1851 = vpop.f32.mrb[0].mxu0
      %v1852 = vadd.f32 0.0, %v1851
      %v1853 = vpop.f32.mrb[0].mxu0
      %v1854 = vpop.f32.mrb[0].mxu0
      %v1855 = vadd.f32 0.0, %v1854
      %v1856 = vpop.f32.mrb[0].mxu0
      %1857 = vmatprep.mubr.bf16.mxu0 0
      %1858 = vmatmul.mubr.bf16.gmra.mrb[0].mxu0 %v775
      %v1859 = vpop.f32.mrb[0].mxu0
      %v1860 = vadd.f32 0.0, %v1859
      %v1861 = vpop.f32.mrb[0].mxu0
      %v1862 = vpop.f32.mrb[0].mxu0
      %v1863 = vadd.f32 0.0, %v1862
      %v1864 = vpop.f32.mrb[0].mxu0
      %1865 = vmatprep.mubr.bf16.mxu0 0
      %1866 = vmatmul.mubr.bf16.gmra.mrb[0].mxu0 %v778
      %v1867 = vpop.f32.mrb[0].mxu0
      %v1868 = vadd.f32 0.0, %v1867
      %v1869 = vpop.f32.mrb[0].mxu0
      %v1870 = vpop.f32.mrb[0].mxu0
      %v1871 = vadd.f32 0.0, %v1870
      %v1872 = vpop.f32.mrb[0].mxu0
      %1873 = vmatprep.mubr.bf16.mxu0 0
      %1874 = vmatmul.mubr.bf16.gmra.mrb[0].mxu0 %v781
      %v1875 = vpop.f32.mrb[0].mxu0
      %v1876 = vadd.f32 0.0, %v1875
      %v1877 = vpop.f32.mrb[0].mxu0
      %v1878 = vpop.f32.mrb[0].mxu0
      %v1879 = vadd.f32 0.0, %v1878
      %v1880 = vpop.f32.mrb[0].mxu0
      %1881 = vmatprep.mubr.bf16.mxu0 0
      %1882 = vmatmul.mubr.bf16.gmra.mrb[0].mxu0 %v784
      %v1883 = vpop.f32.mrb[0].mxu0
      %v1884 = vadd.f32 0.0, %v1883
      %v1885 = vpop.f32.mrb[0].mxu0
      %v1886 = vpop.f32.mrb[0].mxu0
      %v1887 = vadd.f32 0.0, %v1886
      %v1888 = vpop.f32.mrb[0].mxu0
      %1889 = vmatprep.mubr.bf16.mxu0 0
      %1890 = vmatmul.mubr.bf16.gmra.mrb[0].mxu0 %v1796
      %v1891 = vpop.f32.mrb[0].mxu0
      %v1892 = vadd.f32 0.0, %v1891
      %v1893 = vpop.f32.mrb[0].mxu0
      %v1894 = vpop.f32.mrb[0].mxu0
      %v1895 = vadd.f32 0.0, %v1894
      %v1896 = vpop.f32.mrb[0].mxu0
      %1897 = vdwg.mxu0
      %v1898 = vadd.f32 %v1777, %v1836
      %v1899 = vadd.f32 %v1778, %v1839
      %v1900 = vadd.f32 %v1779, %v1844
      %v1901 = vadd.f32 %v1780, %v1847
      %v1902 = vadd.f32 %v1781, %v1852
      %v1903 = vadd.f32 %v1782, %v1855
      %v1904 = vadd.f32 %v1783, %v1860
      %v1905 = vadd.f32 %v1784, %v1863
      %v1906 = vadd.f32 %v1785, %v1868
      %v1907 = vadd.f32 %v1786, %v1871
      %v1908 = vadd.f32 %v1787, %v1876
      %v1909 = vadd.f32 %v1788, %v1879
      %v1910 = vadd.f32 %v1789, %v1884
      %v1911 = vadd.f32 %v1790, %v1887
      %v1912 = vadd.f32 %v1791, %v1892
      %v1913 = vadd.f32 %v1792, %v1895
      %s1914 = scalar_lea.vmem %s1, 14
      %v1915 = vld [vmem:[%s1914] sm:$0x3]
      %v1917 = vsel %vm761, %v728, 0
      %v1920 = vand.u32 %v1915, %v789
      %1922 = vmatprep.subr.bf16.mxu0 0
      %1923 = vmatpush1.bf16.msra.mxu0 %v1920
      %1924 = vmatprep.subr.bf16.mxu0 0
      %1925 = vmatpush1.bf16.msra.mxu0 0
      %1926 = vmatprep.subr.bf16.mxu0 0
      %1927 = vmatpush1.bf16.msra.mxu0 0
      %1928 = vmatprep.subr.bf16.mxu0 0
      %1929 = vmatpush1.bf16.msra.mxu0 0
      %1930 = vmatprep.subr.bf16.mxu0 0
      %1931 = vmatpush1.bf16.msra.mxu0 0
      %1932 = vmatprep.subr.bf16.mxu0 0
      %1933 = vmatpush1.bf16.msra.mxu0 0
      %1934 = vmatprep.subr.bf16.mxu0 0
      %1935 = vmatpush1.bf16.msra.mxu0 0
      %1936 = vmatprep.subr.bf16.mxu0 0
      %1937 = vmatpush1.bf16.msra.mxu0 0
      %1938 = vmatprep.subr.bf16.mxu0 0
      %1939 = vmatpush1.bf16.msra.mxu0 0
      %1940 = vmatprep.subr.bf16.mxu0 0
      %1941 = vmatpush1.bf16.msra.mxu0 0
      %1942 = vmatprep.subr.bf16.mxu0 0
      %1943 = vmatpush1.bf16.msra.mxu0 0
      %1944 = vmatprep.subr.bf16.mxu0 0
      %1945 = vmatpush1.bf16.msra.mxu0 0
      %1946 = vmatprep.subr.bf16.mxu0 0
      %1947 = vmatpush1.bf16.msra.mxu0 0
      %1948 = vmatprep.subr.bf16.mxu0 0
      %1949 = vmatpush1.bf16.msra.mxu0 0
      %1950 = vmatprep.subr.bf16.mxu0 0
      %1951 = vmatpush1.bf16.msra.mxu0 0
      %1952 = vmatprep.subr.bf16.mxu0 0
      %1953 = vmatpush1.bf16.msra.mxu0 0
      %1954 = vmatprep.mubr.bf16.mxu0 0
      %1955 = vmatmul.mubr.bf16.gmra.mrb[0].mxu0 %v912
      %v1956 = vpop.f32.mrb[0].mxu0
      %v1957 = vadd.f32 0.0, %v1956
      %v1958 = vpop.f32.mrb[0].mxu0
      %v1959 = vpop.f32.mrb[0].mxu0
      %v1960 = vadd.f32 0.0, %v1959
      %v1961 = vpop.f32.mrb[0].mxu0
      %1962 = vmatprep.mubr.bf16.mxu0 0
      %1963 = vmatmul.mubr.bf16.gmra.mrb[0].mxu0 %v915
      %v1964 = vpop.f32.mrb[0].mxu0
      %v1965 = vadd.f32 0.0, %v1964
      %v1966 = vpop.f32.mrb[0].mxu0
      %v1967 = vpop.f32.mrb[0].mxu0
      %v1968 = vadd.f32 0.0, %v1967
      %v1969 = vpop.f32.mrb[0].mxu0
      %1970 = vmatprep.mubr.bf16.mxu0 0
      %1971 = vmatmul.mubr.bf16.gmra.mrb[0].mxu0 %v918
      %v1972 = vpop.f32.mrb[0].mxu0
      %v1973 = vadd.f32 0.0, %v1972
      %v1974 = vpop.f32.mrb[0].mxu0
      %v1975 = vpop.f32.mrb[0].mxu0
      %v1976 = vadd.f32 0.0, %v1975
      %v1977 = vpop.f32.mrb[0].mxu0
      %1978 = vmatprep.mubr.bf16.mxu0 0
      %1979 = vmatmul.mubr.bf16.gmra.mrb[0].mxu0 %v921
      %v1980 = vpop.f32.mrb[0].mxu0
      %v1981 = vadd.f32 0.0, %v1980
      %v1982 = vpop.f32.mrb[0].mxu0
      %v1983 = vpop.f32.mrb[0].mxu0
      %v1984 = vadd.f32 0.0, %v1983
      %v1985 = vpop.f32.mrb[0].mxu0
      %1986 = vmatprep.mubr.bf16.mxu0 0
      %1987 = vmatmul.mubr.bf16.gmra.mrb[0].mxu0 %v924
      %v1988 = vpop.f32.mrb[0].mxu0
      %v1989 = vadd.f32 0.0, %v1988
      %v1990 = vpop.f32.mrb[0].mxu0
      %v1991 = vpop.f32.mrb[0].mxu0
      %v1992 = vadd.f32 0.0, %v1991
      %v1993 = vpop.f32.mrb[0].mxu0
      %1994 = vmatprep.mubr.bf16.mxu0 0
      %1995 = vmatmul.mubr.bf16.gmra.mrb[0].mxu0 %v927
      %v1996 = vpop.f32.mrb[0].mxu0
      %v1997 = vadd.f32 0.0, %v1996
      %v1998 = vpop.f32.mrb[0].mxu0
      %v1999 = vpop.f32.mrb[0].mxu0
      %v2000 = vadd.f32 0.0, %v1999
      %v2001 = vpop.f32.mrb[0].mxu0
      %2002 = vmatprep.mubr.bf16.mxu0 0
      %2003 = vmatmul.mubr.bf16.gmra.mrb[0].mxu0 %v930
      %v2004 = vpop.f32.mrb[0].mxu0
      %v2005 = vadd.f32 0.0, %v2004
      %v2006 = vpop.f32.mrb[0].mxu0
      %v2007 = vpop.f32.mrb[0].mxu0
      %v2008 = vadd.f32 0.0, %v2007
      %v2009 = vpop.f32.mrb[0].mxu0
      %2010 = vmatprep.mubr.bf16.mxu0 0
      %2011 = vmatmul.mubr.bf16.gmra.mrb[0].mxu0 %v1917
      %v2012 = vpop.f32.mrb[0].mxu0
      %v2013 = vadd.f32 0.0, %v2012
      %v2014 = vpop.f32.mrb[0].mxu0
      %v2015 = vpop.f32.mrb[0].mxu0
      %v2016 = vadd.f32 0.0, %v2015
      %v2017 = vpop.f32.mrb[0].mxu0
      %2018 = vdwg.mxu0
      %v2019 = vadd.f32 %v1898, %v1957
      %v2020 = vadd.f32 %v1899, %v1960
      %v2021 = vadd.f32 %v1900, %v1965
      %v2022 = vadd.f32 %v1901, %v1968
      %v2023 = vadd.f32 %v1902, %v1973
      %v2024 = vadd.f32 %v1903, %v1976
      %v2025 = vadd.f32 %v1904, %v1981
      %v2026 = vadd.f32 %v1905, %v1984
      %v2027 = vadd.f32 %v1906, %v1989
      %v2028 = vadd.f32 %v1907, %v1992
      %v2029 = vadd.f32 %v1908, %v1997
      %v2030 = vadd.f32 %v1909, %v2000
      %v2031 = vadd.f32 %v1910, %v2005
      %v2032 = vadd.f32 %v1911, %v2008
      %v2033 = vadd.f32 %v1912, %v2013
      %v2034 = vadd.f32 %v1913, %v2016
      %v2035 = vshrl.u32 %v718, 16
      %v2037 = vshll.u32 %v718, 16
      %v2039 = vrot.slane %v2037, 1
      %v2040 = vor.u32 %v2035, %v2039
      %v2042 = vshll.u32 %v719, 16
      %v2044 = vrot.slane %v2042, 1
      %v2045 = vsel %vm1048, %v2040, %v2044
      %s2046 = scalar_lea.vmem %s1, 16
      %v2047 = vld [vmem:[%s2046] sm:$0x3]
      %v2049 = vsel %vm761, %v2045, 0
      %v2052 = vand.u32 %v2047, %v789
      %2054 = vmatprep.subr.bf16.mxu0 0
      %2055 = vmatpush1.bf16.msra.mxu0 %v2052
      %2056 = vmatprep.subr.bf16.mxu0 0
      %2057 = vmatpush1.bf16.msra.mxu0 0
      %2058 = vmatprep.subr.bf16.mxu0 0
      %2059 = vmatpush1.bf16.msra.mxu0 0
      %2060 = vmatprep.subr.bf16.mxu0 0
      %2061 = vmatpush1.bf16.msra.mxu0 0
      %2062 = vmatprep.subr.bf16.mxu0 0
      %2063 = vmatpush1.bf16.msra.mxu0 0
      %2064 = vmatprep.subr.bf16.mxu0 0
      %2065 = vmatpush1.bf16.msra.mxu0 0
      %2066 = vmatprep.subr.bf16.mxu0 0
      %2067 = vmatpush1.bf16.msra.mxu0 0
      %2068 = vmatprep.subr.bf16.mxu0 0
      %2069 = vmatpush1.bf16.msra.mxu0 0
      %2070 = vmatprep.subr.bf16.mxu0 0
      %2071 = vmatpush1.bf16.msra.mxu0 0
      %2072 = vmatprep.subr.bf16.mxu0 0
      %2073 = vmatpush1.bf16.msra.mxu0 0
      %2074 = vmatprep.subr.bf16.mxu0 0
      %2075 = vmatpush1.bf16.msra.mxu0 0
      %2076 = vmatprep.subr.bf16.mxu0 0
      %2077 = vmatpush1.bf16.msra.mxu0 0
      %2078 = vmatprep.subr.bf16.mxu0 0
      %2079 = vmatpush1.bf16.msra.mxu0 0
      %2080 = vmatprep.subr.bf16.mxu0 0
      %2081 = vmatpush1.bf16.msra.mxu0 0
      %2082 = vmatprep.subr.bf16.mxu0 0
      %2083 = vmatpush1.bf16.msra.mxu0 0
      %2084 = vmatprep.subr.bf16.mxu0 0
      %2085 = vmatpush1.bf16.msra.mxu0 0
      %2086 = vmatprep.mubr.bf16.mxu0 0
      %2087 = vmatmul.mubr.bf16.gmra.mrb[0].mxu0 %v1143
      %v2088 = vpop.f32.mrb[0].mxu0
      %v2089 = vadd.f32 0.0, %v2088
      %v2090 = vpop.f32.mrb[0].mxu0
      %v2091 = vpop.f32.mrb[0].mxu0
      %v2092 = vadd.f32 0.0, %v2091
      %v2093 = vpop.f32.mrb[0].mxu0
      %2094 = vmatprep.mubr.bf16.mxu0 0
      %2095 = vmatmul.mubr.bf16.gmra.mrb[0].mxu0 %v1146
      %v2096 = vpop.f32.mrb[0].mxu0
      %v2097 = vadd.f32 0.0, %v2096
      %v2098 = vpop.f32.mrb[0].mxu0
      %v2099 = vpop.f32.mrb[0].mxu0
      %v2100 = vadd.f32 0.0, %v2099
      %v2101 = vpop.f32.mrb[0].mxu0
      %2102 = vmatprep.mubr.bf16.mxu0 0
      %2103 = vmatmul.mubr.bf16.gmra.mrb[0].mxu0 %v1149
      %v2104 = vpop.f32.mrb[0].mxu0
      %v2105 = vadd.f32 0.0, %v2104
      %v2106 = vpop.f32.mrb[0].mxu0
      %v2107 = vpop.f32.mrb[0].mxu0
      %v2108 = vadd.f32 0.0, %v2107
      %v2109 = vpop.f32.mrb[0].mxu0
      %2110 = vmatprep.mubr.bf16.mxu0 0
      %2111 = vmatmul.mubr.bf16.gmra.mrb[0].mxu0 %v1152
      %v2112 = vpop.f32.mrb[0].mxu0
      %v2113 = vadd.f32 0.0, %v2112
      %v2114 = vpop.f32.mrb[0].mxu0
      %v2115 = vpop.f32.mrb[0].mxu0
      %v2116 = vadd.f32 0.0, %v2115
      %v2117 = vpop.f32.mrb[0].mxu0
      %2118 = vmatprep.mubr.bf16.mxu0 0
      %2119 = vmatmul.mubr.bf16.gmra.mrb[0].mxu0 %v1155
      %v2120 = vpop.f32.mrb[0].mxu0
      %v2121 = vadd.f32 0.0, %v2120
      %v2122 = vpop.f32.mrb[0].mxu0
      %v2123 = vpop.f32.mrb[0].mxu0
      %v2124 = vadd.f32 0.0, %v2123
      %v2125 = vpop.f32.mrb[0].mxu0
      %2126 = vmatprep.mubr.bf16.mxu0 0
      %2127 = vmatmul.mubr.bf16.gmra.mrb[0].mxu0 %v1158
      %v2128 = vpop.f32.mrb[0].mxu0
      %v2129 = vadd.f32 0.0, %v2128
      %v2130 = vpop.f32.mrb[0].mxu0
      %v2131 = vpop.f32.mrb[0].mxu0
      %v2132 = vadd.f32 0.0, %v2131
      %v2133 = vpop.f32.mrb[0].mxu0
      %2134 = vmatprep.mubr.bf16.mxu0 0
      %2135 = vmatmul.mubr.bf16.gmra.mrb[0].mxu0 %v1161
      %v2136 = vpop.f32.mrb[0].mxu0
      %v2137 = vadd.f32 0.0, %v2136
      %v2138 = vpop.f32.mrb[0].mxu0
      %v2139 = vpop.f32.mrb[0].mxu0
      %v2140 = vadd.f32 0.0, %v2139
      %v2141 = vpop.f32.mrb[0].mxu0
      %2142 = vmatprep.mubr.bf16.mxu0 0
      %2143 = vmatmul.mubr.bf16.gmra.mrb[0].mxu0 %v2049
      %v2144 = vpop.f32.mrb[0].mxu0
      %v2145 = vadd.f32 0.0, %v2144
      %v2146 = vpop.f32.mrb[0].mxu0
      %v2147 = vpop.f32.mrb[0].mxu0
      %v2148 = vadd.f32 0.0, %v2147
      %v2149 = vpop.f32.mrb[0].mxu0
      %2150 = vdwg.mxu0
      %v2151 = vadd.f32 %v2019, %v2089
      %v2152 = vadd.f32 %v2020, %v2092
      %v2153 = vadd.f32 %v2021, %v2097
      %v2154 = vadd.f32 %v2022, %v2100
      %v2155 = vadd.f32 %v2023, %v2105
      %v2156 = vadd.f32 %v2024, %v2108
      %v2157 = vadd.f32 %v2025, %v2113
      %v2158 = vadd.f32 %v2026, %v2116
      %v2159 = vadd.f32 %v2027, %v2121
      %v2160 = vadd.f32 %v2028, %v2124
      %v2161 = vadd.f32 %v2029, %v2129
      %v2162 = vadd.f32 %v2030, %v2132
      %v2163 = vadd.f32 %v2031, %v2137
      %v2164 = vadd.f32 %v2032, %v2140
      %v2165 = vadd.f32 %v2033, %v2145
      %v2166 = vadd.f32 %v2034, %v2148
      %v2167 = vmax.f32 %v2151, 0.0
      %v2168 = vmax.f32 %v2152, 0.0
      %v2169 = vmax.f32 %v2153, 0.0
      %v2170 = vmax.f32 %v2154, 0.0
      %v2171 = vmax.f32 %v2155, 0.0
      %v2172 = vmax.f32 %v2156, 0.0
      %v2173 = vmax.f32 %v2157, 0.0
      %v2174 = vmax.f32 %v2158, 0.0
      %v2175 = vmax.f32 %v2159, 0.0
      %v2176 = vmax.f32 %v2160, 0.0
      %v2177 = vmax.f32 %v2161, 0.0
      %v2178 = vmax.f32 %v2162, 0.0
      %v2179 = vmax.f32 %v2163, 0.0
      %v2180 = vmax.f32 %v2164, 0.0
      %v2181 = vmax.f32 %v2165, 0.0
      %v2182 = vmax.f32 %v2166, 0.0
      %v2183 = vpack.c.bf16 %v2168, %v2167
      %v2184 = vpack.c.bf16 %v2170, %v2169
      %v2185 = vpack.c.bf16 %v2172, %v2171
      %v2186 = vpack.c.bf16 %v2174, %v2173
      %v2187 = vpack.c.bf16 %v2176, %v2175
      %v2188 = vpack.c.bf16 %v2178, %v2177
      %v2189 = vpack.c.bf16 %v2180, %v2179
      %v2190 = vpack.c.bf16 %v2182, %v2181
      %v2199 = vunpack.c.l.b16 %v2183
      %v2200 = vunpack.c.h.b16 %v2183
      %v2201 = vunpack.c.l.b16 %v2184
      %v2202 = vunpack.c.h.b16 %v2184
      %v2203 = vunpack.c.l.b16 %v2185
      %v2204 = vunpack.c.h.b16 %v2185
      %v2205 = vunpack.c.l.b16 %v2186
      %v2206 = vunpack.c.h.b16 %v2186
      %v2207 = vunpack.c.l.b16 %v2187
      %v2208 = vunpack.c.h.b16 %v2187
      %v2209 = vunpack.c.l.b16 %v2188
      %v2210 = vunpack.c.h.b16 %v2188
      %v2211 = vunpack.c.l.b16 %v2189
      %v2212 = vunpack.c.h.b16 %v2189
      %v2213 = vunpack.c.l.b16 %v2190
      %v2214 = vunpack.c.h.b16 %v2190
      %v2215 = vpack.c.b16 %v2199, %v2199
      %v2216 = vpack.c.b16 %v2200, %v2200
      %v2217 = vpack.c.b16 %v2201, %v2201
      %v2218 = vpack.c.b16 %v2202, %v2202
      %v2219 = vpack.c.b16 %v2203, %v2203
      %v2220 = vpack.c.b16 %v2204, %v2204
      %v2221 = vpack.c.b16 %v2205, %v2205
      %v2222 = vpack.c.b16 %v2206, %v2206
      %v2223 = vpack.c.b16 %v2207, %v2207
      %v2224 = vpack.c.b16 %v2208, %v2208
      %v2225 = vpack.c.b16 %v2209, %v2209
      %v2226 = vpack.c.b16 %v2210, %v2210
      %v2227 = vpack.c.b16 %v2211, %v2211
      %v2228 = vpack.c.b16 %v2212, %v2212
      %v2229 = vpack.c.b16 %v2213, %v2213
      %v2230 = vpack.c.b16 %v2214, %v2214
      %2247 = vst [vmem:[%s260] sm:$0xf] %v2215
      %2248 = vst [vmem:[%s260 + $0x4] sm:$0xf] %v2216
      %2249 = vst [vmem:[%s260 + $0x8] sm:$0xf] %v2217
      %2250 = vst [vmem:[%s260 + $0xc] sm:$0xf] %v2218
      %2251 = vst [vmem:[%s260 + $0x10] sm:$0xf] %v2219
      %2252 = vst [vmem:[%s260 + $0x14] sm:$0xf] %v2220
      %2253 = vst [vmem:[%s260 + $0x18] sm:$0xf] %v2221
      %2254 = vst [vmem:[%s260 + $0x1c] sm:$0xf] %v2222
      %2255 = vst [vmem:[%s260 + $0x20] sm:$0xf] %v2223
      %2256 = vst [vmem:[%s260 + $0x24] sm:$0xf] %v2224
      %2257 = vst [vmem:[%s260 + $0x28] sm:$0xf] %v2225
      %2258 = vst [vmem:[%s260 + $0x2c] sm:$0xf] %v2226
      %2259 = vst [vmem:[%s260 + $0x30] sm:$0xf] %v2227
      %2260 = vst [vmem:[%s260 + $0x34] sm:$0xf] %v2228
      %2261 = vst [vmem:[%s260 + $0x38] sm:$0xf] %v2229
      %2262 = vst [vmem:[%s260 + $0x3c] sm:$0xf] %v2230
      %s2263 = smul.u32 16, %s21
      %p2264 = scmp.lt.s32.totalorder %s20, 1
      %s2265 = scalar_select %p2264, %s20, 1
      %p2266 = scmp.lt.s32.totalorder %s2263, 31
      %s2267 = scalar_select %p2266, %s2263, 31
      %s2268 = smul.addr %s2265, 32
      %s2269 = sadd.s32 %s2267, %s2268
      %s2270 = smul.addr %s2269, 4
      %s2271 = scalar_lea.vmem %s5, %s2270
      // Predicated region
      $region41: #{ddn_fcos3d_forward.9} parent=39 // pred_check
        %p2272 = pneg %p160
      $region42: #{ddn_fcos3d_forward.9} parent=39 // pred_check_branch
        %2274 = sbr.rel (%p2272) target = $region44
      $region43: #{ddn_fcos3d_forward.9} parent=39 // pred_region
        %s2275 = smul.u32 16, %s21
      $region44: #{ddn_fcos3d_forward.9} parent=39 // pred_fallthru
        _
    $region40: #{ddn_fcos3d_forward.9} parent=5 // pred_fallthru
      _
    %p2276 = scmp.le.s32.totalorder 2, %s11
    // Predicated region
    $region45: #{ddn_fcos3d_forward.9} parent=5 // pred_check
      %p2277 = pneg %p2276
    $region46: #{ddn_fcos3d_forward.9} parent=5 // pred_check_branch
      %2279 = sbr.rel (%p2277) target = $region48
    $region47: #{ddn_fcos3d_forward.9} parent=5 // pred_region
      %s2280 = ssub.s32 %s11, 2
      // Predicated region
      $region49: #{ddn_fcos3d_forward.9} parent=47 // pred_check
        %p2281 = pneg %p166
      $region50: #{ddn_fcos3d_forward.9} parent=47 // pred_check_branch
        %2283 = sbr.rel (%p2281) target = $region52
      $region51: #{ddn_fcos3d_forward.9} parent=47 // pred_region
        %s2284 = smul.u32 16, %s23
        %p2285 = scmp.lt.s32.totalorder %s22, 1
        %s2286 = scalar_select %p2285, %s22, 1
        %p2287 = scmp.lt.s32.totalorder %s2284, 31
        %s2288 = scalar_select %p2287, %s2284, 31
        %s2289 = smul.addr %s2286, 32
        %s2290 = sadd.s32 %s2288, %s2289
        %s2291 = smul.addr %s2290, 4
        %s2292 = scalar_lea.vmem %s5, %s2291
      $region52: #{ddn_fcos3d_forward.9} parent=47 // pred_fallthru
        _
    $region48: #{ddn_fcos3d_forward.9} parent=5 // pred_fallthru
      _
  $region6: #{ddn_fcos3d_forward.9} parent=0 // loop_footer
    %s15 = sadd.s32 1, %s11
  $region7: #{ddn_fcos3d_forward.9} parent=0 // loop_footer_branch
    %10 = sbr.rel target = $region3
  $region8: #{ddn_fcos3d_forward.9} parent=0 // loop_exit
    _

// kernel: ddn_fcos3d_forward.10
$region0: #{ddn_fcos3d_forward.10}
  #allocation0 [shape = 'u32[]', space=smem, size = 0x4, offset = 0x4, fixed_abs, tag = 'smem constant byte address 0x4 - core index']
  #allocation1 [shape = 'u32[144,128]{1,0:T(1,128)}', space=vmem, size = 0x12000, scoped, tag = 'internal scratch']
  %s0 = inlined_call_operand.vmem [shape: bf16[2,2,1,10,18,128], index: 0, kind: input, shape index: {}]
  %s1 = inlined_call_operand.vmem [shape: bf16[1152,128], index: 1, kind: input, shape index: {}]
  %s2 = inlined_call_operand.vmem [shape: f32[1,128], index: 2, kind: input, shape index: {}]
  %s3 = inlined_call_operand.vmem [shape: bf16[2,256,128], index: 3, kind: output, shape index: {}]
  %s4 = sld [smem:[#allocation0]]
  $region45: #{ddn_fcos3d_forward.10} parent=0
    _
  %s6 = ssub.s32 1, %s4
  %s7 = scalar_select 0, %s6, %s4
  loop: start=0, step=1, limit=6
  $region2: #{ddn_fcos3d_forward.10} parent=0 // loop_pre_header
    _
  $region3: #{ddn_fcos3d_forward.10} parent=0 // loop_header
    %s9 = sphi 0, %s13
    %p10 = scmp.ge.s32.totalorder %s9, 6
    %s16 = sphi 0, %s28
    %s17 = sphi 0, %s24
    %s18 = sphi 0, %s16
    %s19 = sphi 0, %s17
    %s20 = sphi 0, %s18
    %s21 = sphi 0, %s19
    %s33 = sphi 0, %s35
    %s36 = sphi 0, %s33
    %s37 = sphi 0, %s36
    %s53 = sphi 0, %s37
    %s57 = sphi 0, %s57
    %s59 = sphi 0, %s57
    %s60 = sphi 0, %s59
    %s74 = sphi 0, %s60
    %s78 = sphi 0, %s78
    %s80 = sphi 0, %s78
    %s81 = sphi 0, %s80
    %s95 = sphi 0, %s81
    %s103 = sphi 0, %s105
    %s106 = sphi 0, %s103
    %s107 = sphi 0, %s106
    %s123 = sphi 0, %s107
  $region4: #{ddn_fcos3d_forward.10} parent=0 // loop_header_branch
    %12 = sbr.rel (%p10) target = $region8
  $region5: #{ddn_fcos3d_forward.10} parent=0 // loop_body
    %s14 = ssub.s32 %s9, 1
    %s15 = ssub.s32 %s9, 2
    %s22 = sadd.s32 1, %s17
    %p23 = scmp.ge.s32.totalorder %s22, 2
    %s24 = scalar_select %p23, 0, %s22
    %s25 = sadd.s32 1, %s16
    %s26 = scalar_select %p23, %s25, %s16
    %p27 = scmp.ge.s32.totalorder %s26, 2
    %s28 = scalar_select %p27, 0, %s26
    %s29 = ssub.s32 %s16, %s28
    %s30 = ssub.s32 %s17, %s24
    %s31 = sor.u32 %s29, %s30
    %p32 = scmp.eq.s32.totalorder %s31, 0
    %s34 = sadd.s32 %s33, 1
    %s35 = scalar_select %p32, %s33, %s34
    %p38 = pneg %p32
    %p39 = scmp.eq.s32.totalorder %s9, 3
    %p40 = por %p38, %p39
    %p41 = scmp.ne.s32.totalorder %s33, %s36
    %p42 = scmp.eq.s32.totalorder %s9, 0
    %p43 = por %p41, %p42
    %p44 = scmp.ne.s32.totalorder %s33, %s36
    %p45 = scmp.eq.s32.totalorder %s14, 3
    %p46 = por %p44, %p45
    %p47 = scmp.ne.s32.totalorder %s36, %s37
    %p48 = scmp.eq.s32.totalorder %s14, 0
    %p49 = por %p47, %p48
    %p50 = scmp.ne.s32.totalorder %s36, %s37
    %p51 = scmp.eq.s32.totalorder %s15, 3
    %p52 = por %p50, %p51
    %p54 = scmp.ne.s32.totalorder %s37, %s53
    %p55 = scmp.eq.s32.totalorder %s15, 0
    %p56 = por %p54, %p55
    %s58 = sadd.s32 %s57, 1
    %p61 = scmp.eq.s32.totalorder %s9, 3
    %p62 = scmp.ne.s32.totalorder %s57, %s59
    %p63 = scmp.eq.s32.totalorder %s9, 0
    %p64 = por %p62, %p63
    %p65 = scmp.ne.s32.totalorder %s57, %s59
    %p66 = scmp.eq.s32.totalorder %s14, 3
    %p67 = por %p65, %p66
    %p68 = scmp.ne.s32.totalorder %s59, %s60
    %p69 = scmp.eq.s32.totalorder %s14, 0
    %p70 = por %p68, %p69
    %p71 = scmp.ne.s32.totalorder %s59, %s60
    %p72 = scmp.eq.s32.totalorder %s15, 3
    %p73 = por %p71, %p72
    %p75 = scmp.ne.s32.totalorder %s60, %s74
    %p76 = scmp.eq.s32.totalorder %s15, 0
    %p77 = por %p75, %p76
    %s79 = sadd.s32 %s78, 1
    %p82 = scmp.eq.s32.totalorder %s9, 3
    %p83 = scmp.ne.s32.totalorder %s78, %s80
    %p84 = scmp.eq.s32.totalorder %s9, 0
    %p85 = por %p83, %p84
    %p86 = scmp.ne.s32.totalorder %s78, %s80
    %p87 = scmp.eq.s32.totalorder %s14, 3
    %p88 = por %p86, %p87
    %p89 = scmp.ne.s32.totalorder %s80, %s81
    %p90 = scmp.eq.s32.totalorder %s14, 0
    %p91 = por %p89, %p90
    %p92 = scmp.ne.s32.totalorder %s80, %s81
    %p93 = scmp.eq.s32.totalorder %s15, 3
    %p94 = por %p92, %p93
    %p96 = scmp.ne.s32.totalorder %s81, %s95
    %p97 = scmp.eq.s32.totalorder %s15, 0
    %p98 = por %p96, %p97
    %s99 = ssub.s32 %s16, %s28
    %s100 = ssub.s32 %s17, %s24
    %s101 = sor.u32 %s99, %s100
    %p102 = scmp.eq.s32.totalorder %s101, 0
    %s104 = sadd.s32 %s103, 1
    %s105 = scalar_select %p102, %s103, %s104
    %p108 = pneg %p102
    %p109 = scmp.eq.s32.totalorder %s9, 3
    %p110 = por %p108, %p109
    %p111 = scmp.ne.s32.totalorder %s103, %s106
    %p112 = scmp.eq.s32.totalorder %s9, 0
    %p113 = por %p111, %p112
    %p114 = scmp.ne.s32.totalorder %s103, %s106
    %p115 = scmp.eq.s32.totalorder %s14, 3
    %p116 = por %p114, %p115
    %p117 = scmp.ne.s32.totalorder %s106, %s107
    %p118 = scmp.eq.s32.totalorder %s14, 0
    %p119 = por %p117, %p118
    %p120 = scmp.ne.s32.totalorder %s106, %s107
    %p121 = scmp.eq.s32.totalorder %s15, 3
    %p122 = por %p120, %p121
    %p124 = scmp.ne.s32.totalorder %s107, %s123
    %p125 = scmp.eq.s32.totalorder %s15, 0
    %p126 = por %p124, %p125
    %p127 = scmp.le.s32.totalorder 1, %s9
    %p128 = scmp.lt.s32.totalorder %s9, 5
    %p129 = pnand %p127, %p128
    %p130 = pneg %p129
    // Predicated region
    $region9: #{ddn_fcos3d_forward.10} parent=5 // pred_check
      _
    $region10: #{ddn_fcos3d_forward.10} parent=5 // pred_check_branch
      %132 = sbr.rel (%p129) target = $region12
    $region11: #{ddn_fcos3d_forward.10} parent=5 // pred_region
      %s133 = ssub.s32 %s9, 1
      // Predicated region
      $region13: #{ddn_fcos3d_forward.10} parent=11 // pred_check
        %p134 = pneg %p70
      $region14: #{ddn_fcos3d_forward.10} parent=11 // pred_check_branch
        %136 = sbr.rel (%p134) target = $region16
      $region15: #{ddn_fcos3d_forward.10} parent=11 // pred_region
        _
      $region16: #{ddn_fcos3d_forward.10} parent=11 // pred_fallthru
        _
      // Predicated region
      $region17: #{ddn_fcos3d_forward.10} parent=11 // pred_check
        %p137 = pneg %p91
      $region18: #{ddn_fcos3d_forward.10} parent=11 // pred_check_branch
        %139 = sbr.rel (%p137) target = $region20
      $region19: #{ddn_fcos3d_forward.10} parent=11 // pred_region
        _
      $region20: #{ddn_fcos3d_forward.10} parent=11 // pred_fallthru
        _
    $region12: #{ddn_fcos3d_forward.10} parent=5 // pred_fallthru
      _
    %p140 = scmp.lt.s32.totalorder %s9, 4
    // Predicated region
    $region21: #{ddn_fcos3d_forward.10} parent=5 // pred_check
      %p141 = pneg %p140
    $region22: #{ddn_fcos3d_forward.10} parent=5 // pred_check_branch
      %143 = sbr.rel (%p141) target = $region24
    $region23: #{ddn_fcos3d_forward.10} parent=5 // pred_region
      // Predicated region
      $region25: #{ddn_fcos3d_forward.10} parent=23 // pred_check
        %p144 = pneg %p43
      $region26: #{ddn_fcos3d_forward.10} parent=23 // pred_check_branch
        %146 = sbr.rel (%p144) target = $region28
      $region27: #{ddn_fcos3d_forward.10} parent=23 // pred_region
        %p147 = scmp.lt.s32.totalorder %s16, 1
        %s148 = scalar_select %p147, %s16, 1
        %p149 = scmp.lt.s32.totalorder %s17, 1
        %s150 = scalar_select %p149, %s17, 1
        %s151 = smul.addr %s150, 30
        %s152 = smul.addr %s148, 60
        %s153 = sadd.s32 %s151, %s152
        %s154 = smul.addr %s153, 4
        %s155 = scalar_lea.vmem %s0, %s154
      $region28: #{ddn_fcos3d_forward.10} parent=23 // pred_fallthru
        _
    $region24: #{ddn_fcos3d_forward.10} parent=5 // pred_fallthru
      _
    %p156 = scmp.le.s32.totalorder 1, %s9
    %p157 = scmp.lt.s32.totalorder %s9, 5
    %p158 = pnand %p156, %p157
    %p159 = pneg %p158
    // Predicated region
    $region29: #{ddn_fcos3d_forward.10} parent=5 // pred_check
      _
    $region30: #{ddn_fcos3d_forward.10} parent=5 // pred_check_branch
      %161 = sbr.rel (%p158) target = $region32
    $region31: #{ddn_fcos3d_forward.10} parent=5 // pred_region
      %s162 = ssub.s32 %s9, 1
      %p163 = scmp.lt.s32.totalorder %s18, 1
      %s164 = scalar_select %p163, %s18, 1
      %p165 = scmp.lt.s32.totalorder %s19, 1
      %s166 = scalar_select %p165, %s19, 1
      %s167 = smul.addr %s166, 30
      %s168 = smul.addr %s164, 60
      %s169 = sadd.s32 %s167, %s168
      %s170 = smul.addr %s169, 4
      %s171 = scalar_lea.vmem %s0, %s170
      %p172 = pneg %p49
      %p173 = pneg %p46
      %p174 = pneg %p70
      %p175 = pneg %p67
      %p176 = pneg %p91
      %p177 = pneg %p88
      %p178 = pneg %p119
      %p179 = pneg %p116
      %s180 = smul.u32 16, %s19
      %p181 = scmp.lt.s32.totalorder %s18, 1
      %s182 = scalar_select %p181, %s18, 1
      %p183 = scmp.lt.s32.totalorder %s180, 31
      %s184 = scalar_select %p183, %s180, 31
      %s185 = smul.addr %s182, 32
      %s186 = sadd.s32 %s184, %s185
      %s187 = smul.addr %s186, 4
      %s188 = scalar_lea.vmem %s3, %s187
      %p189 = scmp.lt.s32.totalorder %s18, 1
      %s190 = scalar_select %p189, %s18, 1
      %p191 = scmp.lt.s32.totalorder %s19, 1
      %s192 = scalar_select %p191, %s19, 1
      %s193 = smul.addr %s192, 30
      %s194 = smul.addr %s190, 60
      %s195 = sadd.s32 %s193, %s194
      %s196 = smul.addr %s195, 4
      %s197 = scalar_lea.vmem %s0, %s196
      %s198 = smul.u32 16, %s19
      %p199 = scmp.lt.s32.totalorder %s18, 1
      %s200 = scalar_select %p199, %s18, 1
      %p201 = scmp.lt.s32.totalorder %s198, 31
      %s202 = scalar_select %p201, %s198, 31
      %s203 = smul.addr %s200, 32
      %s204 = sadd.s32 %s202, %s203
      %s205 = smul.addr %s204, 4
      %s206 = scalar_lea.vmem %s3, %s205
      %s207 = smul.u32 16, %s19
      %v209 = vld [vmem:[%s197] sm:$0xf]
      %v210 = vld [vmem:[%s197 + $0x4] sm:$0xf]
      %v211 = vld [vmem:[%s197 + $0x8] sm:$0x1]
      %v212 = vld [vmem:[%s197 + $0xc] sm:$0xf]
      %v213 = vld [vmem:[%s197 + $0x10] sm:$0xf]
      %v214 = vld [vmem:[%s197 + $0x14] sm:$0x1]
      %v215 = vld [vmem:[%s197 + $0x18] sm:$0xf]
      %v216 = vld [vmem:[%s197 + $0x1c] sm:$0xf]
      %v217 = vld [vmem:[%s197 + $0x20] sm:$0x1]
      %v218 = vld [vmem:[%s197 + $0x24] sm:$0xf]
      %v219 = vld [vmem:[%s197 + $0x28] sm:$0xf]
      %v220 = vld [vmem:[%s197 + $0x2c] sm:$0x1]
      %v221 = vld [vmem:[%s197 + $0x30] sm:$0xf]
      %v222 = vld [vmem:[%s197 + $0x34] sm:$0xf]
      %v223 = vld [vmem:[%s197 + $0x38] sm:$0x1]
      %v224 = vld [vmem:[%s197 + $0x3c] sm:$0xf]
      %v225 = vld [vmem:[%s197 + $0x40] sm:$0xf]
      %v226 = vld [vmem:[%s197 + $0x44] sm:$0x1]
      %v227 = vld [vmem:[%s197 + $0x48] sm:$0xf]
      %v228 = vld [vmem:[%s197 + $0x4c] sm:$0xf]
      %v229 = vld [vmem:[%s197 + $0x50] sm:$0x1]
      %v230 = vld [vmem:[%s197 + $0x54] sm:$0xf]
      %v231 = vld [vmem:[%s197 + $0x58] sm:$0xf]
      %v232 = vld [vmem:[%s197 + $0x5c] sm:$0x1]
      %v233 = vld [vmem:[%s197 + $0x60] sm:$0xf]
      %v234 = vld [vmem:[%s197 + $0x64] sm:$0xf]
      %v235 = vld [vmem:[%s197 + $0x68] sm:$0x1]
      %v236 = vld [vmem:[%s197 + $0x6c] sm:$0xf]
      %v237 = vld [vmem:[%s197 + $0x70] sm:$0xf]
      %v238 = vld [vmem:[%s197 + $0x74] sm:$0x1]
      %vm239 = vsmask.f32 3328
      %vm240 = vsmask.f32 7440
      %vm241 = vmor %vm239, %vm240
      %v243 = vshrl.u32 %v209, 16
      %v245 = vrot.slane %v243, 4
      %v246 = vshll.u32 %v209, 16
      %v248 = vrot.slane %v246, 5
      %v249 = vor.u32 %v245, %v248
      %v250 = vrot.slane %v249, 4
      %v252 = vshll.u32 %v210, 16
      %v254 = vrot.slane %v252, 5
      %v255 = vsel %vm241, %v250, %v254
      %v256 = vshrl.u32 %v210, 16
      %v258 = vrot.slane %v256, 4
      %v259 = vor.u32 %v258, %v254
      %v260 = vrot.slane %v259, 4
      %v262 = vshll.u32 %v211, 16
      %v264 = vrot.slane %v262, 5
      %v265 = vsel %vm241, %v260, %v264
      %v267 = vshrl.u32 %v212, 16
      %v269 = vrot.slane %v267, 4
      %v270 = vshll.u32 %v212, 16
      %v272 = vrot.slane %v270, 5
      %v273 = vor.u32 %v269, %v272
      %v274 = vrot.slane %v273, 4
      %v276 = vshll.u32 %v213, 16
      %v278 = vrot.slane %v276, 5
      %v279 = vsel %vm241, %v274, %v278
      %v280 = vshrl.u32 %v213, 16
      %v282 = vrot.slane %v280, 4
      %v283 = vor.u32 %v282, %v278
      %v284 = vrot.slane %v283, 4
      %v286 = vshll.u32 %v214, 16
      %v288 = vrot.slane %v286, 5
      %v289 = vsel %vm241, %v284, %v288
      %v291 = vshrl.u32 %v215, 16
      %v293 = vrot.slane %v291, 4
      %v294 = vshll.u32 %v215, 16
      %v296 = vrot.slane %v294, 5
      %v297 = vor.u32 %v293, %v296
      %v298 = vrot.slane %v297, 4
      %v300 = vshll.u32 %v216, 16
      %v302 = vrot.slane %v300, 5
      %v303 = vsel %vm241, %v298, %v302
      %v304 = vshrl.u32 %v216, 16
      %v306 = vrot.slane %v304, 4
      %v307 = vor.u32 %v306, %v302
      %v308 = vrot.slane %v307, 4
      %v310 = vshll.u32 %v217, 16
      %v312 = vrot.slane %v310, 5
      %v313 = vsel %vm241, %v308, %v312
      %v315 = vshrl.u32 %v218, 16
      %v317 = vrot.slane %v315, 4
      %v318 = vshll.u32 %v218, 16
      %v320 = vrot.slane %v318, 5
      %v321 = vor.u32 %v317, %v320
      %v322 = vrot.slane %v321, 4
      %v324 = vshll.u32 %v219, 16
      %v326 = vrot.slane %v324, 5
      %v327 = vsel %vm241, %v322, %v326
      %v328 = vshrl.u32 %v219, 16
      %v330 = vrot.slane %v328, 4
      %v331 = vor.u32 %v330, %v326
      %v332 = vrot.slane %v331, 4
      %v334 = vshll.u32 %v220, 16
      %v336 = vrot.slane %v334, 5
      %v337 = vsel %vm241, %v332, %v336
      %v339 = vshrl.u32 %v221, 16
      %v341 = vrot.slane %v339, 4
      %v342 = vshll.u32 %v221, 16
      %v344 = vrot.slane %v342, 5
      %v345 = vor.u32 %v341, %v344
      %v346 = vrot.slane %v345, 4
      %v348 = vshll.u32 %v222, 16
      %v350 = vrot.slane %v348, 5
      %v351 = vsel %vm241, %v346, %v350
      %v352 = vshrl.u32 %v222, 16
      %v354 = vrot.slane %v352, 4
      %v355 = vor.u32 %v354, %v350
      %v356 = vrot.slane %v355, 4
      %v358 = vshll.u32 %v223, 16
      %v360 = vrot.slane %v358, 5
      %v361 = vsel %vm241, %v356, %v360
      %v363 = vshrl.u32 %v224, 16
      %v365 = vrot.slane %v363, 4
      %v366 = vshll.u32 %v224, 16
      %v368 = vrot.slane %v366, 5
      %v369 = vor.u32 %v365, %v368
      %v370 = vrot.slane %v369, 4
      %v372 = vshll.u32 %v225, 16
      %v374 = vrot.slane %v372, 5
      %v375 = vsel %vm241, %v370, %v374
      %v376 = vshrl.u32 %v225, 16
      %v378 = vrot.slane %v376, 4
      %v379 = vor.u32 %v378, %v374
      %v380 = vrot.slane %v379, 4
      %v382 = vshll.u32 %v226, 16
      %v384 = vrot.slane %v382, 5
      %v385 = vsel %vm241, %v380, %v384
      %v387 = vshrl.u32 %v227, 16
      %v389 = vrot.slane %v387, 4
      %v390 = vshll.u32 %v227, 16
      %v392 = vrot.slane %v390, 5
      %v393 = vor.u32 %v389, %v392
      %v394 = vrot.slane %v393, 4
      %v396 = vshll.u32 %v228, 16
      %v398 = vrot.slane %v396, 5
      %v399 = vsel %vm241, %v394, %v398
      %v400 = vshrl.u32 %v228, 16
      %v402 = vrot.slane %v400, 4
      %v403 = vor.u32 %v402, %v398
      %v404 = vrot.slane %v403, 4
      %v406 = vshll.u32 %v229, 16
      %v408 = vrot.slane %v406, 5
      %v409 = vsel %vm241, %v404, %v408
      %v411 = vshrl.u32 %v230, 16
      %v413 = vrot.slane %v411, 4
      %v414 = vshll.u32 %v230, 16
      %v416 = vrot.slane %v414, 5
      %v417 = vor.u32 %v413, %v416
      %v418 = vrot.slane %v417, 4
      %v420 = vshll.u32 %v231, 16
      %v422 = vrot.slane %v420, 5
      %v423 = vsel %vm241, %v418, %v422
      %v424 = vshrl.u32 %v231, 16
      %v426 = vrot.slane %v424, 4
      %v427 = vor.u32 %v426, %v422
      %v428 = vrot.slane %v427, 4
      %v430 = vshll.u32 %v232, 16
      %v432 = vrot.slane %v430, 5
      %v433 = vsel %vm241, %v428, %v432
      %vm458 = vcmask 1042432
      %vm459 = vcmask 1046532
      %vm460 = vmor %vm458, %vm459
      %v461 = vrot.slane %v209, 5
      %v462 = vrot.slane %v461, 4
      %v463 = vrot.slane %v210, 5
      %v464 = vsel %vm460, %v462, %v463
      %v465 = vrot.slane %v463, 4
      %v466 = vrot.slane %v211, 5
      %v467 = vsel %vm460, %v465, %v466
      %v468 = vrot.slane %v212, 5
      %v469 = vrot.slane %v468, 4
      %v470 = vrot.slane %v213, 5
      %v471 = vsel %vm460, %v469, %v470
      %v472 = vrot.slane %v470, 4
      %v473 = vrot.slane %v214, 5
      %v474 = vsel %vm460, %v472, %v473
      %v475 = vrot.slane %v215, 5
      %v476 = vrot.slane %v475, 4
      %v477 = vrot.slane %v216, 5
      %v478 = vsel %vm460, %v476, %v477
      %v479 = vrot.slane %v477, 4
      %v480 = vrot.slane %v217, 5
      %v481 = vsel %vm460, %v479, %v480
      %v482 = vrot.slane %v218, 5
      %v483 = vrot.slane %v482, 4
      %v484 = vrot.slane %v219, 5
      %v485 = vsel %vm460, %v483, %v484
      %v486 = vrot.slane %v484, 4
      %v487 = vrot.slane %v220, 5
      %v488 = vsel %vm460, %v486, %v487
      %v489 = vrot.slane %v221, 5
      %v490 = vrot.slane %v489, 4
      %v491 = vrot.slane %v222, 5
      %v492 = vsel %vm460, %v490, %v491
      %v493 = vrot.slane %v491, 4
      %v494 = vrot.slane %v223, 5
      %v495 = vsel %vm460, %v493, %v494
      %v496 = vrot.slane %v224, 5
      %v497 = vrot.slane %v496, 4
      %v498 = vrot.slane %v225, 5
      %v499 = vsel %vm460, %v497, %v498
      %v500 = vrot.slane %v498, 4
      %v501 = vrot.slane %v226, 5
      %v502 = vsel %vm460, %v500, %v501
      %v503 = vrot.slane %v227, 5
      %v504 = vrot.slane %v503, 4
      %v505 = vrot.slane %v228, 5
      %v506 = vsel %vm460, %v504, %v505
      %v507 = vrot.slane %v505, 4
      %v508 = vrot.slane %v229, 5
      %v509 = vsel %vm460, %v507, %v508
      %v510 = vrot.slane %v230, 5
      %v511 = vrot.slane %v510, 4
      %v512 = vrot.slane %v231, 5
      %v513 = vsel %vm460, %v511, %v512
      %v514 = vrot.slane %v512, 4
      %v515 = vrot.slane %v232, 5
      %v516 = vsel %vm460, %v514, %v515
      %v518 = vshrl.u32 %v233, 16
      %v520 = vrot.slane %v518, 4
      %v521 = vshll.u32 %v233, 16
      %v523 = vrot.slane %v521, 5
      %v524 = vor.u32 %v520, %v523
      %v525 = vrot.slane %v524, 4
      %v527 = vshll.u32 %v234, 16
      %v529 = vrot.slane %v527, 5
      %v530 = vsel %vm241, %v525, %v529
      %v531 = vshrl.u32 %v234, 16
      %v533 = vrot.slane %v531, 4
      %v534 = vor.u32 %v533, %v529
      %v535 = vrot.slane %v534, 4
      %v537 = vshll.u32 %v235, 16
      %v539 = vrot.slane %v537, 5
      %v540 = vsel %vm241, %v535, %v539
      %v544 = vrot.slane %v233, 5
      %v545 = vrot.slane %v544, 4
      %v546 = vrot.slane %v234, 5
      %v547 = vsel %vm460, %v545, %v546
      %v548 = vrot.slane %v546, 4
      %v549 = vrot.slane %v235, 5
      %v550 = vsel %vm460, %v548, %v549
      %v552 = vshrl.u32 %v236, 16
      %v554 = vrot.slane %v552, 4
      %v555 = vshll.u32 %v236, 16
      %v557 = vrot.slane %v555, 5
      %v558 = vor.u32 %v554, %v557
      %v559 = vrot.slane %v558, 4
      %v561 = vshll.u32 %v237, 16
      %v563 = vrot.slane %v561, 5
      %v564 = vsel %vm241, %v559, %v563
      %v565 = vshrl.u32 %v237, 16
      %v567 = vrot.slane %v565, 4
      %v568 = vor.u32 %v567, %v563
      %v569 = vrot.slane %v568, 4
      %v571 = vshll.u32 %v238, 16
      %v573 = vrot.slane %v571, 5
      %v574 = vsel %vm241, %v569, %v573
      %v578 = vrot.slane %v236, 5
      %v579 = vrot.slane %v578, 4
      %v580 = vrot.slane %v237, 5
      %v581 = vsel %vm460, %v579, %v580
      %v582 = vrot.slane %v580, 4
      %v583 = vrot.slane %v238, 5
      %v584 = vsel %vm460, %v582, %v583
      %v585 = vunpack.c.l.b16 %v209
      %v586 = vunpack.c.l.b16 %v210
      %v587 = vunpack.c.l.b16 %v212
      %v588 = vunpack.c.l.b16 %v213
      %v589 = vunpack.c.l.b16 %v215
      %v590 = vunpack.c.l.b16 %v216
      %v591 = vunpack.c.l.b16 %v218
      %v592 = vunpack.c.l.b16 %v219
      %v593 = vunpack.c.l.b16 %v221
      %v594 = vunpack.c.l.b16 %v222
      %v595 = vunpack.c.l.b16 %v224
      %v596 = vunpack.c.l.b16 %v225
      %v597 = vunpack.c.l.b16 %v227
      %v598 = vunpack.c.l.b16 %v228
      %v599 = vunpack.c.l.b16 %v230
      %v600 = vunpack.c.l.b16 %v231
      %v601 = vpack.c.b16 %v586, %v585
      %v602 = vpack.c.b16 %v588, %v587
      %v603 = vpack.c.b16 %v590, %v589
      %v604 = vpack.c.b16 %v592, %v591
      %v605 = vpack.c.b16 %v594, %v593
      %v606 = vpack.c.b16 %v596, %v595
      %v607 = vpack.c.b16 %v598, %v597
      %v608 = vpack.c.b16 %v600, %v599
      %v617 = vunpack.c.l.b16 %v255
      %v618 = vunpack.c.l.b16 %v265
      %v619 = vunpack.c.l.b16 %v279
      %v620 = vunpack.c.l.b16 %v289
      %v621 = vunpack.c.l.b16 %v303
      %v622 = vunpack.c.l.b16 %v313
      %v623 = vunpack.c.l.b16 %v327
      %v624 = vunpack.c.l.b16 %v337
      %v625 = vunpack.c.l.b16 %v351
      %v626 = vunpack.c.l.b16 %v361
      %v627 = vunpack.c.l.b16 %v375
      %v628 = vunpack.c.l.b16 %v385
      %v629 = vunpack.c.l.b16 %v399
      %v630 = vunpack.c.l.b16 %v409
      %v631 = vunpack.c.l.b16 %v423
      %v632 = vunpack.c.l.b16 %v433
      %v633 = vpack.c.b16 %v618, %v617
      %v634 = vpack.c.b16 %v620, %v619
      %v635 = vpack.c.b16 %v622, %v621
      %v636 = vpack.c.b16 %v624, %v623
      %v637 = vpack.c.b16 %v626, %v625
      %v638 = vpack.c.b16 %v628, %v627
      %v639 = vpack.c.b16 %v630, %v629
      %v640 = vpack.c.b16 %v632, %v631
      %v649 = vunpack.c.l.b16 %v464
      %v650 = vunpack.c.l.b16 %v467
      %v651 = vunpack.c.l.b16 %v471
      %v652 = vunpack.c.l.b16 %v474
      %v653 = vunpack.c.l.b16 %v478
      %v654 = vunpack.c.l.b16 %v481
      %v655 = vunpack.c.l.b16 %v485
      %v656 = vunpack.c.l.b16 %v488
      %v657 = vunpack.c.l.b16 %v492
      %v658 = vunpack.c.l.b16 %v495
      %v659 = vunpack.c.l.b16 %v499
      %v660 = vunpack.c.l.b16 %v502
      %v661 = vunpack.c.l.b16 %v506
      %v662 = vunpack.c.l.b16 %v509
      %v663 = vunpack.c.l.b16 %v513
      %v664 = vunpack.c.l.b16 %v516
      %v665 = vpack.c.b16 %v650, %v649
      %v666 = vpack.c.b16 %v652, %v651
      %v667 = vpack.c.b16 %v654, %v653
      %v668 = vpack.c.b16 %v656, %v655
      %v669 = vpack.c.b16 %v658, %v657
      %v670 = vpack.c.b16 %v660, %v659
      %v671 = vpack.c.b16 %v662, %v661
      %v672 = vpack.c.b16 %v664, %v663
      %v681 = vunpack.c.l.b16 %v233
      %v682 = vunpack.c.l.b16 %v234
      %v683 = vpack.c.b16 %v682, %v681
      %v685 = vunpack.c.l.b16 %v530
      %v686 = vunpack.c.l.b16 %v540
      %v687 = vpack.c.b16 %v686, %v685
      %v689 = vunpack.c.l.b16 %v547
      %v690 = vunpack.c.l.b16 %v550
      %v691 = vpack.c.b16 %v690, %v689
      %v693 = vunpack.c.l.b16 %v236
      %v694 = vunpack.c.l.b16 %v237
      %v695 = vpack.c.b16 %v694, %v693
      %v697 = vunpack.c.l.b16 %v564
      %v698 = vunpack.c.l.b16 %v574
      %v699 = vpack.c.b16 %v698, %v697
      %v701 = vunpack.c.l.b16 %v581
      %v702 = vunpack.c.l.b16 %v584
      %v703 = vpack.c.b16 %v702, %v701
      %v705 = vld [vmem:[%s1] sm:$0xf]
      %v706 = vld [vmem:[%s1 + $0x4] sm:$0xf]
      %v707 = vld [vmem:[%s1 + $0x8] sm:$0xf]
      %v708 = vld [vmem:[%s1 + $0xc] sm:$0xf]
      %v709 = vld [vmem:[%s1 + $0x10] sm:$0xf]
      %v710 = vld [vmem:[%s1 + $0x14] sm:$0xf]
      %v711 = vld [vmem:[%s1 + $0x18] sm:$0xf]
      %v712 = vld [vmem:[%s1 + $0x1c] sm:$0xf]
      %v713 = vld [vmem:[%s1 + $0x20] sm:$0xf]
      %v714 = vld [vmem:[%s1 + $0x24] sm:$0xf]
      %v715 = vld [vmem:[%s1 + $0x28] sm:$0xf]
      %v716 = vld [vmem:[%s1 + $0x2c] sm:$0xf]
      %v717 = vld [vmem:[%s1 + $0x30] sm:$0xf]
      %v718 = vld [vmem:[%s1 + $0x34] sm:$0xf]
      %v719 = vld [vmem:[%s1 + $0x38] sm:$0xf]
      %v720 = vld [vmem:[%s1 + $0x3c] sm:$0xf]
      %v721 = vld [vmem:[%s1 + $0x40] sm:$0xf]
      %v722 = vld [vmem:[%s1 + $0x44] sm:$0xf]
      %v723 = vld [vmem:[%s1 + $0x48] sm:$0xf]
      %v724 = vld [vmem:[%s1 + $0x4c] sm:$0xf]
      %v725 = vld [vmem:[%s1 + $0x50] sm:$0xf]
      %v726 = vld [vmem:[%s1 + $0x54] sm:$0xf]
      %v727 = vld [vmem:[%s1 + $0x58] sm:$0xf]
      %v728 = vld [vmem:[%s1 + $0x5c] sm:$0xf]
      %v729 = vld [vmem:[%s1 + $0x60] sm:$0xf]
      %v730 = vld [vmem:[%s1 + $0x64] sm:$0xf]
      %v731 = vld [vmem:[%s1 + $0x68] sm:$0xf]
      %v732 = vld [vmem:[%s1 + $0x6c] sm:$0xf]
      %v733 = vld [vmem:[%s1 + $0x70] sm:$0xf]
      %v734 = vld [vmem:[%s1 + $0x74] sm:$0xf]
      %v735 = vld [vmem:[%s1 + $0x78] sm:$0xf]
      %v736 = vld [vmem:[%s1 + $0x7c] sm:$0xf]
      %v737 = vld [vmem:[%s1 + $0x80] sm:$0xf]
      %v738 = vld [vmem:[%s1 + $0x84] sm:$0xf]
      %v739 = vld [vmem:[%s1 + $0x88] sm:$0xf]
      %v740 = vld [vmem:[%s1 + $0x8c] sm:$0xf]
      %v741 = vld [vmem:[%s1 + $0x90] sm:$0xf]
      %v742 = vld [vmem:[%s1 + $0x94] sm:$0xf]
      %v743 = vld [vmem:[%s1 + $0x98] sm:$0xf]
      %v744 = vld [vmem:[%s1 + $0x9c] sm:$0xf]
      %v745 = vld [vmem:[%s1 + $0xa0] sm:$0xf]
      %v746 = vld [vmem:[%s1 + $0xa4] sm:$0xf]
      %v747 = vld [vmem:[%s1 + $0xa8] sm:$0xf]
      %v748 = vld [vmem:[%s1 + $0xac] sm:$0xf]
      %v749 = vld [vmem:[%s1 + $0xb0] sm:$0xf]
      %v750 = vld [vmem:[%s1 + $0xb4] sm:$0xf]
      %v751 = vld [vmem:[%s1 + $0xb8] sm:$0xf]
      %v752 = vld [vmem:[%s1 + $0xbc] sm:$0xf]
      %v753 = vld [vmem:[%s1 + $0xc0] sm:$0xf]
      %v754 = vld [vmem:[%s1 + $0xc4] sm:$0xf]
      %v755 = vld [vmem:[%s1 + $0xc8] sm:$0xf]
      %v756 = vld [vmem:[%s1 + $0xcc] sm:$0xf]
      %v757 = vld [vmem:[%s1 + $0xd0] sm:$0xf]
      %v758 = vld [vmem:[%s1 + $0xd4] sm:$0xf]
      %v759 = vld [vmem:[%s1 + $0xd8] sm:$0xf]
      %v760 = vld [vmem:[%s1 + $0xdc] sm:$0xf]
      %v761 = vld [vmem:[%s1 + $0xe0] sm:$0xf]
      %v762 = vld [vmem:[%s1 + $0xe4] sm:$0xf]
      %v763 = vld [vmem:[%s1 + $0xe8] sm:$0xf]
      %v764 = vld [vmem:[%s1 + $0xec] sm:$0xf]
      %v765 = vld [vmem:[%s1 + $0xf0] sm:$0xf]
      %v766 = vld [vmem:[%s1 + $0xf4] sm:$0xf]
      %v767 = vld [vmem:[%s1 + $0xf8] sm:$0xf]
      %v768 = vld [vmem:[%s1 + $0xfc] sm:$0xf]
      %v769 = vld [vmem:[%s1 + $0x100] sm:$0xf]
      %v770 = vld [vmem:[%s1 + $0x104] sm:$0xf]
      %v771 = vld [vmem:[%s1 + $0x108] sm:$0xf]
      %v772 = vld [vmem:[%s1 + $0x10c] sm:$0xf]
      %v773 = vld [vmem:[%s1 + $0x110] sm:$0xf]
      %v774 = vld [vmem:[%s1 + $0x114] sm:$0xf]
      %v775 = vld [vmem:[%s1 + $0x118] sm:$0xf]
      %v776 = vld [vmem:[%s1 + $0x11c] sm:$0xf]
      %v777 = vld [vmem:[%s1 + $0x120] sm:$0xf]
      %v778 = vld [vmem:[%s1 + $0x124] sm:$0xf]
      %v779 = vld [vmem:[%s1 + $0x128] sm:$0xf]
      %v780 = vld [vmem:[%s1 + $0x12c] sm:$0xf]
      %v781 = vld [vmem:[%s1 + $0x130] sm:$0xf]
      %v782 = vld [vmem:[%s1 + $0x134] sm:$0xf]
      %v783 = vld [vmem:[%s1 + $0x138] sm:$0xf]
      %v784 = vld [vmem:[%s1 + $0x13c] sm:$0xf]
      %v785 = vld [vmem:[%s1 + $0x140] sm:$0xf]
      %v786 = vld [vmem:[%s1 + $0x144] sm:$0xf]
      %v787 = vld [vmem:[%s1 + $0x148] sm:$0xf]
      %v788 = vld [vmem:[%s1 + $0x14c] sm:$0xf]
      %v789 = vld [vmem:[%s1 + $0x150] sm:$0xf]
      %v790 = vld [vmem:[%s1 + $0x154] sm:$0xf]
      %v791 = vld [vmem:[%s1 + $0x158] sm:$0xf]
      %v792 = vld [vmem:[%s1 + $0x15c] sm:$0xf]
      %v793 = vld [vmem:[%s1 + $0x160] sm:$0xf]
      %v794 = vld [vmem:[%s1 + $0x164] sm:$0xf]
      %v795 = vld [vmem:[%s1 + $0x168] sm:$0xf]
      %v796 = vld [vmem:[%s1 + $0x16c] sm:$0xf]
      %v797 = vld [vmem:[%s1 + $0x170] sm:$0xf]
      %v798 = vld [vmem:[%s1 + $0x174] sm:$0xf]
      %v799 = vld [vmem:[%s1 + $0x178] sm:$0xf]
      %v800 = vld [vmem:[%s1 + $0x17c] sm:$0xf]
      %v801 = vld [vmem:[%s1 + $0x180] sm:$0xf]
      %v802 = vld [vmem:[%s1 + $0x184] sm:$0xf]
      %v803 = vld [vmem:[%s1 + $0x188] sm:$0xf]
      %v804 = vld [vmem:[%s1 + $0x18c] sm:$0xf]
      %v805 = vld [vmem:[%s1 + $0x190] sm:$0xf]
      %v806 = vld [vmem:[%s1 + $0x194] sm:$0xf]
      %v807 = vld [vmem:[%s1 + $0x198] sm:$0xf]
      %v808 = vld [vmem:[%s1 + $0x19c] sm:$0xf]
      %v809 = vld [vmem:[%s1 + $0x1a0] sm:$0xf]
      %v810 = vld [vmem:[%s1 + $0x1a4] sm:$0xf]
      %v811 = vld [vmem:[%s1 + $0x1a8] sm:$0xf]
      %v812 = vld [vmem:[%s1 + $0x1ac] sm:$0xf]
      %v813 = vld [vmem:[%s1 + $0x1b0] sm:$0xf]
      %v814 = vld [vmem:[%s1 + $0x1b4] sm:$0xf]
      %v815 = vld [vmem:[%s1 + $0x1b8] sm:$0xf]
      %v816 = vld [vmem:[%s1 + $0x1bc] sm:$0xf]
      %v817 = vld [vmem:[%s1 + $0x1c0] sm:$0xf]
      %v818 = vld [vmem:[%s1 + $0x1c4] sm:$0xf]
      %v819 = vld [vmem:[%s1 + $0x1c8] sm:$0xf]
      %v820 = vld [vmem:[%s1 + $0x1cc] sm:$0xf]
      %v821 = vld [vmem:[%s1 + $0x1d0] sm:$0xf]
      %v822 = vld [vmem:[%s1 + $0x1d4] sm:$0xf]
      %v823 = vld [vmem:[%s1 + $0x1d8] sm:$0xf]
      %v824 = vld [vmem:[%s1 + $0x1dc] sm:$0xf]
      %v825 = vld [vmem:[%s1 + $0x1e0] sm:$0xf]
      %v826 = vld [vmem:[%s1 + $0x1e4] sm:$0xf]
      %v827 = vld [vmem:[%s1 + $0x1e8] sm:$0xf]
      %v828 = vld [vmem:[%s1 + $0x1ec] sm:$0xf]
      %v829 = vld [vmem:[%s1 + $0x1f0] sm:$0xf]
      %v830 = vld [vmem:[%s1 + $0x1f4] sm:$0xf]
      %v831 = vld [vmem:[%s1 + $0x1f8] sm:$0xf]
      %v832 = vld [vmem:[%s1 + $0x1fc] sm:$0xf]
      %v833 = vld [vmem:[%s1 + $0x200] sm:$0xf]
      %v834 = vld [vmem:[%s1 + $0x204] sm:$0xf]
      %v835 = vld [vmem:[%s1 + $0x208] sm:$0xf]
      %v836 = vld [vmem:[%s1 + $0x20c] sm:$0xf]
      %v837 = vld [vmem:[%s1 + $0x210] sm:$0xf]
      %v838 = vld [vmem:[%s1 + $0x214] sm:$0xf]
      %v839 = vld [vmem:[%s1 + $0x218] sm:$0xf]
      %v840 = vld [vmem:[%s1 + $0x21c] sm:$0xf]
      %v841 = vld [vmem:[%s1 + $0x220] sm:$0xf]
      %v842 = vld [vmem:[%s1 + $0x224] sm:$0xf]
      %v843 = vld [vmem:[%s1 + $0x228] sm:$0xf]
      %v844 = vld [vmem:[%s1 + $0x22c] sm:$0xf]
      %v845 = vld [vmem:[%s1 + $0x230] sm:$0xf]
      %v846 = vld [vmem:[%s1 + $0x234] sm:$0xf]
      %v847 = vld [vmem:[%s1 + $0x238] sm:$0xf]
      %v848 = vld [vmem:[%s1 + $0x23c] sm:$0xf]
      %v849 = vld [vmem:[%s2] sm:$0x1]
      %v851 = vlaneseq
      %v852 = vshrl.u32 %v851, 7
      %v853 = vsub.s32 0, %v852
      %v854 = vrot.slane %v849, %v853
      %v1000 = vunpack.c.l.b16 %v705
      %v1001 = vunpack.c.l.b16 %v706
      %v1002 = vunpack.c.l.b16 %v707
      %v1003 = vunpack.c.l.b16 %v708
      %v1004 = vunpack.c.l.b16 %v709
      %v1005 = vunpack.c.l.b16 %v710
      %v1006 = vunpack.c.l.b16 %v711
      %v1007 = vunpack.c.l.b16 %v712
      %v1008 = vunpack.c.l.b16 %v713
      %v1009 = vunpack.c.l.b16 %v714
      %v1010 = vunpack.c.l.b16 %v715
      %v1011 = vunpack.c.l.b16 %v716
      %v1012 = vunpack.c.l.b16 %v717
      %v1013 = vunpack.c.l.b16 %v718
      %v1014 = vunpack.c.l.b16 %v719
      %v1015 = vunpack.c.l.b16 %v720
      %v1016 = vunpack.c.l.b16 %v721
      %v1017 = vunpack.c.l.b16 %v722
      %v1018 = vunpack.c.l.b16 %v723
      %v1019 = vunpack.c.l.b16 %v724
      %v1020 = vunpack.c.l.b16 %v725
      %v1021 = vunpack.c.l.b16 %v726
      %v1022 = vunpack.c.l.b16 %v727
      %v1023 = vunpack.c.l.b16 %v728
      %v1024 = vunpack.c.l.b16 %v729
      %v1025 = vunpack.c.l.b16 %v730
      %v1026 = vunpack.c.l.b16 %v731
      %v1027 = vunpack.c.l.b16 %v732
      %v1028 = vunpack.c.l.b16 %v733
      %v1029 = vunpack.c.l.b16 %v734
      %v1030 = vunpack.c.l.b16 %v735
      %v1031 = vunpack.c.l.b16 %v736
      %v1032 = vunpack.c.l.b16 %v737
      %v1033 = vunpack.c.l.b16 %v738
      %v1034 = vunpack.c.l.b16 %v739
      %v1035 = vunpack.c.l.b16 %v740
      %v1036 = vunpack.c.l.b16 %v741
      %v1037 = vunpack.c.l.b16 %v742
      %v1038 = vunpack.c.l.b16 %v743
      %v1039 = vunpack.c.l.b16 %v744
      %v1040 = vunpack.c.l.b16 %v745
      %v1041 = vunpack.c.l.b16 %v746
      %v1042 = vunpack.c.l.b16 %v747
      %v1043 = vunpack.c.l.b16 %v748
      %v1044 = vunpack.c.l.b16 %v749
      %v1045 = vunpack.c.l.b16 %v750
      %v1046 = vunpack.c.l.b16 %v751
      %v1047 = vunpack.c.l.b16 %v752
      %v1048 = vunpack.c.l.b16 %v753
      %v1049 = vunpack.c.l.b16 %v754
      %v1050 = vunpack.c.l.b16 %v755
      %v1051 = vunpack.c.l.b16 %v756
      %v1052 = vunpack.c.l.b16 %v757
      %v1053 = vunpack.c.l.b16 %v758
      %v1054 = vunpack.c.l.b16 %v759
      %v1055 = vunpack.c.l.b16 %v760
      %v1056 = vunpack.c.l.b16 %v761
      %v1057 = vunpack.c.l.b16 %v762
      %v1058 = vunpack.c.l.b16 %v763
      %v1059 = vunpack.c.l.b16 %v764
      %v1060 = vunpack.c.l.b16 %v765
      %v1061 = vunpack.c.l.b16 %v766
      %v1062 = vunpack.c.l.b16 %v767
      %v1063 = vunpack.c.l.b16 %v768
      %v1064 = vunpack.c.l.b16 %v769
      %v1065 = vunpack.c.l.b16 %v770
      %v1066 = vunpack.c.l.b16 %v771
      %v1067 = vunpack.c.l.b16 %v772
      %v1068 = vunpack.c.l.b16 %v773
      %v1069 = vunpack.c.l.b16 %v774
      %v1070 = vunpack.c.l.b16 %v775
      %v1071 = vunpack.c.l.b16 %v776
      %v1072 = vunpack.c.l.b16 %v777
      %v1073 = vunpack.c.l.b16 %v778
      %v1074 = vunpack.c.l.b16 %v779
      %v1075 = vunpack.c.l.b16 %v780
      %v1076 = vunpack.c.l.b16 %v781
      %v1077 = vunpack.c.l.b16 %v782
      %v1078 = vunpack.c.l.b16 %v783
      %v1079 = vunpack.c.l.b16 %v784
      %v1080 = vunpack.c.l.b16 %v785
      %v1081 = vunpack.c.l.b16 %v786
      %v1082 = vunpack.c.l.b16 %v787
      %v1083 = vunpack.c.l.b16 %v788
      %v1084 = vunpack.c.l.b16 %v789
      %v1085 = vunpack.c.l.b16 %v790
      %v1086 = vunpack.c.l.b16 %v791
      %v1087 = vunpack.c.l.b16 %v792
      %v1088 = vunpack.c.l.b16 %v793
      %v1089 = vunpack.c.l.b16 %v794
      %v1090 = vunpack.c.l.b16 %v795
      %v1091 = vunpack.c.l.b16 %v796
      %v1092 = vunpack.c.l.b16 %v797
      %v1093 = vunpack.c.l.b16 %v798
      %v1094 = vunpack.c.l.b16 %v799
      %v1095 = vunpack.c.l.b16 %v800
      %v1096 = vunpack.c.l.b16 %v801
      %v1097 = vunpack.c.l.b16 %v802
      %v1098 = vunpack.c.l.b16 %v803
      %v1099 = vunpack.c.l.b16 %v804
      %v1100 = vunpack.c.l.b16 %v805
      %v1101 = vunpack.c.l.b16 %v806
      %v1102 = vunpack.c.l.b16 %v807
      %v1103 = vunpack.c.l.b16 %v808
      %v1104 = vunpack.c.l.b16 %v809
      %v1105 = vunpack.c.l.b16 %v810
      %v1106 = vunpack.c.l.b16 %v811
      %v1107 = vunpack.c.l.b16 %v812
      %v1108 = vunpack.c.l.b16 %v813
      %v1109 = vunpack.c.l.b16 %v814
      %v1110 = vunpack.c.l.b16 %v815
      %v1111 = vunpack.c.l.b16 %v816
      %v1112 = vunpack.c.l.b16 %v817
      %v1113 = vunpack.c.l.b16 %v818
      %v1114 = vunpack.c.l.b16 %v819
      %v1115 = vunpack.c.l.b16 %v820
      %v1116 = vunpack.c.l.b16 %v821
      %v1117 = vunpack.c.l.b16 %v822
      %v1118 = vunpack.c.l.b16 %v823
      %v1119 = vunpack.c.l.b16 %v824
      %v1120 = vunpack.c.l.b16 %v825
      %v1121 = vunpack.c.l.b16 %v826
      %v1122 = vunpack.c.l.b16 %v827
      %v1123 = vunpack.c.l.b16 %v828
      %v1124 = vunpack.c.l.b16 %v829
      %v1125 = vunpack.c.l.b16 %v830
      %v1126 = vunpack.c.l.b16 %v831
      %v1127 = vunpack.c.l.b16 %v832
      %v1128 = vunpack.c.l.b16 %v833
      %v1129 = vunpack.c.l.b16 %v834
      %v1130 = vunpack.c.l.b16 %v835
      %v1131 = vunpack.c.l.b16 %v836
      %v1132 = vunpack.c.l.b16 %v837
      %v1133 = vunpack.c.l.b16 %v838
      %v1134 = vunpack.c.l.b16 %v839
      %v1135 = vunpack.c.l.b16 %v840
      %v1136 = vunpack.c.l.b16 %v841
      %v1137 = vunpack.c.l.b16 %v842
      %v1138 = vunpack.c.l.b16 %v843
      %v1139 = vunpack.c.l.b16 %v844
      %v1140 = vunpack.c.l.b16 %v845
      %v1141 = vunpack.c.l.b16 %v846
      %v1142 = vunpack.c.l.b16 %v847
      %v1143 = vunpack.c.l.b16 %v848
      %v1144 = vpack.c.b16 %v1001, %v1000
      %v1145 = vpack.c.b16 %v1003, %v1002
      %v1146 = vpack.c.b16 %v1005, %v1004
      %v1147 = vpack.c.b16 %v1007, %v1006
      %v1148 = vpack.c.b16 %v1009, %v1008
      %v1149 = vpack.c.b16 %v1011, %v1010
      %v1150 = vpack.c.b16 %v1013, %v1012
      %v1151 = vpack.c.b16 %v1015, %v1014
      %v1152 = vpack.c.b16 %v1017, %v1016
      %v1153 = vpack.c.b16 %v1019, %v1018
      %v1154 = vpack.c.b16 %v1021, %v1020
      %v1155 = vpack.c.b16 %v1023, %v1022
      %v1156 = vpack.c.b16 %v1025, %v1024
      %v1157 = vpack.c.b16 %v1027, %v1026
      %v1158 = vpack.c.b16 %v1029, %v1028
      %v1159 = vpack.c.b16 %v1031, %v1030
      %v1160 = vpack.c.b16 %v1033, %v1032
      %v1161 = vpack.c.b16 %v1035, %v1034
      %v1162 = vpack.c.b16 %v1037, %v1036
      %v1163 = vpack.c.b16 %v1039, %v1038
      %v1164 = vpack.c.b16 %v1041, %v1040
      %v1165 = vpack.c.b16 %v1043, %v1042
      %v1166 = vpack.c.b16 %v1045, %v1044
      %v1167 = vpack.c.b16 %v1047, %v1046
      %v1168 = vpack.c.b16 %v1049, %v1048
      %v1169 = vpack.c.b16 %v1051, %v1050
      %v1170 = vpack.c.b16 %v1053, %v1052
      %v1171 = vpack.c.b16 %v1055, %v1054
      %v1172 = vpack.c.b16 %v1057, %v1056
      %v1173 = vpack.c.b16 %v1059, %v1058
      %v1174 = vpack.c.b16 %v1061, %v1060
      %v1175 = vpack.c.b16 %v1063, %v1062
      %v1176 = vpack.c.b16 %v1065, %v1064
      %v1177 = vpack.c.b16 %v1067, %v1066
      %v1178 = vpack.c.b16 %v1069, %v1068
      %v1179 = vpack.c.b16 %v1071, %v1070
      %v1180 = vpack.c.b16 %v1073, %v1072
      %v1181 = vpack.c.b16 %v1075, %v1074
      %v1182 = vpack.c.b16 %v1077, %v1076
      %v1183 = vpack.c.b16 %v1079, %v1078
      %v1184 = vpack.c.b16 %v1081, %v1080
      %v1185 = vpack.c.b16 %v1083, %v1082
      %v1186 = vpack.c.b16 %v1085, %v1084
      %v1187 = vpack.c.b16 %v1087, %v1086
      %v1188 = vpack.c.b16 %v1089, %v1088
      %v1189 = vpack.c.b16 %v1091, %v1090
      %v1190 = vpack.c.b16 %v1093, %v1092
      %v1191 = vpack.c.b16 %v1095, %v1094
      %v1192 = vpack.c.b16 %v1097, %v1096
      %v1193 = vpack.c.b16 %v1099, %v1098
      %v1194 = vpack.c.b16 %v1101, %v1100
      %v1195 = vpack.c.b16 %v1103, %v1102
      %v1196 = vpack.c.b16 %v1105, %v1104
      %v1197 = vpack.c.b16 %v1107, %v1106
      %v1198 = vpack.c.b16 %v1109, %v1108
      %v1199 = vpack.c.b16 %v1111, %v1110
      %v1200 = vpack.c.b16 %v1113, %v1112
      %v1201 = vpack.c.b16 %v1115, %v1114
      %v1202 = vpack.c.b16 %v1117, %v1116
      %v1203 = vpack.c.b16 %v1119, %v1118
      %v1204 = vpack.c.b16 %v1121, %v1120
      %v1205 = vpack.c.b16 %v1123, %v1122
      %v1206 = vpack.c.b16 %v1125, %v1124
      %v1207 = vpack.c.b16 %v1127, %v1126
      %v1208 = vpack.c.b16 %v1129, %v1128
      %v1209 = vpack.c.b16 %v1131, %v1130
      %v1210 = vpack.c.b16 %v1133, %v1132
      %v1211 = vpack.c.b16 %v1135, %v1134
      %v1212 = vpack.c.b16 %v1137, %v1136
      %v1213 = vpack.c.b16 %v1139, %v1138
      %v1214 = vpack.c.b16 %v1141, %v1140
      %v1215 = vpack.c.b16 %v1143, %v1142
      %1288 = vmatprep.subr.bf16.mxu0 0
      %1289 = vmatpush1.bf16.msra.mxu0 %v1144
      %1290 = vmatprep.subr.bf16.mxu0 0
      %1291 = vmatpush1.bf16.msra.mxu0 %v1145
      %1292 = vmatprep.subr.bf16.mxu0 0
      %1293 = vmatpush1.bf16.msra.mxu0 %v1146
      %1294 = vmatprep.subr.bf16.mxu0 0
      %1295 = vmatpush1.bf16.msra.mxu0 %v1147
      %1296 = vmatprep.subr.bf16.mxu0 0
      %1297 = vmatpush1.bf16.msra.mxu0 %v1148
      %1298 = vmatprep.subr.bf16.mxu0 0
      %1299 = vmatpush1.bf16.msra.mxu0 %v1149
      %1300 = vmatprep.subr.bf16.mxu0 0
      %1301 = vmatpush1.bf16.msra.mxu0 %v1150
      %1302 = vmatprep.subr.bf16.mxu0 0
      %1303 = vmatpush1.bf16.msra.mxu0 %v1151
      %1304 = vmatprep.subr.bf16.mxu0 0
      %1305 = vmatpush1.bf16.msra.mxu0 %v1152
      %1306 = vmatprep.subr.bf16.mxu0 0
      %1307 = vmatpush1.bf16.msra.mxu0 %v1153
      %1308 = vmatprep.subr.bf16.mxu0 0
      %1309 = vmatpush1.bf16.msra.mxu0 %v1154
      %1310 = vmatprep.subr.bf16.mxu0 0
      %1311 = vmatpush1.bf16.msra.mxu0 %v1155
      %1312 = vmatprep.subr.bf16.mxu0 0
      %1313 = vmatpush1.bf16.msra.mxu0 %v1156
      %1314 = vmatprep.subr.bf16.mxu0 0
      %1315 = vmatpush1.bf16.msra.mxu0 %v1157
      %1316 = vmatprep.subr.bf16.mxu0 0
      %1317 = vmatpush1.bf16.msra.mxu0 %v1158
      %1318 = vmatprep.subr.bf16.mxu0 0
      %1319 = vmatpush1.bf16.msra.mxu0 %v1159
      %1320 = vmatprep.mubr.bf16.mxu0 %v633
      %1321 = vmatmul.mubr.bf16.gmra.mrb[0].mxu0 %v601
      %v1322 = vpop.f32.mrb[0].mxu0
      %v1323 = vadd.f32 %v854, %v1322
      %v1324 = vpop.f32.mrb[0].mxu0
      %v1325 = vpop.f32.mrb[0].mxu0
      %v1326 = vadd.f32 %v854, %v1325
      %v1327 = vpop.f32.mrb[0].mxu0
      %1328 = vmatprep.mubr.bf16.mxu0 %v634
      %1329 = vmatmul.mubr.bf16.gmra.mrb[0].mxu0 %v602
      %v1330 = vpop.f32.mrb[0].mxu0
      %v1331 = vadd.f32 %v854, %v1330
      %v1332 = vpop.f32.mrb[0].mxu0
      %v1333 = vpop.f32.mrb[0].mxu0
      %v1334 = vadd.f32 %v854, %v1333
      %v1335 = vpop.f32.mrb[0].mxu0
      %1336 = vmatprep.mubr.bf16.mxu0 %v635
      %1337 = vmatmul.mubr.bf16.gmra.mrb[0].mxu0 %v603
      %v1338 = vpop.f32.mrb[0].mxu0
      %v1339 = vadd.f32 %v854, %v1338
      %v1340 = vpop.f32.mrb[0].mxu0
      %v1341 = vpop.f32.mrb[0].mxu0
      %v1342 = vadd.f32 %v854, %v1341
      %v1343 = vpop.f32.mrb[0].mxu0
      %1344 = vmatprep.mubr.bf16.mxu0 %v636
      %1345 = vmatmul.mubr.bf16.gmra.mrb[0].mxu0 %v604
      %v1346 = vpop.f32.mrb[0].mxu0
      %v1347 = vadd.f32 %v854, %v1346
      %v1348 = vpop.f32.mrb[0].mxu0
      %v1349 = vpop.f32.mrb[0].mxu0
      %v1350 = vadd.f32 %v854, %v1349
      %v1351 = vpop.f32.mrb[0].mxu0
      %1352 = vmatprep.mubr.bf16.mxu0 %v637
      %1353 = vmatmul.mubr.bf16.gmra.mrb[0].mxu0 %v605
      %v1354 = vpop.f32.mrb[0].mxu0
      %v1355 = vadd.f32 %v854, %v1354
      %v1356 = vpop.f32.mrb[0].mxu0
      %v1357 = vpop.f32.mrb[0].mxu0
      %v1358 = vadd.f32 %v854, %v1357
      %v1359 = vpop.f32.mrb[0].mxu0
      %1360 = vmatprep.mubr.bf16.mxu0 %v638
      %1361 = vmatmul.mubr.bf16.gmra.mrb[0].mxu0 %v606
      %v1362 = vpop.f32.mrb[0].mxu0
      %v1363 = vadd.f32 %v854, %v1362
      %v1364 = vpop.f32.mrb[0].mxu0
      %v1365 = vpop.f32.mrb[0].mxu0
      %v1366 = vadd.f32 %v854, %v1365
      %v1367 = vpop.f32.mrb[0].mxu0
      %1368 = vmatprep.mubr.bf16.mxu0 %v639
      %1369 = vmatmul.mubr.bf16.gmra.mrb[0].mxu0 %v607
      %v1370 = vpop.f32.mrb[0].mxu0
      %v1371 = vadd.f32 %v854, %v1370
      %v1372 = vpop.f32.mrb[0].mxu0
      %v1373 = vpop.f32.mrb[0].mxu0
      %v1374 = vadd.f32 %v854, %v1373
      %v1375 = vpop.f32.mrb[0].mxu0
      %1376 = vmatprep.mubr.bf16.mxu0 %v640
      %1377 = vmatmul.mubr.bf16.gmra.mrb[0].mxu0 %v608
      %v1378 = vpop.f32.mrb[0].mxu0
      %v1379 = vadd.f32 %v854, %v1378
      %v1380 = vpop.f32.mrb[0].mxu0
      %v1381 = vpop.f32.mrb[0].mxu0
      %v1382 = vadd.f32 %v854, %v1381
      %v1383 = vpop.f32.mrb[0].mxu0
      %1384 = vdwg.mxu0
      %1385 = vmatprep.subr.bf16.mxu0 0
      %1386 = vmatpush1.bf16.msra.mxu0 %v1160
      %1387 = vmatprep.subr.bf16.mxu0 0
      %1388 = vmatpush1.bf16.msra.mxu0 %v1161
      %1389 = vmatprep.subr.bf16.mxu0 0
      %1390 = vmatpush1.bf16.msra.mxu0 %v1162
      %1391 = vmatprep.subr.bf16.mxu0 0
      %1392 = vmatpush1.bf16.msra.mxu0 %v1163
      %1393 = vmatprep.subr.bf16.mxu0 0
      %1394 = vmatpush1.bf16.msra.mxu0 %v1164
      %1395 = vmatprep.subr.bf16.mxu0 0
      %1396 = vmatpush1.bf16.msra.mxu0 %v1165
      %1397 = vmatprep.subr.bf16.mxu0 0
      %1398 = vmatpush1.bf16.msra.mxu0 %v1166
      %1399 = vmatprep.subr.bf16.mxu0 0
      %1400 = vmatpush1.bf16.msra.mxu0 %v1167
      %1401 = vmatprep.subr.bf16.mxu0 0
      %1402 = vmatpush1.bf16.msra.mxu0 %v1168
      %1403 = vmatprep.subr.bf16.mxu0 0
      %1404 = vmatpush1.bf16.msra.mxu0 %v1169
      %1405 = vmatprep.subr.bf16.mxu0 0
      %1406 = vmatpush1.bf16.msra.mxu0 %v1170
      %1407 = vmatprep.subr.bf16.mxu0 0
      %1408 = vmatpush1.bf16.msra.mxu0 %v1171
      %1409 = vmatprep.subr.bf16.mxu0 0
      %1410 = vmatpush1.bf16.msra.mxu0 %v1172
      %1411 = vmatprep.subr.bf16.mxu0 0
      %1412 = vmatpush1.bf16.msra.mxu0 %v1173
      %1413 = vmatprep.subr.bf16.mxu0 0
      %1414 = vmatpush1.bf16.msra.mxu0 %v1174
      %1415 = vmatprep.subr.bf16.mxu0 0
      %1416 = vmatpush1.bf16.msra.mxu0 %v1175
      %1417 = vmatprep.mubr.bf16.mxu0 %v602
      %1418 = vmatmul.mubr.bf16.gmra.mrb[0].mxu0 %v665
      %v1419 = vpop.f32.mrb[0].mxu0
      %v1420 = vadd.f32 %v1323, %v1419
      %v1421 = vpop.f32.mrb[0].mxu0
      %v1422 = vpop.f32.mrb[0].mxu0
      %v1423 = vadd.f32 %v1326, %v1422
      %v1424 = vpop.f32.mrb[0].mxu0
      %1425 = vmatprep.mubr.bf16.mxu0 %v603
      %1426 = vmatmul.mubr.bf16.gmra.mrb[0].mxu0 %v666
      %v1427 = vpop.f32.mrb[0].mxu0
      %v1428 = vadd.f32 %v1331, %v1427
      %v1429 = vpop.f32.mrb[0].mxu0
      %v1430 = vpop.f32.mrb[0].mxu0
      %v1431 = vadd.f32 %v1334, %v1430
      %v1432 = vpop.f32.mrb[0].mxu0
      %1433 = vmatprep.mubr.bf16.mxu0 %v604
      %1434 = vmatmul.mubr.bf16.gmra.mrb[0].mxu0 %v667
      %v1435 = vpop.f32.mrb[0].mxu0
      %v1436 = vadd.f32 %v1339, %v1435
      %v1437 = vpop.f32.mrb[0].mxu0
      %v1438 = vpop.f32.mrb[0].mxu0
      %v1439 = vadd.f32 %v1342, %v1438
      %v1440 = vpop.f32.mrb[0].mxu0
      %1441 = vmatprep.mubr.bf16.mxu0 %v605
      %1442 = vmatmul.mubr.bf16.gmra.mrb[0].mxu0 %v668
      %v1443 = vpop.f32.mrb[0].mxu0
      %v1444 = vadd.f32 %v1347, %v1443
      %v1445 = vpop.f32.mrb[0].mxu0
      %v1446 = vpop.f32.mrb[0].mxu0
      %v1447 = vadd.f32 %v1350, %v1446
      %v1448 = vpop.f32.mrb[0].mxu0
      %1449 = vmatprep.mubr.bf16.mxu0 %v606
      %1450 = vmatmul.mubr.bf16.gmra.mrb[0].mxu0 %v669
      %v1451 = vpop.f32.mrb[0].mxu0
      %v1452 = vadd.f32 %v1355, %v1451
      %v1453 = vpop.f32.mrb[0].mxu0
      %v1454 = vpop.f32.mrb[0].mxu0
      %v1455 = vadd.f32 %v1358, %v1454
      %v1456 = vpop.f32.mrb[0].mxu0
      %1457 = vmatprep.mubr.bf16.mxu0 %v607
      %1458 = vmatmul.mubr.bf16.gmra.mrb[0].mxu0 %v670
      %v1459 = vpop.f32.mrb[0].mxu0
      %v1460 = vadd.f32 %v1363, %v1459
      %v1461 = vpop.f32.mrb[0].mxu0
      %v1462 = vpop.f32.mrb[0].mxu0
      %v1463 = vadd.f32 %v1366, %v1462
      %v1464 = vpop.f32.mrb[0].mxu0
      %1465 = vmatprep.mubr.bf16.mxu0 %v608
      %1466 = vmatmul.mubr.bf16.gmra.mrb[0].mxu0 %v671
      %v1467 = vpop.f32.mrb[0].mxu0
      %v1468 = vadd.f32 %v1371, %v1467
      %v1469 = vpop.f32.mrb[0].mxu0
      %v1470 = vpop.f32.mrb[0].mxu0
      %v1471 = vadd.f32 %v1374, %v1470
      %v1472 = vpop.f32.mrb[0].mxu0
      %1473 = vmatprep.mubr.bf16.mxu0 %v683
      %1474 = vmatmul.mubr.bf16.gmra.mrb[0].mxu0 %v672
      %v1475 = vpop.f32.mrb[0].mxu0
      %v1476 = vadd.f32 %v1379, %v1475
      %v1477 = vpop.f32.mrb[0].mxu0
      %v1478 = vpop.f32.mrb[0].mxu0
      %v1479 = vadd.f32 %v1382, %v1478
      %v1480 = vpop.f32.mrb[0].mxu0
      %1481 = vdwg.mxu0
      %1482 = vmatprep.subr.bf16.mxu0 0
      %1483 = vmatpush1.bf16.msra.mxu0 %v1176
      %1484 = vmatprep.subr.bf16.mxu0 0
      %1485 = vmatpush1.bf16.msra.mxu0 %v1177
      %1486 = vmatprep.subr.bf16.mxu0 0
      %1487 = vmatpush1.bf16.msra.mxu0 %v1178
      %1488 = vmatprep.subr.bf16.mxu0 0
      %1489 = vmatpush1.bf16.msra.mxu0 %v1179
      %1490 = vmatprep.subr.bf16.mxu0 0
      %1491 = vmatpush1.bf16.msra.mxu0 %v1180
      %1492 = vmatprep.subr.bf16.mxu0 0
      %1493 = vmatpush1.bf16.msra.mxu0 %v1181
      %1494 = vmatprep.subr.bf16.mxu0 0
      %1495 = vmatpush1.bf16.msra.mxu0 %v1182
      %1496 = vmatprep.subr.bf16.mxu0 0
      %1497 = vmatpush1.bf16.msra.mxu0 %v1183
      %1498 = vmatprep.subr.bf16.mxu0 0
      %1499 = vmatpush1.bf16.msra.mxu0 %v1184
      %1500 = vmatprep.subr.bf16.mxu0 0
      %1501 = vmatpush1.bf16.msra.mxu0 %v1185
      %1502 = vmatprep.subr.bf16.mxu0 0
      %1503 = vmatpush1.bf16.msra.mxu0 %v1186
      %1504 = vmatprep.subr.bf16.mxu0 0
      %1505 = vmatpush1.bf16.msra.mxu0 %v1187
      %1506 = vmatprep.subr.bf16.mxu0 0
      %1507 = vmatpush1.bf16.msra.mxu0 %v1188
      %1508 = vmatprep.subr.bf16.mxu0 0
      %1509 = vmatpush1.bf16.msra.mxu0 %v1189
      %1510 = vmatprep.subr.bf16.mxu0 0
      %1511 = vmatpush1.bf16.msra.mxu0 %v1190
      %1512 = vmatprep.subr.bf16.mxu0 0
      %1513 = vmatpush1.bf16.msra.mxu0 %v1191
      %1514 = vmatprep.mubr.bf16.mxu0 %v666
      %1515 = vmatmul.mubr.bf16.gmra.mrb[0].mxu0 %v634
      %v1516 = vpop.f32.mrb[0].mxu0
      %v1517 = vadd.f32 %v1420, %v1516
      %v1518 = vpop.f32.mrb[0].mxu0
      %v1519 = vpop.f32.mrb[0].mxu0
      %v1520 = vadd.f32 %v1423, %v1519
      %v1521 = vpop.f32.mrb[0].mxu0
      %1522 = vmatprep.mubr.bf16.mxu0 %v667
      %1523 = vmatmul.mubr.bf16.gmra.mrb[0].mxu0 %v635
      %v1524 = vpop.f32.mrb[0].mxu0
      %v1525 = vadd.f32 %v1428, %v1524
      %v1526 = vpop.f32.mrb[0].mxu0
      %v1527 = vpop.f32.mrb[0].mxu0
      %v1528 = vadd.f32 %v1431, %v1527
      %v1529 = vpop.f32.mrb[0].mxu0
      %1530 = vmatprep.mubr.bf16.mxu0 %v668
      %1531 = vmatmul.mubr.bf16.gmra.mrb[0].mxu0 %v636
      %v1532 = vpop.f32.mrb[0].mxu0
      %v1533 = vadd.f32 %v1436, %v1532
      %v1534 = vpop.f32.mrb[0].mxu0
      %v1535 = vpop.f32.mrb[0].mxu0
      %v1536 = vadd.f32 %v1439, %v1535
      %v1537 = vpop.f32.mrb[0].mxu0
      %1538 = vmatprep.mubr.bf16.mxu0 %v669
      %1539 = vmatmul.mubr.bf16.gmra.mrb[0].mxu0 %v637
      %v1540 = vpop.f32.mrb[0].mxu0
      %v1541 = vadd.f32 %v1444, %v1540
      %v1542 = vpop.f32.mrb[0].mxu0
      %v1543 = vpop.f32.mrb[0].mxu0
      %v1544 = vadd.f32 %v1447, %v1543
      %v1545 = vpop.f32.mrb[0].mxu0
      %1546 = vmatprep.mubr.bf16.mxu0 %v670
      %1547 = vmatmul.mubr.bf16.gmra.mrb[0].mxu0 %v638
      %v1548 = vpop.f32.mrb[0].mxu0
      %v1549 = vadd.f32 %v1452, %v1548
      %v1550 = vpop.f32.mrb[0].mxu0
      %v1551 = vpop.f32.mrb[0].mxu0
      %v1552 = vadd.f32 %v1455, %v1551
      %v1553 = vpop.f32.mrb[0].mxu0
      %1554 = vmatprep.mubr.bf16.mxu0 %v671
      %1555 = vmatmul.mubr.bf16.gmra.mrb[0].mxu0 %v639
      %v1556 = vpop.f32.mrb[0].mxu0
      %v1557 = vadd.f32 %v1460, %v1556
      %v1558 = vpop.f32.mrb[0].mxu0
      %v1559 = vpop.f32.mrb[0].mxu0
      %v1560 = vadd.f32 %v1463, %v1559
      %v1561 = vpop.f32.mrb[0].mxu0
      %1562 = vmatprep.mubr.bf16.mxu0 %v672
      %1563 = vmatmul.mubr.bf16.gmra.mrb[0].mxu0 %v640
      %v1564 = vpop.f32.mrb[0].mxu0
      %v1565 = vadd.f32 %v1468, %v1564
      %v1566 = vpop.f32.mrb[0].mxu0
      %v1567 = vpop.f32.mrb[0].mxu0
      %v1568 = vadd.f32 %v1471, %v1567
      %v1569 = vpop.f32.mrb[0].mxu0
      %1570 = vmatprep.mubr.bf16.mxu0 %v691
      %1571 = vmatmul.mubr.bf16.gmra.mrb[0].mxu0 %v687
      %v1572 = vpop.f32.mrb[0].mxu0
      %v1573 = vadd.f32 %v1476, %v1572
      %v1574 = vpop.f32.mrb[0].mxu0
      %v1575 = vpop.f32.mrb[0].mxu0
      %v1576 = vadd.f32 %v1479, %v1575
      %v1577 = vpop.f32.mrb[0].mxu0
      %1578 = vdwg.mxu0
      %1579 = vmatprep.subr.bf16.mxu0 0
      %1580 = vmatpush1.bf16.msra.mxu0 %v1192
      %1581 = vmatprep.subr.bf16.mxu0 0
      %1582 = vmatpush1.bf16.msra.mxu0 %v1193
      %1583 = vmatprep.subr.bf16.mxu0 0
      %1584 = vmatpush1.bf16.msra.mxu0 %v1194
      %1585 = vmatprep.subr.bf16.mxu0 0
      %1586 = vmatpush1.bf16.msra.mxu0 %v1195
      %1587 = vmatprep.subr.bf16.mxu0 0
      %1588 = vmatpush1.bf16.msra.mxu0 %v1196
      %1589 = vmatprep.subr.bf16.mxu0 0
      %1590 = vmatpush1.bf16.msra.mxu0 %v1197
      %1591 = vmatprep.subr.bf16.mxu0 0
      %1592 = vmatpush1.bf16.msra.mxu0 %v1198
      %1593 = vmatprep.subr.bf16.mxu0 0
      %1594 = vmatpush1.bf16.msra.mxu0 %v1199
      %1595 = vmatprep.subr.bf16.mxu0 0
      %1596 = vmatpush1.bf16.msra.mxu0 %v1200
      %1597 = vmatprep.subr.bf16.mxu0 0
      %1598 = vmatpush1.bf16.msra.mxu0 %v1201
      %1599 = vmatprep.subr.bf16.mxu0 0
      %1600 = vmatpush1.bf16.msra.mxu0 %v1202
      %1601 = vmatprep.subr.bf16.mxu0 0
      %1602 = vmatpush1.bf16.msra.mxu0 %v1203
      %1603 = vmatprep.subr.bf16.mxu0 0
      %1604 = vmatpush1.bf16.msra.mxu0 %v1204
      %1605 = vmatprep.subr.bf16.mxu0 0
      %1606 = vmatpush1.bf16.msra.mxu0 %v1205
      %1607 = vmatprep.subr.bf16.mxu0 0
      %1608 = vmatpush1.bf16.msra.mxu0 %v1206
      %1609 = vmatprep.subr.bf16.mxu0 0
      %1610 = vmatpush1.bf16.msra.mxu0 %v1207
      %1611 = vmatprep.mubr.bf16.mxu0 %v635
      %1612 = vmatmul.mubr.bf16.gmra.mrb[0].mxu0 %v603
      %v1613 = vpop.f32.mrb[0].mxu0
      %v1614 = vadd.f32 %v1517, %v1613
      %v1615 = vpop.f32.mrb[0].mxu0
      %v1616 = vpop.f32.mrb[0].mxu0
      %v1617 = vadd.f32 %v1520, %v1616
      %v1618 = vpop.f32.mrb[0].mxu0
      %1619 = vmatprep.mubr.bf16.mxu0 %v636
      %1620 = vmatmul.mubr.bf16.gmra.mrb[0].mxu0 %v604
      %v1621 = vpop.f32.mrb[0].mxu0
      %v1622 = vadd.f32 %v1525, %v1621
      %v1623 = vpop.f32.mrb[0].mxu0
      %v1624 = vpop.f32.mrb[0].mxu0
      %v1625 = vadd.f32 %v1528, %v1624
      %v1626 = vpop.f32.mrb[0].mxu0
      %1627 = vmatprep.mubr.bf16.mxu0 %v637
      %1628 = vmatmul.mubr.bf16.gmra.mrb[0].mxu0 %v605
      %v1629 = vpop.f32.mrb[0].mxu0
      %v1630 = vadd.f32 %v1533, %v1629
      %v1631 = vpop.f32.mrb[0].mxu0
      %v1632 = vpop.f32.mrb[0].mxu0
      %v1633 = vadd.f32 %v1536, %v1632
      %v1634 = vpop.f32.mrb[0].mxu0
      %1635 = vmatprep.mubr.bf16.mxu0 %v638
      %1636 = vmatmul.mubr.bf16.gmra.mrb[0].mxu0 %v606
      %v1637 = vpop.f32.mrb[0].mxu0
      %v1638 = vadd.f32 %v1541, %v1637
      %v1639 = vpop.f32.mrb[0].mxu0
      %v1640 = vpop.f32.mrb[0].mxu0
      %v1641 = vadd.f32 %v1544, %v1640
      %v1642 = vpop.f32.mrb[0].mxu0
      %1643 = vmatprep.mubr.bf16.mxu0 %v639
      %1644 = vmatmul.mubr.bf16.gmra.mrb[0].mxu0 %v607
      %v1645 = vpop.f32.mrb[0].mxu0
      %v1646 = vadd.f32 %v1549, %v1645
      %v1647 = vpop.f32.mrb[0].mxu0
      %v1648 = vpop.f32.mrb[0].mxu0
      %v1649 = vadd.f32 %v1552, %v1648
      %v1650 = vpop.f32.mrb[0].mxu0
      %1651 = vmatprep.mubr.bf16.mxu0 %v640
      %1652 = vmatmul.mubr.bf16.gmra.mrb[0].mxu0 %v608
      %v1653 = vpop.f32.mrb[0].mxu0
      %v1654 = vadd.f32 %v1557, %v1653
      %v1655 = vpop.f32.mrb[0].mxu0
      %v1656 = vpop.f32.mrb[0].mxu0
      %v1657 = vadd.f32 %v1560, %v1656
      %v1658 = vpop.f32.mrb[0].mxu0
      %1659 = vmatprep.mubr.bf16.mxu0 %v687
      %1660 = vmatmul.mubr.bf16.gmra.mrb[0].mxu0 %v683
      %v1661 = vpop.f32.mrb[0].mxu0
      %v1662 = vadd.f32 %v1565, %v1661
      %v1663 = vpop.f32.mrb[0].mxu0
      %v1664 = vpop.f32.mrb[0].mxu0
      %v1665 = vadd.f32 %v1568, %v1664
      %v1666 = vpop.f32.mrb[0].mxu0
      %1667 = vmatprep.mubr.bf16.mxu0 %v699
      %1668 = vmatmul.mubr.bf16.gmra.mrb[0].mxu0 %v695
      %v1669 = vpop.f32.mrb[0].mxu0
      %v1670 = vadd.f32 %v1573, %v1669
      %v1671 = vpop.f32.mrb[0].mxu0
      %v1672 = vpop.f32.mrb[0].mxu0
      %v1673 = vadd.f32 %v1576, %v1672
      %v1674 = vpop.f32.mrb[0].mxu0
      %1675 = vdwg.mxu0
      %1676 = vmatprep.subr.bf16.mxu0 0
      %1677 = vmatpush1.bf16.msra.mxu0 %v1208
      %1678 = vmatprep.subr.bf16.mxu0 0
      %1679 = vmatpush1.bf16.msra.mxu0 %v1209
      %1680 = vmatprep.subr.bf16.mxu0 0
      %1681 = vmatpush1.bf16.msra.mxu0 %v1210
      %1682 = vmatprep.subr.bf16.mxu0 0
      %1683 = vmatpush1.bf16.msra.mxu0 %v1211
      %1684 = vmatprep.subr.bf16.mxu0 0
      %1685 = vmatpush1.bf16.msra.mxu0 %v1212
      %1686 = vmatprep.subr.bf16.mxu0 0
      %1687 = vmatpush1.bf16.msra.mxu0 %v1213
      %1688 = vmatprep.subr.bf16.mxu0 0
      %1689 = vmatpush1.bf16.msra.mxu0 %v1214
      %1690 = vmatprep.subr.bf16.mxu0 0
      %1691 = vmatpush1.bf16.msra.mxu0 %v1215
      %1692 = vmatprep.subr.bf16.mxu0 0
      %1693 = vmatpush1.bf16.msra.mxu0 0
      %1694 = vmatprep.subr.bf16.mxu0 0
      %1695 = vmatpush1.bf16.msra.mxu0 0
      %1696 = vmatprep.subr.bf16.mxu0 0
      %1697 = vmatpush1.bf16.msra.mxu0 0
      %1698 = vmatprep.subr.bf16.mxu0 0
      %1699 = vmatpush1.bf16.msra.mxu0 0
      %1700 = vmatprep.subr.bf16.mxu0 0
      %1701 = vmatpush1.bf16.msra.mxu0 0
      %1702 = vmatprep.subr.bf16.mxu0 0
      %1703 = vmatpush1.bf16.msra.mxu0 0
      %1704 = vmatprep.subr.bf16.mxu0 0
      %1705 = vmatpush1.bf16.msra.mxu0 0
      %1706 = vmatprep.subr.bf16.mxu0 0
      %1707 = vmatpush1.bf16.msra.mxu0 0
      %1708 = vmatprep.mubr.bf16.mxu0 0
      %1709 = vmatmul.mubr.bf16.gmra.mrb[0].mxu0 %v667
      %v1710 = vpop.f32.mrb[0].mxu0
      %v1711 = vadd.f32 %v1614, %v1710
      %v1712 = vpop.f32.mrb[0].mxu0
      %v1713 = vpop.f32.mrb[0].mxu0
      %v1714 = vadd.f32 %v1617, %v1713
      %v1715 = vpop.f32.mrb[0].mxu0
      %1716 = vmatprep.mubr.bf16.mxu0 0
      %1717 = vmatmul.mubr.bf16.gmra.mrb[0].mxu0 %v668
      %v1718 = vpop.f32.mrb[0].mxu0
      %v1719 = vadd.f32 %v1622, %v1718
      %v1720 = vpop.f32.mrb[0].mxu0
      %v1721 = vpop.f32.mrb[0].mxu0
      %v1722 = vadd.f32 %v1625, %v1721
      %v1723 = vpop.f32.mrb[0].mxu0
      %1724 = vmatprep.mubr.bf16.mxu0 0
      %1725 = vmatmul.mubr.bf16.gmra.mrb[0].mxu0 %v669
      %v1726 = vpop.f32.mrb[0].mxu0
      %v1727 = vadd.f32 %v1630, %v1726
      %v1728 = vpop.f32.mrb[0].mxu0
      %v1729 = vpop.f32.mrb[0].mxu0
      %v1730 = vadd.f32 %v1633, %v1729
      %v1731 = vpop.f32.mrb[0].mxu0
      %1732 = vmatprep.mubr.bf16.mxu0 0
      %1733 = vmatmul.mubr.bf16.gmra.mrb[0].mxu0 %v670
      %v1734 = vpop.f32.mrb[0].mxu0
      %v1735 = vadd.f32 %v1638, %v1734
      %v1736 = vpop.f32.mrb[0].mxu0
      %v1737 = vpop.f32.mrb[0].mxu0
      %v1738 = vadd.f32 %v1641, %v1737
      %v1739 = vpop.f32.mrb[0].mxu0
      %1740 = vmatprep.mubr.bf16.mxu0 0
      %1741 = vmatmul.mubr.bf16.gmra.mrb[0].mxu0 %v671
      %v1742 = vpop.f32.mrb[0].mxu0
      %v1743 = vadd.f32 %v1646, %v1742
      %v1744 = vpop.f32.mrb[0].mxu0
      %v1745 = vpop.f32.mrb[0].mxu0
      %v1746 = vadd.f32 %v1649, %v1745
      %v1747 = vpop.f32.mrb[0].mxu0
      %1748 = vmatprep.mubr.bf16.mxu0 0
      %1749 = vmatmul.mubr.bf16.gmra.mrb[0].mxu0 %v672
      %v1750 = vpop.f32.mrb[0].mxu0
      %v1751 = vadd.f32 %v1654, %v1750
      %v1752 = vpop.f32.mrb[0].mxu0
      %v1753 = vpop.f32.mrb[0].mxu0
      %v1754 = vadd.f32 %v1657, %v1753
      %v1755 = vpop.f32.mrb[0].mxu0
      %1756 = vmatprep.mubr.bf16.mxu0 0
      %1757 = vmatmul.mubr.bf16.gmra.mrb[0].mxu0 %v691
      %v1758 = vpop.f32.mrb[0].mxu0
      %v1759 = vadd.f32 %v1662, %v1758
      %v1760 = vpop.f32.mrb[0].mxu0
      %v1761 = vpop.f32.mrb[0].mxu0
      %v1762 = vadd.f32 %v1665, %v1761
      %v1763 = vpop.f32.mrb[0].mxu0
      %1764 = vmatprep.mubr.bf16.mxu0 0
      %1765 = vmatmul.mubr.bf16.gmra.mrb[0].mxu0 %v703
      %v1766 = vpop.f32.mrb[0].mxu0
      %v1767 = vadd.f32 %v1670, %v1766
      %v1768 = vpop.f32.mrb[0].mxu0
      %v1769 = vpop.f32.mrb[0].mxu0
      %v1770 = vadd.f32 %v1673, %v1769
      %v1771 = vpop.f32.mrb[0].mxu0
      %1772 = vdwg.mxu0
      %v1773 = vmax.f32 %v1711, 0.0
      %v1774 = vmax.f32 %v1714, 0.0
      %v1775 = vmax.f32 %v1719, 0.0
      %v1776 = vmax.f32 %v1722, 0.0
      %v1777 = vmax.f32 %v1727, 0.0
      %v1778 = vmax.f32 %v1730, 0.0
      %v1779 = vmax.f32 %v1735, 0.0
      %v1780 = vmax.f32 %v1738, 0.0
      %v1781 = vmax.f32 %v1743, 0.0
      %v1782 = vmax.f32 %v1746, 0.0
      %v1783 = vmax.f32 %v1751, 0.0
      %v1784 = vmax.f32 %v1754, 0.0
      %v1785 = vmax.f32 %v1759, 0.0
      %v1786 = vmax.f32 %v1762, 0.0
      %v1787 = vmax.f32 %v1767, 0.0
      %v1788 = vmax.f32 %v1770, 0.0
      %v1789 = vpack.c.bf16 %v1774, %v1773
      %v1790 = vpack.c.bf16 %v1776, %v1775
      %v1791 = vpack.c.bf16 %v1778, %v1777
      %v1792 = vpack.c.bf16 %v1780, %v1779
      %v1793 = vpack.c.bf16 %v1782, %v1781
      %v1794 = vpack.c.bf16 %v1784, %v1783
      %v1795 = vpack.c.bf16 %v1786, %v1785
      %v1796 = vpack.c.bf16 %v1788, %v1787
      %v1805 = vunpack.c.l.b16 %v1789
      %v1806 = vunpack.c.h.b16 %v1789
      %v1807 = vunpack.c.l.b16 %v1790
      %v1808 = vunpack.c.h.b16 %v1790
      %v1809 = vunpack.c.l.b16 %v1791
      %v1810 = vunpack.c.h.b16 %v1791
      %v1811 = vunpack.c.l.b16 %v1792
      %v1812 = vunpack.c.h.b16 %v1792
      %v1813 = vunpack.c.l.b16 %v1793
      %v1814 = vunpack.c.h.b16 %v1793
      %v1815 = vunpack.c.l.b16 %v1794
      %v1816 = vunpack.c.h.b16 %v1794
      %v1817 = vunpack.c.l.b16 %v1795
      %v1818 = vunpack.c.h.b16 %v1795
      %v1819 = vunpack.c.l.b16 %v1796
      %v1820 = vunpack.c.h.b16 %v1796
      %v1821 = vpack.c.b16 %v1805, %v1805
      %v1822 = vpack.c.b16 %v1806, %v1806
      %v1823 = vpack.c.b16 %v1807, %v1807
      %v1824 = vpack.c.b16 %v1808, %v1808
      %v1825 = vpack.c.b16 %v1809, %v1809
      %v1826 = vpack.c.b16 %v1810, %v1810
      %v1827 = vpack.c.b16 %v1811, %v1811
      %v1828 = vpack.c.b16 %v1812, %v1812
      %v1829 = vpack.c.b16 %v1813, %v1813
      %v1830 = vpack.c.b16 %v1814, %v1814
      %v1831 = vpack.c.b16 %v1815, %v1815
      %v1832 = vpack.c.b16 %v1816, %v1816
      %v1833 = vpack.c.b16 %v1817, %v1817
      %v1834 = vpack.c.b16 %v1818, %v1818
      %v1835 = vpack.c.b16 %v1819, %v1819
      %v1836 = vpack.c.b16 %v1820, %v1820
      %1853 = vst [vmem:[%s206] sm:$0xf] %v1821
      %1854 = vst [vmem:[%s206 + $0x4] sm:$0xf] %v1822
      %1855 = vst [vmem:[%s206 + $0x8] sm:$0xf] %v1823
      %1856 = vst [vmem:[%s206 + $0xc] sm:$0xf] %v1824
      %1857 = vst [vmem:[%s206 + $0x10] sm:$0xf] %v1825
      %1858 = vst [vmem:[%s206 + $0x14] sm:$0xf] %v1826
      %1859 = vst [vmem:[%s206 + $0x18] sm:$0xf] %v1827
      %1860 = vst [vmem:[%s206 + $0x1c] sm:$0xf] %v1828
      %1861 = vst [vmem:[%s206 + $0x20] sm:$0xf] %v1829
      %1862 = vst [vmem:[%s206 + $0x24] sm:$0xf] %v1830
      %1863 = vst [vmem:[%s206 + $0x28] sm:$0xf] %v1831
      %1864 = vst [vmem:[%s206 + $0x2c] sm:$0xf] %v1832
      %1865 = vst [vmem:[%s206 + $0x30] sm:$0xf] %v1833
      %1866 = vst [vmem:[%s206 + $0x34] sm:$0xf] %v1834
      %1867 = vst [vmem:[%s206 + $0x38] sm:$0xf] %v1835
      %1868 = vst [vmem:[%s206 + $0x3c] sm:$0xf] %v1836
      %s1869 = smul.u32 16, %s19
      %p1870 = scmp.lt.s32.totalorder %s18, 1
      %s1871 = scalar_select %p1870, %s18, 1
      %p1872 = scmp.lt.s32.totalorder %s1869, 31
      %s1873 = scalar_select %p1872, %s1869, 31
      %s1874 = smul.addr %s1871, 32
      %s1875 = sadd.s32 %s1873, %s1874
      %s1876 = smul.addr %s1875, 4
      %s1877 = scalar_lea.vmem %s3, %s1876
      // Predicated region
      $region33: #{ddn_fcos3d_forward.10} parent=31 // pred_check
        %p1878 = pneg %p116
      $region34: #{ddn_fcos3d_forward.10} parent=31 // pred_check_branch
        %1880 = sbr.rel (%p1878) target = $region36
      $region35: #{ddn_fcos3d_forward.10} parent=31 // pred_region
        %s1881 = smul.u32 16, %s19
      $region36: #{ddn_fcos3d_forward.10} parent=31 // pred_fallthru
        _
    $region32: #{ddn_fcos3d_forward.10} parent=5 // pred_fallthru
      _
    %p1882 = scmp.le.s32.totalorder 2, %s9
    // Predicated region
    $region37: #{ddn_fcos3d_forward.10} parent=5 // pred_check
      %p1883 = pneg %p1882
    $region38: #{ddn_fcos3d_forward.10} parent=5 // pred_check_branch
      %1885 = sbr.rel (%p1883) target = $region40
    $region39: #{ddn_fcos3d_forward.10} parent=5 // pred_region
      %s1886 = ssub.s32 %s9, 2
      // Predicated region
      $region41: #{ddn_fcos3d_forward.10} parent=39 // pred_check
        %p1887 = pneg %p122
      $region42: #{ddn_fcos3d_forward.10} parent=39 // pred_check_branch
        %1889 = sbr.rel (%p1887) target = $region44
      $region43: #{ddn_fcos3d_forward.10} parent=39 // pred_region
        %s1890 = smul.u32 16, %s21
        %p1891 = scmp.lt.s32.totalorder %s20, 1
        %s1892 = scalar_select %p1891, %s20, 1
        %p1893 = scmp.lt.s32.totalorder %s1890, 31
        %s1894 = scalar_select %p1893, %s1890, 31
        %s1895 = smul.addr %s1892, 32
        %s1896 = sadd.s32 %s1894, %s1895
        %s1897 = smul.addr %s1896, 4
        %s1898 = scalar_lea.vmem %s3, %s1897
      $region44: #{ddn_fcos3d_forward.10} parent=39 // pred_fallthru
        _
    $region40: #{ddn_fcos3d_forward.10} parent=5 // pred_fallthru
      _
  $region6: #{ddn_fcos3d_forward.10} parent=0 // loop_footer
    %s13 = sadd.s32 1, %s9
  $region7: #{ddn_fcos3d_forward.10} parent=0 // loop_footer_branch
    %8 = sbr.rel target = $region3
  $region8: #{ddn_fcos3d_forward.10} parent=0 // loop_exit
    _

// kernel: ddn_fcos3d_forward.16
$region0: #{ddn_fcos3d_forward.16}
  #allocation0 [shape = 'u32[]', space=smem, size = 0x4, offset = 0x4, fixed_abs, tag = 'smem constant byte address 0x4 - core index']
  #allocation1 [shape = 'u32[144,128]{1,0:T(1,128)}', space=vmem, size = 0x12000, scoped, tag = 'internal scratch']
  %s0 = inlined_call_operand.vmem [shape: bf16[2,1,1,8,8,128], index: 0, kind: input, shape index: {}]
  %s1 = inlined_call_operand.vmem [shape: bf16[128,128], index: 1, kind: input, shape index: {}]
  %s2 = inlined_call_operand.vmem [shape: f32[1,128], index: 2, kind: input, shape index: {}]
  %s3 = inlined_call_operand.vmem [shape: bf16[2,64,128], index: 3, kind: output, shape index: {}]
  %s4 = sld [smem:[#allocation0]]
  $region22: #{ddn_fcos3d_forward.16} parent=0
    _
  %s6 = ssub.s32 1, %s4
  %s7 = scalar_select 0, %s6, %s4
  // Predicated region
  $region2: #{ddn_fcos3d_forward.16} parent=0 // pred_check
    _
  $region3: #{ddn_fcos3d_forward.16} parent=0 // pred_check_branch
    %9 = sbr.rel (0) target = $region5
  $region4: #{ddn_fcos3d_forward.16} parent=0 // pred_region
    _
  $region5: #{ddn_fcos3d_forward.16} parent=0 // pred_fallthru
    _
  // Predicated region
  $region6: #{ddn_fcos3d_forward.16} parent=0 // pred_check
    _
  $region7: #{ddn_fcos3d_forward.16} parent=0 // pred_check_branch
    %11 = sbr.rel (0) target = $region9
  $region8: #{ddn_fcos3d_forward.16} parent=0 // pred_region
    _
  $region9: #{ddn_fcos3d_forward.16} parent=0 // pred_fallthru
    _
  // Predicated region
  $region10: #{ddn_fcos3d_forward.16} parent=0 // pred_check
    _
  $region11: #{ddn_fcos3d_forward.16} parent=0 // pred_check_branch
    %13 = sbr.rel (0) target = $region13
  $region12: #{ddn_fcos3d_forward.16} parent=0 // pred_region
    _
  $region13: #{ddn_fcos3d_forward.16} parent=0 // pred_fallthru
    _
  %v15 = vld [vmem:[%s0] sm:$0xf]
  %v16 = vld [vmem:[%s0 + $0x4] sm:$0xf]
  %v17 = vld [vmem:[%s0 + $0x8] sm:$0xf]
  %v18 = vld [vmem:[%s0 + $0xc] sm:$0xf]
  %v19 = vld [vmem:[%s0 + $0x10] sm:$0xf]
  %v20 = vld [vmem:[%s0 + $0x14] sm:$0xf]
  %v21 = vld [vmem:[%s0 + $0x18] sm:$0xf]
  %v22 = vld [vmem:[%s0 + $0x1c] sm:$0xf]
  %s23 = scalar_lea.vmem %s0, 32
  %v24 = vld [vmem:[%s23] sm:$0xf]
  %v25 = vld [vmem:[%s23 + $0x4] sm:$0xf]
  %v26 = vld [vmem:[%s23 + $0x8] sm:$0xf]
  %v27 = vld [vmem:[%s23 + $0xc] sm:$0xf]
  %v28 = vld [vmem:[%s23 + $0x10] sm:$0xf]
  %v29 = vld [vmem:[%s23 + $0x14] sm:$0xf]
  %v30 = vld [vmem:[%s23 + $0x18] sm:$0xf]
  %v31 = vld [vmem:[%s23 + $0x1c] sm:$0xf]
  %v40 = vunpack.c.l.b16 %v15
  %v41 = vunpack.c.l.b16 %v16
  %v42 = vunpack.c.l.b16 %v17
  %v43 = vunpack.c.l.b16 %v18
  %v44 = vunpack.c.l.b16 %v19
  %v45 = vunpack.c.l.b16 %v20
  %v46 = vunpack.c.l.b16 %v21
  %v47 = vunpack.c.l.b16 %v22
  %v48 = vpack.c.b16 %v41, %v40
  %v49 = vpack.c.b16 %v43, %v42
  %v50 = vpack.c.b16 %v45, %v44
  %v51 = vpack.c.b16 %v47, %v46
  %v64 = vunpack.c.l.b16 %v24
  %v65 = vunpack.c.l.b16 %v25
  %v66 = vunpack.c.l.b16 %v26
  %v67 = vunpack.c.l.b16 %v27
  %v68 = vunpack.c.l.b16 %v28
  %v69 = vunpack.c.l.b16 %v29
  %v70 = vunpack.c.l.b16 %v30
  %v71 = vunpack.c.l.b16 %v31
  %v72 = vpack.c.b16 %v65, %v64
  %v73 = vpack.c.b16 %v67, %v66
  %v74 = vpack.c.b16 %v69, %v68
  %v75 = vpack.c.b16 %v71, %v70
  %v80 = vld [vmem:[%s1] sm:$0xf]
  %v81 = vld [vmem:[%s1 + $0x4] sm:$0xf]
  %v82 = vld [vmem:[%s1 + $0x8] sm:$0xf]
  %v83 = vld [vmem:[%s1 + $0xc] sm:$0xf]
  %v84 = vld [vmem:[%s1 + $0x10] sm:$0xf]
  %v85 = vld [vmem:[%s1 + $0x14] sm:$0xf]
  %v86 = vld [vmem:[%s1 + $0x18] sm:$0xf]
  %v87 = vld [vmem:[%s1 + $0x1c] sm:$0xf]
  %v88 = vld [vmem:[%s1 + $0x20] sm:$0xf]
  %v89 = vld [vmem:[%s1 + $0x24] sm:$0xf]
  %v90 = vld [vmem:[%s1 + $0x28] sm:$0xf]
  %v91 = vld [vmem:[%s1 + $0x2c] sm:$0xf]
  %v92 = vld [vmem:[%s1 + $0x30] sm:$0xf]
  %v93 = vld [vmem:[%s1 + $0x34] sm:$0xf]
  %v94 = vld [vmem:[%s1 + $0x38] sm:$0xf]
  %v95 = vld [vmem:[%s1 + $0x3c] sm:$0xf]
  %v96 = vld [vmem:[%s2] sm:$0x1]
  %v98 = vlaneseq
  %v99 = vshrl.u32 %v98, 7
  %v100 = vsub.s32 0, %v99
  %v101 = vrot.slane %v96, %v100
  %v119 = vunpack.c.l.b16 %v80
  %v120 = vunpack.c.l.b16 %v81
  %v121 = vunpack.c.l.b16 %v82
  %v122 = vunpack.c.l.b16 %v83
  %v123 = vunpack.c.l.b16 %v84
  %v124 = vunpack.c.l.b16 %v85
  %v125 = vunpack.c.l.b16 %v86
  %v126 = vunpack.c.l.b16 %v87
  %v127 = vunpack.c.l.b16 %v88
  %v128 = vunpack.c.l.b16 %v89
  %v129 = vunpack.c.l.b16 %v90
  %v130 = vunpack.c.l.b16 %v91
  %v131 = vunpack.c.l.b16 %v92
  %v132 = vunpack.c.l.b16 %v93
  %v133 = vunpack.c.l.b16 %v94
  %v134 = vunpack.c.l.b16 %v95
  %v135 = vpack.c.b16 %v120, %v119
  %v136 = vpack.c.b16 %v122, %v121
  %v137 = vpack.c.b16 %v124, %v123
  %v138 = vpack.c.b16 %v126, %v125
  %v139 = vpack.c.b16 %v128, %v127
  %v140 = vpack.c.b16 %v130, %v129
  %v141 = vpack.c.b16 %v132, %v131
  %v142 = vpack.c.b16 %v134, %v133
  %151 = vmatprep.subr.bf16.mxu0 0
  %152 = vmatpush1.bf16.msra.mxu0 %v135
  %153 = vmatprep.subr.bf16.mxu0 0
  %154 = vmatpush1.bf16.msra.mxu0 %v136
  %155 = vmatprep.subr.bf16.mxu0 0
  %156 = vmatpush1.bf16.msra.mxu0 %v137
  %157 = vmatprep.subr.bf16.mxu0 0
  %158 = vmatpush1.bf16.msra.mxu0 %v138
  %159 = vmatprep.subr.bf16.mxu0 0
  %160 = vmatpush1.bf16.msra.mxu0 %v139
  %161 = vmatprep.subr.bf16.mxu0 0
  %162 = vmatpush1.bf16.msra.mxu0 %v140
  %163 = vmatprep.subr.bf16.mxu0 0
  %164 = vmatpush1.bf16.msra.mxu0 %v141
  %165 = vmatprep.subr.bf16.mxu0 0
  %166 = vmatpush1.bf16.msra.mxu0 %v142
  %167 = vmatprep.subr.bf16.mxu0 0
  %168 = vmatpush1.bf16.msra.mxu0 0
  %169 = vmatprep.subr.bf16.mxu0 0
  %170 = vmatpush1.bf16.msra.mxu0 0
  %171 = vmatprep.subr.bf16.mxu0 0
  %172 = vmatpush1.bf16.msra.mxu0 0
  %173 = vmatprep.subr.bf16.mxu0 0
  %174 = vmatpush1.bf16.msra.mxu0 0
  %175 = vmatprep.subr.bf16.mxu0 0
  %176 = vmatpush1.bf16.msra.mxu0 0
  %177 = vmatprep.subr.bf16.mxu0 0
  %178 = vmatpush1.bf16.msra.mxu0 0
  %179 = vmatprep.subr.bf16.mxu0 0
  %180 = vmatpush1.bf16.msra.mxu0 0
  %181 = vmatprep.subr.bf16.mxu0 0
  %182 = vmatpush1.bf16.msra.mxu0 0
  %183 = vmatprep.mubr.bf16.mxu0 0
  %184 = vmatmul.mubr.bf16.gmra.mrb[0].mxu0 %v48
  %v185 = vpop.f32.mrb[0].mxu0
  %v186 = vadd.f32 %v101, %v185
  %v187 = vpop.f32.mrb[0].mxu0
  %v188 = vpop.f32.mrb[0].mxu0
  %v189 = vadd.f32 %v101, %v188
  %v190 = vpop.f32.mrb[0].mxu0
  %191 = vmatprep.mubr.bf16.mxu0 0
  %192 = vmatmul.mubr.bf16.gmra.mrb[0].mxu0 %v49
  %v193 = vpop.f32.mrb[0].mxu0
  %v194 = vadd.f32 %v101, %v193
  %v195 = vpop.f32.mrb[0].mxu0
  %v196 = vpop.f32.mrb[0].mxu0
  %v197 = vadd.f32 %v101, %v196
  %v198 = vpop.f32.mrb[0].mxu0
  %199 = vmatprep.mubr.bf16.mxu0 0
  %200 = vmatmul.mubr.bf16.gmra.mrb[0].mxu0 %v50
  %v201 = vpop.f32.mrb[0].mxu0
  %v202 = vadd.f32 %v101, %v201
  %v203 = vpop.f32.mrb[0].mxu0
  %v204 = vpop.f32.mrb[0].mxu0
  %v205 = vadd.f32 %v101, %v204
  %v206 = vpop.f32.mrb[0].mxu0
  %207 = vmatprep.mubr.bf16.mxu0 0
  %208 = vmatmul.mubr.bf16.gmra.mrb[0].mxu0 %v51
  %v209 = vpop.f32.mrb[0].mxu0
  %v210 = vadd.f32 %v101, %v209
  %v211 = vpop.f32.mrb[0].mxu0
  %v212 = vpop.f32.mrb[0].mxu0
  %v213 = vadd.f32 %v101, %v212
  %v214 = vpop.f32.mrb[0].mxu0
  %215 = vmatprep.mubr.bf16.mxu0 0
  %216 = vmatmul.mubr.bf16.gmra.mrb[0].mxu0 %v72
  %v217 = vpop.f32.mrb[0].mxu0
  %v218 = vadd.f32 %v101, %v217
  %v219 = vpop.f32.mrb[0].mxu0
  %v220 = vpop.f32.mrb[0].mxu0
  %v221 = vadd.f32 %v101, %v220
  %v222 = vpop.f32.mrb[0].mxu0
  %223 = vmatprep.mubr.bf16.mxu0 0
  %224 = vmatmul.mubr.bf16.gmra.mrb[0].mxu0 %v73
  %v225 = vpop.f32.mrb[0].mxu0
  %v226 = vadd.f32 %v101, %v225
  %v227 = vpop.f32.mrb[0].mxu0
  %v228 = vpop.f32.mrb[0].mxu0
  %v229 = vadd.f32 %v101, %v228
  %v230 = vpop.f32.mrb[0].mxu0
  %231 = vmatprep.mubr.bf16.mxu0 0
  %232 = vmatmul.mubr.bf16.gmra.mrb[0].mxu0 %v74
  %v233 = vpop.f32.mrb[0].mxu0
  %v234 = vadd.f32 %v101, %v233
  %v235 = vpop.f32.mrb[0].mxu0
  %v236 = vpop.f32.mrb[0].mxu0
  %v237 = vadd.f32 %v101, %v236
  %v238 = vpop.f32.mrb[0].mxu0
  %239 = vmatprep.mubr.bf16.mxu0 0
  %240 = vmatmul.mubr.bf16.gmra.mrb[0].mxu0 %v75
  %v241 = vpop.f32.mrb[0].mxu0
  %v242 = vadd.f32 %v101, %v241
  %v243 = vpop.f32.mrb[0].mxu0
  %v244 = vpop.f32.mrb[0].mxu0
  %v245 = vadd.f32 %v101, %v244
  %v246 = vpop.f32.mrb[0].mxu0
  %247 = vdwg.mxu0
  %v248 = vpack.c.bf16 %v189, %v186
  %v249 = vpack.c.bf16 %v197, %v194
  %v250 = vpack.c.bf16 %v205, %v202
  %v251 = vpack.c.bf16 %v213, %v210
  %v252 = vpack.c.bf16 %v221, %v218
  %v253 = vpack.c.bf16 %v229, %v226
  %v254 = vpack.c.bf16 %v237, %v234
  %v255 = vpack.c.bf16 %v245, %v242
  %v264 = vunpack.c.l.b16 %v248
  %v265 = vunpack.c.h.b16 %v248
  %v266 = vunpack.c.l.b16 %v249
  %v267 = vunpack.c.h.b16 %v249
  %v268 = vunpack.c.l.b16 %v250
  %v269 = vunpack.c.h.b16 %v250
  %v270 = vunpack.c.l.b16 %v251
  %v271 = vunpack.c.h.b16 %v251
  %v272 = vunpack.c.l.b16 %v252
  %v273 = vunpack.c.h.b16 %v252
  %v274 = vunpack.c.l.b16 %v253
  %v275 = vunpack.c.h.b16 %v253
  %v276 = vunpack.c.l.b16 %v254
  %v277 = vunpack.c.h.b16 %v254
  %v278 = vunpack.c.l.b16 %v255
  %v279 = vunpack.c.h.b16 %v255
  %v280 = vpack.c.b16 %v264, %v264
  %v281 = vpack.c.b16 %v265, %v265
  %v282 = vpack.c.b16 %v266, %v266
  %v283 = vpack.c.b16 %v267, %v267
  %v284 = vpack.c.b16 %v268, %v268
  %v285 = vpack.c.b16 %v269, %v269
  %v286 = vpack.c.b16 %v270, %v270
  %v287 = vpack.c.b16 %v271, %v271
  %v288 = vpack.c.b16 %v272, %v272
  %v289 = vpack.c.b16 %v273, %v273
  %v290 = vpack.c.b16 %v274, %v274
  %v291 = vpack.c.b16 %v275, %v275
  %v292 = vpack.c.b16 %v276, %v276
  %v293 = vpack.c.b16 %v277, %v277
  %v294 = vpack.c.b16 %v278, %v278
  %v295 = vpack.c.b16 %v279, %v279
  %312 = vst [vmem:[%s3] sm:$0xf] %v280
  %313 = vst [vmem:[%s3 + $0x4] sm:$0xf] %v281
  %314 = vst [vmem:[%s3 + $0x8] sm:$0xf] %v282
  %315 = vst [vmem:[%s3 + $0xc] sm:$0xf] %v283
  %316 = vst [vmem:[%s3 + $0x10] sm:$0xf] %v284
  %317 = vst [vmem:[%s3 + $0x14] sm:$0xf] %v285
  %318 = vst [vmem:[%s3 + $0x18] sm:$0xf] %v286
  %319 = vst [vmem:[%s3 + $0x1c] sm:$0xf] %v287
  %320 = vst [vmem:[%s3 + $0x20] sm:$0xf] %v288
  %321 = vst [vmem:[%s3 + $0x24] sm:$0xf] %v289
  %322 = vst [vmem:[%s3 + $0x28] sm:$0xf] %v290
  %323 = vst [vmem:[%s3 + $0x2c] sm:$0xf] %v291
  %324 = vst [vmem:[%s3 + $0x30] sm:$0xf] %v292
  %325 = vst [vmem:[%s3 + $0x34] sm:$0xf] %v293
  %326 = vst [vmem:[%s3 + $0x38] sm:$0xf] %v294
  %327 = vst [vmem:[%s3 + $0x3c] sm:$0xf] %v295
  // Predicated region
  $region14: #{ddn_fcos3d_forward.16} parent=0 // pred_check
    _
  $region15: #{ddn_fcos3d_forward.16} parent=0 // pred_check_branch
    %329 = sbr.rel (0) target = $region17
  $region16: #{ddn_fcos3d_forward.16} parent=0 // pred_region
    _
  $region17: #{ddn_fcos3d_forward.16} parent=0 // pred_fallthru
    _
  // Predicated region
  $region18: #{ddn_fcos3d_forward.16} parent=0 // pred_check
    _
  $region19: #{ddn_fcos3d_forward.16} parent=0 // pred_check_branch
    %331 = sbr.rel (0) target = $region21
  $region20: #{ddn_fcos3d_forward.16} parent=0 // pred_region
    _
  $region21: #{ddn_fcos3d_forward.16} parent=0 // pred_fallthru
    _

// kernel: ddn_fcos3d_forward.12
$region0: #{ddn_fcos3d_forward.12}
  #allocation0 [shape = 'u32[]', space=smem, size = 0x4, offset = 0x4, fixed_abs, tag = 'smem constant byte address 0x4 - core index']
  #allocation1 [shape = 'u32[144,128]{1,0:T(1,128)}', space=vmem, size = 0x12000, scoped, tag = 'internal scratch']
  %s0 = inlined_call_operand.vmem [shape: bf16[2,1,4,9,9,128], index: 0, kind: input, shape index: {}]
  %s1 = inlined_call_operand.vmem [shape: bf16[1152,128], index: 1, kind: input, shape index: {}]
  %s2 = inlined_call_operand.vmem [shape: f32[1,128], index: 2, kind: input, shape index: {}]
  %s3 = inlined_call_operand.vmem [shape: bf16[2,64,128], index: 3, kind: output, shape index: {}]
  %s4 = sld [smem:[#allocation0]]
  $region22: #{ddn_fcos3d_forward.12} parent=0
    _
  %s6 = ssub.s32 1, %s4
  %s7 = scalar_select 0, %s6, %s4
  // Predicated region
  $region2: #{ddn_fcos3d_forward.12} parent=0 // pred_check
    _
  $region3: #{ddn_fcos3d_forward.12} parent=0 // pred_check_branch
    %9 = sbr.rel (0) target = $region5
  $region4: #{ddn_fcos3d_forward.12} parent=0 // pred_region
    _
  $region5: #{ddn_fcos3d_forward.12} parent=0 // pred_fallthru
    _
  // Predicated region
  $region6: #{ddn_fcos3d_forward.12} parent=0 // pred_check
    _
  $region7: #{ddn_fcos3d_forward.12} parent=0 // pred_check_branch
    %11 = sbr.rel (0) target = $region9
  $region8: #{ddn_fcos3d_forward.12} parent=0 // pred_region
    _
  $region9: #{ddn_fcos3d_forward.12} parent=0 // pred_fallthru
    _
  // Predicated region
  $region10: #{ddn_fcos3d_forward.12} parent=0 // pred_check
    _
  $region11: #{ddn_fcos3d_forward.12} parent=0 // pred_check_branch
    %13 = sbr.rel (0) target = $region13
  $region12: #{ddn_fcos3d_forward.12} parent=0 // pred_region
    _
  $region13: #{ddn_fcos3d_forward.12} parent=0 // pred_fallthru
    _
  %v15 = vld [vmem:[%s0] sm:$0xf]
  %v16 = vld [vmem:[%s0 + $0x4] sm:$0x1]
  %v17 = vld [vmem:[%s0 + $0x8] sm:$0xf]
  %v18 = vld [vmem:[%s0 + $0xc] sm:$0x1]
  %v19 = vld [vmem:[%s0 + $0x10] sm:$0xf]
  %v20 = vld [vmem:[%s0 + $0x14] sm:$0x1]
  %v21 = vld [vmem:[%s0 + $0x18] sm:$0xf]
  %v22 = vld [vmem:[%s0 + $0x1c] sm:$0x1]
  %v23 = vld [vmem:[%s0 + $0x20] sm:$0xf]
  %v24 = vld [vmem:[%s0 + $0x24] sm:$0x1]
  %v25 = vld [vmem:[%s0 + $0x28] sm:$0xf]
  %v26 = vld [vmem:[%s0 + $0x2c] sm:$0x1]
  %v27 = vld [vmem:[%s0 + $0x30] sm:$0xf]
  %v28 = vld [vmem:[%s0 + $0x34] sm:$0x1]
  %v29 = vld [vmem:[%s0 + $0x38] sm:$0xf]
  %v30 = vld [vmem:[%s0 + $0x3c] sm:$0x1]
  %v31 = vld [vmem:[%s0 + $0x40] sm:$0xf]
  %v32 = vld [vmem:[%s0 + $0x44] sm:$0x1]
  %v33 = vld [vmem:[%s0 + $0x48] sm:$0xf]
  %v34 = vld [vmem:[%s0 + $0x50] sm:$0xf]
  %v35 = vld [vmem:[%s0 + $0x58] sm:$0xf]
  %v36 = vld [vmem:[%s0 + $0x60] sm:$0xf]
  %v37 = vld [vmem:[%s0 + $0x68] sm:$0xf]
  %v38 = vld [vmem:[%s0 + $0x70] sm:$0xf]
  %v39 = vld [vmem:[%s0 + $0x78] sm:$0xf]
  %v40 = vld [vmem:[%s0 + $0x80] sm:$0xf]
  %v41 = vld [vmem:[%s0 + $0x88] sm:$0xf]
  %v42 = vld [vmem:[%s0 + $0x90] sm:$0xf]
  %v43 = vld [vmem:[%s0 + $0x94] sm:$0x1]
  %v44 = vld [vmem:[%s0 + $0x98] sm:$0xf]
  %v45 = vld [vmem:[%s0 + $0x9c] sm:$0x1]
  %v46 = vld [vmem:[%s0 + $0xa0] sm:$0xf]
  %v47 = vld [vmem:[%s0 + $0xa4] sm:$0x1]
  %v48 = vld [vmem:[%s0 + $0xa8] sm:$0xf]
  %v49 = vld [vmem:[%s0 + $0xac] sm:$0x1]
  %v50 = vld [vmem:[%s0 + $0xb0] sm:$0xf]
  %v51 = vld [vmem:[%s0 + $0xb4] sm:$0x1]
  %v52 = vld [vmem:[%s0 + $0xb8] sm:$0xf]
  %v53 = vld [vmem:[%s0 + $0xbc] sm:$0x1]
  %v54 = vld [vmem:[%s0 + $0xc0] sm:$0xf]
  %v55 = vld [vmem:[%s0 + $0xc4] sm:$0x1]
  %v56 = vld [vmem:[%s0 + $0xc8] sm:$0xf]
  %v57 = vld [vmem:[%s0 + $0xcc] sm:$0x1]
  %v58 = vld [vmem:[%s0 + $0xd8] sm:$0xf]
  %v59 = vld [vmem:[%s0 + $0xe0] sm:$0xf]
  %v60 = vld [vmem:[%s0 + $0xe8] sm:$0xf]
  %v61 = vld [vmem:[%s0 + $0xf0] sm:$0xf]
  %v62 = vld [vmem:[%s0 + $0xf8] sm:$0xf]
  %v63 = vld [vmem:[%s0 + $0x100] sm:$0xf]
  %v64 = vld [vmem:[%s0 + $0x108] sm:$0xf]
  %v65 = vld [vmem:[%s0 + $0x110] sm:$0xf]
  %vm66 = vsmask.f32 3328
  %vm67 = vsmask.f32 7440
  %vm68 = vmor %vm66, %vm67
  %v70 = vshrl.u32 %v15, 16
  %v72 = vrot.slane %v70, 4
  %v73 = vshll.u32 %v15, 16
  %v75 = vrot.slane %v73, 5
  %v76 = vor.u32 %v72, %v75
  %v77 = vrot.slane %v76, 4
  %v79 = vshll.u32 %v16, 16
  %v81 = vrot.slane %v79, 5
  %v82 = vsel %vm68, %v77, %v81
  %v84 = vshrl.u32 %v17, 16
  %v86 = vrot.slane %v84, 4
  %v87 = vshll.u32 %v17, 16
  %v89 = vrot.slane %v87, 5
  %v90 = vor.u32 %v86, %v89
  %v91 = vrot.slane %v90, 4
  %v93 = vshll.u32 %v18, 16
  %v95 = vrot.slane %v93, 5
  %v96 = vsel %vm68, %v91, %v95
  %v98 = vshrl.u32 %v19, 16
  %v100 = vrot.slane %v98, 4
  %v101 = vshll.u32 %v19, 16
  %v103 = vrot.slane %v101, 5
  %v104 = vor.u32 %v100, %v103
  %v105 = vrot.slane %v104, 4
  %v107 = vshll.u32 %v20, 16
  %v109 = vrot.slane %v107, 5
  %v110 = vsel %vm68, %v105, %v109
  %v112 = vshrl.u32 %v21, 16
  %v114 = vrot.slane %v112, 4
  %v115 = vshll.u32 %v21, 16
  %v117 = vrot.slane %v115, 5
  %v118 = vor.u32 %v114, %v117
  %v119 = vrot.slane %v118, 4
  %v121 = vshll.u32 %v22, 16
  %v123 = vrot.slane %v121, 5
  %v124 = vsel %vm68, %v119, %v123
  %v126 = vshrl.u32 %v23, 16
  %v128 = vrot.slane %v126, 4
  %v129 = vshll.u32 %v23, 16
  %v131 = vrot.slane %v129, 5
  %v132 = vor.u32 %v128, %v131
  %v133 = vrot.slane %v132, 4
  %v135 = vshll.u32 %v24, 16
  %v137 = vrot.slane %v135, 5
  %v138 = vsel %vm68, %v133, %v137
  %v140 = vshrl.u32 %v25, 16
  %v142 = vrot.slane %v140, 4
  %v143 = vshll.u32 %v25, 16
  %v145 = vrot.slane %v143, 5
  %v146 = vor.u32 %v142, %v145
  %v147 = vrot.slane %v146, 4
  %v149 = vshll.u32 %v26, 16
  %v151 = vrot.slane %v149, 5
  %v152 = vsel %vm68, %v147, %v151
  %v154 = vshrl.u32 %v27, 16
  %v156 = vrot.slane %v154, 4
  %v157 = vshll.u32 %v27, 16
  %v159 = vrot.slane %v157, 5
  %v160 = vor.u32 %v156, %v159
  %v161 = vrot.slane %v160, 4
  %v163 = vshll.u32 %v28, 16
  %v165 = vrot.slane %v163, 5
  %v166 = vsel %vm68, %v161, %v165
  %v168 = vshrl.u32 %v29, 16
  %v170 = vrot.slane %v168, 4
  %v171 = vshll.u32 %v29, 16
  %v173 = vrot.slane %v171, 5
  %v174 = vor.u32 %v170, %v173
  %v175 = vrot.slane %v174, 4
  %v177 = vshll.u32 %v30, 16
  %v179 = vrot.slane %v177, 5
  %v180 = vsel %vm68, %v175, %v179
  %v182 = vshrl.u32 %v42, 16
  %v184 = vrot.slane %v182, 4
  %v185 = vshll.u32 %v42, 16
  %v187 = vrot.slane %v185, 5
  %v188 = vor.u32 %v184, %v187
  %v189 = vrot.slane %v188, 4
  %v191 = vshll.u32 %v43, 16
  %v193 = vrot.slane %v191, 5
  %v194 = vsel %vm68, %v189, %v193
  %v196 = vshrl.u32 %v44, 16
  %v198 = vrot.slane %v196, 4
  %v199 = vshll.u32 %v44, 16
  %v201 = vrot.slane %v199, 5
  %v202 = vor.u32 %v198, %v201
  %v203 = vrot.slane %v202, 4
  %v205 = vshll.u32 %v45, 16
  %v207 = vrot.slane %v205, 5
  %v208 = vsel %vm68, %v203, %v207
  %v210 = vshrl.u32 %v46, 16
  %v212 = vrot.slane %v210, 4
  %v213 = vshll.u32 %v46, 16
  %v215 = vrot.slane %v213, 5
  %v216 = vor.u32 %v212, %v215
  %v217 = vrot.slane %v216, 4
  %v219 = vshll.u32 %v47, 16
  %v221 = vrot.slane %v219, 5
  %v222 = vsel %vm68, %v217, %v221
  %v224 = vshrl.u32 %v48, 16
  %v226 = vrot.slane %v224, 4
  %v227 = vshll.u32 %v48, 16
  %v229 = vrot.slane %v227, 5
  %v230 = vor.u32 %v226, %v229
  %v231 = vrot.slane %v230, 4
  %v233 = vshll.u32 %v49, 16
  %v235 = vrot.slane %v233, 5
  %v236 = vsel %vm68, %v231, %v235
  %v238 = vshrl.u32 %v50, 16
  %v240 = vrot.slane %v238, 4
  %v241 = vshll.u32 %v50, 16
  %v243 = vrot.slane %v241, 5
  %v244 = vor.u32 %v240, %v243
  %v245 = vrot.slane %v244, 4
  %v247 = vshll.u32 %v51, 16
  %v249 = vrot.slane %v247, 5
  %v250 = vsel %vm68, %v245, %v249
  %v252 = vshrl.u32 %v52, 16
  %v254 = vrot.slane %v252, 4
  %v255 = vshll.u32 %v52, 16
  %v257 = vrot.slane %v255, 5
  %v258 = vor.u32 %v254, %v257
  %v259 = vrot.slane %v258, 4
  %v261 = vshll.u32 %v53, 16
  %v263 = vrot.slane %v261, 5
  %v264 = vsel %vm68, %v259, %v263
  %v266 = vshrl.u32 %v54, 16
  %v268 = vrot.slane %v266, 4
  %v269 = vshll.u32 %v54, 16
  %v271 = vrot.slane %v269, 5
  %v272 = vor.u32 %v268, %v271
  %v273 = vrot.slane %v272, 4
  %v275 = vshll.u32 %v55, 16
  %v277 = vrot.slane %v275, 5
  %v278 = vsel %vm68, %v273, %v277
  %v280 = vshrl.u32 %v56, 16
  %v282 = vrot.slane %v280, 4
  %v283 = vshll.u32 %v56, 16
  %v285 = vrot.slane %v283, 5
  %v286 = vor.u32 %v282, %v285
  %v287 = vrot.slane %v286, 4
  %v289 = vshll.u32 %v57, 16
  %v291 = vrot.slane %v289, 5
  %v292 = vsel %vm68, %v287, %v291
  %v294 = vshrl.u32 %v31, 16
  %v296 = vrot.slane %v294, 4
  %v297 = vshll.u32 %v31, 16
  %v299 = vrot.slane %v297, 5
  %v300 = vor.u32 %v296, %v299
  %v301 = vrot.slane %v300, 4
  %v303 = vshll.u32 %v32, 16
  %v305 = vrot.slane %v303, 5
  %v306 = vsel %vm68, %v301, %v305
  %v315 = vunpack.c.l.b16 %v15
  %v316 = vunpack.c.l.b16 %v17
  %v317 = vunpack.c.l.b16 %v19
  %v318 = vunpack.c.l.b16 %v21
  %v319 = vunpack.c.l.b16 %v23
  %v320 = vunpack.c.l.b16 %v25
  %v321 = vunpack.c.l.b16 %v27
  %v322 = vunpack.c.l.b16 %v29
  %v323 = vpack.c.b16 %v316, %v315
  %v324 = vpack.c.b16 %v318, %v317
  %v325 = vpack.c.b16 %v320, %v319
  %v326 = vpack.c.b16 %v322, %v321
  %v339 = vunpack.c.l.b16 %v33
  %v340 = vunpack.c.l.b16 %v34
  %v341 = vunpack.c.l.b16 %v35
  %v342 = vunpack.c.l.b16 %v36
  %v343 = vunpack.c.l.b16 %v37
  %v344 = vunpack.c.l.b16 %v38
  %v345 = vunpack.c.l.b16 %v39
  %v346 = vunpack.c.l.b16 %v40
  %v347 = vpack.c.b16 %v340, %v339
  %v348 = vpack.c.b16 %v342, %v341
  %v349 = vpack.c.b16 %v344, %v343
  %v350 = vpack.c.b16 %v346, %v345
  %v355 = vunpack.c.l.b16 %v82
  %v356 = vunpack.c.l.b16 %v96
  %v357 = vunpack.c.l.b16 %v110
  %v358 = vunpack.c.l.b16 %v124
  %v359 = vunpack.c.l.b16 %v138
  %v360 = vunpack.c.l.b16 %v152
  %v361 = vunpack.c.l.b16 %v166
  %v362 = vunpack.c.l.b16 %v180
  %v363 = vpack.c.b16 %v356, %v355
  %v364 = vpack.c.b16 %v358, %v357
  %v365 = vpack.c.b16 %v360, %v359
  %v366 = vpack.c.b16 %v362, %v361
  %v379 = vunpack.c.l.b16 %v42
  %v380 = vunpack.c.l.b16 %v44
  %v381 = vunpack.c.l.b16 %v46
  %v382 = vunpack.c.l.b16 %v48
  %v383 = vunpack.c.l.b16 %v50
  %v384 = vunpack.c.l.b16 %v52
  %v385 = vunpack.c.l.b16 %v54
  %v386 = vunpack.c.l.b16 %v56
  %v387 = vpack.c.b16 %v380, %v379
  %v388 = vpack.c.b16 %v382, %v381
  %v389 = vpack.c.b16 %v384, %v383
  %v390 = vpack.c.b16 %v386, %v385
  %v403 = vunpack.c.l.b16 %v58
  %v404 = vunpack.c.l.b16 %v59
  %v405 = vunpack.c.l.b16 %v60
  %v406 = vunpack.c.l.b16 %v61
  %v407 = vunpack.c.l.b16 %v62
  %v408 = vunpack.c.l.b16 %v63
  %v409 = vunpack.c.l.b16 %v64
  %v410 = vunpack.c.l.b16 %v65
  %v411 = vpack.c.b16 %v404, %v403
  %v412 = vpack.c.b16 %v406, %v405
  %v413 = vpack.c.b16 %v408, %v407
  %v414 = vpack.c.b16 %v410, %v409
  %v419 = vunpack.c.l.b16 %v194
  %v420 = vunpack.c.l.b16 %v208
  %v421 = vunpack.c.l.b16 %v222
  %v422 = vunpack.c.l.b16 %v236
  %v423 = vunpack.c.l.b16 %v250
  %v424 = vunpack.c.l.b16 %v264
  %v425 = vunpack.c.l.b16 %v278
  %v426 = vunpack.c.l.b16 %v292
  %v427 = vpack.c.b16 %v420, %v419
  %v428 = vpack.c.b16 %v422, %v421
  %v429 = vpack.c.b16 %v424, %v423
  %v430 = vpack.c.b16 %v426, %v425
  %v436 = vunpack.c.l.b16 %v31
  %v437 = vpack.c.b16 %v317, %v316
  %v438 = vpack.c.b16 %v319, %v318
  %v439 = vpack.c.b16 %v321, %v320
  %v440 = vpack.c.b16 %v436, %v322
  %v446 = vunpack.c.l.b16 %v41
  %v447 = vpack.c.b16 %v341, %v340
  %v448 = vpack.c.b16 %v343, %v342
  %v449 = vpack.c.b16 %v345, %v344
  %v450 = vpack.c.b16 %v446, %v346
  %v455 = vunpack.c.l.b16 %v306
  %v456 = vpack.c.b16 %v357, %v356
  %v457 = vpack.c.b16 %v359, %v358
  %v458 = vpack.c.b16 %v361, %v360
  %v459 = vpack.c.b16 %v455, %v362
  %s464 = scalar_lea.vmem %s0, 288
  %v465 = vld [vmem:[%s464] sm:$0xf]
  %v466 = vld [vmem:[%s464 + $0x4] sm:$0x1]
  %v467 = vld [vmem:[%s464 + $0x8] sm:$0xf]
  %v468 = vld [vmem:[%s464 + $0xc] sm:$0x1]
  %v469 = vld [vmem:[%s464 + $0x10] sm:$0xf]
  %v470 = vld [vmem:[%s464 + $0x14] sm:$0x1]
  %v471 = vld [vmem:[%s464 + $0x18] sm:$0xf]
  %v472 = vld [vmem:[%s464 + $0x1c] sm:$0x1]
  %v473 = vld [vmem:[%s464 + $0x20] sm:$0xf]
  %v474 = vld [vmem:[%s464 + $0x24] sm:$0x1]
  %v475 = vld [vmem:[%s464 + $0x28] sm:$0xf]
  %v476 = vld [vmem:[%s464 + $0x2c] sm:$0x1]
  %v477 = vld [vmem:[%s464 + $0x30] sm:$0xf]
  %v478 = vld [vmem:[%s464 + $0x34] sm:$0x1]
  %v479 = vld [vmem:[%s464 + $0x38] sm:$0xf]
  %v480 = vld [vmem:[%s464 + $0x3c] sm:$0x1]
  %v481 = vld [vmem:[%s464 + $0x40] sm:$0xf]
  %v482 = vld [vmem:[%s464 + $0x44] sm:$0x1]
  %v483 = vld [vmem:[%s464 + $0x48] sm:$0xf]
  %v484 = vld [vmem:[%s464 + $0x50] sm:$0xf]
  %v485 = vld [vmem:[%s464 + $0x58] sm:$0xf]
  %v486 = vld [vmem:[%s464 + $0x60] sm:$0xf]
  %v487 = vld [vmem:[%s464 + $0x68] sm:$0xf]
  %v488 = vld [vmem:[%s464 + $0x70] sm:$0xf]
  %v489 = vld [vmem:[%s464 + $0x78] sm:$0xf]
  %v490 = vld [vmem:[%s464 + $0x80] sm:$0xf]
  %v491 = vld [vmem:[%s464 + $0x88] sm:$0xf]
  %v492 = vld [vmem:[%s464 + $0x90] sm:$0xf]
  %v493 = vld [vmem:[%s464 + $0x94] sm:$0x1]
  %v494 = vld [vmem:[%s464 + $0x98] sm:$0xf]
  %v495 = vld [vmem:[%s464 + $0x9c] sm:$0x1]
  %v496 = vld [vmem:[%s464 + $0xa0] sm:$0xf]
  %v497 = vld [vmem:[%s464 + $0xa4] sm:$0x1]
  %v498 = vld [vmem:[%s464 + $0xa8] sm:$0xf]
  %v499 = vld [vmem:[%s464 + $0xac] sm:$0x1]
  %v500 = vld [vmem:[%s464 + $0xb0] sm:$0xf]
  %v501 = vld [vmem:[%s464 + $0xb4] sm:$0x1]
  %v502 = vld [vmem:[%s464 + $0xb8] sm:$0xf]
  %v503 = vld [vmem:[%s464 + $0xbc] sm:$0x1]
  %v504 = vld [vmem:[%s464 + $0xc0] sm:$0xf]
  %v505 = vld [vmem:[%s464 + $0xc4] sm:$0x1]
  %v506 = vld [vmem:[%s464 + $0xc8] sm:$0xf]
  %v507 = vld [vmem:[%s464 + $0xcc] sm:$0x1]
  %v508 = vld [vmem:[%s464 + $0xd8] sm:$0xf]
  %v509 = vld [vmem:[%s464 + $0xe0] sm:$0xf]
  %v510 = vld [vmem:[%s464 + $0xe8] sm:$0xf]
  %v511 = vld [vmem:[%s464 + $0xf0] sm:$0xf]
  %v512 = vld [vmem:[%s464 + $0xf8] sm:$0xf]
  %v513 = vld [vmem:[%s464 + $0x100] sm:$0xf]
  %v514 = vld [vmem:[%s464 + $0x108] sm:$0xf]
  %v515 = vld [vmem:[%s464 + $0x110] sm:$0xf]
  %v517 = vshrl.u32 %v465, 16
  %v519 = vrot.slane %v517, 4
  %v520 = vshll.u32 %v465, 16
  %v522 = vrot.slane %v520, 5
  %v523 = vor.u32 %v519, %v522
  %v524 = vrot.slane %v523, 4
  %v526 = vshll.u32 %v466, 16
  %v528 = vrot.slane %v526, 5
  %v529 = vsel %vm68, %v524, %v528
  %v531 = vshrl.u32 %v467, 16
  %v533 = vrot.slane %v531, 4
  %v534 = vshll.u32 %v467, 16
  %v536 = vrot.slane %v534, 5
  %v537 = vor.u32 %v533, %v536
  %v538 = vrot.slane %v537, 4
  %v540 = vshll.u32 %v468, 16
  %v542 = vrot.slane %v540, 5
  %v543 = vsel %vm68, %v538, %v542
  %v545 = vshrl.u32 %v469, 16
  %v547 = vrot.slane %v545, 4
  %v548 = vshll.u32 %v469, 16
  %v550 = vrot.slane %v548, 5
  %v551 = vor.u32 %v547, %v550
  %v552 = vrot.slane %v551, 4
  %v554 = vshll.u32 %v470, 16
  %v556 = vrot.slane %v554, 5
  %v557 = vsel %vm68, %v552, %v556
  %v559 = vshrl.u32 %v471, 16
  %v561 = vrot.slane %v559, 4
  %v562 = vshll.u32 %v471, 16
  %v564 = vrot.slane %v562, 5
  %v565 = vor.u32 %v561, %v564
  %v566 = vrot.slane %v565, 4
  %v568 = vshll.u32 %v472, 16
  %v570 = vrot.slane %v568, 5
  %v571 = vsel %vm68, %v566, %v570
  %v573 = vshrl.u32 %v473, 16
  %v575 = vrot.slane %v573, 4
  %v576 = vshll.u32 %v473, 16
  %v578 = vrot.slane %v576, 5
  %v579 = vor.u32 %v575, %v578
  %v580 = vrot.slane %v579, 4
  %v582 = vshll.u32 %v474, 16
  %v584 = vrot.slane %v582, 5
  %v585 = vsel %vm68, %v580, %v584
  %v587 = vshrl.u32 %v475, 16
  %v589 = vrot.slane %v587, 4
  %v590 = vshll.u32 %v475, 16
  %v592 = vrot.slane %v590, 5
  %v593 = vor.u32 %v589, %v592
  %v594 = vrot.slane %v593, 4
  %v596 = vshll.u32 %v476, 16
  %v598 = vrot.slane %v596, 5
  %v599 = vsel %vm68, %v594, %v598
  %v601 = vshrl.u32 %v477, 16
  %v603 = vrot.slane %v601, 4
  %v604 = vshll.u32 %v477, 16
  %v606 = vrot.slane %v604, 5
  %v607 = vor.u32 %v603, %v606
  %v608 = vrot.slane %v607, 4
  %v610 = vshll.u32 %v478, 16
  %v612 = vrot.slane %v610, 5
  %v613 = vsel %vm68, %v608, %v612
  %v615 = vshrl.u32 %v479, 16
  %v617 = vrot.slane %v615, 4
  %v618 = vshll.u32 %v479, 16
  %v620 = vrot.slane %v618, 5
  %v621 = vor.u32 %v617, %v620
  %v622 = vrot.slane %v621, 4
  %v624 = vshll.u32 %v480, 16
  %v626 = vrot.slane %v624, 5
  %v627 = vsel %vm68, %v622, %v626
  %v629 = vshrl.u32 %v492, 16
  %v631 = vrot.slane %v629, 4
  %v632 = vshll.u32 %v492, 16
  %v634 = vrot.slane %v632, 5
  %v635 = vor.u32 %v631, %v634
  %v636 = vrot.slane %v635, 4
  %v638 = vshll.u32 %v493, 16
  %v640 = vrot.slane %v638, 5
  %v641 = vsel %vm68, %v636, %v640
  %v643 = vshrl.u32 %v494, 16
  %v645 = vrot.slane %v643, 4
  %v646 = vshll.u32 %v494, 16
  %v648 = vrot.slane %v646, 5
  %v649 = vor.u32 %v645, %v648
  %v650 = vrot.slane %v649, 4
  %v652 = vshll.u32 %v495, 16
  %v654 = vrot.slane %v652, 5
  %v655 = vsel %vm68, %v650, %v654
  %v657 = vshrl.u32 %v496, 16
  %v659 = vrot.slane %v657, 4
  %v660 = vshll.u32 %v496, 16
  %v662 = vrot.slane %v660, 5
  %v663 = vor.u32 %v659, %v662
  %v664 = vrot.slane %v663, 4
  %v666 = vshll.u32 %v497, 16
  %v668 = vrot.slane %v666, 5
  %v669 = vsel %vm68, %v664, %v668
  %v671 = vshrl.u32 %v498, 16
  %v673 = vrot.slane %v671, 4
  %v674 = vshll.u32 %v498, 16
  %v676 = vrot.slane %v674, 5
  %v677 = vor.u32 %v673, %v676
  %v678 = vrot.slane %v677, 4
  %v680 = vshll.u32 %v499, 16
  %v682 = vrot.slane %v680, 5
  %v683 = vsel %vm68, %v678, %v682
  %v685 = vshrl.u32 %v500, 16
  %v687 = vrot.slane %v685, 4
  %v688 = vshll.u32 %v500, 16
  %v690 = vrot.slane %v688, 5
  %v691 = vor.u32 %v687, %v690
  %v692 = vrot.slane %v691, 4
  %v694 = vshll.u32 %v501, 16
  %v696 = vrot.slane %v694, 5
  %v697 = vsel %vm68, %v692, %v696
  %v699 = vshrl.u32 %v502, 16
  %v701 = vrot.slane %v699, 4
  %v702 = vshll.u32 %v502, 16
  %v704 = vrot.slane %v702, 5
  %v705 = vor.u32 %v701, %v704
  %v706 = vrot.slane %v705, 4
  %v708 = vshll.u32 %v503, 16
  %v710 = vrot.slane %v708, 5
  %v711 = vsel %vm68, %v706, %v710
  %v713 = vshrl.u32 %v504, 16
  %v715 = vrot.slane %v713, 4
  %v716 = vshll.u32 %v504, 16
  %v718 = vrot.slane %v716, 5
  %v719 = vor.u32 %v715, %v718
  %v720 = vrot.slane %v719, 4
  %v722 = vshll.u32 %v505, 16
  %v724 = vrot.slane %v722, 5
  %v725 = vsel %vm68, %v720, %v724
  %v727 = vshrl.u32 %v506, 16
  %v729 = vrot.slane %v727, 4
  %v730 = vshll.u32 %v506, 16
  %v732 = vrot.slane %v730, 5
  %v733 = vor.u32 %v729, %v732
  %v734 = vrot.slane %v733, 4
  %v736 = vshll.u32 %v507, 16
  %v738 = vrot.slane %v736, 5
  %v739 = vsel %vm68, %v734, %v738
  %v741 = vshrl.u32 %v481, 16
  %v743 = vrot.slane %v741, 4
  %v744 = vshll.u32 %v481, 16
  %v746 = vrot.slane %v744, 5
  %v747 = vor.u32 %v743, %v746
  %v748 = vrot.slane %v747, 4
  %v750 = vshll.u32 %v482, 16
  %v752 = vrot.slane %v750, 5
  %v753 = vsel %vm68, %v748, %v752
  %v762 = vunpack.c.l.b16 %v465
  %v763 = vunpack.c.l.b16 %v467
  %v764 = vunpack.c.l.b16 %v469
  %v765 = vunpack.c.l.b16 %v471
  %v766 = vunpack.c.l.b16 %v473
  %v767 = vunpack.c.l.b16 %v475
  %v768 = vunpack.c.l.b16 %v477
  %v769 = vunpack.c.l.b16 %v479
  %v770 = vpack.c.b16 %v763, %v762
  %v771 = vpack.c.b16 %v765, %v764
  %v772 = vpack.c.b16 %v767, %v766
  %v773 = vpack.c.b16 %v769, %v768
  %v786 = vunpack.c.l.b16 %v483
  %v787 = vunpack.c.l.b16 %v484
  %v788 = vunpack.c.l.b16 %v485
  %v789 = vunpack.c.l.b16 %v486
  %v790 = vunpack.c.l.b16 %v487
  %v791 = vunpack.c.l.b16 %v488
  %v792 = vunpack.c.l.b16 %v489
  %v793 = vunpack.c.l.b16 %v490
  %v794 = vpack.c.b16 %v787, %v786
  %v795 = vpack.c.b16 %v789, %v788
  %v796 = vpack.c.b16 %v791, %v790
  %v797 = vpack.c.b16 %v793, %v792
  %v802 = vunpack.c.l.b16 %v529
  %v803 = vunpack.c.l.b16 %v543
  %v804 = vunpack.c.l.b16 %v557
  %v805 = vunpack.c.l.b16 %v571
  %v806 = vunpack.c.l.b16 %v585
  %v807 = vunpack.c.l.b16 %v599
  %v808 = vunpack.c.l.b16 %v613
  %v809 = vunpack.c.l.b16 %v627
  %v810 = vpack.c.b16 %v803, %v802
  %v811 = vpack.c.b16 %v805, %v804
  %v812 = vpack.c.b16 %v807, %v806
  %v813 = vpack.c.b16 %v809, %v808
  %v826 = vunpack.c.l.b16 %v492
  %v827 = vunpack.c.l.b16 %v494
  %v828 = vunpack.c.l.b16 %v496
  %v829 = vunpack.c.l.b16 %v498
  %v830 = vunpack.c.l.b16 %v500
  %v831 = vunpack.c.l.b16 %v502
  %v832 = vunpack.c.l.b16 %v504
  %v833 = vunpack.c.l.b16 %v506
  %v834 = vpack.c.b16 %v827, %v826
  %v835 = vpack.c.b16 %v829, %v828
  %v836 = vpack.c.b16 %v831, %v830
  %v837 = vpack.c.b16 %v833, %v832
  %v850 = vunpack.c.l.b16 %v508
  %v851 = vunpack.c.l.b16 %v509
  %v852 = vunpack.c.l.b16 %v510
  %v853 = vunpack.c.l.b16 %v511
  %v854 = vunpack.c.l.b16 %v512
  %v855 = vunpack.c.l.b16 %v513
  %v856 = vunpack.c.l.b16 %v514
  %v857 = vunpack.c.l.b16 %v515
  %v858 = vpack.c.b16 %v851, %v850
  %v859 = vpack.c.b16 %v853, %v852
  %v860 = vpack.c.b16 %v855, %v854
  %v861 = vpack.c.b16 %v857, %v856
  %v866 = vunpack.c.l.b16 %v641
  %v867 = vunpack.c.l.b16 %v655
  %v868 = vunpack.c.l.b16 %v669
  %v869 = vunpack.c.l.b16 %v683
  %v870 = vunpack.c.l.b16 %v697
  %v871 = vunpack.c.l.b16 %v711
  %v872 = vunpack.c.l.b16 %v725
  %v873 = vunpack.c.l.b16 %v739
  %v874 = vpack.c.b16 %v867, %v866
  %v875 = vpack.c.b16 %v869, %v868
  %v876 = vpack.c.b16 %v871, %v870
  %v877 = vpack.c.b16 %v873, %v872
  %v883 = vunpack.c.l.b16 %v481
  %v884 = vpack.c.b16 %v764, %v763
  %v885 = vpack.c.b16 %v766, %v765
  %v886 = vpack.c.b16 %v768, %v767
  %v887 = vpack.c.b16 %v883, %v769
  %v893 = vunpack.c.l.b16 %v491
  %v894 = vpack.c.b16 %v788, %v787
  %v895 = vpack.c.b16 %v790, %v789
  %v896 = vpack.c.b16 %v792, %v791
  %v897 = vpack.c.b16 %v893, %v793
  %v902 = vunpack.c.l.b16 %v753
  %v903 = vpack.c.b16 %v804, %v803
  %v904 = vpack.c.b16 %v806, %v805
  %v905 = vpack.c.b16 %v808, %v807
  %v906 = vpack.c.b16 %v902, %v809
  %v911 = vld [vmem:[%s1] sm:$0xf]
  %v912 = vld [vmem:[%s1 + $0x4] sm:$0xf]
  %v913 = vld [vmem:[%s1 + $0x8] sm:$0xf]
  %v914 = vld [vmem:[%s1 + $0xc] sm:$0xf]
  %v915 = vld [vmem:[%s1 + $0x10] sm:$0xf]
  %v916 = vld [vmem:[%s1 + $0x14] sm:$0xf]
  %v917 = vld [vmem:[%s1 + $0x18] sm:$0xf]
  %v918 = vld [vmem:[%s1 + $0x1c] sm:$0xf]
  %v919 = vld [vmem:[%s1 + $0x20] sm:$0xf]
  %v920 = vld [vmem:[%s1 + $0x24] sm:$0xf]
  %v921 = vld [vmem:[%s1 + $0x28] sm:$0xf]
  %v922 = vld [vmem:[%s1 + $0x2c] sm:$0xf]
  %v923 = vld [vmem:[%s1 + $0x30] sm:$0xf]
  %v924 = vld [vmem:[%s1 + $0x34] sm:$0xf]
  %v925 = vld [vmem:[%s1 + $0x38] sm:$0xf]
  %v926 = vld [vmem:[%s1 + $0x3c] sm:$0xf]
  %v927 = vld [vmem:[%s1 + $0x40] sm:$0xf]
  %v928 = vld [vmem:[%s1 + $0x44] sm:$0xf]
  %v929 = vld [vmem:[%s1 + $0x48] sm:$0xf]
  %v930 = vld [vmem:[%s1 + $0x4c] sm:$0xf]
  %v931 = vld [vmem:[%s1 + $0x50] sm:$0xf]
  %v932 = vld [vmem:[%s1 + $0x54] sm:$0xf]
  %v933 = vld [vmem:[%s1 + $0x58] sm:$0xf]
  %v934 = vld [vmem:[%s1 + $0x5c] sm:$0xf]
  %v935 = vld [vmem:[%s1 + $0x60] sm:$0xf]
  %v936 = vld [vmem:[%s1 + $0x64] sm:$0xf]
  %v937 = vld [vmem:[%s1 + $0x68] sm:$0xf]
  %v938 = vld [vmem:[%s1 + $0x6c] sm:$0xf]
  %v939 = vld [vmem:[%s1 + $0x70] sm:$0xf]
  %v940 = vld [vmem:[%s1 + $0x74] sm:$0xf]
  %v941 = vld [vmem:[%s1 + $0x78] sm:$0xf]
  %v942 = vld [vmem:[%s1 + $0x7c] sm:$0xf]
  %v943 = vld [vmem:[%s1 + $0x80] sm:$0xf]
  %v944 = vld [vmem:[%s1 + $0x84] sm:$0xf]
  %v945 = vld [vmem:[%s1 + $0x88] sm:$0xf]
  %v946 = vld [vmem:[%s1 + $0x8c] sm:$0xf]
  %v947 = vld [vmem:[%s1 + $0x90] sm:$0xf]
  %v948 = vld [vmem:[%s1 + $0x94] sm:$0xf]
  %v949 = vld [vmem:[%s1 + $0x98] sm:$0xf]
  %v950 = vld [vmem:[%s1 + $0x9c] sm:$0xf]
  %v951 = vld [vmem:[%s1 + $0xa0] sm:$0xf]
  %v952 = vld [vmem:[%s1 + $0xa4] sm:$0xf]
  %v953 = vld [vmem:[%s1 + $0xa8] sm:$0xf]
  %v954 = vld [vmem:[%s1 + $0xac] sm:$0xf]
  %v955 = vld [vmem:[%s1 + $0xb0] sm:$0xf]
  %v956 = vld [vmem:[%s1 + $0xb4] sm:$0xf]
  %v957 = vld [vmem:[%s1 + $0xb8] sm:$0xf]
  %v958 = vld [vmem:[%s1 + $0xbc] sm:$0xf]
  %v959 = vld [vmem:[%s1 + $0xc0] sm:$0xf]
  %v960 = vld [vmem:[%s1 + $0xc4] sm:$0xf]
  %v961 = vld [vmem:[%s1 + $0xc8] sm:$0xf]
  %v962 = vld [vmem:[%s1 + $0xcc] sm:$0xf]
  %v963 = vld [vmem:[%s1 + $0xd0] sm:$0xf]
  %v964 = vld [vmem:[%s1 + $0xd4] sm:$0xf]
  %v965 = vld [vmem:[%s1 + $0xd8] sm:$0xf]
  %v966 = vld [vmem:[%s1 + $0xdc] sm:$0xf]
  %v967 = vld [vmem:[%s1 + $0xe0] sm:$0xf]
  %v968 = vld [vmem:[%s1 + $0xe4] sm:$0xf]
  %v969 = vld [vmem:[%s1 + $0xe8] sm:$0xf]
  %v970 = vld [vmem:[%s1 + $0xec] sm:$0xf]
  %v971 = vld [vmem:[%s1 + $0xf0] sm:$0xf]
  %v972 = vld [vmem:[%s1 + $0xf4] sm:$0xf]
  %v973 = vld [vmem:[%s1 + $0xf8] sm:$0xf]
  %v974 = vld [vmem:[%s1 + $0xfc] sm:$0xf]
  %v975 = vld [vmem:[%s1 + $0x100] sm:$0xf]
  %v976 = vld [vmem:[%s1 + $0x104] sm:$0xf]
  %v977 = vld [vmem:[%s1 + $0x108] sm:$0xf]
  %v978 = vld [vmem:[%s1 + $0x10c] sm:$0xf]
  %v979 = vld [vmem:[%s1 + $0x110] sm:$0xf]
  %v980 = vld [vmem:[%s1 + $0x114] sm:$0xf]
  %v981 = vld [vmem:[%s1 + $0x118] sm:$0xf]
  %v982 = vld [vmem:[%s1 + $0x11c] sm:$0xf]
  %v983 = vld [vmem:[%s1 + $0x120] sm:$0xf]
  %v984 = vld [vmem:[%s1 + $0x124] sm:$0xf]
  %v985 = vld [vmem:[%s1 + $0x128] sm:$0xf]
  %v986 = vld [vmem:[%s1 + $0x12c] sm:$0xf]
  %v987 = vld [vmem:[%s1 + $0x130] sm:$0xf]
  %v988 = vld [vmem:[%s1 + $0x134] sm:$0xf]
  %v989 = vld [vmem:[%s1 + $0x138] sm:$0xf]
  %v990 = vld [vmem:[%s1 + $0x13c] sm:$0xf]
  %v991 = vld [vmem:[%s1 + $0x140] sm:$0xf]
  %v992 = vld [vmem:[%s1 + $0x144] sm:$0xf]
  %v993 = vld [vmem:[%s1 + $0x148] sm:$0xf]
  %v994 = vld [vmem:[%s1 + $0x14c] sm:$0xf]
  %v995 = vld [vmem:[%s1 + $0x150] sm:$0xf]
  %v996 = vld [vmem:[%s1 + $0x154] sm:$0xf]
  %v997 = vld [vmem:[%s1 + $0x158] sm:$0xf]
  %v998 = vld [vmem:[%s1 + $0x15c] sm:$0xf]
  %v999 = vld [vmem:[%s1 + $0x160] sm:$0xf]
  %v1000 = vld [vmem:[%s1 + $0x164] sm:$0xf]
  %v1001 = vld [vmem:[%s1 + $0x168] sm:$0xf]
  %v1002 = vld [vmem:[%s1 + $0x16c] sm:$0xf]
  %v1003 = vld [vmem:[%s1 + $0x170] sm:$0xf]
  %v1004 = vld [vmem:[%s1 + $0x174] sm:$0xf]
  %v1005 = vld [vmem:[%s1 + $0x178] sm:$0xf]
  %v1006 = vld [vmem:[%s1 + $0x17c] sm:$0xf]
  %v1007 = vld [vmem:[%s1 + $0x180] sm:$0xf]
  %v1008 = vld [vmem:[%s1 + $0x184] sm:$0xf]
  %v1009 = vld [vmem:[%s1 + $0x188] sm:$0xf]
  %v1010 = vld [vmem:[%s1 + $0x18c] sm:$0xf]
  %v1011 = vld [vmem:[%s1 + $0x190] sm:$0xf]
  %v1012 = vld [vmem:[%s1 + $0x194] sm:$0xf]
  %v1013 = vld [vmem:[%s1 + $0x198] sm:$0xf]
  %v1014 = vld [vmem:[%s1 + $0x19c] sm:$0xf]
  %v1015 = vld [vmem:[%s1 + $0x1a0] sm:$0xf]
  %v1016 = vld [vmem:[%s1 + $0x1a4] sm:$0xf]
  %v1017 = vld [vmem:[%s1 + $0x1a8] sm:$0xf]
  %v1018 = vld [vmem:[%s1 + $0x1ac] sm:$0xf]
  %v1019 = vld [vmem:[%s1 + $0x1b0] sm:$0xf]
  %v1020 = vld [vmem:[%s1 + $0x1b4] sm:$0xf]
  %v1021 = vld [vmem:[%s1 + $0x1b8] sm:$0xf]
  %v1022 = vld [vmem:[%s1 + $0x1bc] sm:$0xf]
  %v1023 = vld [vmem:[%s1 + $0x1c0] sm:$0xf]
  %v1024 = vld [vmem:[%s1 + $0x1c4] sm:$0xf]
  %v1025 = vld [vmem:[%s1 + $0x1c8] sm:$0xf]
  %v1026 = vld [vmem:[%s1 + $0x1cc] sm:$0xf]
  %v1027 = vld [vmem:[%s1 + $0x1d0] sm:$0xf]
  %v1028 = vld [vmem:[%s1 + $0x1d4] sm:$0xf]
  %v1029 = vld [vmem:[%s1 + $0x1d8] sm:$0xf]
  %v1030 = vld [vmem:[%s1 + $0x1dc] sm:$0xf]
  %v1031 = vld [vmem:[%s1 + $0x1e0] sm:$0xf]
  %v1032 = vld [vmem:[%s1 + $0x1e4] sm:$0xf]
  %v1033 = vld [vmem:[%s1 + $0x1e8] sm:$0xf]
  %v1034 = vld [vmem:[%s1 + $0x1ec] sm:$0xf]
  %v1035 = vld [vmem:[%s1 + $0x1f0] sm:$0xf]
  %v1036 = vld [vmem:[%s1 + $0x1f4] sm:$0xf]
  %v1037 = vld [vmem:[%s1 + $0x1f8] sm:$0xf]
  %v1038 = vld [vmem:[%s1 + $0x1fc] sm:$0xf]
  %v1039 = vld [vmem:[%s1 + $0x200] sm:$0xf]
  %v1040 = vld [vmem:[%s1 + $0x204] sm:$0xf]
  %v1041 = vld [vmem:[%s1 + $0x208] sm:$0xf]
  %v1042 = vld [vmem:[%s1 + $0x20c] sm:$0xf]
  %v1043 = vld [vmem:[%s1 + $0x210] sm:$0xf]
  %v1044 = vld [vmem:[%s1 + $0x214] sm:$0xf]
  %v1045 = vld [vmem:[%s1 + $0x218] sm:$0xf]
  %v1046 = vld [vmem:[%s1 + $0x21c] sm:$0xf]
  %v1047 = vld [vmem:[%s1 + $0x220] sm:$0xf]
  %v1048 = vld [vmem:[%s1 + $0x224] sm:$0xf]
  %v1049 = vld [vmem:[%s1 + $0x228] sm:$0xf]
  %v1050 = vld [vmem:[%s1 + $0x22c] sm:$0xf]
  %v1051 = vld [vmem:[%s1 + $0x230] sm:$0xf]
  %v1052 = vld [vmem:[%s1 + $0x234] sm:$0xf]
  %v1053 = vld [vmem:[%s1 + $0x238] sm:$0xf]
  %v1054 = vld [vmem:[%s1 + $0x23c] sm:$0xf]
  %v1055 = vld [vmem:[%s2] sm:$0x1]
  %v1057 = vlaneseq
  %v1058 = vshrl.u32 %v1057, 7
  %v1059 = vsub.s32 0, %v1058
  %v1060 = vrot.slane %v1055, %v1059
  %v1206 = vunpack.c.l.b16 %v911
  %v1207 = vunpack.c.l.b16 %v912
  %v1208 = vunpack.c.l.b16 %v913
  %v1209 = vunpack.c.l.b16 %v914
  %v1210 = vunpack.c.l.b16 %v915
  %v1211 = vunpack.c.l.b16 %v916
  %v1212 = vunpack.c.l.b16 %v917
  %v1213 = vunpack.c.l.b16 %v918
  %v1214 = vunpack.c.l.b16 %v919
  %v1215 = vunpack.c.l.b16 %v920
  %v1216 = vunpack.c.l.b16 %v921
  %v1217 = vunpack.c.l.b16 %v922
  %v1218 = vunpack.c.l.b16 %v923
  %v1219 = vunpack.c.l.b16 %v924
  %v1220 = vunpack.c.l.b16 %v925
  %v1221 = vunpack.c.l.b16 %v926
  %v1222 = vunpack.c.l.b16 %v927
  %v1223 = vunpack.c.l.b16 %v928
  %v1224 = vunpack.c.l.b16 %v929
  %v1225 = vunpack.c.l.b16 %v930
  %v1226 = vunpack.c.l.b16 %v931
  %v1227 = vunpack.c.l.b16 %v932
  %v1228 = vunpack.c.l.b16 %v933
  %v1229 = vunpack.c.l.b16 %v934
  %v1230 = vunpack.c.l.b16 %v935
  %v1231 = vunpack.c.l.b16 %v936
  %v1232 = vunpack.c.l.b16 %v937
  %v1233 = vunpack.c.l.b16 %v938
  %v1234 = vunpack.c.l.b16 %v939
  %v1235 = vunpack.c.l.b16 %v940
  %v1236 = vunpack.c.l.b16 %v941
  %v1237 = vunpack.c.l.b16 %v942
  %v1238 = vunpack.c.l.b16 %v943
  %v1239 = vunpack.c.l.b16 %v944
  %v1240 = vunpack.c.l.b16 %v945
  %v1241 = vunpack.c.l.b16 %v946
  %v1242 = vunpack.c.l.b16 %v947
  %v1243 = vunpack.c.l.b16 %v948
  %v1244 = vunpack.c.l.b16 %v949
  %v1245 = vunpack.c.l.b16 %v950
  %v1246 = vunpack.c.l.b16 %v951
  %v1247 = vunpack.c.l.b16 %v952
  %v1248 = vunpack.c.l.b16 %v953
  %v1249 = vunpack.c.l.b16 %v954
  %v1250 = vunpack.c.l.b16 %v955
  %v1251 = vunpack.c.l.b16 %v956
  %v1252 = vunpack.c.l.b16 %v957
  %v1253 = vunpack.c.l.b16 %v958
  %v1254 = vunpack.c.l.b16 %v959
  %v1255 = vunpack.c.l.b16 %v960
  %v1256 = vunpack.c.l.b16 %v961
  %v1257 = vunpack.c.l.b16 %v962
  %v1258 = vunpack.c.l.b16 %v963
  %v1259 = vunpack.c.l.b16 %v964
  %v1260 = vunpack.c.l.b16 %v965
  %v1261 = vunpack.c.l.b16 %v966
  %v1262 = vunpack.c.l.b16 %v967
  %v1263 = vunpack.c.l.b16 %v968
  %v1264 = vunpack.c.l.b16 %v969
  %v1265 = vunpack.c.l.b16 %v970
  %v1266 = vunpack.c.l.b16 %v971
  %v1267 = vunpack.c.l.b16 %v972
  %v1268 = vunpack.c.l.b16 %v973
  %v1269 = vunpack.c.l.b16 %v974
  %v1270 = vunpack.c.l.b16 %v975
  %v1271 = vunpack.c.l.b16 %v976
  %v1272 = vunpack.c.l.b16 %v977
  %v1273 = vunpack.c.l.b16 %v978
  %v1274 = vunpack.c.l.b16 %v979
  %v1275 = vunpack.c.l.b16 %v980
  %v1276 = vunpack.c.l.b16 %v981
  %v1277 = vunpack.c.l.b16 %v982
  %v1278 = vunpack.c.l.b16 %v983
  %v1279 = vunpack.c.l.b16 %v984
  %v1280 = vunpack.c.l.b16 %v985
  %v1281 = vunpack.c.l.b16 %v986
  %v1282 = vunpack.c.l.b16 %v987
  %v1283 = vunpack.c.l.b16 %v988
  %v1284 = vunpack.c.l.b16 %v989
  %v1285 = vunpack.c.l.b16 %v990
  %v1286 = vunpack.c.l.b16 %v991
  %v1287 = vunpack.c.l.b16 %v992
  %v1288 = vunpack.c.l.b16 %v993
  %v1289 = vunpack.c.l.b16 %v994
  %v1290 = vunpack.c.l.b16 %v995
  %v1291 = vunpack.c.l.b16 %v996
  %v1292 = vunpack.c.l.b16 %v997
  %v1293 = vunpack.c.l.b16 %v998
  %v1294 = vunpack.c.l.b16 %v999
  %v1295 = vunpack.c.l.b16 %v1000
  %v1296 = vunpack.c.l.b16 %v1001
  %v1297 = vunpack.c.l.b16 %v1002
  %v1298 = vunpack.c.l.b16 %v1003
  %v1299 = vunpack.c.l.b16 %v1004
  %v1300 = vunpack.c.l.b16 %v1005
  %v1301 = vunpack.c.l.b16 %v1006
  %v1302 = vunpack.c.l.b16 %v1007
  %v1303 = vunpack.c.l.b16 %v1008
  %v1304 = vunpack.c.l.b16 %v1009
  %v1305 = vunpack.c.l.b16 %v1010
  %v1306 = vunpack.c.l.b16 %v1011
  %v1307 = vunpack.c.l.b16 %v1012
  %v1308 = vunpack.c.l.b16 %v1013
  %v1309 = vunpack.c.l.b16 %v1014
  %v1310 = vunpack.c.l.b16 %v1015
  %v1311 = vunpack.c.l.b16 %v1016
  %v1312 = vunpack.c.l.b16 %v1017
  %v1313 = vunpack.c.l.b16 %v1018
  %v1314 = vunpack.c.l.b16 %v1019
  %v1315 = vunpack.c.l.b16 %v1020
  %v1316 = vunpack.c.l.b16 %v1021
  %v1317 = vunpack.c.l.b16 %v1022
  %v1318 = vunpack.c.l.b16 %v1023
  %v1319 = vunpack.c.l.b16 %v1024
  %v1320 = vunpack.c.l.b16 %v1025
  %v1321 = vunpack.c.l.b16 %v1026
  %v1322 = vunpack.c.l.b16 %v1027
  %v1323 = vunpack.c.l.b16 %v1028
  %v1324 = vunpack.c.l.b16 %v1029
  %v1325 = vunpack.c.l.b16 %v1030
  %v1326 = vunpack.c.l.b16 %v1031
  %v1327 = vunpack.c.l.b16 %v1032
  %v1328 = vunpack.c.l.b16 %v1033
  %v1329 = vunpack.c.l.b16 %v1034
  %v1330 = vunpack.c.l.b16 %v1035
  %v1331 = vunpack.c.l.b16 %v1036
  %v1332 = vunpack.c.l.b16 %v1037
  %v1333 = vunpack.c.l.b16 %v1038
  %v1334 = vunpack.c.l.b16 %v1039
  %v1335 = vunpack.c.l.b16 %v1040
  %v1336 = vunpack.c.l.b16 %v1041
  %v1337 = vunpack.c.l.b16 %v1042
  %v1338 = vunpack.c.l.b16 %v1043
  %v1339 = vunpack.c.l.b16 %v1044
  %v1340 = vunpack.c.l.b16 %v1045
  %v1341 = vunpack.c.l.b16 %v1046
  %v1342 = vunpack.c.l.b16 %v1047
  %v1343 = vunpack.c.l.b16 %v1048
  %v1344 = vunpack.c.l.b16 %v1049
  %v1345 = vunpack.c.l.b16 %v1050
  %v1346 = vunpack.c.l.b16 %v1051
  %v1347 = vunpack.c.l.b16 %v1052
  %v1348 = vunpack.c.l.b16 %v1053
  %v1349 = vunpack.c.l.b16 %v1054
  %v1350 = vpack.c.b16 %v1207, %v1206
  %v1351 = vpack.c.b16 %v1209, %v1208
  %v1352 = vpack.c.b16 %v1211, %v1210
  %v1353 = vpack.c.b16 %v1213, %v1212
  %v1354 = vpack.c.b16 %v1215, %v1214
  %v1355 = vpack.c.b16 %v1217, %v1216
  %v1356 = vpack.c.b16 %v1219, %v1218
  %v1357 = vpack.c.b16 %v1221, %v1220
  %v1358 = vpack.c.b16 %v1223, %v1222
  %v1359 = vpack.c.b16 %v1225, %v1224
  %v1360 = vpack.c.b16 %v1227, %v1226
  %v1361 = vpack.c.b16 %v1229, %v1228
  %v1362 = vpack.c.b16 %v1231, %v1230
  %v1363 = vpack.c.b16 %v1233, %v1232
  %v1364 = vpack.c.b16 %v1235, %v1234
  %v1365 = vpack.c.b16 %v1237, %v1236
  %v1366 = vpack.c.b16 %v1239, %v1238
  %v1367 = vpack.c.b16 %v1241, %v1240
  %v1368 = vpack.c.b16 %v1243, %v1242
  %v1369 = vpack.c.b16 %v1245, %v1244
  %v1370 = vpack.c.b16 %v1247, %v1246
  %v1371 = vpack.c.b16 %v1249, %v1248
  %v1372 = vpack.c.b16 %v1251, %v1250
  %v1373 = vpack.c.b16 %v1253, %v1252
  %v1374 = vpack.c.b16 %v1255, %v1254
  %v1375 = vpack.c.b16 %v1257, %v1256
  %v1376 = vpack.c.b16 %v1259, %v1258
  %v1377 = vpack.c.b16 %v1261, %v1260
  %v1378 = vpack.c.b16 %v1263, %v1262
  %v1379 = vpack.c.b16 %v1265, %v1264
  %v1380 = vpack.c.b16 %v1267, %v1266
  %v1381 = vpack.c.b16 %v1269, %v1268
  %v1382 = vpack.c.b16 %v1271, %v1270
  %v1383 = vpack.c.b16 %v1273, %v1272
  %v1384 = vpack.c.b16 %v1275, %v1274
  %v1385 = vpack.c.b16 %v1277, %v1276
  %v1386 = vpack.c.b16 %v1279, %v1278
  %v1387 = vpack.c.b16 %v1281, %v1280
  %v1388 = vpack.c.b16 %v1283, %v1282
  %v1389 = vpack.c.b16 %v1285, %v1284
  %v1390 = vpack.c.b16 %v1287, %v1286
  %v1391 = vpack.c.b16 %v1289, %v1288
  %v1392 = vpack.c.b16 %v1291, %v1290
  %v1393 = vpack.c.b16 %v1293, %v1292
  %v1394 = vpack.c.b16 %v1295, %v1294
  %v1395 = vpack.c.b16 %v1297, %v1296
  %v1396 = vpack.c.b16 %v1299, %v1298
  %v1397 = vpack.c.b16 %v1301, %v1300
  %v1398 = vpack.c.b16 %v1303, %v1302
  %v1399 = vpack.c.b16 %v1305, %v1304
  %v1400 = vpack.c.b16 %v1307, %v1306
  %v1401 = vpack.c.b16 %v1309, %v1308
  %v1402 = vpack.c.b16 %v1311, %v1310
  %v1403 = vpack.c.b16 %v1313, %v1312
  %v1404 = vpack.c.b16 %v1315, %v1314
  %v1405 = vpack.c.b16 %v1317, %v1316
  %v1406 = vpack.c.b16 %v1319, %v1318
  %v1407 = vpack.c.b16 %v1321, %v1320
  %v1408 = vpack.c.b16 %v1323, %v1322
  %v1409 = vpack.c.b16 %v1325, %v1324
  %v1410 = vpack.c.b16 %v1327, %v1326
  %v1411 = vpack.c.b16 %v1329, %v1328
  %v1412 = vpack.c.b16 %v1331, %v1330
  %v1413 = vpack.c.b16 %v1333, %v1332
  %v1414 = vpack.c.b16 %v1335, %v1334
  %v1415 = vpack.c.b16 %v1337, %v1336
  %v1416 = vpack.c.b16 %v1339, %v1338
  %v1417 = vpack.c.b16 %v1341, %v1340
  %v1418 = vpack.c.b16 %v1343, %v1342
  %v1419 = vpack.c.b16 %v1345, %v1344
  %v1420 = vpack.c.b16 %v1347, %v1346
  %v1421 = vpack.c.b16 %v1349, %v1348
  %1494 = vmatprep.subr.bf16.mxu0 0
  %1495 = vmatpush1.bf16.msra.mxu0 %v1350
  %1496 = vmatprep.subr.bf16.mxu0 0
  %1497 = vmatpush1.bf16.msra.mxu0 %v1351
  %1498 = vmatprep.subr.bf16.mxu0 0
  %1499 = vmatpush1.bf16.msra.mxu0 %v1352
  %1500 = vmatprep.subr.bf16.mxu0 0
  %1501 = vmatpush1.bf16.msra.mxu0 %v1353
  %1502 = vmatprep.subr.bf16.mxu0 0
  %1503 = vmatpush1.bf16.msra.mxu0 %v1354
  %1504 = vmatprep.subr.bf16.mxu0 0
  %1505 = vmatpush1.bf16.msra.mxu0 %v1355
  %1506 = vmatprep.subr.bf16.mxu0 0
  %1507 = vmatpush1.bf16.msra.mxu0 %v1356
  %1508 = vmatprep.subr.bf16.mxu0 0
  %1509 = vmatpush1.bf16.msra.mxu0 %v1357
  %1510 = vmatprep.subr.bf16.mxu0 0
  %1511 = vmatpush1.bf16.msra.mxu0 %v1358
  %1512 = vmatprep.subr.bf16.mxu0 0
  %1513 = vmatpush1.bf16.msra.mxu0 %v1359
  %1514 = vmatprep.subr.bf16.mxu0 0
  %1515 = vmatpush1.bf16.msra.mxu0 %v1360
  %1516 = vmatprep.subr.bf16.mxu0 0
  %1517 = vmatpush1.bf16.msra.mxu0 %v1361
  %1518 = vmatprep.subr.bf16.mxu0 0
  %1519 = vmatpush1.bf16.msra.mxu0 %v1362
  %1520 = vmatprep.subr.bf16.mxu0 0
  %1521 = vmatpush1.bf16.msra.mxu0 %v1363
  %1522 = vmatprep.subr.bf16.mxu0 0
  %1523 = vmatpush1.bf16.msra.mxu0 %v1364
  %1524 = vmatprep.subr.bf16.mxu0 0
  %1525 = vmatpush1.bf16.msra.mxu0 %v1365
  %1526 = vmatprep.mubr.bf16.mxu0 %v347
  %1527 = vmatmul.mubr.bf16.gmra.mrb[0].mxu0 %v323
  %v1528 = vpop.f32.mrb[0].mxu0
  %v1529 = vadd.f32 %v1060, %v1528
  %v1530 = vpop.f32.mrb[0].mxu0
  %v1531 = vpop.f32.mrb[0].mxu0
  %v1532 = vadd.f32 %v1060, %v1531
  %v1533 = vpop.f32.mrb[0].mxu0
  %1534 = vmatprep.mubr.bf16.mxu0 %v348
  %1535 = vmatmul.mubr.bf16.gmra.mrb[0].mxu0 %v324
  %v1536 = vpop.f32.mrb[0].mxu0
  %v1537 = vadd.f32 %v1060, %v1536
  %v1538 = vpop.f32.mrb[0].mxu0
  %v1539 = vpop.f32.mrb[0].mxu0
  %v1540 = vadd.f32 %v1060, %v1539
  %v1541 = vpop.f32.mrb[0].mxu0
  %1542 = vmatprep.mubr.bf16.mxu0 %v349
  %1543 = vmatmul.mubr.bf16.gmra.mrb[0].mxu0 %v325
  %v1544 = vpop.f32.mrb[0].mxu0
  %v1545 = vadd.f32 %v1060, %v1544
  %v1546 = vpop.f32.mrb[0].mxu0
  %v1547 = vpop.f32.mrb[0].mxu0
  %v1548 = vadd.f32 %v1060, %v1547
  %v1549 = vpop.f32.mrb[0].mxu0
  %1550 = vmatprep.mubr.bf16.mxu0 %v350
  %1551 = vmatmul.mubr.bf16.gmra.mrb[0].mxu0 %v326
  %v1552 = vpop.f32.mrb[0].mxu0
  %v1553 = vadd.f32 %v1060, %v1552
  %v1554 = vpop.f32.mrb[0].mxu0
  %v1555 = vpop.f32.mrb[0].mxu0
  %v1556 = vadd.f32 %v1060, %v1555
  %v1557 = vpop.f32.mrb[0].mxu0
  %1558 = vmatprep.mubr.bf16.mxu0 %v794
  %1559 = vmatmul.mubr.bf16.gmra.mrb[0].mxu0 %v770
  %v1560 = vpop.f32.mrb[0].mxu0
  %v1561 = vadd.f32 %v1060, %v1560
  %v1562 = vpop.f32.mrb[0].mxu0
  %v1563 = vpop.f32.mrb[0].mxu0
  %v1564 = vadd.f32 %v1060, %v1563
  %v1565 = vpop.f32.mrb[0].mxu0
  %1566 = vmatprep.mubr.bf16.mxu0 %v795
  %1567 = vmatmul.mubr.bf16.gmra.mrb[0].mxu0 %v771
  %v1568 = vpop.f32.mrb[0].mxu0
  %v1569 = vadd.f32 %v1060, %v1568
  %v1570 = vpop.f32.mrb[0].mxu0
  %v1571 = vpop.f32.mrb[0].mxu0
  %v1572 = vadd.f32 %v1060, %v1571
  %v1573 = vpop.f32.mrb[0].mxu0
  %1574 = vmatprep.mubr.bf16.mxu0 %v796
  %1575 = vmatmul.mubr.bf16.gmra.mrb[0].mxu0 %v772
  %v1576 = vpop.f32.mrb[0].mxu0
  %v1577 = vadd.f32 %v1060, %v1576
  %v1578 = vpop.f32.mrb[0].mxu0
  %v1579 = vpop.f32.mrb[0].mxu0
  %v1580 = vadd.f32 %v1060, %v1579
  %v1581 = vpop.f32.mrb[0].mxu0
  %1582 = vmatprep.mubr.bf16.mxu0 %v797
  %1583 = vmatmul.mubr.bf16.gmra.mrb[0].mxu0 %v773
  %v1584 = vpop.f32.mrb[0].mxu0
  %v1585 = vadd.f32 %v1060, %v1584
  %v1586 = vpop.f32.mrb[0].mxu0
  %v1587 = vpop.f32.mrb[0].mxu0
  %v1588 = vadd.f32 %v1060, %v1587
  %v1589 = vpop.f32.mrb[0].mxu0
  %1590 = vdwg.mxu0
  %1591 = vmatprep.subr.bf16.mxu0 0
  %1592 = vmatpush1.bf16.msra.mxu0 %v1366
  %1593 = vmatprep.subr.bf16.mxu0 0
  %1594 = vmatpush1.bf16.msra.mxu0 %v1367
  %1595 = vmatprep.subr.bf16.mxu0 0
  %1596 = vmatpush1.bf16.msra.mxu0 %v1368
  %1597 = vmatprep.subr.bf16.mxu0 0
  %1598 = vmatpush1.bf16.msra.mxu0 %v1369
  %1599 = vmatprep.subr.bf16.mxu0 0
  %1600 = vmatpush1.bf16.msra.mxu0 %v1370
  %1601 = vmatprep.subr.bf16.mxu0 0
  %1602 = vmatpush1.bf16.msra.mxu0 %v1371
  %1603 = vmatprep.subr.bf16.mxu0 0
  %1604 = vmatpush1.bf16.msra.mxu0 %v1372
  %1605 = vmatprep.subr.bf16.mxu0 0
  %1606 = vmatpush1.bf16.msra.mxu0 %v1373
  %1607 = vmatprep.subr.bf16.mxu0 0
  %1608 = vmatpush1.bf16.msra.mxu0 %v1374
  %1609 = vmatprep.subr.bf16.mxu0 0
  %1610 = vmatpush1.bf16.msra.mxu0 %v1375
  %1611 = vmatprep.subr.bf16.mxu0 0
  %1612 = vmatpush1.bf16.msra.mxu0 %v1376
  %1613 = vmatprep.subr.bf16.mxu0 0
  %1614 = vmatpush1.bf16.msra.mxu0 %v1377
  %1615 = vmatprep.subr.bf16.mxu0 0
  %1616 = vmatpush1.bf16.msra.mxu0 %v1378
  %1617 = vmatprep.subr.bf16.mxu0 0
  %1618 = vmatpush1.bf16.msra.mxu0 %v1379
  %1619 = vmatprep.subr.bf16.mxu0 0
  %1620 = vmatpush1.bf16.msra.mxu0 %v1380
  %1621 = vmatprep.subr.bf16.mxu0 0
  %1622 = vmatpush1.bf16.msra.mxu0 %v1381
  %1623 = vmatprep.mubr.bf16.mxu0 %v387
  %1624 = vmatmul.mubr.bf16.gmra.mrb[0].mxu0 %v363
  %v1625 = vpop.f32.mrb[0].mxu0
  %v1626 = vadd.f32 %v1529, %v1625
  %v1627 = vpop.f32.mrb[0].mxu0
  %v1628 = vpop.f32.mrb[0].mxu0
  %v1629 = vadd.f32 %v1532, %v1628
  %v1630 = vpop.f32.mrb[0].mxu0
  %1631 = vmatprep.mubr.bf16.mxu0 %v388
  %1632 = vmatmul.mubr.bf16.gmra.mrb[0].mxu0 %v364
  %v1633 = vpop.f32.mrb[0].mxu0
  %v1634 = vadd.f32 %v1537, %v1633
  %v1635 = vpop.f32.mrb[0].mxu0
  %v1636 = vpop.f32.mrb[0].mxu0
  %v1637 = vadd.f32 %v1540, %v1636
  %v1638 = vpop.f32.mrb[0].mxu0
  %1639 = vmatprep.mubr.bf16.mxu0 %v389
  %1640 = vmatmul.mubr.bf16.gmra.mrb[0].mxu0 %v365
  %v1641 = vpop.f32.mrb[0].mxu0
  %v1642 = vadd.f32 %v1545, %v1641
  %v1643 = vpop.f32.mrb[0].mxu0
  %v1644 = vpop.f32.mrb[0].mxu0
  %v1645 = vadd.f32 %v1548, %v1644
  %v1646 = vpop.f32.mrb[0].mxu0
  %1647 = vmatprep.mubr.bf16.mxu0 %v390
  %1648 = vmatmul.mubr.bf16.gmra.mrb[0].mxu0 %v366
  %v1649 = vpop.f32.mrb[0].mxu0
  %v1650 = vadd.f32 %v1553, %v1649
  %v1651 = vpop.f32.mrb[0].mxu0
  %v1652 = vpop.f32.mrb[0].mxu0
  %v1653 = vadd.f32 %v1556, %v1652
  %v1654 = vpop.f32.mrb[0].mxu0
  %1655 = vmatprep.mubr.bf16.mxu0 %v834
  %1656 = vmatmul.mubr.bf16.gmra.mrb[0].mxu0 %v810
  %v1657 = vpop.f32.mrb[0].mxu0
  %v1658 = vadd.f32 %v1561, %v1657
  %v1659 = vpop.f32.mrb[0].mxu0
  %v1660 = vpop.f32.mrb[0].mxu0
  %v1661 = vadd.f32 %v1564, %v1660
  %v1662 = vpop.f32.mrb[0].mxu0
  %1663 = vmatprep.mubr.bf16.mxu0 %v835
  %1664 = vmatmul.mubr.bf16.gmra.mrb[0].mxu0 %v811
  %v1665 = vpop.f32.mrb[0].mxu0
  %v1666 = vadd.f32 %v1569, %v1665
  %v1667 = vpop.f32.mrb[0].mxu0
  %v1668 = vpop.f32.mrb[0].mxu0
  %v1669 = vadd.f32 %v1572, %v1668
  %v1670 = vpop.f32.mrb[0].mxu0
  %1671 = vmatprep.mubr.bf16.mxu0 %v836
  %1672 = vmatmul.mubr.bf16.gmra.mrb[0].mxu0 %v812
  %v1673 = vpop.f32.mrb[0].mxu0
  %v1674 = vadd.f32 %v1577, %v1673
  %v1675 = vpop.f32.mrb[0].mxu0
  %v1676 = vpop.f32.mrb[0].mxu0
  %v1677 = vadd.f32 %v1580, %v1676
  %v1678 = vpop.f32.mrb[0].mxu0
  %1679 = vmatprep.mubr.bf16.mxu0 %v837
  %1680 = vmatmul.mubr.bf16.gmra.mrb[0].mxu0 %v813
  %v1681 = vpop.f32.mrb[0].mxu0
  %v1682 = vadd.f32 %v1585, %v1681
  %v1683 = vpop.f32.mrb[0].mxu0
  %v1684 = vpop.f32.mrb[0].mxu0
  %v1685 = vadd.f32 %v1588, %v1684
  %v1686 = vpop.f32.mrb[0].mxu0
  %1687 = vdwg.mxu0
  %1688 = vmatprep.subr.bf16.mxu0 0
  %1689 = vmatpush1.bf16.msra.mxu0 %v1382
  %1690 = vmatprep.subr.bf16.mxu0 0
  %1691 = vmatpush1.bf16.msra.mxu0 %v1383
  %1692 = vmatprep.subr.bf16.mxu0 0
  %1693 = vmatpush1.bf16.msra.mxu0 %v1384
  %1694 = vmatprep.subr.bf16.mxu0 0
  %1695 = vmatpush1.bf16.msra.mxu0 %v1385
  %1696 = vmatprep.subr.bf16.mxu0 0
  %1697 = vmatpush1.bf16.msra.mxu0 %v1386
  %1698 = vmatprep.subr.bf16.mxu0 0
  %1699 = vmatpush1.bf16.msra.mxu0 %v1387
  %1700 = vmatprep.subr.bf16.mxu0 0
  %1701 = vmatpush1.bf16.msra.mxu0 %v1388
  %1702 = vmatprep.subr.bf16.mxu0 0
  %1703 = vmatpush1.bf16.msra.mxu0 %v1389
  %1704 = vmatprep.subr.bf16.mxu0 0
  %1705 = vmatpush1.bf16.msra.mxu0 %v1390
  %1706 = vmatprep.subr.bf16.mxu0 0
  %1707 = vmatpush1.bf16.msra.mxu0 %v1391
  %1708 = vmatprep.subr.bf16.mxu0 0
  %1709 = vmatpush1.bf16.msra.mxu0 %v1392
  %1710 = vmatprep.subr.bf16.mxu0 0
  %1711 = vmatpush1.bf16.msra.mxu0 %v1393
  %1712 = vmatprep.subr.bf16.mxu0 0
  %1713 = vmatpush1.bf16.msra.mxu0 %v1394
  %1714 = vmatprep.subr.bf16.mxu0 0
  %1715 = vmatpush1.bf16.msra.mxu0 %v1395
  %1716 = vmatprep.subr.bf16.mxu0 0
  %1717 = vmatpush1.bf16.msra.mxu0 %v1396
  %1718 = vmatprep.subr.bf16.mxu0 0
  %1719 = vmatpush1.bf16.msra.mxu0 %v1397
  %1720 = vmatprep.mubr.bf16.mxu0 %v427
  %1721 = vmatmul.mubr.bf16.gmra.mrb[0].mxu0 %v411
  %v1722 = vpop.f32.mrb[0].mxu0
  %v1723 = vadd.f32 %v1626, %v1722
  %v1724 = vpop.f32.mrb[0].mxu0
  %v1725 = vpop.f32.mrb[0].mxu0
  %v1726 = vadd.f32 %v1629, %v1725
  %v1727 = vpop.f32.mrb[0].mxu0
  %1728 = vmatprep.mubr.bf16.mxu0 %v428
  %1729 = vmatmul.mubr.bf16.gmra.mrb[0].mxu0 %v412
  %v1730 = vpop.f32.mrb[0].mxu0
  %v1731 = vadd.f32 %v1634, %v1730
  %v1732 = vpop.f32.mrb[0].mxu0
  %v1733 = vpop.f32.mrb[0].mxu0
  %v1734 = vadd.f32 %v1637, %v1733
  %v1735 = vpop.f32.mrb[0].mxu0
  %1736 = vmatprep.mubr.bf16.mxu0 %v429
  %1737 = vmatmul.mubr.bf16.gmra.mrb[0].mxu0 %v413
  %v1738 = vpop.f32.mrb[0].mxu0
  %v1739 = vadd.f32 %v1642, %v1738
  %v1740 = vpop.f32.mrb[0].mxu0
  %v1741 = vpop.f32.mrb[0].mxu0
  %v1742 = vadd.f32 %v1645, %v1741
  %v1743 = vpop.f32.mrb[0].mxu0
  %1744 = vmatprep.mubr.bf16.mxu0 %v430
  %1745 = vmatmul.mubr.bf16.gmra.mrb[0].mxu0 %v414
  %v1746 = vpop.f32.mrb[0].mxu0
  %v1747 = vadd.f32 %v1650, %v1746
  %v1748 = vpop.f32.mrb[0].mxu0
  %v1749 = vpop.f32.mrb[0].mxu0
  %v1750 = vadd.f32 %v1653, %v1749
  %v1751 = vpop.f32.mrb[0].mxu0
  %1752 = vmatprep.mubr.bf16.mxu0 %v874
  %1753 = vmatmul.mubr.bf16.gmra.mrb[0].mxu0 %v858
  %v1754 = vpop.f32.mrb[0].mxu0
  %v1755 = vadd.f32 %v1658, %v1754
  %v1756 = vpop.f32.mrb[0].mxu0
  %v1757 = vpop.f32.mrb[0].mxu0
  %v1758 = vadd.f32 %v1661, %v1757
  %v1759 = vpop.f32.mrb[0].mxu0
  %1760 = vmatprep.mubr.bf16.mxu0 %v875
  %1761 = vmatmul.mubr.bf16.gmra.mrb[0].mxu0 %v859
  %v1762 = vpop.f32.mrb[0].mxu0
  %v1763 = vadd.f32 %v1666, %v1762
  %v1764 = vpop.f32.mrb[0].mxu0
  %v1765 = vpop.f32.mrb[0].mxu0
  %v1766 = vadd.f32 %v1669, %v1765
  %v1767 = vpop.f32.mrb[0].mxu0
  %1768 = vmatprep.mubr.bf16.mxu0 %v876
  %1769 = vmatmul.mubr.bf16.gmra.mrb[0].mxu0 %v860
  %v1770 = vpop.f32.mrb[0].mxu0
  %v1771 = vadd.f32 %v1674, %v1770
  %v1772 = vpop.f32.mrb[0].mxu0
  %v1773 = vpop.f32.mrb[0].mxu0
  %v1774 = vadd.f32 %v1677, %v1773
  %v1775 = vpop.f32.mrb[0].mxu0
  %1776 = vmatprep.mubr.bf16.mxu0 %v877
  %1777 = vmatmul.mubr.bf16.gmra.mrb[0].mxu0 %v861
  %v1778 = vpop.f32.mrb[0].mxu0
  %v1779 = vadd.f32 %v1682, %v1778
  %v1780 = vpop.f32.mrb[0].mxu0
  %v1781 = vpop.f32.mrb[0].mxu0
  %v1782 = vadd.f32 %v1685, %v1781
  %v1783 = vpop.f32.mrb[0].mxu0
  %1784 = vdwg.mxu0
  %1785 = vmatprep.subr.bf16.mxu0 0
  %1786 = vmatpush1.bf16.msra.mxu0 %v1398
  %1787 = vmatprep.subr.bf16.mxu0 0
  %1788 = vmatpush1.bf16.msra.mxu0 %v1399
  %1789 = vmatprep.subr.bf16.mxu0 0
  %1790 = vmatpush1.bf16.msra.mxu0 %v1400
  %1791 = vmatprep.subr.bf16.mxu0 0
  %1792 = vmatpush1.bf16.msra.mxu0 %v1401
  %1793 = vmatprep.subr.bf16.mxu0 0
  %1794 = vmatpush1.bf16.msra.mxu0 %v1402
  %1795 = vmatprep.subr.bf16.mxu0 0
  %1796 = vmatpush1.bf16.msra.mxu0 %v1403
  %1797 = vmatprep.subr.bf16.mxu0 0
  %1798 = vmatpush1.bf16.msra.mxu0 %v1404
  %1799 = vmatprep.subr.bf16.mxu0 0
  %1800 = vmatpush1.bf16.msra.mxu0 %v1405
  %1801 = vmatprep.subr.bf16.mxu0 0
  %1802 = vmatpush1.bf16.msra.mxu0 %v1406
  %1803 = vmatprep.subr.bf16.mxu0 0
  %1804 = vmatpush1.bf16.msra.mxu0 %v1407
  %1805 = vmatprep.subr.bf16.mxu0 0
  %1806 = vmatpush1.bf16.msra.mxu0 %v1408
  %1807 = vmatprep.subr.bf16.mxu0 0
  %1808 = vmatpush1.bf16.msra.mxu0 %v1409
  %1809 = vmatprep.subr.bf16.mxu0 0
  %1810 = vmatpush1.bf16.msra.mxu0 %v1410
  %1811 = vmatprep.subr.bf16.mxu0 0
  %1812 = vmatpush1.bf16.msra.mxu0 %v1411
  %1813 = vmatprep.subr.bf16.mxu0 0
  %1814 = vmatpush1.bf16.msra.mxu0 %v1412
  %1815 = vmatprep.subr.bf16.mxu0 0
  %1816 = vmatpush1.bf16.msra.mxu0 %v1413
  %1817 = vmatprep.mubr.bf16.mxu0 %v447
  %1818 = vmatmul.mubr.bf16.gmra.mrb[0].mxu0 %v437
  %v1819 = vpop.f32.mrb[0].mxu0
  %v1820 = vadd.f32 %v1723, %v1819
  %v1821 = vpop.f32.mrb[0].mxu0
  %v1822 = vpop.f32.mrb[0].mxu0
  %v1823 = vadd.f32 %v1726, %v1822
  %v1824 = vpop.f32.mrb[0].mxu0
  %1825 = vmatprep.mubr.bf16.mxu0 %v448
  %1826 = vmatmul.mubr.bf16.gmra.mrb[0].mxu0 %v438
  %v1827 = vpop.f32.mrb[0].mxu0
  %v1828 = vadd.f32 %v1731, %v1827
  %v1829 = vpop.f32.mrb[0].mxu0
  %v1830 = vpop.f32.mrb[0].mxu0
  %v1831 = vadd.f32 %v1734, %v1830
  %v1832 = vpop.f32.mrb[0].mxu0
  %1833 = vmatprep.mubr.bf16.mxu0 %v449
  %1834 = vmatmul.mubr.bf16.gmra.mrb[0].mxu0 %v439
  %v1835 = vpop.f32.mrb[0].mxu0
  %v1836 = vadd.f32 %v1739, %v1835
  %v1837 = vpop.f32.mrb[0].mxu0
  %v1838 = vpop.f32.mrb[0].mxu0
  %v1839 = vadd.f32 %v1742, %v1838
  %v1840 = vpop.f32.mrb[0].mxu0
  %1841 = vmatprep.mubr.bf16.mxu0 %v450
  %1842 = vmatmul.mubr.bf16.gmra.mrb[0].mxu0 %v440
  %v1843 = vpop.f32.mrb[0].mxu0
  %v1844 = vadd.f32 %v1747, %v1843
  %v1845 = vpop.f32.mrb[0].mxu0
  %v1846 = vpop.f32.mrb[0].mxu0
  %v1847 = vadd.f32 %v1750, %v1846
  %v1848 = vpop.f32.mrb[0].mxu0
  %1849 = vmatprep.mubr.bf16.mxu0 %v894
  %1850 = vmatmul.mubr.bf16.gmra.mrb[0].mxu0 %v884
  %v1851 = vpop.f32.mrb[0].mxu0
  %v1852 = vadd.f32 %v1755, %v1851
  %v1853 = vpop.f32.mrb[0].mxu0
  %v1854 = vpop.f32.mrb[0].mxu0
  %v1855 = vadd.f32 %v1758, %v1854
  %v1856 = vpop.f32.mrb[0].mxu0
  %1857 = vmatprep.mubr.bf16.mxu0 %v895
  %1858 = vmatmul.mubr.bf16.gmra.mrb[0].mxu0 %v885
  %v1859 = vpop.f32.mrb[0].mxu0
  %v1860 = vadd.f32 %v1763, %v1859
  %v1861 = vpop.f32.mrb[0].mxu0
  %v1862 = vpop.f32.mrb[0].mxu0
  %v1863 = vadd.f32 %v1766, %v1862
  %v1864 = vpop.f32.mrb[0].mxu0
  %1865 = vmatprep.mubr.bf16.mxu0 %v896
  %1866 = vmatmul.mubr.bf16.gmra.mrb[0].mxu0 %v886
  %v1867 = vpop.f32.mrb[0].mxu0
  %v1868 = vadd.f32 %v1771, %v1867
  %v1869 = vpop.f32.mrb[0].mxu0
  %v1870 = vpop.f32.mrb[0].mxu0
  %v1871 = vadd.f32 %v1774, %v1870
  %v1872 = vpop.f32.mrb[0].mxu0
  %1873 = vmatprep.mubr.bf16.mxu0 %v897
  %1874 = vmatmul.mubr.bf16.gmra.mrb[0].mxu0 %v887
  %v1875 = vpop.f32.mrb[0].mxu0
  %v1876 = vadd.f32 %v1779, %v1875
  %v1877 = vpop.f32.mrb[0].mxu0
  %v1878 = vpop.f32.mrb[0].mxu0
  %v1879 = vadd.f32 %v1782, %v1878
  %v1880 = vpop.f32.mrb[0].mxu0
  %1881 = vdwg.mxu0
  %1882 = vmatprep.subr.bf16.mxu0 0
  %1883 = vmatpush1.bf16.msra.mxu0 %v1414
  %1884 = vmatprep.subr.bf16.mxu0 0
  %1885 = vmatpush1.bf16.msra.mxu0 %v1415
  %1886 = vmatprep.subr.bf16.mxu0 0
  %1887 = vmatpush1.bf16.msra.mxu0 %v1416
  %1888 = vmatprep.subr.bf16.mxu0 0
  %1889 = vmatpush1.bf16.msra.mxu0 %v1417
  %1890 = vmatprep.subr.bf16.mxu0 0
  %1891 = vmatpush1.bf16.msra.mxu0 %v1418
  %1892 = vmatprep.subr.bf16.mxu0 0
  %1893 = vmatpush1.bf16.msra.mxu0 %v1419
  %1894 = vmatprep.subr.bf16.mxu0 0
  %1895 = vmatpush1.bf16.msra.mxu0 %v1420
  %1896 = vmatprep.subr.bf16.mxu0 0
  %1897 = vmatpush1.bf16.msra.mxu0 %v1421
  %1898 = vmatprep.subr.bf16.mxu0 0
  %1899 = vmatpush1.bf16.msra.mxu0 0
  %1900 = vmatprep.subr.bf16.mxu0 0
  %1901 = vmatpush1.bf16.msra.mxu0 0
  %1902 = vmatprep.subr.bf16.mxu0 0
  %1903 = vmatpush1.bf16.msra.mxu0 0
  %1904 = vmatprep.subr.bf16.mxu0 0
  %1905 = vmatpush1.bf16.msra.mxu0 0
  %1906 = vmatprep.subr.bf16.mxu0 0
  %1907 = vmatpush1.bf16.msra.mxu0 0
  %1908 = vmatprep.subr.bf16.mxu0 0
  %1909 = vmatpush1.bf16.msra.mxu0 0
  %1910 = vmatprep.subr.bf16.mxu0 0
  %1911 = vmatpush1.bf16.msra.mxu0 0
  %1912 = vmatprep.subr.bf16.mxu0 0
  %1913 = vmatpush1.bf16.msra.mxu0 0
  %1914 = vmatprep.mubr.bf16.mxu0 0
  %1915 = vmatmul.mubr.bf16.gmra.mrb[0].mxu0 %v456
  %v1916 = vpop.f32.mrb[0].mxu0
  %v1917 = vadd.f32 %v1820, %v1916
  %v1918 = vpop.f32.mrb[0].mxu0
  %v1919 = vpop.f32.mrb[0].mxu0
  %v1920 = vadd.f32 %v1823, %v1919
  %v1921 = vpop.f32.mrb[0].mxu0
  %1922 = vmatprep.mubr.bf16.mxu0 0
  %1923 = vmatmul.mubr.bf16.gmra.mrb[0].mxu0 %v457
  %v1924 = vpop.f32.mrb[0].mxu0
  %v1925 = vadd.f32 %v1828, %v1924
  %v1926 = vpop.f32.mrb[0].mxu0
  %v1927 = vpop.f32.mrb[0].mxu0
  %v1928 = vadd.f32 %v1831, %v1927
  %v1929 = vpop.f32.mrb[0].mxu0
  %1930 = vmatprep.mubr.bf16.mxu0 0
  %1931 = vmatmul.mubr.bf16.gmra.mrb[0].mxu0 %v458
  %v1932 = vpop.f32.mrb[0].mxu0
  %v1933 = vadd.f32 %v1836, %v1932
  %v1934 = vpop.f32.mrb[0].mxu0
  %v1935 = vpop.f32.mrb[0].mxu0
  %v1936 = vadd.f32 %v1839, %v1935
  %v1937 = vpop.f32.mrb[0].mxu0
  %1938 = vmatprep.mubr.bf16.mxu0 0
  %1939 = vmatmul.mubr.bf16.gmra.mrb[0].mxu0 %v459
  %v1940 = vpop.f32.mrb[0].mxu0
  %v1941 = vadd.f32 %v1844, %v1940
  %v1942 = vpop.f32.mrb[0].mxu0
  %v1943 = vpop.f32.mrb[0].mxu0
  %v1944 = vadd.f32 %v1847, %v1943
  %v1945 = vpop.f32.mrb[0].mxu0
  %1946 = vmatprep.mubr.bf16.mxu0 0
  %1947 = vmatmul.mubr.bf16.gmra.mrb[0].mxu0 %v903
  %v1948 = vpop.f32.mrb[0].mxu0
  %v1949 = vadd.f32 %v1852, %v1948
  %v1950 = vpop.f32.mrb[0].mxu0
  %v1951 = vpop.f32.mrb[0].mxu0
  %v1952 = vadd.f32 %v1855, %v1951
  %v1953 = vpop.f32.mrb[0].mxu0
  %1954 = vmatprep.mubr.bf16.mxu0 0
  %1955 = vmatmul.mubr.bf16.gmra.mrb[0].mxu0 %v904
  %v1956 = vpop.f32.mrb[0].mxu0
  %v1957 = vadd.f32 %v1860, %v1956
  %v1958 = vpop.f32.mrb[0].mxu0
  %v1959 = vpop.f32.mrb[0].mxu0
  %v1960 = vadd.f32 %v1863, %v1959
  %v1961 = vpop.f32.mrb[0].mxu0
  %1962 = vmatprep.mubr.bf16.mxu0 0
  %1963 = vmatmul.mubr.bf16.gmra.mrb[0].mxu0 %v905
  %v1964 = vpop.f32.mrb[0].mxu0
  %v1965 = vadd.f32 %v1868, %v1964
  %v1966 = vpop.f32.mrb[0].mxu0
  %v1967 = vpop.f32.mrb[0].mxu0
  %v1968 = vadd.f32 %v1871, %v1967
  %v1969 = vpop.f32.mrb[0].mxu0
  %1970 = vmatprep.mubr.bf16.mxu0 0
  %1971 = vmatmul.mubr.bf16.gmra.mrb[0].mxu0 %v906
  %v1972 = vpop.f32.mrb[0].mxu0
  %v1973 = vadd.f32 %v1876, %v1972
  %v1974 = vpop.f32.mrb[0].mxu0
  %v1975 = vpop.f32.mrb[0].mxu0
  %v1976 = vadd.f32 %v1879, %v1975
  %v1977 = vpop.f32.mrb[0].mxu0
  %1978 = vdwg.mxu0
  %v1979 = vmax.f32 %v1917, 0.0
  %v1980 = vmax.f32 %v1920, 0.0
  %v1981 = vmax.f32 %v1925, 0.0
  %v1982 = vmax.f32 %v1928, 0.0
  %v1983 = vmax.f32 %v1933, 0.0
  %v1984 = vmax.f32 %v1936, 0.0
  %v1985 = vmax.f32 %v1941, 0.0
  %v1986 = vmax.f32 %v1944, 0.0
  %v1987 = vmax.f32 %v1949, 0.0
  %v1988 = vmax.f32 %v1952, 0.0
  %v1989 = vmax.f32 %v1957, 0.0
  %v1990 = vmax.f32 %v1960, 0.0
  %v1991 = vmax.f32 %v1965, 0.0
  %v1992 = vmax.f32 %v1968, 0.0
  %v1993 = vmax.f32 %v1973, 0.0
  %v1994 = vmax.f32 %v1976, 0.0
  %v1995 = vpack.c.bf16 %v1980, %v1979
  %v1996 = vpack.c.bf16 %v1982, %v1981
  %v1997 = vpack.c.bf16 %v1984, %v1983
  %v1998 = vpack.c.bf16 %v1986, %v1985
  %v1999 = vpack.c.bf16 %v1988, %v1987
  %v2000 = vpack.c.bf16 %v1990, %v1989
  %v2001 = vpack.c.bf16 %v1992, %v1991
  %v2002 = vpack.c.bf16 %v1994, %v1993
  %v2011 = vunpack.c.l.b16 %v1995
  %v2012 = vunpack.c.h.b16 %v1995
  %v2013 = vunpack.c.l.b16 %v1996
  %v2014 = vunpack.c.h.b16 %v1996
  %v2015 = vunpack.c.l.b16 %v1997
  %v2016 = vunpack.c.h.b16 %v1997
  %v2017 = vunpack.c.l.b16 %v1998
  %v2018 = vunpack.c.h.b16 %v1998
  %v2019 = vunpack.c.l.b16 %v1999
  %v2020 = vunpack.c.h.b16 %v1999
  %v2021 = vunpack.c.l.b16 %v2000
  %v2022 = vunpack.c.h.b16 %v2000
  %v2023 = vunpack.c.l.b16 %v2001
  %v2024 = vunpack.c.h.b16 %v2001
  %v2025 = vunpack.c.l.b16 %v2002
  %v2026 = vunpack.c.h.b16 %v2002
  %v2027 = vpack.c.b16 %v2011, %v2011
  %v2028 = vpack.c.b16 %v2012, %v2012
  %v2029 = vpack.c.b16 %v2013, %v2013
  %v2030 = vpack.c.b16 %v2014, %v2014
  %v2031 = vpack.c.b16 %v2015, %v2015
  %v2032 = vpack.c.b16 %v2016, %v2016
  %v2033 = vpack.c.b16 %v2017, %v2017
  %v2034 = vpack.c.b16 %v2018, %v2018
  %v2035 = vpack.c.b16 %v2019, %v2019
  %v2036 = vpack.c.b16 %v2020, %v2020
  %v2037 = vpack.c.b16 %v2021, %v2021
  %v2038 = vpack.c.b16 %v2022, %v2022
  %v2039 = vpack.c.b16 %v2023, %v2023
  %v2040 = vpack.c.b16 %v2024, %v2024
  %v2041 = vpack.c.b16 %v2025, %v2025
  %v2042 = vpack.c.b16 %v2026, %v2026
  %2059 = vst [vmem:[%s3] sm:$0xf] %v2027
  %2060 = vst [vmem:[%s3 + $0x4] sm:$0xf] %v2028
  %2061 = vst [vmem:[%s3 + $0x8] sm:$0xf] %v2029
  %2062 = vst [vmem:[%s3 + $0xc] sm:$0xf] %v2030
  %2063 = vst [vmem:[%s3 + $0x10] sm:$0xf] %v2031
  %2064 = vst [vmem:[%s3 + $0x14] sm:$0xf] %v2032
  %2065 = vst [vmem:[%s3 + $0x18] sm:$0xf] %v2033
  %2066 = vst [vmem:[%s3 + $0x1c] sm:$0xf] %v2034
  %2067 = vst [vmem:[%s3 + $0x20] sm:$0xf] %v2035
  %2068 = vst [vmem:[%s3 + $0x24] sm:$0xf] %v2036
  %2069 = vst [vmem:[%s3 + $0x28] sm:$0xf] %v2037
  %2070 = vst [vmem:[%s3 + $0x2c] sm:$0xf] %v2038
  %2071 = vst [vmem:[%s3 + $0x30] sm:$0xf] %v2039
  %2072 = vst [vmem:[%s3 + $0x34] sm:$0xf] %v2040
  %2073 = vst [vmem:[%s3 + $0x38] sm:$0xf] %v2041
  %2074 = vst [vmem:[%s3 + $0x3c] sm:$0xf] %v2042
  // Predicated region
  $region14: #{ddn_fcos3d_forward.12} parent=0 // pred_check
    _
  $region15: #{ddn_fcos3d_forward.12} parent=0 // pred_check_branch
    %2076 = sbr.rel (0) target = $region17
  $region16: #{ddn_fcos3d_forward.12} parent=0 // pred_region
    _
  $region17: #{ddn_fcos3d_forward.12} parent=0 // pred_fallthru
    _
  // Predicated region
  $region18: #{ddn_fcos3d_forward.12} parent=0 // pred_check
    _
  $region19: #{ddn_fcos3d_forward.12} parent=0 // pred_check_branch
    %2078 = sbr.rel (0) target = $region21
  $region20: #{ddn_fcos3d_forward.12} parent=0 // pred_region
    _
  $region21: #{ddn_fcos3d_forward.12} parent=0 // pred_fallthru
    _

// kernel: ddn_fcos3d_forward.15
$region0: #{ddn_fcos3d_forward.15}
  #allocation0 [shape = 'u32[]', space=smem, size = 0x4, offset = 0x4, fixed_abs, tag = 'smem constant byte address 0x4 - core index']
  #allocation1 [shape = 'u32[144,128]{1,0:T(1,128)}', space=vmem, size = 0x12000, scoped, tag = 'internal scratch']
  %s0 = inlined_call_operand.vmem [shape: bf16[2,1,1,10,10,128], index: 0, kind: input, shape index: {}]
  %s1 = inlined_call_operand.vmem [shape: bf16[1152,128], index: 1, kind: input, shape index: {}]
  %s2 = inlined_call_operand.vmem [shape: f32[1,128], index: 2, kind: input, shape index: {}]
  %s3 = inlined_call_operand.vmem [shape: bf16[2,64,128], index: 3, kind: output, shape index: {}]
  %s4 = sld [smem:[#allocation0]]
  $region22: #{ddn_fcos3d_forward.15} parent=0
    _
  %s6 = ssub.s32 1, %s4
  %s7 = scalar_select 0, %s6, %s4
  // Predicated region
  $region2: #{ddn_fcos3d_forward.15} parent=0 // pred_check
    _
  $region3: #{ddn_fcos3d_forward.15} parent=0 // pred_check_branch
    %9 = sbr.rel (0) target = $region5
  $region4: #{ddn_fcos3d_forward.15} parent=0 // pred_region
    _
  $region5: #{ddn_fcos3d_forward.15} parent=0 // pred_fallthru
    _
  // Predicated region
  $region6: #{ddn_fcos3d_forward.15} parent=0 // pred_check
    _
  $region7: #{ddn_fcos3d_forward.15} parent=0 // pred_check_branch
    %11 = sbr.rel (0) target = $region9
  $region8: #{ddn_fcos3d_forward.15} parent=0 // pred_region
    _
  $region9: #{ddn_fcos3d_forward.15} parent=0 // pred_fallthru
    _
  // Predicated region
  $region10: #{ddn_fcos3d_forward.15} parent=0 // pred_check
    _
  $region11: #{ddn_fcos3d_forward.15} parent=0 // pred_check_branch
    %13 = sbr.rel (0) target = $region13
  $region12: #{ddn_fcos3d_forward.15} parent=0 // pred_region
    _
  $region13: #{ddn_fcos3d_forward.15} parent=0 // pred_fallthru
    _
  %v15 = vld [vmem:[%s0] sm:$0xf]
  %v16 = vld [vmem:[%s0 + $0x4] sm:$0x1]
  %v17 = vld [vmem:[%s0 + $0x8] sm:$0xf]
  %v18 = vld [vmem:[%s0 + $0xc] sm:$0x1]
  %v19 = vld [vmem:[%s0 + $0x10] sm:$0xf]
  %v20 = vld [vmem:[%s0 + $0x14] sm:$0x1]
  %v21 = vld [vmem:[%s0 + $0x18] sm:$0xf]
  %v22 = vld [vmem:[%s0 + $0x1c] sm:$0x1]
  %v23 = vld [vmem:[%s0 + $0x20] sm:$0xf]
  %v24 = vld [vmem:[%s0 + $0x24] sm:$0x1]
  %v25 = vld [vmem:[%s0 + $0x28] sm:$0xf]
  %v26 = vld [vmem:[%s0 + $0x2c] sm:$0x1]
  %v27 = vld [vmem:[%s0 + $0x30] sm:$0xf]
  %v28 = vld [vmem:[%s0 + $0x34] sm:$0x1]
  %v29 = vld [vmem:[%s0 + $0x38] sm:$0xf]
  %v30 = vld [vmem:[%s0 + $0x3c] sm:$0x1]
  %v31 = vld [vmem:[%s0 + $0x40] sm:$0xf]
  %v32 = vld [vmem:[%s0 + $0x44] sm:$0x1]
  %v33 = vld [vmem:[%s0 + $0x48] sm:$0xf]
  %v34 = vld [vmem:[%s0 + $0x4c] sm:$0x1]
  %vm35 = vsmask.f32 3328
  %vm36 = vsmask.f32 7440
  %vm37 = vmor %vm35, %vm36
  %v39 = vshrl.u32 %v15, 16
  %v41 = vrot.slane %v39, 4
  %v42 = vshll.u32 %v15, 16
  %v44 = vrot.slane %v42, 5
  %v45 = vor.u32 %v41, %v44
  %v46 = vrot.slane %v45, 4
  %v48 = vshll.u32 %v16, 16
  %v50 = vrot.slane %v48, 5
  %v51 = vsel %vm37, %v46, %v50
  %v53 = vshrl.u32 %v17, 16
  %v55 = vrot.slane %v53, 4
  %v56 = vshll.u32 %v17, 16
  %v58 = vrot.slane %v56, 5
  %v59 = vor.u32 %v55, %v58
  %v60 = vrot.slane %v59, 4
  %v62 = vshll.u32 %v18, 16
  %v64 = vrot.slane %v62, 5
  %v65 = vsel %vm37, %v60, %v64
  %v67 = vshrl.u32 %v19, 16
  %v69 = vrot.slane %v67, 4
  %v70 = vshll.u32 %v19, 16
  %v72 = vrot.slane %v70, 5
  %v73 = vor.u32 %v69, %v72
  %v74 = vrot.slane %v73, 4
  %v76 = vshll.u32 %v20, 16
  %v78 = vrot.slane %v76, 5
  %v79 = vsel %vm37, %v74, %v78
  %v81 = vshrl.u32 %v21, 16
  %v83 = vrot.slane %v81, 4
  %v84 = vshll.u32 %v21, 16
  %v86 = vrot.slane %v84, 5
  %v87 = vor.u32 %v83, %v86
  %v88 = vrot.slane %v87, 4
  %v90 = vshll.u32 %v22, 16
  %v92 = vrot.slane %v90, 5
  %v93 = vsel %vm37, %v88, %v92
  %v95 = vshrl.u32 %v23, 16
  %v97 = vrot.slane %v95, 4
  %v98 = vshll.u32 %v23, 16
  %v100 = vrot.slane %v98, 5
  %v101 = vor.u32 %v97, %v100
  %v102 = vrot.slane %v101, 4
  %v104 = vshll.u32 %v24, 16
  %v106 = vrot.slane %v104, 5
  %v107 = vsel %vm37, %v102, %v106
  %v109 = vshrl.u32 %v25, 16
  %v111 = vrot.slane %v109, 4
  %v112 = vshll.u32 %v25, 16
  %v114 = vrot.slane %v112, 5
  %v115 = vor.u32 %v111, %v114
  %v116 = vrot.slane %v115, 4
  %v118 = vshll.u32 %v26, 16
  %v120 = vrot.slane %v118, 5
  %v121 = vsel %vm37, %v116, %v120
  %v123 = vshrl.u32 %v27, 16
  %v125 = vrot.slane %v123, 4
  %v126 = vshll.u32 %v27, 16
  %v128 = vrot.slane %v126, 5
  %v129 = vor.u32 %v125, %v128
  %v130 = vrot.slane %v129, 4
  %v132 = vshll.u32 %v28, 16
  %v134 = vrot.slane %v132, 5
  %v135 = vsel %vm37, %v130, %v134
  %v137 = vshrl.u32 %v29, 16
  %v139 = vrot.slane %v137, 4
  %v140 = vshll.u32 %v29, 16
  %v142 = vrot.slane %v140, 5
  %v143 = vor.u32 %v139, %v142
  %v144 = vrot.slane %v143, 4
  %v146 = vshll.u32 %v30, 16
  %v148 = vrot.slane %v146, 5
  %v149 = vsel %vm37, %v144, %v148
  %vm166 = vcmask 1042432
  %vm167 = vcmask 1046532
  %vm168 = vmor %vm166, %vm167
  %v169 = vrot.slane %v15, 5
  %v170 = vrot.slane %v169, 4
  %v171 = vrot.slane %v16, 5
  %v172 = vsel %vm168, %v170, %v171
  %v173 = vrot.slane %v17, 5
  %v174 = vrot.slane %v173, 4
  %v175 = vrot.slane %v18, 5
  %v176 = vsel %vm168, %v174, %v175
  %v177 = vrot.slane %v19, 5
  %v178 = vrot.slane %v177, 4
  %v179 = vrot.slane %v20, 5
  %v180 = vsel %vm168, %v178, %v179
  %v181 = vrot.slane %v21, 5
  %v182 = vrot.slane %v181, 4
  %v183 = vrot.slane %v22, 5
  %v184 = vsel %vm168, %v182, %v183
  %v185 = vrot.slane %v23, 5
  %v186 = vrot.slane %v185, 4
  %v187 = vrot.slane %v24, 5
  %v188 = vsel %vm168, %v186, %v187
  %v189 = vrot.slane %v25, 5
  %v190 = vrot.slane %v189, 4
  %v191 = vrot.slane %v26, 5
  %v192 = vsel %vm168, %v190, %v191
  %v193 = vrot.slane %v27, 5
  %v194 = vrot.slane %v193, 4
  %v195 = vrot.slane %v28, 5
  %v196 = vsel %vm168, %v194, %v195
  %v197 = vrot.slane %v29, 5
  %v198 = vrot.slane %v197, 4
  %v199 = vrot.slane %v30, 5
  %v200 = vsel %vm168, %v198, %v199
  %v202 = vshrl.u32 %v31, 16
  %v204 = vrot.slane %v202, 4
  %v205 = vshll.u32 %v31, 16
  %v207 = vrot.slane %v205, 5
  %v208 = vor.u32 %v204, %v207
  %v209 = vrot.slane %v208, 4
  %v211 = vshll.u32 %v32, 16
  %v213 = vrot.slane %v211, 5
  %v214 = vsel %vm37, %v209, %v213
  %v217 = vrot.slane %v31, 5
  %v218 = vrot.slane %v217, 4
  %v219 = vrot.slane %v32, 5
  %v220 = vsel %vm168, %v218, %v219
  %v222 = vshrl.u32 %v33, 16
  %v224 = vrot.slane %v222, 4
  %v225 = vshll.u32 %v33, 16
  %v227 = vrot.slane %v225, 5
  %v228 = vor.u32 %v224, %v227
  %v229 = vrot.slane %v228, 4
  %v231 = vshll.u32 %v34, 16
  %v233 = vrot.slane %v231, 5
  %v234 = vsel %vm37, %v229, %v233
  %v237 = vrot.slane %v33, 5
  %v238 = vrot.slane %v237, 4
  %v239 = vrot.slane %v34, 5
  %v240 = vsel %vm168, %v238, %v239
  %v241 = vunpack.c.l.b16 %v15
  %v242 = vunpack.c.l.b16 %v17
  %v243 = vunpack.c.l.b16 %v19
  %v244 = vunpack.c.l.b16 %v21
  %v245 = vunpack.c.l.b16 %v23
  %v246 = vunpack.c.l.b16 %v25
  %v247 = vunpack.c.l.b16 %v27
  %v248 = vunpack.c.l.b16 %v29
  %v249 = vpack.c.b16 %v242, %v241
  %v250 = vpack.c.b16 %v244, %v243
  %v251 = vpack.c.b16 %v246, %v245
  %v252 = vpack.c.b16 %v248, %v247
  %v257 = vunpack.c.l.b16 %v51
  %v258 = vunpack.c.l.b16 %v65
  %v259 = vunpack.c.l.b16 %v79
  %v260 = vunpack.c.l.b16 %v93
  %v261 = vunpack.c.l.b16 %v107
  %v262 = vunpack.c.l.b16 %v121
  %v263 = vunpack.c.l.b16 %v135
  %v264 = vunpack.c.l.b16 %v149
  %v265 = vpack.c.b16 %v258, %v257
  %v266 = vpack.c.b16 %v260, %v259
  %v267 = vpack.c.b16 %v262, %v261
  %v268 = vpack.c.b16 %v264, %v263
  %v273 = vunpack.c.l.b16 %v172
  %v274 = vunpack.c.l.b16 %v176
  %v275 = vunpack.c.l.b16 %v180
  %v276 = vunpack.c.l.b16 %v184
  %v277 = vunpack.c.l.b16 %v188
  %v278 = vunpack.c.l.b16 %v192
  %v279 = vunpack.c.l.b16 %v196
  %v280 = vunpack.c.l.b16 %v200
  %v281 = vpack.c.b16 %v274, %v273
  %v282 = vpack.c.b16 %v276, %v275
  %v283 = vpack.c.b16 %v278, %v277
  %v284 = vpack.c.b16 %v280, %v279
  %v289 = vunpack.c.l.b16 %v31
  %v290 = vpack.c.b16 %v243, %v242
  %v291 = vpack.c.b16 %v245, %v244
  %v292 = vpack.c.b16 %v247, %v246
  %v293 = vpack.c.b16 %v289, %v248
  %v298 = vunpack.c.l.b16 %v214
  %v299 = vpack.c.b16 %v259, %v258
  %v300 = vpack.c.b16 %v261, %v260
  %v301 = vpack.c.b16 %v263, %v262
  %v302 = vpack.c.b16 %v298, %v264
  %v307 = vunpack.c.l.b16 %v220
  %v308 = vpack.c.b16 %v275, %v274
  %v309 = vpack.c.b16 %v277, %v276
  %v310 = vpack.c.b16 %v279, %v278
  %v311 = vpack.c.b16 %v307, %v280
  %v316 = vunpack.c.l.b16 %v33
  %v317 = vpack.c.b16 %v316, %v289
  %v319 = vunpack.c.l.b16 %v234
  %v320 = vpack.c.b16 %v319, %v298
  %v322 = vunpack.c.l.b16 %v240
  %v323 = vpack.c.b16 %v322, %v307
  %s325 = scalar_lea.vmem %s0, 80
  %v326 = vld [vmem:[%s325] sm:$0xf]
  %v327 = vld [vmem:[%s325 + $0x4] sm:$0x1]
  %v328 = vld [vmem:[%s325 + $0x8] sm:$0xf]
  %v329 = vld [vmem:[%s325 + $0xc] sm:$0x1]
  %v330 = vld [vmem:[%s325 + $0x10] sm:$0xf]
  %v331 = vld [vmem:[%s325 + $0x14] sm:$0x1]
  %v332 = vld [vmem:[%s325 + $0x18] sm:$0xf]
  %v333 = vld [vmem:[%s325 + $0x1c] sm:$0x1]
  %v334 = vld [vmem:[%s325 + $0x20] sm:$0xf]
  %v335 = vld [vmem:[%s325 + $0x24] sm:$0x1]
  %v336 = vld [vmem:[%s325 + $0x28] sm:$0xf]
  %v337 = vld [vmem:[%s325 + $0x2c] sm:$0x1]
  %v338 = vld [vmem:[%s325 + $0x30] sm:$0xf]
  %v339 = vld [vmem:[%s325 + $0x34] sm:$0x1]
  %v340 = vld [vmem:[%s325 + $0x38] sm:$0xf]
  %v341 = vld [vmem:[%s325 + $0x3c] sm:$0x1]
  %v342 = vld [vmem:[%s325 + $0x40] sm:$0xf]
  %v343 = vld [vmem:[%s325 + $0x44] sm:$0x1]
  %v344 = vld [vmem:[%s325 + $0x48] sm:$0xf]
  %v345 = vld [vmem:[%s325 + $0x4c] sm:$0x1]
  %v347 = vshrl.u32 %v326, 16
  %v349 = vrot.slane %v347, 4
  %v350 = vshll.u32 %v326, 16
  %v352 = vrot.slane %v350, 5
  %v353 = vor.u32 %v349, %v352
  %v354 = vrot.slane %v353, 4
  %v356 = vshll.u32 %v327, 16
  %v358 = vrot.slane %v356, 5
  %v359 = vsel %vm37, %v354, %v358
  %v361 = vshrl.u32 %v328, 16
  %v363 = vrot.slane %v361, 4
  %v364 = vshll.u32 %v328, 16
  %v366 = vrot.slane %v364, 5
  %v367 = vor.u32 %v363, %v366
  %v368 = vrot.slane %v367, 4
  %v370 = vshll.u32 %v329, 16
  %v372 = vrot.slane %v370, 5
  %v373 = vsel %vm37, %v368, %v372
  %v375 = vshrl.u32 %v330, 16
  %v377 = vrot.slane %v375, 4
  %v378 = vshll.u32 %v330, 16
  %v380 = vrot.slane %v378, 5
  %v381 = vor.u32 %v377, %v380
  %v382 = vrot.slane %v381, 4
  %v384 = vshll.u32 %v331, 16
  %v386 = vrot.slane %v384, 5
  %v387 = vsel %vm37, %v382, %v386
  %v389 = vshrl.u32 %v332, 16
  %v391 = vrot.slane %v389, 4
  %v392 = vshll.u32 %v332, 16
  %v394 = vrot.slane %v392, 5
  %v395 = vor.u32 %v391, %v394
  %v396 = vrot.slane %v395, 4
  %v398 = vshll.u32 %v333, 16
  %v400 = vrot.slane %v398, 5
  %v401 = vsel %vm37, %v396, %v400
  %v403 = vshrl.u32 %v334, 16
  %v405 = vrot.slane %v403, 4
  %v406 = vshll.u32 %v334, 16
  %v408 = vrot.slane %v406, 5
  %v409 = vor.u32 %v405, %v408
  %v410 = vrot.slane %v409, 4
  %v412 = vshll.u32 %v335, 16
  %v414 = vrot.slane %v412, 5
  %v415 = vsel %vm37, %v410, %v414
  %v417 = vshrl.u32 %v336, 16
  %v419 = vrot.slane %v417, 4
  %v420 = vshll.u32 %v336, 16
  %v422 = vrot.slane %v420, 5
  %v423 = vor.u32 %v419, %v422
  %v424 = vrot.slane %v423, 4
  %v426 = vshll.u32 %v337, 16
  %v428 = vrot.slane %v426, 5
  %v429 = vsel %vm37, %v424, %v428
  %v431 = vshrl.u32 %v338, 16
  %v433 = vrot.slane %v431, 4
  %v434 = vshll.u32 %v338, 16
  %v436 = vrot.slane %v434, 5
  %v437 = vor.u32 %v433, %v436
  %v438 = vrot.slane %v437, 4
  %v440 = vshll.u32 %v339, 16
  %v442 = vrot.slane %v440, 5
  %v443 = vsel %vm37, %v438, %v442
  %v445 = vshrl.u32 %v340, 16
  %v447 = vrot.slane %v445, 4
  %v448 = vshll.u32 %v340, 16
  %v450 = vrot.slane %v448, 5
  %v451 = vor.u32 %v447, %v450
  %v452 = vrot.slane %v451, 4
  %v454 = vshll.u32 %v341, 16
  %v456 = vrot.slane %v454, 5
  %v457 = vsel %vm37, %v452, %v456
  %v474 = vrot.slane %v326, 5
  %v475 = vrot.slane %v474, 4
  %v476 = vrot.slane %v327, 5
  %v477 = vsel %vm168, %v475, %v476
  %v478 = vrot.slane %v328, 5
  %v479 = vrot.slane %v478, 4
  %v480 = vrot.slane %v329, 5
  %v481 = vsel %vm168, %v479, %v480
  %v482 = vrot.slane %v330, 5
  %v483 = vrot.slane %v482, 4
  %v484 = vrot.slane %v331, 5
  %v485 = vsel %vm168, %v483, %v484
  %v486 = vrot.slane %v332, 5
  %v487 = vrot.slane %v486, 4
  %v488 = vrot.slane %v333, 5
  %v489 = vsel %vm168, %v487, %v488
  %v490 = vrot.slane %v334, 5
  %v491 = vrot.slane %v490, 4
  %v492 = vrot.slane %v335, 5
  %v493 = vsel %vm168, %v491, %v492
  %v494 = vrot.slane %v336, 5
  %v495 = vrot.slane %v494, 4
  %v496 = vrot.slane %v337, 5
  %v497 = vsel %vm168, %v495, %v496
  %v498 = vrot.slane %v338, 5
  %v499 = vrot.slane %v498, 4
  %v500 = vrot.slane %v339, 5
  %v501 = vsel %vm168, %v499, %v500
  %v502 = vrot.slane %v340, 5
  %v503 = vrot.slane %v502, 4
  %v504 = vrot.slane %v341, 5
  %v505 = vsel %vm168, %v503, %v504
  %v507 = vshrl.u32 %v342, 16
  %v509 = vrot.slane %v507, 4
  %v510 = vshll.u32 %v342, 16
  %v512 = vrot.slane %v510, 5
  %v513 = vor.u32 %v509, %v512
  %v514 = vrot.slane %v513, 4
  %v516 = vshll.u32 %v343, 16
  %v518 = vrot.slane %v516, 5
  %v519 = vsel %vm37, %v514, %v518
  %v522 = vrot.slane %v342, 5
  %v523 = vrot.slane %v522, 4
  %v524 = vrot.slane %v343, 5
  %v525 = vsel %vm168, %v523, %v524
  %v527 = vshrl.u32 %v344, 16
  %v529 = vrot.slane %v527, 4
  %v530 = vshll.u32 %v344, 16
  %v532 = vrot.slane %v530, 5
  %v533 = vor.u32 %v529, %v532
  %v534 = vrot.slane %v533, 4
  %v536 = vshll.u32 %v345, 16
  %v538 = vrot.slane %v536, 5
  %v539 = vsel %vm37, %v534, %v538
  %v542 = vrot.slane %v344, 5
  %v543 = vrot.slane %v542, 4
  %v544 = vrot.slane %v345, 5
  %v545 = vsel %vm168, %v543, %v544
  %v546 = vunpack.c.l.b16 %v326
  %v547 = vunpack.c.l.b16 %v328
  %v548 = vunpack.c.l.b16 %v330
  %v549 = vunpack.c.l.b16 %v332
  %v550 = vunpack.c.l.b16 %v334
  %v551 = vunpack.c.l.b16 %v336
  %v552 = vunpack.c.l.b16 %v338
  %v553 = vunpack.c.l.b16 %v340
  %v554 = vpack.c.b16 %v547, %v546
  %v555 = vpack.c.b16 %v549, %v548
  %v556 = vpack.c.b16 %v551, %v550
  %v557 = vpack.c.b16 %v553, %v552
  %v562 = vunpack.c.l.b16 %v359
  %v563 = vunpack.c.l.b16 %v373
  %v564 = vunpack.c.l.b16 %v387
  %v565 = vunpack.c.l.b16 %v401
  %v566 = vunpack.c.l.b16 %v415
  %v567 = vunpack.c.l.b16 %v429
  %v568 = vunpack.c.l.b16 %v443
  %v569 = vunpack.c.l.b16 %v457
  %v570 = vpack.c.b16 %v563, %v562
  %v571 = vpack.c.b16 %v565, %v564
  %v572 = vpack.c.b16 %v567, %v566
  %v573 = vpack.c.b16 %v569, %v568
  %v578 = vunpack.c.l.b16 %v477
  %v579 = vunpack.c.l.b16 %v481
  %v580 = vunpack.c.l.b16 %v485
  %v581 = vunpack.c.l.b16 %v489
  %v582 = vunpack.c.l.b16 %v493
  %v583 = vunpack.c.l.b16 %v497
  %v584 = vunpack.c.l.b16 %v501
  %v585 = vunpack.c.l.b16 %v505
  %v586 = vpack.c.b16 %v579, %v578
  %v587 = vpack.c.b16 %v581, %v580
  %v588 = vpack.c.b16 %v583, %v582
  %v589 = vpack.c.b16 %v585, %v584
  %v594 = vunpack.c.l.b16 %v342
  %v595 = vpack.c.b16 %v548, %v547
  %v596 = vpack.c.b16 %v550, %v549
  %v597 = vpack.c.b16 %v552, %v551
  %v598 = vpack.c.b16 %v594, %v553
  %v603 = vunpack.c.l.b16 %v519
  %v604 = vpack.c.b16 %v564, %v563
  %v605 = vpack.c.b16 %v566, %v565
  %v606 = vpack.c.b16 %v568, %v567
  %v607 = vpack.c.b16 %v603, %v569
  %v612 = vunpack.c.l.b16 %v525
  %v613 = vpack.c.b16 %v580, %v579
  %v614 = vpack.c.b16 %v582, %v581
  %v615 = vpack.c.b16 %v584, %v583
  %v616 = vpack.c.b16 %v612, %v585
  %v621 = vunpack.c.l.b16 %v344
  %v622 = vpack.c.b16 %v621, %v594
  %v624 = vunpack.c.l.b16 %v539
  %v625 = vpack.c.b16 %v624, %v603
  %v627 = vunpack.c.l.b16 %v545
  %v628 = vpack.c.b16 %v627, %v612
  %v630 = vld [vmem:[%s1] sm:$0xf]
  %v631 = vld [vmem:[%s1 + $0x4] sm:$0xf]
  %v632 = vld [vmem:[%s1 + $0x8] sm:$0xf]
  %v633 = vld [vmem:[%s1 + $0xc] sm:$0xf]
  %v634 = vld [vmem:[%s1 + $0x10] sm:$0xf]
  %v635 = vld [vmem:[%s1 + $0x14] sm:$0xf]
  %v636 = vld [vmem:[%s1 + $0x18] sm:$0xf]
  %v637 = vld [vmem:[%s1 + $0x1c] sm:$0xf]
  %v638 = vld [vmem:[%s1 + $0x20] sm:$0xf]
  %v639 = vld [vmem:[%s1 + $0x24] sm:$0xf]
  %v640 = vld [vmem:[%s1 + $0x28] sm:$0xf]
  %v641 = vld [vmem:[%s1 + $0x2c] sm:$0xf]
  %v642 = vld [vmem:[%s1 + $0x30] sm:$0xf]
  %v643 = vld [vmem:[%s1 + $0x34] sm:$0xf]
  %v644 = vld [vmem:[%s1 + $0x38] sm:$0xf]
  %v645 = vld [vmem:[%s1 + $0x3c] sm:$0xf]
  %v646 = vld [vmem:[%s1 + $0x40] sm:$0xf]
  %v647 = vld [vmem:[%s1 + $0x44] sm:$0xf]
  %v648 = vld [vmem:[%s1 + $0x48] sm:$0xf]
  %v649 = vld [vmem:[%s1 + $0x4c] sm:$0xf]
  %v650 = vld [vmem:[%s1 + $0x50] sm:$0xf]
  %v651 = vld [vmem:[%s1 + $0x54] sm:$0xf]
  %v652 = vld [vmem:[%s1 + $0x58] sm:$0xf]
  %v653 = vld [vmem:[%s1 + $0x5c] sm:$0xf]
  %v654 = vld [vmem:[%s1 + $0x60] sm:$0xf]
  %v655 = vld [vmem:[%s1 + $0x64] sm:$0xf]
  %v656 = vld [vmem:[%s1 + $0x68] sm:$0xf]
  %v657 = vld [vmem:[%s1 + $0x6c] sm:$0xf]
  %v658 = vld [vmem:[%s1 + $0x70] sm:$0xf]
  %v659 = vld [vmem:[%s1 + $0x74] sm:$0xf]
  %v660 = vld [vmem:[%s1 + $0x78] sm:$0xf]
  %v661 = vld [vmem:[%s1 + $0x7c] sm:$0xf]
  %v662 = vld [vmem:[%s1 + $0x80] sm:$0xf]
  %v663 = vld [vmem:[%s1 + $0x84] sm:$0xf]
  %v664 = vld [vmem:[%s1 + $0x88] sm:$0xf]
  %v665 = vld [vmem:[%s1 + $0x8c] sm:$0xf]
  %v666 = vld [vmem:[%s1 + $0x90] sm:$0xf]
  %v667 = vld [vmem:[%s1 + $0x94] sm:$0xf]
  %v668 = vld [vmem:[%s1 + $0x98] sm:$0xf]
  %v669 = vld [vmem:[%s1 + $0x9c] sm:$0xf]
  %v670 = vld [vmem:[%s1 + $0xa0] sm:$0xf]
  %v671 = vld [vmem:[%s1 + $0xa4] sm:$0xf]
  %v672 = vld [vmem:[%s1 + $0xa8] sm:$0xf]
  %v673 = vld [vmem:[%s1 + $0xac] sm:$0xf]
  %v674 = vld [vmem:[%s1 + $0xb0] sm:$0xf]
  %v675 = vld [vmem:[%s1 + $0xb4] sm:$0xf]
  %v676 = vld [vmem:[%s1 + $0xb8] sm:$0xf]
  %v677 = vld [vmem:[%s1 + $0xbc] sm:$0xf]
  %v678 = vld [vmem:[%s1 + $0xc0] sm:$0xf]
  %v679 = vld [vmem:[%s1 + $0xc4] sm:$0xf]
  %v680 = vld [vmem:[%s1 + $0xc8] sm:$0xf]
  %v681 = vld [vmem:[%s1 + $0xcc] sm:$0xf]
  %v682 = vld [vmem:[%s1 + $0xd0] sm:$0xf]
  %v683 = vld [vmem:[%s1 + $0xd4] sm:$0xf]
  %v684 = vld [vmem:[%s1 + $0xd8] sm:$0xf]
  %v685 = vld [vmem:[%s1 + $0xdc] sm:$0xf]
  %v686 = vld [vmem:[%s1 + $0xe0] sm:$0xf]
  %v687 = vld [vmem:[%s1 + $0xe4] sm:$0xf]
  %v688 = vld [vmem:[%s1 + $0xe8] sm:$0xf]
  %v689 = vld [vmem:[%s1 + $0xec] sm:$0xf]
  %v690 = vld [vmem:[%s1 + $0xf0] sm:$0xf]
  %v691 = vld [vmem:[%s1 + $0xf4] sm:$0xf]
  %v692 = vld [vmem:[%s1 + $0xf8] sm:$0xf]
  %v693 = vld [vmem:[%s1 + $0xfc] sm:$0xf]
  %v694 = vld [vmem:[%s1 + $0x100] sm:$0xf]
  %v695 = vld [vmem:[%s1 + $0x104] sm:$0xf]
  %v696 = vld [vmem:[%s1 + $0x108] sm:$0xf]
  %v697 = vld [vmem:[%s1 + $0x10c] sm:$0xf]
  %v698 = vld [vmem:[%s1 + $0x110] sm:$0xf]
  %v699 = vld [vmem:[%s1 + $0x114] sm:$0xf]
  %v700 = vld [vmem:[%s1 + $0x118] sm:$0xf]
  %v701 = vld [vmem:[%s1 + $0x11c] sm:$0xf]
  %v702 = vld [vmem:[%s1 + $0x120] sm:$0xf]
  %v703 = vld [vmem:[%s1 + $0x124] sm:$0xf]
  %v704 = vld [vmem:[%s1 + $0x128] sm:$0xf]
  %v705 = vld [vmem:[%s1 + $0x12c] sm:$0xf]
  %v706 = vld [vmem:[%s1 + $0x130] sm:$0xf]
  %v707 = vld [vmem:[%s1 + $0x134] sm:$0xf]
  %v708 = vld [vmem:[%s1 + $0x138] sm:$0xf]
  %v709 = vld [vmem:[%s1 + $0x13c] sm:$0xf]
  %v710 = vld [vmem:[%s1 + $0x140] sm:$0xf]
  %v711 = vld [vmem:[%s1 + $0x144] sm:$0xf]
  %v712 = vld [vmem:[%s1 + $0x148] sm:$0xf]
  %v713 = vld [vmem:[%s1 + $0x14c] sm:$0xf]
  %v714 = vld [vmem:[%s1 + $0x150] sm:$0xf]
  %v715 = vld [vmem:[%s1 + $0x154] sm:$0xf]
  %v716 = vld [vmem:[%s1 + $0x158] sm:$0xf]
  %v717 = vld [vmem:[%s1 + $0x15c] sm:$0xf]
  %v718 = vld [vmem:[%s1 + $0x160] sm:$0xf]
  %v719 = vld [vmem:[%s1 + $0x164] sm:$0xf]
  %v720 = vld [vmem:[%s1 + $0x168] sm:$0xf]
  %v721 = vld [vmem:[%s1 + $0x16c] sm:$0xf]
  %v722 = vld [vmem:[%s1 + $0x170] sm:$0xf]
  %v723 = vld [vmem:[%s1 + $0x174] sm:$0xf]
  %v724 = vld [vmem:[%s1 + $0x178] sm:$0xf]
  %v725 = vld [vmem:[%s1 + $0x17c] sm:$0xf]
  %v726 = vld [vmem:[%s1 + $0x180] sm:$0xf]
  %v727 = vld [vmem:[%s1 + $0x184] sm:$0xf]
  %v728 = vld [vmem:[%s1 + $0x188] sm:$0xf]
  %v729 = vld [vmem:[%s1 + $0x18c] sm:$0xf]
  %v730 = vld [vmem:[%s1 + $0x190] sm:$0xf]
  %v731 = vld [vmem:[%s1 + $0x194] sm:$0xf]
  %v732 = vld [vmem:[%s1 + $0x198] sm:$0xf]
  %v733 = vld [vmem:[%s1 + $0x19c] sm:$0xf]
  %v734 = vld [vmem:[%s1 + $0x1a0] sm:$0xf]
  %v735 = vld [vmem:[%s1 + $0x1a4] sm:$0xf]
  %v736 = vld [vmem:[%s1 + $0x1a8] sm:$0xf]
  %v737 = vld [vmem:[%s1 + $0x1ac] sm:$0xf]
  %v738 = vld [vmem:[%s1 + $0x1b0] sm:$0xf]
  %v739 = vld [vmem:[%s1 + $0x1b4] sm:$0xf]
  %v740 = vld [vmem:[%s1 + $0x1b8] sm:$0xf]
  %v741 = vld [vmem:[%s1 + $0x1bc] sm:$0xf]
  %v742 = vld [vmem:[%s1 + $0x1c0] sm:$0xf]
  %v743 = vld [vmem:[%s1 + $0x1c4] sm:$0xf]
  %v744 = vld [vmem:[%s1 + $0x1c8] sm:$0xf]
  %v745 = vld [vmem:[%s1 + $0x1cc] sm:$0xf]
  %v746 = vld [vmem:[%s1 + $0x1d0] sm:$0xf]
  %v747 = vld [vmem:[%s1 + $0x1d4] sm:$0xf]
  %v748 = vld [vmem:[%s1 + $0x1d8] sm:$0xf]
  %v749 = vld [vmem:[%s1 + $0x1dc] sm:$0xf]
  %v750 = vld [vmem:[%s1 + $0x1e0] sm:$0xf]
  %v751 = vld [vmem:[%s1 + $0x1e4] sm:$0xf]
  %v752 = vld [vmem:[%s1 + $0x1e8] sm:$0xf]
  %v753 = vld [vmem:[%s1 + $0x1ec] sm:$0xf]
  %v754 = vld [vmem:[%s1 + $0x1f0] sm:$0xf]
  %v755 = vld [vmem:[%s1 + $0x1f4] sm:$0xf]
  %v756 = vld [vmem:[%s1 + $0x1f8] sm:$0xf]
  %v757 = vld [vmem:[%s1 + $0x1fc] sm:$0xf]
  %v758 = vld [vmem:[%s1 + $0x200] sm:$0xf]
  %v759 = vld [vmem:[%s1 + $0x204] sm:$0xf]
  %v760 = vld [vmem:[%s1 + $0x208] sm:$0xf]
  %v761 = vld [vmem:[%s1 + $0x20c] sm:$0xf]
  %v762 = vld [vmem:[%s1 + $0x210] sm:$0xf]
  %v763 = vld [vmem:[%s1 + $0x214] sm:$0xf]
  %v764 = vld [vmem:[%s1 + $0x218] sm:$0xf]
  %v765 = vld [vmem:[%s1 + $0x21c] sm:$0xf]
  %v766 = vld [vmem:[%s1 + $0x220] sm:$0xf]
  %v767 = vld [vmem:[%s1 + $0x224] sm:$0xf]
  %v768 = vld [vmem:[%s1 + $0x228] sm:$0xf]
  %v769 = vld [vmem:[%s1 + $0x22c] sm:$0xf]
  %v770 = vld [vmem:[%s1 + $0x230] sm:$0xf]
  %v771 = vld [vmem:[%s1 + $0x234] sm:$0xf]
  %v772 = vld [vmem:[%s1 + $0x238] sm:$0xf]
  %v773 = vld [vmem:[%s1 + $0x23c] sm:$0xf]
  %v774 = vld [vmem:[%s2] sm:$0x1]
  %v776 = vlaneseq
  %v777 = vshrl.u32 %v776, 7
  %v778 = vsub.s32 0, %v777
  %v779 = vrot.slane %v774, %v778
  %v925 = vunpack.c.l.b16 %v630
  %v926 = vunpack.c.l.b16 %v631
  %v927 = vunpack.c.l.b16 %v632
  %v928 = vunpack.c.l.b16 %v633
  %v929 = vunpack.c.l.b16 %v634
  %v930 = vunpack.c.l.b16 %v635
  %v931 = vunpack.c.l.b16 %v636
  %v932 = vunpack.c.l.b16 %v637
  %v933 = vunpack.c.l.b16 %v638
  %v934 = vunpack.c.l.b16 %v639
  %v935 = vunpack.c.l.b16 %v640
  %v936 = vunpack.c.l.b16 %v641
  %v937 = vunpack.c.l.b16 %v642
  %v938 = vunpack.c.l.b16 %v643
  %v939 = vunpack.c.l.b16 %v644
  %v940 = vunpack.c.l.b16 %v645
  %v941 = vunpack.c.l.b16 %v646
  %v942 = vunpack.c.l.b16 %v647
  %v943 = vunpack.c.l.b16 %v648
  %v944 = vunpack.c.l.b16 %v649
  %v945 = vunpack.c.l.b16 %v650
  %v946 = vunpack.c.l.b16 %v651
  %v947 = vunpack.c.l.b16 %v652
  %v948 = vunpack.c.l.b16 %v653
  %v949 = vunpack.c.l.b16 %v654
  %v950 = vunpack.c.l.b16 %v655
  %v951 = vunpack.c.l.b16 %v656
  %v952 = vunpack.c.l.b16 %v657
  %v953 = vunpack.c.l.b16 %v658
  %v954 = vunpack.c.l.b16 %v659
  %v955 = vunpack.c.l.b16 %v660
  %v956 = vunpack.c.l.b16 %v661
  %v957 = vunpack.c.l.b16 %v662
  %v958 = vunpack.c.l.b16 %v663
  %v959 = vunpack.c.l.b16 %v664
  %v960 = vunpack.c.l.b16 %v665
  %v961 = vunpack.c.l.b16 %v666
  %v962 = vunpack.c.l.b16 %v667
  %v963 = vunpack.c.l.b16 %v668
  %v964 = vunpack.c.l.b16 %v669
  %v965 = vunpack.c.l.b16 %v670
  %v966 = vunpack.c.l.b16 %v671
  %v967 = vunpack.c.l.b16 %v672
  %v968 = vunpack.c.l.b16 %v673
  %v969 = vunpack.c.l.b16 %v674
  %v970 = vunpack.c.l.b16 %v675
  %v971 = vunpack.c.l.b16 %v676
  %v972 = vunpack.c.l.b16 %v677
  %v973 = vunpack.c.l.b16 %v678
  %v974 = vunpack.c.l.b16 %v679
  %v975 = vunpack.c.l.b16 %v680
  %v976 = vunpack.c.l.b16 %v681
  %v977 = vunpack.c.l.b16 %v682
  %v978 = vunpack.c.l.b16 %v683
  %v979 = vunpack.c.l.b16 %v684
  %v980 = vunpack.c.l.b16 %v685
  %v981 = vunpack.c.l.b16 %v686
  %v982 = vunpack.c.l.b16 %v687
  %v983 = vunpack.c.l.b16 %v688
  %v984 = vunpack.c.l.b16 %v689
  %v985 = vunpack.c.l.b16 %v690
  %v986 = vunpack.c.l.b16 %v691
  %v987 = vunpack.c.l.b16 %v692
  %v988 = vunpack.c.l.b16 %v693
  %v989 = vunpack.c.l.b16 %v694
  %v990 = vunpack.c.l.b16 %v695
  %v991 = vunpack.c.l.b16 %v696
  %v992 = vunpack.c.l.b16 %v697
  %v993 = vunpack.c.l.b16 %v698
  %v994 = vunpack.c.l.b16 %v699
  %v995 = vunpack.c.l.b16 %v700
  %v996 = vunpack.c.l.b16 %v701
  %v997 = vunpack.c.l.b16 %v702
  %v998 = vunpack.c.l.b16 %v703
  %v999 = vunpack.c.l.b16 %v704
  %v1000 = vunpack.c.l.b16 %v705
  %v1001 = vunpack.c.l.b16 %v706
  %v1002 = vunpack.c.l.b16 %v707
  %v1003 = vunpack.c.l.b16 %v708
  %v1004 = vunpack.c.l.b16 %v709
  %v1005 = vunpack.c.l.b16 %v710
  %v1006 = vunpack.c.l.b16 %v711
  %v1007 = vunpack.c.l.b16 %v712
  %v1008 = vunpack.c.l.b16 %v713
  %v1009 = vunpack.c.l.b16 %v714
  %v1010 = vunpack.c.l.b16 %v715
  %v1011 = vunpack.c.l.b16 %v716
  %v1012 = vunpack.c.l.b16 %v717
  %v1013 = vunpack.c.l.b16 %v718
  %v1014 = vunpack.c.l.b16 %v719
  %v1015 = vunpack.c.l.b16 %v720
  %v1016 = vunpack.c.l.b16 %v721
  %v1017 = vunpack.c.l.b16 %v722
  %v1018 = vunpack.c.l.b16 %v723
  %v1019 = vunpack.c.l.b16 %v724
  %v1020 = vunpack.c.l.b16 %v725
  %v1021 = vunpack.c.l.b16 %v726
  %v1022 = vunpack.c.l.b16 %v727
  %v1023 = vunpack.c.l.b16 %v728
  %v1024 = vunpack.c.l.b16 %v729
  %v1025 = vunpack.c.l.b16 %v730
  %v1026 = vunpack.c.l.b16 %v731
  %v1027 = vunpack.c.l.b16 %v732
  %v1028 = vunpack.c.l.b16 %v733
  %v1029 = vunpack.c.l.b16 %v734
  %v1030 = vunpack.c.l.b16 %v735
  %v1031 = vunpack.c.l.b16 %v736
  %v1032 = vunpack.c.l.b16 %v737
  %v1033 = vunpack.c.l.b16 %v738
  %v1034 = vunpack.c.l.b16 %v739
  %v1035 = vunpack.c.l.b16 %v740
  %v1036 = vunpack.c.l.b16 %v741
  %v1037 = vunpack.c.l.b16 %v742
  %v1038 = vunpack.c.l.b16 %v743
  %v1039 = vunpack.c.l.b16 %v744
  %v1040 = vunpack.c.l.b16 %v745
  %v1041 = vunpack.c.l.b16 %v746
  %v1042 = vunpack.c.l.b16 %v747
  %v1043 = vunpack.c.l.b16 %v748
  %v1044 = vunpack.c.l.b16 %v749
  %v1045 = vunpack.c.l.b16 %v750
  %v1046 = vunpack.c.l.b16 %v751
  %v1047 = vunpack.c.l.b16 %v752
  %v1048 = vunpack.c.l.b16 %v753
  %v1049 = vunpack.c.l.b16 %v754
  %v1050 = vunpack.c.l.b16 %v755
  %v1051 = vunpack.c.l.b16 %v756
  %v1052 = vunpack.c.l.b16 %v757
  %v1053 = vunpack.c.l.b16 %v758
  %v1054 = vunpack.c.l.b16 %v759
  %v1055 = vunpack.c.l.b16 %v760
  %v1056 = vunpack.c.l.b16 %v761
  %v1057 = vunpack.c.l.b16 %v762
  %v1058 = vunpack.c.l.b16 %v763
  %v1059 = vunpack.c.l.b16 %v764
  %v1060 = vunpack.c.l.b16 %v765
  %v1061 = vunpack.c.l.b16 %v766
  %v1062 = vunpack.c.l.b16 %v767
  %v1063 = vunpack.c.l.b16 %v768
  %v1064 = vunpack.c.l.b16 %v769
  %v1065 = vunpack.c.l.b16 %v770
  %v1066 = vunpack.c.l.b16 %v771
  %v1067 = vunpack.c.l.b16 %v772
  %v1068 = vunpack.c.l.b16 %v773
  %v1069 = vpack.c.b16 %v926, %v925
  %v1070 = vpack.c.b16 %v928, %v927
  %v1071 = vpack.c.b16 %v930, %v929
  %v1072 = vpack.c.b16 %v932, %v931
  %v1073 = vpack.c.b16 %v934, %v933
  %v1074 = vpack.c.b16 %v936, %v935
  %v1075 = vpack.c.b16 %v938, %v937
  %v1076 = vpack.c.b16 %v940, %v939
  %v1077 = vpack.c.b16 %v942, %v941
  %v1078 = vpack.c.b16 %v944, %v943
  %v1079 = vpack.c.b16 %v946, %v945
  %v1080 = vpack.c.b16 %v948, %v947
  %v1081 = vpack.c.b16 %v950, %v949
  %v1082 = vpack.c.b16 %v952, %v951
  %v1083 = vpack.c.b16 %v954, %v953
  %v1084 = vpack.c.b16 %v956, %v955
  %v1085 = vpack.c.b16 %v958, %v957
  %v1086 = vpack.c.b16 %v960, %v959
  %v1087 = vpack.c.b16 %v962, %v961
  %v1088 = vpack.c.b16 %v964, %v963
  %v1089 = vpack.c.b16 %v966, %v965
  %v1090 = vpack.c.b16 %v968, %v967
  %v1091 = vpack.c.b16 %v970, %v969
  %v1092 = vpack.c.b16 %v972, %v971
  %v1093 = vpack.c.b16 %v974, %v973
  %v1094 = vpack.c.b16 %v976, %v975
  %v1095 = vpack.c.b16 %v978, %v977
  %v1096 = vpack.c.b16 %v980, %v979
  %v1097 = vpack.c.b16 %v982, %v981
  %v1098 = vpack.c.b16 %v984, %v983
  %v1099 = vpack.c.b16 %v986, %v985
  %v1100 = vpack.c.b16 %v988, %v987
  %v1101 = vpack.c.b16 %v990, %v989
  %v1102 = vpack.c.b16 %v992, %v991
  %v1103 = vpack.c.b16 %v994, %v993
  %v1104 = vpack.c.b16 %v996, %v995
  %v1105 = vpack.c.b16 %v998, %v997
  %v1106 = vpack.c.b16 %v1000, %v999
  %v1107 = vpack.c.b16 %v1002, %v1001
  %v1108 = vpack.c.b16 %v1004, %v1003
  %v1109 = vpack.c.b16 %v1006, %v1005
  %v1110 = vpack.c.b16 %v1008, %v1007
  %v1111 = vpack.c.b16 %v1010, %v1009
  %v1112 = vpack.c.b16 %v1012, %v1011
  %v1113 = vpack.c.b16 %v1014, %v1013
  %v1114 = vpack.c.b16 %v1016, %v1015
  %v1115 = vpack.c.b16 %v1018, %v1017
  %v1116 = vpack.c.b16 %v1020, %v1019
  %v1117 = vpack.c.b16 %v1022, %v1021
  %v1118 = vpack.c.b16 %v1024, %v1023
  %v1119 = vpack.c.b16 %v1026, %v1025
  %v1120 = vpack.c.b16 %v1028, %v1027
  %v1121 = vpack.c.b16 %v1030, %v1029
  %v1122 = vpack.c.b16 %v1032, %v1031
  %v1123 = vpack.c.b16 %v1034, %v1033
  %v1124 = vpack.c.b16 %v1036, %v1035
  %v1125 = vpack.c.b16 %v1038, %v1037
  %v1126 = vpack.c.b16 %v1040, %v1039
  %v1127 = vpack.c.b16 %v1042, %v1041
  %v1128 = vpack.c.b16 %v1044, %v1043
  %v1129 = vpack.c.b16 %v1046, %v1045
  %v1130 = vpack.c.b16 %v1048, %v1047
  %v1131 = vpack.c.b16 %v1050, %v1049
  %v1132 = vpack.c.b16 %v1052, %v1051
  %v1133 = vpack.c.b16 %v1054, %v1053
  %v1134 = vpack.c.b16 %v1056, %v1055
  %v1135 = vpack.c.b16 %v1058, %v1057
  %v1136 = vpack.c.b16 %v1060, %v1059
  %v1137 = vpack.c.b16 %v1062, %v1061
  %v1138 = vpack.c.b16 %v1064, %v1063
  %v1139 = vpack.c.b16 %v1066, %v1065
  %v1140 = vpack.c.b16 %v1068, %v1067
  %1213 = vmatprep.subr.bf16.mxu0 0
  %1214 = vmatpush1.bf16.msra.mxu0 %v1069
  %1215 = vmatprep.subr.bf16.mxu0 0
  %1216 = vmatpush1.bf16.msra.mxu0 %v1070
  %1217 = vmatprep.subr.bf16.mxu0 0
  %1218 = vmatpush1.bf16.msra.mxu0 %v1071
  %1219 = vmatprep.subr.bf16.mxu0 0
  %1220 = vmatpush1.bf16.msra.mxu0 %v1072
  %1221 = vmatprep.subr.bf16.mxu0 0
  %1222 = vmatpush1.bf16.msra.mxu0 %v1073
  %1223 = vmatprep.subr.bf16.mxu0 0
  %1224 = vmatpush1.bf16.msra.mxu0 %v1074
  %1225 = vmatprep.subr.bf16.mxu0 0
  %1226 = vmatpush1.bf16.msra.mxu0 %v1075
  %1227 = vmatprep.subr.bf16.mxu0 0
  %1228 = vmatpush1.bf16.msra.mxu0 %v1076
  %1229 = vmatprep.subr.bf16.mxu0 0
  %1230 = vmatpush1.bf16.msra.mxu0 %v1077
  %1231 = vmatprep.subr.bf16.mxu0 0
  %1232 = vmatpush1.bf16.msra.mxu0 %v1078
  %1233 = vmatprep.subr.bf16.mxu0 0
  %1234 = vmatpush1.bf16.msra.mxu0 %v1079
  %1235 = vmatprep.subr.bf16.mxu0 0
  %1236 = vmatpush1.bf16.msra.mxu0 %v1080
  %1237 = vmatprep.subr.bf16.mxu0 0
  %1238 = vmatpush1.bf16.msra.mxu0 %v1081
  %1239 = vmatprep.subr.bf16.mxu0 0
  %1240 = vmatpush1.bf16.msra.mxu0 %v1082
  %1241 = vmatprep.subr.bf16.mxu0 0
  %1242 = vmatpush1.bf16.msra.mxu0 %v1083
  %1243 = vmatprep.subr.bf16.mxu0 0
  %1244 = vmatpush1.bf16.msra.mxu0 %v1084
  %1245 = vmatprep.mubr.bf16.mxu0 %v265
  %1246 = vmatmul.mubr.bf16.gmra.mrb[0].mxu0 %v249
  %v1247 = vpop.f32.mrb[0].mxu0
  %v1248 = vadd.f32 %v779, %v1247
  %v1249 = vpop.f32.mrb[0].mxu0
  %v1250 = vpop.f32.mrb[0].mxu0
  %v1251 = vadd.f32 %v779, %v1250
  %v1252 = vpop.f32.mrb[0].mxu0
  %1253 = vmatprep.mubr.bf16.mxu0 %v266
  %1254 = vmatmul.mubr.bf16.gmra.mrb[0].mxu0 %v250
  %v1255 = vpop.f32.mrb[0].mxu0
  %v1256 = vadd.f32 %v779, %v1255
  %v1257 = vpop.f32.mrb[0].mxu0
  %v1258 = vpop.f32.mrb[0].mxu0
  %v1259 = vadd.f32 %v779, %v1258
  %v1260 = vpop.f32.mrb[0].mxu0
  %1261 = vmatprep.mubr.bf16.mxu0 %v267
  %1262 = vmatmul.mubr.bf16.gmra.mrb[0].mxu0 %v251
  %v1263 = vpop.f32.mrb[0].mxu0
  %v1264 = vadd.f32 %v779, %v1263
  %v1265 = vpop.f32.mrb[0].mxu0
  %v1266 = vpop.f32.mrb[0].mxu0
  %v1267 = vadd.f32 %v779, %v1266
  %v1268 = vpop.f32.mrb[0].mxu0
  %1269 = vmatprep.mubr.bf16.mxu0 %v268
  %1270 = vmatmul.mubr.bf16.gmra.mrb[0].mxu0 %v252
  %v1271 = vpop.f32.mrb[0].mxu0
  %v1272 = vadd.f32 %v779, %v1271
  %v1273 = vpop.f32.mrb[0].mxu0
  %v1274 = vpop.f32.mrb[0].mxu0
  %v1275 = vadd.f32 %v779, %v1274
  %v1276 = vpop.f32.mrb[0].mxu0
  %1277 = vmatprep.mubr.bf16.mxu0 %v570
  %1278 = vmatmul.mubr.bf16.gmra.mrb[0].mxu0 %v554
  %v1279 = vpop.f32.mrb[0].mxu0
  %v1280 = vadd.f32 %v779, %v1279
  %v1281 = vpop.f32.mrb[0].mxu0
  %v1282 = vpop.f32.mrb[0].mxu0
  %v1283 = vadd.f32 %v779, %v1282
  %v1284 = vpop.f32.mrb[0].mxu0
  %1285 = vmatprep.mubr.bf16.mxu0 %v571
  %1286 = vmatmul.mubr.bf16.gmra.mrb[0].mxu0 %v555
  %v1287 = vpop.f32.mrb[0].mxu0
  %v1288 = vadd.f32 %v779, %v1287
  %v1289 = vpop.f32.mrb[0].mxu0
  %v1290 = vpop.f32.mrb[0].mxu0
  %v1291 = vadd.f32 %v779, %v1290
  %v1292 = vpop.f32.mrb[0].mxu0
  %1293 = vmatprep.mubr.bf16.mxu0 %v572
  %1294 = vmatmul.mubr.bf16.gmra.mrb[0].mxu0 %v556
  %v1295 = vpop.f32.mrb[0].mxu0
  %v1296 = vadd.f32 %v779, %v1295
  %v1297 = vpop.f32.mrb[0].mxu0
  %v1298 = vpop.f32.mrb[0].mxu0
  %v1299 = vadd.f32 %v779, %v1298
  %v1300 = vpop.f32.mrb[0].mxu0
  %1301 = vmatprep.mubr.bf16.mxu0 %v573
  %1302 = vmatmul.mubr.bf16.gmra.mrb[0].mxu0 %v557
  %v1303 = vpop.f32.mrb[0].mxu0
  %v1304 = vadd.f32 %v779, %v1303
  %v1305 = vpop.f32.mrb[0].mxu0
  %v1306 = vpop.f32.mrb[0].mxu0
  %v1307 = vadd.f32 %v779, %v1306
  %v1308 = vpop.f32.mrb[0].mxu0
  %1309 = vdwg.mxu0
  %1310 = vmatprep.subr.bf16.mxu0 0
  %1311 = vmatpush1.bf16.msra.mxu0 %v1085
  %1312 = vmatprep.subr.bf16.mxu0 0
  %1313 = vmatpush1.bf16.msra.mxu0 %v1086
  %1314 = vmatprep.subr.bf16.mxu0 0
  %1315 = vmatpush1.bf16.msra.mxu0 %v1087
  %1316 = vmatprep.subr.bf16.mxu0 0
  %1317 = vmatpush1.bf16.msra.mxu0 %v1088
  %1318 = vmatprep.subr.bf16.mxu0 0
  %1319 = vmatpush1.bf16.msra.mxu0 %v1089
  %1320 = vmatprep.subr.bf16.mxu0 0
  %1321 = vmatpush1.bf16.msra.mxu0 %v1090
  %1322 = vmatprep.subr.bf16.mxu0 0
  %1323 = vmatpush1.bf16.msra.mxu0 %v1091
  %1324 = vmatprep.subr.bf16.mxu0 0
  %1325 = vmatpush1.bf16.msra.mxu0 %v1092
  %1326 = vmatprep.subr.bf16.mxu0 0
  %1327 = vmatpush1.bf16.msra.mxu0 %v1093
  %1328 = vmatprep.subr.bf16.mxu0 0
  %1329 = vmatpush1.bf16.msra.mxu0 %v1094
  %1330 = vmatprep.subr.bf16.mxu0 0
  %1331 = vmatpush1.bf16.msra.mxu0 %v1095
  %1332 = vmatprep.subr.bf16.mxu0 0
  %1333 = vmatpush1.bf16.msra.mxu0 %v1096
  %1334 = vmatprep.subr.bf16.mxu0 0
  %1335 = vmatpush1.bf16.msra.mxu0 %v1097
  %1336 = vmatprep.subr.bf16.mxu0 0
  %1337 = vmatpush1.bf16.msra.mxu0 %v1098
  %1338 = vmatprep.subr.bf16.mxu0 0
  %1339 = vmatpush1.bf16.msra.mxu0 %v1099
  %1340 = vmatprep.subr.bf16.mxu0 0
  %1341 = vmatpush1.bf16.msra.mxu0 %v1100
  %1342 = vmatprep.mubr.bf16.mxu0 %v290
  %1343 = vmatmul.mubr.bf16.gmra.mrb[0].mxu0 %v281
  %v1344 = vpop.f32.mrb[0].mxu0
  %v1345 = vadd.f32 %v1248, %v1344
  %v1346 = vpop.f32.mrb[0].mxu0
  %v1347 = vpop.f32.mrb[0].mxu0
  %v1348 = vadd.f32 %v1251, %v1347
  %v1349 = vpop.f32.mrb[0].mxu0
  %1350 = vmatprep.mubr.bf16.mxu0 %v291
  %1351 = vmatmul.mubr.bf16.gmra.mrb[0].mxu0 %v282
  %v1352 = vpop.f32.mrb[0].mxu0
  %v1353 = vadd.f32 %v1256, %v1352
  %v1354 = vpop.f32.mrb[0].mxu0
  %v1355 = vpop.f32.mrb[0].mxu0
  %v1356 = vadd.f32 %v1259, %v1355
  %v1357 = vpop.f32.mrb[0].mxu0
  %1358 = vmatprep.mubr.bf16.mxu0 %v292
  %1359 = vmatmul.mubr.bf16.gmra.mrb[0].mxu0 %v283
  %v1360 = vpop.f32.mrb[0].mxu0
  %v1361 = vadd.f32 %v1264, %v1360
  %v1362 = vpop.f32.mrb[0].mxu0
  %v1363 = vpop.f32.mrb[0].mxu0
  %v1364 = vadd.f32 %v1267, %v1363
  %v1365 = vpop.f32.mrb[0].mxu0
  %1366 = vmatprep.mubr.bf16.mxu0 %v293
  %1367 = vmatmul.mubr.bf16.gmra.mrb[0].mxu0 %v284
  %v1368 = vpop.f32.mrb[0].mxu0
  %v1369 = vadd.f32 %v1272, %v1368
  %v1370 = vpop.f32.mrb[0].mxu0
  %v1371 = vpop.f32.mrb[0].mxu0
  %v1372 = vadd.f32 %v1275, %v1371
  %v1373 = vpop.f32.mrb[0].mxu0
  %1374 = vmatprep.mubr.bf16.mxu0 %v595
  %1375 = vmatmul.mubr.bf16.gmra.mrb[0].mxu0 %v586
  %v1376 = vpop.f32.mrb[0].mxu0
  %v1377 = vadd.f32 %v1280, %v1376
  %v1378 = vpop.f32.mrb[0].mxu0
  %v1379 = vpop.f32.mrb[0].mxu0
  %v1380 = vadd.f32 %v1283, %v1379
  %v1381 = vpop.f32.mrb[0].mxu0
  %1382 = vmatprep.mubr.bf16.mxu0 %v596
  %1383 = vmatmul.mubr.bf16.gmra.mrb[0].mxu0 %v587
  %v1384 = vpop.f32.mrb[0].mxu0
  %v1385 = vadd.f32 %v1288, %v1384
  %v1386 = vpop.f32.mrb[0].mxu0
  %v1387 = vpop.f32.mrb[0].mxu0
  %v1388 = vadd.f32 %v1291, %v1387
  %v1389 = vpop.f32.mrb[0].mxu0
  %1390 = vmatprep.mubr.bf16.mxu0 %v597
  %1391 = vmatmul.mubr.bf16.gmra.mrb[0].mxu0 %v588
  %v1392 = vpop.f32.mrb[0].mxu0
  %v1393 = vadd.f32 %v1296, %v1392
  %v1394 = vpop.f32.mrb[0].mxu0
  %v1395 = vpop.f32.mrb[0].mxu0
  %v1396 = vadd.f32 %v1299, %v1395
  %v1397 = vpop.f32.mrb[0].mxu0
  %1398 = vmatprep.mubr.bf16.mxu0 %v598
  %1399 = vmatmul.mubr.bf16.gmra.mrb[0].mxu0 %v589
  %v1400 = vpop.f32.mrb[0].mxu0
  %v1401 = vadd.f32 %v1304, %v1400
  %v1402 = vpop.f32.mrb[0].mxu0
  %v1403 = vpop.f32.mrb[0].mxu0
  %v1404 = vadd.f32 %v1307, %v1403
  %v1405 = vpop.f32.mrb[0].mxu0
  %1406 = vdwg.mxu0
  %1407 = vmatprep.subr.bf16.mxu0 0
  %1408 = vmatpush1.bf16.msra.mxu0 %v1101
  %1409 = vmatprep.subr.bf16.mxu0 0
  %1410 = vmatpush1.bf16.msra.mxu0 %v1102
  %1411 = vmatprep.subr.bf16.mxu0 0
  %1412 = vmatpush1.bf16.msra.mxu0 %v1103
  %1413 = vmatprep.subr.bf16.mxu0 0
  %1414 = vmatpush1.bf16.msra.mxu0 %v1104
  %1415 = vmatprep.subr.bf16.mxu0 0
  %1416 = vmatpush1.bf16.msra.mxu0 %v1105
  %1417 = vmatprep.subr.bf16.mxu0 0
  %1418 = vmatpush1.bf16.msra.mxu0 %v1106
  %1419 = vmatprep.subr.bf16.mxu0 0
  %1420 = vmatpush1.bf16.msra.mxu0 %v1107
  %1421 = vmatprep.subr.bf16.mxu0 0
  %1422 = vmatpush1.bf16.msra.mxu0 %v1108
  %1423 = vmatprep.subr.bf16.mxu0 0
  %1424 = vmatpush1.bf16.msra.mxu0 %v1109
  %1425 = vmatprep.subr.bf16.mxu0 0
  %1426 = vmatpush1.bf16.msra.mxu0 %v1110
  %1427 = vmatprep.subr.bf16.mxu0 0
  %1428 = vmatpush1.bf16.msra.mxu0 %v1111
  %1429 = vmatprep.subr.bf16.mxu0 0
  %1430 = vmatpush1.bf16.msra.mxu0 %v1112
  %1431 = vmatprep.subr.bf16.mxu0 0
  %1432 = vmatpush1.bf16.msra.mxu0 %v1113
  %1433 = vmatprep.subr.bf16.mxu0 0
  %1434 = vmatpush1.bf16.msra.mxu0 %v1114
  %1435 = vmatprep.subr.bf16.mxu0 0
  %1436 = vmatpush1.bf16.msra.mxu0 %v1115
  %1437 = vmatprep.subr.bf16.mxu0 0
  %1438 = vmatpush1.bf16.msra.mxu0 %v1116
  %1439 = vmatprep.mubr.bf16.mxu0 %v308
  %1440 = vmatmul.mubr.bf16.gmra.mrb[0].mxu0 %v299
  %v1441 = vpop.f32.mrb[0].mxu0
  %v1442 = vadd.f32 %v1345, %v1441
  %v1443 = vpop.f32.mrb[0].mxu0
  %v1444 = vpop.f32.mrb[0].mxu0
  %v1445 = vadd.f32 %v1348, %v1444
  %v1446 = vpop.f32.mrb[0].mxu0
  %1447 = vmatprep.mubr.bf16.mxu0 %v309
  %1448 = vmatmul.mubr.bf16.gmra.mrb[0].mxu0 %v300
  %v1449 = vpop.f32.mrb[0].mxu0
  %v1450 = vadd.f32 %v1353, %v1449
  %v1451 = vpop.f32.mrb[0].mxu0
  %v1452 = vpop.f32.mrb[0].mxu0
  %v1453 = vadd.f32 %v1356, %v1452
  %v1454 = vpop.f32.mrb[0].mxu0
  %1455 = vmatprep.mubr.bf16.mxu0 %v310
  %1456 = vmatmul.mubr.bf16.gmra.mrb[0].mxu0 %v301
  %v1457 = vpop.f32.mrb[0].mxu0
  %v1458 = vadd.f32 %v1361, %v1457
  %v1459 = vpop.f32.mrb[0].mxu0
  %v1460 = vpop.f32.mrb[0].mxu0
  %v1461 = vadd.f32 %v1364, %v1460
  %v1462 = vpop.f32.mrb[0].mxu0
  %1463 = vmatprep.mubr.bf16.mxu0 %v311
  %1464 = vmatmul.mubr.bf16.gmra.mrb[0].mxu0 %v302
  %v1465 = vpop.f32.mrb[0].mxu0
  %v1466 = vadd.f32 %v1369, %v1465
  %v1467 = vpop.f32.mrb[0].mxu0
  %v1468 = vpop.f32.mrb[0].mxu0
  %v1469 = vadd.f32 %v1372, %v1468
  %v1470 = vpop.f32.mrb[0].mxu0
  %1471 = vmatprep.mubr.bf16.mxu0 %v613
  %1472 = vmatmul.mubr.bf16.gmra.mrb[0].mxu0 %v604
  %v1473 = vpop.f32.mrb[0].mxu0
  %v1474 = vadd.f32 %v1377, %v1473
  %v1475 = vpop.f32.mrb[0].mxu0
  %v1476 = vpop.f32.mrb[0].mxu0
  %v1477 = vadd.f32 %v1380, %v1476
  %v1478 = vpop.f32.mrb[0].mxu0
  %1479 = vmatprep.mubr.bf16.mxu0 %v614
  %1480 = vmatmul.mubr.bf16.gmra.mrb[0].mxu0 %v605
  %v1481 = vpop.f32.mrb[0].mxu0
  %v1482 = vadd.f32 %v1385, %v1481
  %v1483 = vpop.f32.mrb[0].mxu0
  %v1484 = vpop.f32.mrb[0].mxu0
  %v1485 = vadd.f32 %v1388, %v1484
  %v1486 = vpop.f32.mrb[0].mxu0
  %1487 = vmatprep.mubr.bf16.mxu0 %v615
  %1488 = vmatmul.mubr.bf16.gmra.mrb[0].mxu0 %v606
  %v1489 = vpop.f32.mrb[0].mxu0
  %v1490 = vadd.f32 %v1393, %v1489
  %v1491 = vpop.f32.mrb[0].mxu0
  %v1492 = vpop.f32.mrb[0].mxu0
  %v1493 = vadd.f32 %v1396, %v1492
  %v1494 = vpop.f32.mrb[0].mxu0
  %1495 = vmatprep.mubr.bf16.mxu0 %v616
  %1496 = vmatmul.mubr.bf16.gmra.mrb[0].mxu0 %v607
  %v1497 = vpop.f32.mrb[0].mxu0
  %v1498 = vadd.f32 %v1401, %v1497
  %v1499 = vpop.f32.mrb[0].mxu0
  %v1500 = vpop.f32.mrb[0].mxu0
  %v1501 = vadd.f32 %v1404, %v1500
  %v1502 = vpop.f32.mrb[0].mxu0
  %1503 = vdwg.mxu0
  %1504 = vmatprep.subr.bf16.mxu0 0
  %1505 = vmatpush1.bf16.msra.mxu0 %v1117
  %1506 = vmatprep.subr.bf16.mxu0 0
  %1507 = vmatpush1.bf16.msra.mxu0 %v1118
  %1508 = vmatprep.subr.bf16.mxu0 0
  %1509 = vmatpush1.bf16.msra.mxu0 %v1119
  %1510 = vmatprep.subr.bf16.mxu0 0
  %1511 = vmatpush1.bf16.msra.mxu0 %v1120
  %1512 = vmatprep.subr.bf16.mxu0 0
  %1513 = vmatpush1.bf16.msra.mxu0 %v1121
  %1514 = vmatprep.subr.bf16.mxu0 0
  %1515 = vmatpush1.bf16.msra.mxu0 %v1122
  %1516 = vmatprep.subr.bf16.mxu0 0
  %1517 = vmatpush1.bf16.msra.mxu0 %v1123
  %1518 = vmatprep.subr.bf16.mxu0 0
  %1519 = vmatpush1.bf16.msra.mxu0 %v1124
  %1520 = vmatprep.subr.bf16.mxu0 0
  %1521 = vmatpush1.bf16.msra.mxu0 %v1125
  %1522 = vmatprep.subr.bf16.mxu0 0
  %1523 = vmatpush1.bf16.msra.mxu0 %v1126
  %1524 = vmatprep.subr.bf16.mxu0 0
  %1525 = vmatpush1.bf16.msra.mxu0 %v1127
  %1526 = vmatprep.subr.bf16.mxu0 0
  %1527 = vmatpush1.bf16.msra.mxu0 %v1128
  %1528 = vmatprep.subr.bf16.mxu0 0
  %1529 = vmatpush1.bf16.msra.mxu0 %v1129
  %1530 = vmatprep.subr.bf16.mxu0 0
  %1531 = vmatpush1.bf16.msra.mxu0 %v1130
  %1532 = vmatprep.subr.bf16.mxu0 0
  %1533 = vmatpush1.bf16.msra.mxu0 %v1131
  %1534 = vmatprep.subr.bf16.mxu0 0
  %1535 = vmatpush1.bf16.msra.mxu0 %v1132
  %1536 = vmatprep.mubr.bf16.mxu0 %v266
  %1537 = vmatmul.mubr.bf16.gmra.mrb[0].mxu0 %v250
  %v1538 = vpop.f32.mrb[0].mxu0
  %v1539 = vadd.f32 %v1442, %v1538
  %v1540 = vpop.f32.mrb[0].mxu0
  %v1541 = vpop.f32.mrb[0].mxu0
  %v1542 = vadd.f32 %v1445, %v1541
  %v1543 = vpop.f32.mrb[0].mxu0
  %1544 = vmatprep.mubr.bf16.mxu0 %v267
  %1545 = vmatmul.mubr.bf16.gmra.mrb[0].mxu0 %v251
  %v1546 = vpop.f32.mrb[0].mxu0
  %v1547 = vadd.f32 %v1450, %v1546
  %v1548 = vpop.f32.mrb[0].mxu0
  %v1549 = vpop.f32.mrb[0].mxu0
  %v1550 = vadd.f32 %v1453, %v1549
  %v1551 = vpop.f32.mrb[0].mxu0
  %1552 = vmatprep.mubr.bf16.mxu0 %v268
  %1553 = vmatmul.mubr.bf16.gmra.mrb[0].mxu0 %v252
  %v1554 = vpop.f32.mrb[0].mxu0
  %v1555 = vadd.f32 %v1458, %v1554
  %v1556 = vpop.f32.mrb[0].mxu0
  %v1557 = vpop.f32.mrb[0].mxu0
  %v1558 = vadd.f32 %v1461, %v1557
  %v1559 = vpop.f32.mrb[0].mxu0
  %1560 = vmatprep.mubr.bf16.mxu0 %v320
  %1561 = vmatmul.mubr.bf16.gmra.mrb[0].mxu0 %v317
  %v1562 = vpop.f32.mrb[0].mxu0
  %v1563 = vadd.f32 %v1466, %v1562
  %v1564 = vpop.f32.mrb[0].mxu0
  %v1565 = vpop.f32.mrb[0].mxu0
  %v1566 = vadd.f32 %v1469, %v1565
  %v1567 = vpop.f32.mrb[0].mxu0
  %1568 = vmatprep.mubr.bf16.mxu0 %v571
  %1569 = vmatmul.mubr.bf16.gmra.mrb[0].mxu0 %v555
  %v1570 = vpop.f32.mrb[0].mxu0
  %v1571 = vadd.f32 %v1474, %v1570
  %v1572 = vpop.f32.mrb[0].mxu0
  %v1573 = vpop.f32.mrb[0].mxu0
  %v1574 = vadd.f32 %v1477, %v1573
  %v1575 = vpop.f32.mrb[0].mxu0
  %1576 = vmatprep.mubr.bf16.mxu0 %v572
  %1577 = vmatmul.mubr.bf16.gmra.mrb[0].mxu0 %v556
  %v1578 = vpop.f32.mrb[0].mxu0
  %v1579 = vadd.f32 %v1482, %v1578
  %v1580 = vpop.f32.mrb[0].mxu0
  %v1581 = vpop.f32.mrb[0].mxu0
  %v1582 = vadd.f32 %v1485, %v1581
  %v1583 = vpop.f32.mrb[0].mxu0
  %1584 = vmatprep.mubr.bf16.mxu0 %v573
  %1585 = vmatmul.mubr.bf16.gmra.mrb[0].mxu0 %v557
  %v1586 = vpop.f32.mrb[0].mxu0
  %v1587 = vadd.f32 %v1490, %v1586
  %v1588 = vpop.f32.mrb[0].mxu0
  %v1589 = vpop.f32.mrb[0].mxu0
  %v1590 = vadd.f32 %v1493, %v1589
  %v1591 = vpop.f32.mrb[0].mxu0
  %1592 = vmatprep.mubr.bf16.mxu0 %v625
  %1593 = vmatmul.mubr.bf16.gmra.mrb[0].mxu0 %v622
  %v1594 = vpop.f32.mrb[0].mxu0
  %v1595 = vadd.f32 %v1498, %v1594
  %v1596 = vpop.f32.mrb[0].mxu0
  %v1597 = vpop.f32.mrb[0].mxu0
  %v1598 = vadd.f32 %v1501, %v1597
  %v1599 = vpop.f32.mrb[0].mxu0
  %1600 = vdwg.mxu0
  %1601 = vmatprep.subr.bf16.mxu0 0
  %1602 = vmatpush1.bf16.msra.mxu0 %v1133
  %1603 = vmatprep.subr.bf16.mxu0 0
  %1604 = vmatpush1.bf16.msra.mxu0 %v1134
  %1605 = vmatprep.subr.bf16.mxu0 0
  %1606 = vmatpush1.bf16.msra.mxu0 %v1135
  %1607 = vmatprep.subr.bf16.mxu0 0
  %1608 = vmatpush1.bf16.msra.mxu0 %v1136
  %1609 = vmatprep.subr.bf16.mxu0 0
  %1610 = vmatpush1.bf16.msra.mxu0 %v1137
  %1611 = vmatprep.subr.bf16.mxu0 0
  %1612 = vmatpush1.bf16.msra.mxu0 %v1138
  %1613 = vmatprep.subr.bf16.mxu0 0
  %1614 = vmatpush1.bf16.msra.mxu0 %v1139
  %1615 = vmatprep.subr.bf16.mxu0 0
  %1616 = vmatpush1.bf16.msra.mxu0 %v1140
  %1617 = vmatprep.subr.bf16.mxu0 0
  %1618 = vmatpush1.bf16.msra.mxu0 0
  %1619 = vmatprep.subr.bf16.mxu0 0
  %1620 = vmatpush1.bf16.msra.mxu0 0
  %1621 = vmatprep.subr.bf16.mxu0 0
  %1622 = vmatpush1.bf16.msra.mxu0 0
  %1623 = vmatprep.subr.bf16.mxu0 0
  %1624 = vmatpush1.bf16.msra.mxu0 0
  %1625 = vmatprep.subr.bf16.mxu0 0
  %1626 = vmatpush1.bf16.msra.mxu0 0
  %1627 = vmatprep.subr.bf16.mxu0 0
  %1628 = vmatpush1.bf16.msra.mxu0 0
  %1629 = vmatprep.subr.bf16.mxu0 0
  %1630 = vmatpush1.bf16.msra.mxu0 0
  %1631 = vmatprep.subr.bf16.mxu0 0
  %1632 = vmatpush1.bf16.msra.mxu0 0
  %1633 = vmatprep.mubr.bf16.mxu0 0
  %1634 = vmatmul.mubr.bf16.gmra.mrb[0].mxu0 %v282
  %v1635 = vpop.f32.mrb[0].mxu0
  %v1636 = vadd.f32 %v1539, %v1635
  %v1637 = vpop.f32.mrb[0].mxu0
  %v1638 = vpop.f32.mrb[0].mxu0
  %v1639 = vadd.f32 %v1542, %v1638
  %v1640 = vpop.f32.mrb[0].mxu0
  %1641 = vmatprep.mubr.bf16.mxu0 0
  %1642 = vmatmul.mubr.bf16.gmra.mrb[0].mxu0 %v283
  %v1643 = vpop.f32.mrb[0].mxu0
  %v1644 = vadd.f32 %v1547, %v1643
  %v1645 = vpop.f32.mrb[0].mxu0
  %v1646 = vpop.f32.mrb[0].mxu0
  %v1647 = vadd.f32 %v1550, %v1646
  %v1648 = vpop.f32.mrb[0].mxu0
  %1649 = vmatprep.mubr.bf16.mxu0 0
  %1650 = vmatmul.mubr.bf16.gmra.mrb[0].mxu0 %v284
  %v1651 = vpop.f32.mrb[0].mxu0
  %v1652 = vadd.f32 %v1555, %v1651
  %v1653 = vpop.f32.mrb[0].mxu0
  %v1654 = vpop.f32.mrb[0].mxu0
  %v1655 = vadd.f32 %v1558, %v1654
  %v1656 = vpop.f32.mrb[0].mxu0
  %1657 = vmatprep.mubr.bf16.mxu0 0
  %1658 = vmatmul.mubr.bf16.gmra.mrb[0].mxu0 %v323
  %v1659 = vpop.f32.mrb[0].mxu0
  %v1660 = vadd.f32 %v1563, %v1659
  %v1661 = vpop.f32.mrb[0].mxu0
  %v1662 = vpop.f32.mrb[0].mxu0
  %v1663 = vadd.f32 %v1566, %v1662
  %v1664 = vpop.f32.mrb[0].mxu0
  %1665 = vmatprep.mubr.bf16.mxu0 0
  %1666 = vmatmul.mubr.bf16.gmra.mrb[0].mxu0 %v587
  %v1667 = vpop.f32.mrb[0].mxu0
  %v1668 = vadd.f32 %v1571, %v1667
  %v1669 = vpop.f32.mrb[0].mxu0
  %v1670 = vpop.f32.mrb[0].mxu0
  %v1671 = vadd.f32 %v1574, %v1670
  %v1672 = vpop.f32.mrb[0].mxu0
  %1673 = vmatprep.mubr.bf16.mxu0 0
  %1674 = vmatmul.mubr.bf16.gmra.mrb[0].mxu0 %v588
  %v1675 = vpop.f32.mrb[0].mxu0
  %v1676 = vadd.f32 %v1579, %v1675
  %v1677 = vpop.f32.mrb[0].mxu0
  %v1678 = vpop.f32.mrb[0].mxu0
  %v1679 = vadd.f32 %v1582, %v1678
  %v1680 = vpop.f32.mrb[0].mxu0
  %1681 = vmatprep.mubr.bf16.mxu0 0
  %1682 = vmatmul.mubr.bf16.gmra.mrb[0].mxu0 %v589
  %v1683 = vpop.f32.mrb[0].mxu0
  %v1684 = vadd.f32 %v1587, %v1683
  %v1685 = vpop.f32.mrb[0].mxu0
  %v1686 = vpop.f32.mrb[0].mxu0
  %v1687 = vadd.f32 %v1590, %v1686
  %v1688 = vpop.f32.mrb[0].mxu0
  %1689 = vmatprep.mubr.bf16.mxu0 0
  %1690 = vmatmul.mubr.bf16.gmra.mrb[0].mxu0 %v628
  %v1691 = vpop.f32.mrb[0].mxu0
  %v1692 = vadd.f32 %v1595, %v1691
  %v1693 = vpop.f32.mrb[0].mxu0
  %v1694 = vpop.f32.mrb[0].mxu0
  %v1695 = vadd.f32 %v1598, %v1694
  %v1696 = vpop.f32.mrb[0].mxu0
  %1697 = vdwg.mxu0
  %v1698 = vmax.f32 %v1636, 0.0
  %v1699 = vmax.f32 %v1639, 0.0
  %v1700 = vmax.f32 %v1644, 0.0
  %v1701 = vmax.f32 %v1647, 0.0
  %v1702 = vmax.f32 %v1652, 0.0
  %v1703 = vmax.f32 %v1655, 0.0
  %v1704 = vmax.f32 %v1660, 0.0
  %v1705 = vmax.f32 %v1663, 0.0
  %v1706 = vmax.f32 %v1668, 0.0
  %v1707 = vmax.f32 %v1671, 0.0
  %v1708 = vmax.f32 %v1676, 0.0
  %v1709 = vmax.f32 %v1679, 0.0
  %v1710 = vmax.f32 %v1684, 0.0
  %v1711 = vmax.f32 %v1687, 0.0
  %v1712 = vmax.f32 %v1692, 0.0
  %v1713 = vmax.f32 %v1695, 0.0
  %v1714 = vpack.c.bf16 %v1699, %v1698
  %v1715 = vpack.c.bf16 %v1701, %v1700
  %v1716 = vpack.c.bf16 %v1703, %v1702
  %v1717 = vpack.c.bf16 %v1705, %v1704
  %v1718 = vpack.c.bf16 %v1707, %v1706
  %v1719 = vpack.c.bf16 %v1709, %v1708
  %v1720 = vpack.c.bf16 %v1711, %v1710
  %v1721 = vpack.c.bf16 %v1713, %v1712
  %v1730 = vunpack.c.l.b16 %v1714
  %v1731 = vunpack.c.h.b16 %v1714
  %v1732 = vunpack.c.l.b16 %v1715
  %v1733 = vunpack.c.h.b16 %v1715
  %v1734 = vunpack.c.l.b16 %v1716
  %v1735 = vunpack.c.h.b16 %v1716
  %v1736 = vunpack.c.l.b16 %v1717
  %v1737 = vunpack.c.h.b16 %v1717
  %v1738 = vunpack.c.l.b16 %v1718
  %v1739 = vunpack.c.h.b16 %v1718
  %v1740 = vunpack.c.l.b16 %v1719
  %v1741 = vunpack.c.h.b16 %v1719
  %v1742 = vunpack.c.l.b16 %v1720
  %v1743 = vunpack.c.h.b16 %v1720
  %v1744 = vunpack.c.l.b16 %v1721
  %v1745 = vunpack.c.h.b16 %v1721
  %v1746 = vpack.c.b16 %v1730, %v1730
  %v1747 = vpack.c.b16 %v1731, %v1731
  %v1748 = vpack.c.b16 %v1732, %v1732
  %v1749 = vpack.c.b16 %v1733, %v1733
  %v1750 = vpack.c.b16 %v1734, %v1734
  %v1751 = vpack.c.b16 %v1735, %v1735
  %v1752 = vpack.c.b16 %v1736, %v1736
  %v1753 = vpack.c.b16 %v1737, %v1737
  %v1754 = vpack.c.b16 %v1738, %v1738
  %v1755 = vpack.c.b16 %v1739, %v1739
  %v1756 = vpack.c.b16 %v1740, %v1740
  %v1757 = vpack.c.b16 %v1741, %v1741
  %v1758 = vpack.c.b16 %v1742, %v1742
  %v1759 = vpack.c.b16 %v1743, %v1743
  %v1760 = vpack.c.b16 %v1744, %v1744
  %v1761 = vpack.c.b16 %v1745, %v1745
  %1778 = vst [vmem:[%s3] sm:$0xf] %v1746
  %1779 = vst [vmem:[%s3 + $0x4] sm:$0xf] %v1747
  %1780 = vst [vmem:[%s3 + $0x8] sm:$0xf] %v1748
  %1781 = vst [vmem:[%s3 + $0xc] sm:$0xf] %v1749
  %1782 = vst [vmem:[%s3 + $0x10] sm:$0xf] %v1750
  %1783 = vst [vmem:[%s3 + $0x14] sm:$0xf] %v1751
  %1784 = vst [vmem:[%s3 + $0x18] sm:$0xf] %v1752
  %1785 = vst [vmem:[%s3 + $0x1c] sm:$0xf] %v1753
  %1786 = vst [vmem:[%s3 + $0x20] sm:$0xf] %v1754
  %1787 = vst [vmem:[%s3 + $0x24] sm:$0xf] %v1755
  %1788 = vst [vmem:[%s3 + $0x28] sm:$0xf] %v1756
  %1789 = vst [vmem:[%s3 + $0x2c] sm:$0xf] %v1757
  %1790 = vst [vmem:[%s3 + $0x30] sm:$0xf] %v1758
  %1791 = vst [vmem:[%s3 + $0x34] sm:$0xf] %v1759
  %1792 = vst [vmem:[%s3 + $0x38] sm:$0xf] %v1760
  %1793 = vst [vmem:[%s3 + $0x3c] sm:$0xf] %v1761
  // Predicated region
  $region14: #{ddn_fcos3d_forward.15} parent=0 // pred_check
    _
  $region15: #{ddn_fcos3d_forward.15} parent=0 // pred_check_branch
    %1795 = sbr.rel (0) target = $region17
  $region16: #{ddn_fcos3d_forward.15} parent=0 // pred_region
    _
  $region17: #{ddn_fcos3d_forward.15} parent=0 // pred_fallthru
    _
  // Predicated region
  $region18: #{ddn_fcos3d_forward.15} parent=0 // pred_check
    _
  $region19: #{ddn_fcos3d_forward.15} parent=0 // pred_check_branch
    %1797 = sbr.rel (0) target = $region21
  $region20: #{ddn_fcos3d_forward.15} parent=0 // pred_region
    _
  $region21: #{ddn_fcos3d_forward.15} parent=0 // pred_fallthru
    _

// kernel: ddn_fcos3d_forward.17
$region0: #{ddn_fcos3d_forward.17}
  #allocation0 [shape = 'u32[]', space=smem, size = 0x4, offset = 0x4, fixed_abs, tag = 'smem constant byte address 0x4 - core index']
  #allocation1 [shape = 'u32[144,128]{1,0:T(1,128)}', space=vmem, size = 0x12000, scoped, tag = 'internal scratch']
  %s0 = inlined_call_operand.vmem [shape: bf16[40,64], index: 0, kind: input, shape index: {}]
  %s1 = inlined_call_operand.vmem [shape: bf16[64,2048], index: 1, kind: input, shape index: {}]
  %s2 = inlined_call_operand.vmem [shape: f32[40,2048], index: 2, kind: output, shape index: {}]
  %s3 = sld [smem:[#allocation0]]
  $region18: #{ddn_fcos3d_forward.17} parent=0
    _
  %s5 = ssub.s32 1, %s3
  %s6 = scalar_select 0, %s5, %s3
  // Predicated region
  $region2: #{ddn_fcos3d_forward.17} parent=0 // pred_check
    _
  $region3: #{ddn_fcos3d_forward.17} parent=0 // pred_check_branch
    %8 = sbr.rel (0) target = $region5
  $region4: #{ddn_fcos3d_forward.17} parent=0 // pred_region
    _
  $region5: #{ddn_fcos3d_forward.17} parent=0 // pred_fallthru
    _
  // Predicated region
  $region6: #{ddn_fcos3d_forward.17} parent=0 // pred_check
    _
  $region7: #{ddn_fcos3d_forward.17} parent=0 // pred_check_branch
    %10 = sbr.rel (0) target = $region9
  $region8: #{ddn_fcos3d_forward.17} parent=0 // pred_region
    _
  $region9: #{ddn_fcos3d_forward.17} parent=0 // pred_fallthru
    _
  %v12 = vld [vmem:[%s0] sm:$0xf]
  %v13 = vld [vmem:[%s0 + $0x4] sm:$0xf]
  %v14 = vld [vmem:[%s0 + $0x8] sm:$0xf]
  %v15 = vld [vmem:[%s0 + $0xc] sm:$0xf]
  %v16 = vld [vmem:[%s0 + $0x10] sm:$0xf]
  %v17 = vld [vmem:[%s1] sm:$0xff]
  %v18 = vld [vmem:[%s1 + $0x8] sm:$0xff]
  %v19 = vld [vmem:[%s1 + $0x10] sm:$0xff]
  %v20 = vld [vmem:[%s1 + $0x18] sm:$0xff]
  %v21 = vld [vmem:[%s1 + $0x20] sm:$0xff]
  %v22 = vld [vmem:[%s1 + $0x28] sm:$0xff]
  %v23 = vld [vmem:[%s1 + $0x30] sm:$0xff]
  %v24 = vld [vmem:[%s1 + $0x38] sm:$0xff]
  %v25 = vld [vmem:[%s1 + $0x40] sm:$0xff]
  %v26 = vld [vmem:[%s1 + $0x48] sm:$0xff]
  %v27 = vld [vmem:[%s1 + $0x50] sm:$0xff]
  %v28 = vld [vmem:[%s1 + $0x58] sm:$0xff]
  %v29 = vld [vmem:[%s1 + $0x60] sm:$0xff]
  %v30 = vld [vmem:[%s1 + $0x68] sm:$0xff]
  %v31 = vld [vmem:[%s1 + $0x70] sm:$0xff]
  %v32 = vld [vmem:[%s1 + $0x78] sm:$0xff]
  %v33 = vld [vmem:[%s1 + $0x80] sm:$0xff]
  %v34 = vld [vmem:[%s1 + $0x88] sm:$0xff]
  %v35 = vld [vmem:[%s1 + $0x90] sm:$0xff]
  %v36 = vld [vmem:[%s1 + $0x98] sm:$0xff]
  %v37 = vld [vmem:[%s1 + $0xa0] sm:$0xff]
  %v38 = vld [vmem:[%s1 + $0xa8] sm:$0xff]
  %v39 = vld [vmem:[%s1 + $0xb0] sm:$0xff]
  %v40 = vld [vmem:[%s1 + $0xb8] sm:$0xff]
  %v41 = vld [vmem:[%s1 + $0xc0] sm:$0xff]
  %v42 = vld [vmem:[%s1 + $0xc8] sm:$0xff]
  %v43 = vld [vmem:[%s1 + $0xd0] sm:$0xff]
  %v44 = vld [vmem:[%s1 + $0xd8] sm:$0xff]
  %v45 = vld [vmem:[%s1 + $0xe0] sm:$0xff]
  %v46 = vld [vmem:[%s1 + $0xe8] sm:$0xff]
  %v47 = vld [vmem:[%s1 + $0xf0] sm:$0xff]
  %v48 = vld [vmem:[%s1 + $0xf8] sm:$0xff]
  %v49 = vld [vmem:[%s1 + $0x100] sm:$0xff]
  %v50 = vld [vmem:[%s1 + $0x108] sm:$0xff]
  %v51 = vld [vmem:[%s1 + $0x110] sm:$0xff]
  %v52 = vld [vmem:[%s1 + $0x118] sm:$0xff]
  %v53 = vld [vmem:[%s1 + $0x120] sm:$0xff]
  %v54 = vld [vmem:[%s1 + $0x128] sm:$0xff]
  %v55 = vld [vmem:[%s1 + $0x130] sm:$0xff]
  %v56 = vld [vmem:[%s1 + $0x138] sm:$0xff]
  %v57 = vld [vmem:[%s1 + $0x140] sm:$0xff]
  %v58 = vld [vmem:[%s1 + $0x148] sm:$0xff]
  %v59 = vld [vmem:[%s1 + $0x150] sm:$0xff]
  %v60 = vld [vmem:[%s1 + $0x158] sm:$0xff]
  %v61 = vld [vmem:[%s1 + $0x160] sm:$0xff]
  %v62 = vld [vmem:[%s1 + $0x168] sm:$0xff]
  %v63 = vld [vmem:[%s1 + $0x170] sm:$0xff]
  %v64 = vld [vmem:[%s1 + $0x178] sm:$0xff]
  %v65 = vld [vmem:[%s1 + $0x180] sm:$0xff]
  %v66 = vld [vmem:[%s1 + $0x188] sm:$0xff]
  %v67 = vld [vmem:[%s1 + $0x190] sm:$0xff]
  %v68 = vld [vmem:[%s1 + $0x198] sm:$0xff]
  %v69 = vld [vmem:[%s1 + $0x1a0] sm:$0xff]
  %v70 = vld [vmem:[%s1 + $0x1a8] sm:$0xff]
  %v71 = vld [vmem:[%s1 + $0x1b0] sm:$0xff]
  %v72 = vld [vmem:[%s1 + $0x1b8] sm:$0xff]
  %v73 = vld [vmem:[%s1 + $0x1c0] sm:$0xff]
  %v74 = vld [vmem:[%s1 + $0x1c8] sm:$0xff]
  %v75 = vld [vmem:[%s1 + $0x1d0] sm:$0xff]
  %v76 = vld [vmem:[%s1 + $0x1d8] sm:$0xff]
  %v77 = vld [vmem:[%s1 + $0x1e0] sm:$0xff]
  %v78 = vld [vmem:[%s1 + $0x1e8] sm:$0xff]
  %v79 = vld [vmem:[%s1 + $0x1f0] sm:$0xff]
  %v80 = vld [vmem:[%s1 + $0x1f8] sm:$0xff]
  %v86 = vunpack.c.l.b16 %v12
  %v87 = vunpack.c.l.b16 %v13
  %v88 = vunpack.c.l.b16 %v14
  %v89 = vunpack.c.l.b16 %v15
  %v90 = vunpack.c.l.b16 %v16
  %v91 = vpack.c.b16 %v87, %v86
  %v92 = vpack.c.b16 %v89, %v88
  %v93 = vpack.c.b16 %v90, %v90
  %v158 = vunpack.c.l.b16 %v17
  %v159 = vunpack.c.h.b16 %v17
  %v160 = vunpack.c.l.b16 %v18
  %v161 = vunpack.c.h.b16 %v18
  %v162 = vunpack.c.l.b16 %v19
  %v163 = vunpack.c.h.b16 %v19
  %v164 = vunpack.c.l.b16 %v20
  %v165 = vunpack.c.h.b16 %v20
  %v166 = vunpack.c.l.b16 %v21
  %v167 = vunpack.c.h.b16 %v21
  %v168 = vunpack.c.l.b16 %v22
  %v169 = vunpack.c.h.b16 %v22
  %v170 = vunpack.c.l.b16 %v23
  %v171 = vunpack.c.h.b16 %v23
  %v172 = vunpack.c.l.b16 %v24
  %v173 = vunpack.c.h.b16 %v24
  %v174 = vunpack.c.l.b16 %v25
  %v175 = vunpack.c.h.b16 %v25
  %v176 = vunpack.c.l.b16 %v26
  %v177 = vunpack.c.h.b16 %v26
  %v178 = vunpack.c.l.b16 %v27
  %v179 = vunpack.c.h.b16 %v27
  %v180 = vunpack.c.l.b16 %v28
  %v181 = vunpack.c.h.b16 %v28
  %v182 = vunpack.c.l.b16 %v29
  %v183 = vunpack.c.h.b16 %v29
  %v184 = vunpack.c.l.b16 %v30
  %v185 = vunpack.c.h.b16 %v30
  %v186 = vunpack.c.l.b16 %v31
  %v187 = vunpack.c.h.b16 %v31
  %v188 = vunpack.c.l.b16 %v32
  %v189 = vunpack.c.h.b16 %v32
  %v190 = vunpack.c.l.b16 %v33
  %v191 = vunpack.c.h.b16 %v33
  %v192 = vunpack.c.l.b16 %v34
  %v193 = vunpack.c.h.b16 %v34
  %v194 = vunpack.c.l.b16 %v35
  %v195 = vunpack.c.h.b16 %v35
  %v196 = vunpack.c.l.b16 %v36
  %v197 = vunpack.c.h.b16 %v36
  %v198 = vunpack.c.l.b16 %v37
  %v199 = vunpack.c.h.b16 %v37
  %v200 = vunpack.c.l.b16 %v38
  %v201 = vunpack.c.h.b16 %v38
  %v202 = vunpack.c.l.b16 %v39
  %v203 = vunpack.c.h.b16 %v39
  %v204 = vunpack.c.l.b16 %v40
  %v205 = vunpack.c.h.b16 %v40
  %v206 = vunpack.c.l.b16 %v41
  %v207 = vunpack.c.h.b16 %v41
  %v208 = vunpack.c.l.b16 %v42
  %v209 = vunpack.c.h.b16 %v42
  %v210 = vunpack.c.l.b16 %v43
  %v211 = vunpack.c.h.b16 %v43
  %v212 = vunpack.c.l.b16 %v44
  %v213 = vunpack.c.h.b16 %v44
  %v214 = vunpack.c.l.b16 %v45
  %v215 = vunpack.c.h.b16 %v45
  %v216 = vunpack.c.l.b16 %v46
  %v217 = vunpack.c.h.b16 %v46
  %v218 = vunpack.c.l.b16 %v47
  %v219 = vunpack.c.h.b16 %v47
  %v220 = vunpack.c.l.b16 %v48
  %v221 = vunpack.c.h.b16 %v48
  %v222 = vunpack.c.l.b16 %v49
  %v223 = vunpack.c.h.b16 %v49
  %v224 = vunpack.c.l.b16 %v50
  %v225 = vunpack.c.h.b16 %v50
  %v226 = vunpack.c.l.b16 %v51
  %v227 = vunpack.c.h.b16 %v51
  %v228 = vunpack.c.l.b16 %v52
  %v229 = vunpack.c.h.b16 %v52
  %v230 = vunpack.c.l.b16 %v53
  %v231 = vunpack.c.h.b16 %v53
  %v232 = vunpack.c.l.b16 %v54
  %v233 = vunpack.c.h.b16 %v54
  %v234 = vunpack.c.l.b16 %v55
  %v235 = vunpack.c.h.b16 %v55
  %v236 = vunpack.c.l.b16 %v56
  %v237 = vunpack.c.h.b16 %v56
  %v238 = vunpack.c.l.b16 %v57
  %v239 = vunpack.c.h.b16 %v57
  %v240 = vunpack.c.l.b16 %v58
  %v241 = vunpack.c.h.b16 %v58
  %v242 = vunpack.c.l.b16 %v59
  %v243 = vunpack.c.h.b16 %v59
  %v244 = vunpack.c.l.b16 %v60
  %v245 = vunpack.c.h.b16 %v60
  %v246 = vunpack.c.l.b16 %v61
  %v247 = vunpack.c.h.b16 %v61
  %v248 = vunpack.c.l.b16 %v62
  %v249 = vunpack.c.h.b16 %v62
  %v250 = vunpack.c.l.b16 %v63
  %v251 = vunpack.c.h.b16 %v63
  %v252 = vunpack.c.l.b16 %v64
  %v253 = vunpack.c.h.b16 %v64
  %v254 = vunpack.c.l.b16 %v65
  %v255 = vunpack.c.h.b16 %v65
  %v256 = vunpack.c.l.b16 %v66
  %v257 = vunpack.c.h.b16 %v66
  %v258 = vunpack.c.l.b16 %v67
  %v259 = vunpack.c.h.b16 %v67
  %v260 = vunpack.c.l.b16 %v68
  %v261 = vunpack.c.h.b16 %v68
  %v262 = vunpack.c.l.b16 %v69
  %v263 = vunpack.c.h.b16 %v69
  %v264 = vunpack.c.l.b16 %v70
  %v265 = vunpack.c.h.b16 %v70
  %v266 = vunpack.c.l.b16 %v71
  %v267 = vunpack.c.h.b16 %v71
  %v268 = vunpack.c.l.b16 %v72
  %v269 = vunpack.c.h.b16 %v72
  %v270 = vunpack.c.l.b16 %v73
  %v271 = vunpack.c.h.b16 %v73
  %v272 = vunpack.c.l.b16 %v74
  %v273 = vunpack.c.h.b16 %v74
  %v274 = vunpack.c.l.b16 %v75
  %v275 = vunpack.c.h.b16 %v75
  %v276 = vunpack.c.l.b16 %v76
  %v277 = vunpack.c.h.b16 %v76
  %v278 = vunpack.c.l.b16 %v77
  %v279 = vunpack.c.h.b16 %v77
  %v280 = vunpack.c.l.b16 %v78
  %v281 = vunpack.c.h.b16 %v78
  %v282 = vunpack.c.l.b16 %v79
  %v283 = vunpack.c.h.b16 %v79
  %v284 = vunpack.c.l.b16 %v80
  %v285 = vunpack.c.h.b16 %v80
  %v286 = vpack.c.b16 %v174, %v158
  %v287 = vpack.c.b16 %v175, %v159
  %v288 = vpack.c.b16 %v176, %v160
  %v289 = vpack.c.b16 %v177, %v161
  %v290 = vpack.c.b16 %v178, %v162
  %v291 = vpack.c.b16 %v179, %v163
  %v292 = vpack.c.b16 %v180, %v164
  %v293 = vpack.c.b16 %v181, %v165
  %v294 = vpack.c.b16 %v182, %v166
  %v295 = vpack.c.b16 %v183, %v167
  %v296 = vpack.c.b16 %v184, %v168
  %v297 = vpack.c.b16 %v185, %v169
  %v298 = vpack.c.b16 %v186, %v170
  %v299 = vpack.c.b16 %v187, %v171
  %v300 = vpack.c.b16 %v188, %v172
  %v301 = vpack.c.b16 %v189, %v173
  %v302 = vpack.c.b16 %v206, %v190
  %v303 = vpack.c.b16 %v207, %v191
  %v304 = vpack.c.b16 %v208, %v192
  %v305 = vpack.c.b16 %v209, %v193
  %v306 = vpack.c.b16 %v210, %v194
  %v307 = vpack.c.b16 %v211, %v195
  %v308 = vpack.c.b16 %v212, %v196
  %v309 = vpack.c.b16 %v213, %v197
  %v310 = vpack.c.b16 %v214, %v198
  %v311 = vpack.c.b16 %v215, %v199
  %v312 = vpack.c.b16 %v216, %v200
  %v313 = vpack.c.b16 %v217, %v201
  %v314 = vpack.c.b16 %v218, %v202
  %v315 = vpack.c.b16 %v219, %v203
  %v316 = vpack.c.b16 %v220, %v204
  %v317 = vpack.c.b16 %v221, %v205
  %v318 = vpack.c.b16 %v238, %v222
  %v319 = vpack.c.b16 %v239, %v223
  %v320 = vpack.c.b16 %v240, %v224
  %v321 = vpack.c.b16 %v241, %v225
  %v322 = vpack.c.b16 %v242, %v226
  %v323 = vpack.c.b16 %v243, %v227
  %v324 = vpack.c.b16 %v244, %v228
  %v325 = vpack.c.b16 %v245, %v229
  %v326 = vpack.c.b16 %v246, %v230
  %v327 = vpack.c.b16 %v247, %v231
  %v328 = vpack.c.b16 %v248, %v232
  %v329 = vpack.c.b16 %v249, %v233
  %v330 = vpack.c.b16 %v250, %v234
  %v331 = vpack.c.b16 %v251, %v235
  %v332 = vpack.c.b16 %v252, %v236
  %v333 = vpack.c.b16 %v253, %v237
  %v334 = vpack.c.b16 %v270, %v254
  %v335 = vpack.c.b16 %v271, %v255
  %v336 = vpack.c.b16 %v272, %v256
  %v337 = vpack.c.b16 %v273, %v257
  %v338 = vpack.c.b16 %v274, %v258
  %v339 = vpack.c.b16 %v275, %v259
  %v340 = vpack.c.b16 %v276, %v260
  %v341 = vpack.c.b16 %v277, %v261
  %v342 = vpack.c.b16 %v278, %v262
  %v343 = vpack.c.b16 %v279, %v263
  %v344 = vpack.c.b16 %v280, %v264
  %v345 = vpack.c.b16 %v281, %v265
  %v346 = vpack.c.b16 %v282, %v266
  %v347 = vpack.c.b16 %v283, %v267
  %v348 = vpack.c.b16 %v284, %v268
  %v349 = vpack.c.b16 %v285, %v269
  %vm414 = vcmask 523264
  %v416 = vsel %vm414, %v91, 0
  %v419 = vsel %vm414, %v92, 0
  %v422 = vsel %vm414, %v93, 0
  %424 = vmatprep.subr.bf16.mxu0 %v287
  %425 = vmatpush1.bf16.msra.mxu0 %v286
  %426 = vmatprep.subr.bf16.mxu0 %v303
  %427 = vmatpush1.bf16.msra.mxu0 %v302
  %428 = vmatprep.subr.bf16.mxu0 %v319
  %429 = vmatpush1.bf16.msra.mxu0 %v318
  %430 = vmatprep.subr.bf16.mxu0 %v335
  %431 = vmatpush1.bf16.msra.mxu0 %v334
  %432 = vmatprep.subr.bf16.mxu0 0
  %433 = vmatpush1.bf16.msra.mxu0 0
  %434 = vmatprep.subr.bf16.mxu0 0
  %435 = vmatpush1.bf16.msra.mxu0 0
  %436 = vmatprep.subr.bf16.mxu0 0
  %437 = vmatpush1.bf16.msra.mxu0 0
  %438 = vmatprep.subr.bf16.mxu0 0
  %439 = vmatpush1.bf16.msra.mxu0 0
  %440 = vmatprep.subr.bf16.mxu0 0
  %441 = vmatpush1.bf16.msra.mxu0 0
  %442 = vmatprep.subr.bf16.mxu0 0
  %443 = vmatpush1.bf16.msra.mxu0 0
  %444 = vmatprep.subr.bf16.mxu0 0
  %445 = vmatpush1.bf16.msra.mxu0 0
  %446 = vmatprep.subr.bf16.mxu0 0
  %447 = vmatpush1.bf16.msra.mxu0 0
  %448 = vmatprep.subr.bf16.mxu0 0
  %449 = vmatpush1.bf16.msra.mxu0 0
  %450 = vmatprep.subr.bf16.mxu0 0
  %451 = vmatpush1.bf16.msra.mxu0 0
  %452 = vmatprep.subr.bf16.mxu0 0
  %453 = vmatpush1.bf16.msra.mxu0 0
  %454 = vmatprep.subr.bf16.mxu0 0
  %455 = vmatpush1.bf16.msra.mxu0 0
  %456 = vmatprep.mubr.bf16.mxu0 0
  %457 = vmatmul.mubr.bf16.gmra.mrb[0].mxu0 %v416
  %v458 = vpop.f32.mrb[0].mxu0
  %v459 = vadd.f32 0.0, %v458
  %v460 = vpop.f32.mrb[0].mxu0
  %v461 = vadd.f32 0.0, %v460
  %v462 = vpop.f32.mrb[0].mxu0
  %v463 = vadd.f32 0.0, %v462
  %v464 = vpop.f32.mrb[0].mxu0
  %v465 = vadd.f32 0.0, %v464
  %466 = vmatprep.mubr.bf16.mxu0 0
  %467 = vmatmul.mubr.bf16.gmra.mrb[0].mxu0 %v419
  %v468 = vpop.f32.mrb[0].mxu0
  %v469 = vadd.f32 0.0, %v468
  %v470 = vpop.f32.mrb[0].mxu0
  %v471 = vadd.f32 0.0, %v470
  %v472 = vpop.f32.mrb[0].mxu0
  %v473 = vadd.f32 0.0, %v472
  %v474 = vpop.f32.mrb[0].mxu0
  %v475 = vadd.f32 0.0, %v474
  %476 = vmatprep.mubr.bf16.mxu0 0
  %477 = vmatmul.mubr.bf16.gmra.mrb[0].mxu0 %v422
  %v478 = vpop.f32.mrb[0].mxu0
  %v479 = vadd.f32 0.0, %v478
  %v480 = vpop.f32.mrb[0].mxu0
  %v481 = vadd.f32 0.0, %v480
  %v482 = vpop.f32.mrb[0].mxu0
  %v483 = vpop.f32.mrb[0].mxu0
  %484 = vdwg.mxu0
  %485 = vmatprep.subr.bf16.mxu0 %v289
  %486 = vmatpush1.bf16.msra.mxu0 %v288
  %487 = vmatprep.subr.bf16.mxu0 %v305
  %488 = vmatpush1.bf16.msra.mxu0 %v304
  %489 = vmatprep.subr.bf16.mxu0 %v321
  %490 = vmatpush1.bf16.msra.mxu0 %v320
  %491 = vmatprep.subr.bf16.mxu0 %v337
  %492 = vmatpush1.bf16.msra.mxu0 %v336
  %493 = vmatprep.subr.bf16.mxu0 0
  %494 = vmatpush1.bf16.msra.mxu0 0
  %495 = vmatprep.subr.bf16.mxu0 0
  %496 = vmatpush1.bf16.msra.mxu0 0
  %497 = vmatprep.subr.bf16.mxu0 0
  %498 = vmatpush1.bf16.msra.mxu0 0
  %499 = vmatprep.subr.bf16.mxu0 0
  %500 = vmatpush1.bf16.msra.mxu0 0
  %501 = vmatprep.subr.bf16.mxu0 0
  %502 = vmatpush1.bf16.msra.mxu0 0
  %503 = vmatprep.subr.bf16.mxu0 0
  %504 = vmatpush1.bf16.msra.mxu0 0
  %505 = vmatprep.subr.bf16.mxu0 0
  %506 = vmatpush1.bf16.msra.mxu0 0
  %507 = vmatprep.subr.bf16.mxu0 0
  %508 = vmatpush1.bf16.msra.mxu0 0
  %509 = vmatprep.subr.bf16.mxu0 0
  %510 = vmatpush1.bf16.msra.mxu0 0
  %511 = vmatprep.subr.bf16.mxu0 0
  %512 = vmatpush1.bf16.msra.mxu0 0
  %513 = vmatprep.subr.bf16.mxu0 0
  %514 = vmatpush1.bf16.msra.mxu0 0
  %515 = vmatprep.subr.bf16.mxu0 0
  %516 = vmatpush1.bf16.msra.mxu0 0
  %517 = vmatprep.mubr.bf16.mxu0 0
  %518 = vmatmul.mubr.bf16.gmra.mrb[0].mxu0 %v416
  %v519 = vpop.f32.mrb[0].mxu0
  %v520 = vadd.f32 0.0, %v519
  %v521 = vpop.f32.mrb[0].mxu0
  %v522 = vadd.f32 0.0, %v521
  %v523 = vpop.f32.mrb[0].mxu0
  %v524 = vadd.f32 0.0, %v523
  %v525 = vpop.f32.mrb[0].mxu0
  %v526 = vadd.f32 0.0, %v525
  %527 = vmatprep.mubr.bf16.mxu0 0
  %528 = vmatmul.mubr.bf16.gmra.mrb[0].mxu0 %v419
  %v529 = vpop.f32.mrb[0].mxu0
  %v530 = vadd.f32 0.0, %v529
  %v531 = vpop.f32.mrb[0].mxu0
  %v532 = vadd.f32 0.0, %v531
  %v533 = vpop.f32.mrb[0].mxu0
  %v534 = vadd.f32 0.0, %v533
  %v535 = vpop.f32.mrb[0].mxu0
  %v536 = vadd.f32 0.0, %v535
  %537 = vmatprep.mubr.bf16.mxu0 0
  %538 = vmatmul.mubr.bf16.gmra.mrb[0].mxu0 %v422
  %v539 = vpop.f32.mrb[0].mxu0
  %v540 = vadd.f32 0.0, %v539
  %v541 = vpop.f32.mrb[0].mxu0
  %v542 = vadd.f32 0.0, %v541
  %v543 = vpop.f32.mrb[0].mxu0
  %v544 = vpop.f32.mrb[0].mxu0
  %545 = vdwg.mxu0
  %546 = vmatprep.subr.bf16.mxu0 %v291
  %547 = vmatpush1.bf16.msra.mxu0 %v290
  %548 = vmatprep.subr.bf16.mxu0 %v307
  %549 = vmatpush1.bf16.msra.mxu0 %v306
  %550 = vmatprep.subr.bf16.mxu0 %v323
  %551 = vmatpush1.bf16.msra.mxu0 %v322
  %552 = vmatprep.subr.bf16.mxu0 %v339
  %553 = vmatpush1.bf16.msra.mxu0 %v338
  %554 = vmatprep.subr.bf16.mxu0 0
  %555 = vmatpush1.bf16.msra.mxu0 0
  %556 = vmatprep.subr.bf16.mxu0 0
  %557 = vmatpush1.bf16.msra.mxu0 0
  %558 = vmatprep.subr.bf16.mxu0 0
  %559 = vmatpush1.bf16.msra.mxu0 0
  %560 = vmatprep.subr.bf16.mxu0 0
  %561 = vmatpush1.bf16.msra.mxu0 0
  %562 = vmatprep.subr.bf16.mxu0 0
  %563 = vmatpush1.bf16.msra.mxu0 0
  %564 = vmatprep.subr.bf16.mxu0 0
  %565 = vmatpush1.bf16.msra.mxu0 0
  %566 = vmatprep.subr.bf16.mxu0 0
  %567 = vmatpush1.bf16.msra.mxu0 0
  %568 = vmatprep.subr.bf16.mxu0 0
  %569 = vmatpush1.bf16.msra.mxu0 0
  %570 = vmatprep.subr.bf16.mxu0 0
  %571 = vmatpush1.bf16.msra.mxu0 0
  %572 = vmatprep.subr.bf16.mxu0 0
  %573 = vmatpush1.bf16.msra.mxu0 0
  %574 = vmatprep.subr.bf16.mxu0 0
  %575 = vmatpush1.bf16.msra.mxu0 0
  %576 = vmatprep.subr.bf16.mxu0 0
  %577 = vmatpush1.bf16.msra.mxu0 0
  %578 = vmatprep.mubr.bf16.mxu0 0
  %579 = vmatmul.mubr.bf16.gmra.mrb[0].mxu0 %v416
  %v580 = vpop.f32.mrb[0].mxu0
  %v581 = vadd.f32 0.0, %v580
  %v582 = vpop.f32.mrb[0].mxu0
  %v583 = vadd.f32 0.0, %v582
  %v584 = vpop.f32.mrb[0].mxu0
  %v585 = vadd.f32 0.0, %v584
  %v586 = vpop.f32.mrb[0].mxu0
  %v587 = vadd.f32 0.0, %v586
  %588 = vmatprep.mubr.bf16.mxu0 0
  %589 = vmatmul.mubr.bf16.gmra.mrb[0].mxu0 %v419
  %v590 = vpop.f32.mrb[0].mxu0
  %v591 = vadd.f32 0.0, %v590
  %v592 = vpop.f32.mrb[0].mxu0
  %v593 = vadd.f32 0.0, %v592
  %v594 = vpop.f32.mrb[0].mxu0
  %v595 = vadd.f32 0.0, %v594
  %v596 = vpop.f32.mrb[0].mxu0
  %v597 = vadd.f32 0.0, %v596
  %598 = vmatprep.mubr.bf16.mxu0 0
  %599 = vmatmul.mubr.bf16.gmra.mrb[0].mxu0 %v422
  %v600 = vpop.f32.mrb[0].mxu0
  %v601 = vadd.f32 0.0, %v600
  %v602 = vpop.f32.mrb[0].mxu0
  %v603 = vadd.f32 0.0, %v602
  %v604 = vpop.f32.mrb[0].mxu0
  %v605 = vpop.f32.mrb[0].mxu0
  %606 = vdwg.mxu0
  %607 = vmatprep.subr.bf16.mxu0 %v293
  %608 = vmatpush1.bf16.msra.mxu0 %v292
  %609 = vmatprep.subr.bf16.mxu0 %v309
  %610 = vmatpush1.bf16.msra.mxu0 %v308
  %611 = vmatprep.subr.bf16.mxu0 %v325
  %612 = vmatpush1.bf16.msra.mxu0 %v324
  %613 = vmatprep.subr.bf16.mxu0 %v341
  %614 = vmatpush1.bf16.msra.mxu0 %v340
  %615 = vmatprep.subr.bf16.mxu0 0
  %616 = vmatpush1.bf16.msra.mxu0 0
  %617 = vmatprep.subr.bf16.mxu0 0
  %618 = vmatpush1.bf16.msra.mxu0 0
  %619 = vmatprep.subr.bf16.mxu0 0
  %620 = vmatpush1.bf16.msra.mxu0 0
  %621 = vmatprep.subr.bf16.mxu0 0
  %622 = vmatpush1.bf16.msra.mxu0 0
  %623 = vmatprep.subr.bf16.mxu0 0
  %624 = vmatpush1.bf16.msra.mxu0 0
  %625 = vmatprep.subr.bf16.mxu0 0
  %626 = vmatpush1.bf16.msra.mxu0 0
  %627 = vmatprep.subr.bf16.mxu0 0
  %628 = vmatpush1.bf16.msra.mxu0 0
  %629 = vmatprep.subr.bf16.mxu0 0
  %630 = vmatpush1.bf16.msra.mxu0 0
  %631 = vmatprep.subr.bf16.mxu0 0
  %632 = vmatpush1.bf16.msra.mxu0 0
  %633 = vmatprep.subr.bf16.mxu0 0
  %634 = vmatpush1.bf16.msra.mxu0 0
  %635 = vmatprep.subr.bf16.mxu0 0
  %636 = vmatpush1.bf16.msra.mxu0 0
  %637 = vmatprep.subr.bf16.mxu0 0
  %638 = vmatpush1.bf16.msra.mxu0 0
  %639 = vmatprep.mubr.bf16.mxu0 0
  %640 = vmatmul.mubr.bf16.gmra.mrb[0].mxu0 %v416
  %v641 = vpop.f32.mrb[0].mxu0
  %v642 = vadd.f32 0.0, %v641
  %v643 = vpop.f32.mrb[0].mxu0
  %v644 = vadd.f32 0.0, %v643
  %v645 = vpop.f32.mrb[0].mxu0
  %v646 = vadd.f32 0.0, %v645
  %v647 = vpop.f32.mrb[0].mxu0
  %v648 = vadd.f32 0.0, %v647
  %649 = vmatprep.mubr.bf16.mxu0 0
  %650 = vmatmul.mubr.bf16.gmra.mrb[0].mxu0 %v419
  %v651 = vpop.f32.mrb[0].mxu0
  %v652 = vadd.f32 0.0, %v651
  %v653 = vpop.f32.mrb[0].mxu0
  %v654 = vadd.f32 0.0, %v653
  %v655 = vpop.f32.mrb[0].mxu0
  %v656 = vadd.f32 0.0, %v655
  %v657 = vpop.f32.mrb[0].mxu0
  %v658 = vadd.f32 0.0, %v657
  %659 = vmatprep.mubr.bf16.mxu0 0
  %660 = vmatmul.mubr.bf16.gmra.mrb[0].mxu0 %v422
  %v661 = vpop.f32.mrb[0].mxu0
  %v662 = vadd.f32 0.0, %v661
  %v663 = vpop.f32.mrb[0].mxu0
  %v664 = vadd.f32 0.0, %v663
  %v665 = vpop.f32.mrb[0].mxu0
  %v666 = vpop.f32.mrb[0].mxu0
  %667 = vdwg.mxu0
  %668 = vmatprep.subr.bf16.mxu0 %v295
  %669 = vmatpush1.bf16.msra.mxu0 %v294
  %670 = vmatprep.subr.bf16.mxu0 %v311
  %671 = vmatpush1.bf16.msra.mxu0 %v310
  %672 = vmatprep.subr.bf16.mxu0 %v327
  %673 = vmatpush1.bf16.msra.mxu0 %v326
  %674 = vmatprep.subr.bf16.mxu0 %v343
  %675 = vmatpush1.bf16.msra.mxu0 %v342
  %676 = vmatprep.subr.bf16.mxu0 0
  %677 = vmatpush1.bf16.msra.mxu0 0
  %678 = vmatprep.subr.bf16.mxu0 0
  %679 = vmatpush1.bf16.msra.mxu0 0
  %680 = vmatprep.subr.bf16.mxu0 0
  %681 = vmatpush1.bf16.msra.mxu0 0
  %682 = vmatprep.subr.bf16.mxu0 0
  %683 = vmatpush1.bf16.msra.mxu0 0
  %684 = vmatprep.subr.bf16.mxu0 0
  %685 = vmatpush1.bf16.msra.mxu0 0
  %686 = vmatprep.subr.bf16.mxu0 0
  %687 = vmatpush1.bf16.msra.mxu0 0
  %688 = vmatprep.subr.bf16.mxu0 0
  %689 = vmatpush1.bf16.msra.mxu0 0
  %690 = vmatprep.subr.bf16.mxu0 0
  %691 = vmatpush1.bf16.msra.mxu0 0
  %692 = vmatprep.subr.bf16.mxu0 0
  %693 = vmatpush1.bf16.msra.mxu0 0
  %694 = vmatprep.subr.bf16.mxu0 0
  %695 = vmatpush1.bf16.msra.mxu0 0
  %696 = vmatprep.subr.bf16.mxu0 0
  %697 = vmatpush1.bf16.msra.mxu0 0
  %698 = vmatprep.subr.bf16.mxu0 0
  %699 = vmatpush1.bf16.msra.mxu0 0
  %700 = vmatprep.mubr.bf16.mxu0 0
  %701 = vmatmul.mubr.bf16.gmra.mrb[0].mxu0 %v416
  %v702 = vpop.f32.mrb[0].mxu0
  %v703 = vadd.f32 0.0, %v702
  %v704 = vpop.f32.mrb[0].mxu0
  %v705 = vadd.f32 0.0, %v704
  %v706 = vpop.f32.mrb[0].mxu0
  %v707 = vadd.f32 0.0, %v706
  %v708 = vpop.f32.mrb[0].mxu0
  %v709 = vadd.f32 0.0, %v708
  %710 = vmatprep.mubr.bf16.mxu0 0
  %711 = vmatmul.mubr.bf16.gmra.mrb[0].mxu0 %v419
  %v712 = vpop.f32.mrb[0].mxu0
  %v713 = vadd.f32 0.0, %v712
  %v714 = vpop.f32.mrb[0].mxu0
  %v715 = vadd.f32 0.0, %v714
  %v716 = vpop.f32.mrb[0].mxu0
  %v717 = vadd.f32 0.0, %v716
  %v718 = vpop.f32.mrb[0].mxu0
  %v719 = vadd.f32 0.0, %v718
  %720 = vmatprep.mubr.bf16.mxu0 0
  %721 = vmatmul.mubr.bf16.gmra.mrb[0].mxu0 %v422
  %v722 = vpop.f32.mrb[0].mxu0
  %v723 = vadd.f32 0.0, %v722
  %v724 = vpop.f32.mrb[0].mxu0
  %v725 = vadd.f32 0.0, %v724
  %v726 = vpop.f32.mrb[0].mxu0
  %v727 = vpop.f32.mrb[0].mxu0
  %728 = vdwg.mxu0
  %729 = vmatprep.subr.bf16.mxu0 %v297
  %730 = vmatpush1.bf16.msra.mxu0 %v296
  %731 = vmatprep.subr.bf16.mxu0 %v313
  %732 = vmatpush1.bf16.msra.mxu0 %v312
  %733 = vmatprep.subr.bf16.mxu0 %v329
  %734 = vmatpush1.bf16.msra.mxu0 %v328
  %735 = vmatprep.subr.bf16.mxu0 %v345
  %736 = vmatpush1.bf16.msra.mxu0 %v344
  %737 = vmatprep.subr.bf16.mxu0 0
  %738 = vmatpush1.bf16.msra.mxu0 0
  %739 = vmatprep.subr.bf16.mxu0 0
  %740 = vmatpush1.bf16.msra.mxu0 0
  %741 = vmatprep.subr.bf16.mxu0 0
  %742 = vmatpush1.bf16.msra.mxu0 0
  %743 = vmatprep.subr.bf16.mxu0 0
  %744 = vmatpush1.bf16.msra.mxu0 0
  %745 = vmatprep.subr.bf16.mxu0 0
  %746 = vmatpush1.bf16.msra.mxu0 0
  %747 = vmatprep.subr.bf16.mxu0 0
  %748 = vmatpush1.bf16.msra.mxu0 0
  %749 = vmatprep.subr.bf16.mxu0 0
  %750 = vmatpush1.bf16.msra.mxu0 0
  %751 = vmatprep.subr.bf16.mxu0 0
  %752 = vmatpush1.bf16.msra.mxu0 0
  %753 = vmatprep.subr.bf16.mxu0 0
  %754 = vmatpush1.bf16.msra.mxu0 0
  %755 = vmatprep.subr.bf16.mxu0 0
  %756 = vmatpush1.bf16.msra.mxu0 0
  %757 = vmatprep.subr.bf16.mxu0 0
  %758 = vmatpush1.bf16.msra.mxu0 0
  %759 = vmatprep.subr.bf16.mxu0 0
  %760 = vmatpush1.bf16.msra.mxu0 0
  %761 = vmatprep.mubr.bf16.mxu0 0
  %762 = vmatmul.mubr.bf16.gmra.mrb[0].mxu0 %v416
  %v763 = vpop.f32.mrb[0].mxu0
  %v764 = vadd.f32 0.0, %v763
  %v765 = vpop.f32.mrb[0].mxu0
  %v766 = vadd.f32 0.0, %v765
  %v767 = vpop.f32.mrb[0].mxu0
  %v768 = vadd.f32 0.0, %v767
  %v769 = vpop.f32.mrb[0].mxu0
  %v770 = vadd.f32 0.0, %v769
  %771 = vmatprep.mubr.bf16.mxu0 0
  %772 = vmatmul.mubr.bf16.gmra.mrb[0].mxu0 %v419
  %v773 = vpop.f32.mrb[0].mxu0
  %v774 = vadd.f32 0.0, %v773
  %v775 = vpop.f32.mrb[0].mxu0
  %v776 = vadd.f32 0.0, %v775
  %v777 = vpop.f32.mrb[0].mxu0
  %v778 = vadd.f32 0.0, %v777
  %v779 = vpop.f32.mrb[0].mxu0
  %v780 = vadd.f32 0.0, %v779
  %781 = vmatprep.mubr.bf16.mxu0 0
  %782 = vmatmul.mubr.bf16.gmra.mrb[0].mxu0 %v422
  %v783 = vpop.f32.mrb[0].mxu0
  %v784 = vadd.f32 0.0, %v783
  %v785 = vpop.f32.mrb[0].mxu0
  %v786 = vadd.f32 0.0, %v785
  %v787 = vpop.f32.mrb[0].mxu0
  %v788 = vpop.f32.mrb[0].mxu0
  %789 = vdwg.mxu0
  %790 = vmatprep.subr.bf16.mxu0 %v299
  %791 = vmatpush1.bf16.msra.mxu0 %v298
  %792 = vmatprep.subr.bf16.mxu0 %v315
  %793 = vmatpush1.bf16.msra.mxu0 %v314
  %794 = vmatprep.subr.bf16.mxu0 %v331
  %795 = vmatpush1.bf16.msra.mxu0 %v330
  %796 = vmatprep.subr.bf16.mxu0 %v347
  %797 = vmatpush1.bf16.msra.mxu0 %v346
  %798 = vmatprep.subr.bf16.mxu0 0
  %799 = vmatpush1.bf16.msra.mxu0 0
  %800 = vmatprep.subr.bf16.mxu0 0
  %801 = vmatpush1.bf16.msra.mxu0 0
  %802 = vmatprep.subr.bf16.mxu0 0
  %803 = vmatpush1.bf16.msra.mxu0 0
  %804 = vmatprep.subr.bf16.mxu0 0
  %805 = vmatpush1.bf16.msra.mxu0 0
  %806 = vmatprep.subr.bf16.mxu0 0
  %807 = vmatpush1.bf16.msra.mxu0 0
  %808 = vmatprep.subr.bf16.mxu0 0
  %809 = vmatpush1.bf16.msra.mxu0 0
  %810 = vmatprep.subr.bf16.mxu0 0
  %811 = vmatpush1.bf16.msra.mxu0 0
  %812 = vmatprep.subr.bf16.mxu0 0
  %813 = vmatpush1.bf16.msra.mxu0 0
  %814 = vmatprep.subr.bf16.mxu0 0
  %815 = vmatpush1.bf16.msra.mxu0 0
  %816 = vmatprep.subr.bf16.mxu0 0
  %817 = vmatpush1.bf16.msra.mxu0 0
  %818 = vmatprep.subr.bf16.mxu0 0
  %819 = vmatpush1.bf16.msra.mxu0 0
  %820 = vmatprep.subr.bf16.mxu0 0
  %821 = vmatpush1.bf16.msra.mxu0 0
  %822 = vmatprep.mubr.bf16.mxu0 0
  %823 = vmatmul.mubr.bf16.gmra.mrb[0].mxu0 %v416
  %v824 = vpop.f32.mrb[0].mxu0
  %v825 = vadd.f32 0.0, %v824
  %v826 = vpop.f32.mrb[0].mxu0
  %v827 = vadd.f32 0.0, %v826
  %v828 = vpop.f32.mrb[0].mxu0
  %v829 = vadd.f32 0.0, %v828
  %v830 = vpop.f32.mrb[0].mxu0
  %v831 = vadd.f32 0.0, %v830
  %832 = vmatprep.mubr.bf16.mxu0 0
  %833 = vmatmul.mubr.bf16.gmra.mrb[0].mxu0 %v419
  %v834 = vpop.f32.mrb[0].mxu0
  %v835 = vadd.f32 0.0, %v834
  %v836 = vpop.f32.mrb[0].mxu0
  %v837 = vadd.f32 0.0, %v836
  %v838 = vpop.f32.mrb[0].mxu0
  %v839 = vadd.f32 0.0, %v838
  %v840 = vpop.f32.mrb[0].mxu0
  %v841 = vadd.f32 0.0, %v840
  %842 = vmatprep.mubr.bf16.mxu0 0
  %843 = vmatmul.mubr.bf16.gmra.mrb[0].mxu0 %v422
  %v844 = vpop.f32.mrb[0].mxu0
  %v845 = vadd.f32 0.0, %v844
  %v846 = vpop.f32.mrb[0].mxu0
  %v847 = vadd.f32 0.0, %v846
  %v848 = vpop.f32.mrb[0].mxu0
  %v849 = vpop.f32.mrb[0].mxu0
  %850 = vdwg.mxu0
  %851 = vmatprep.subr.bf16.mxu0 %v301
  %852 = vmatpush1.bf16.msra.mxu0 %v300
  %853 = vmatprep.subr.bf16.mxu0 %v317
  %854 = vmatpush1.bf16.msra.mxu0 %v316
  %855 = vmatprep.subr.bf16.mxu0 %v333
  %856 = vmatpush1.bf16.msra.mxu0 %v332
  %857 = vmatprep.subr.bf16.mxu0 %v349
  %858 = vmatpush1.bf16.msra.mxu0 %v348
  %859 = vmatprep.subr.bf16.mxu0 0
  %860 = vmatpush1.bf16.msra.mxu0 0
  %861 = vmatprep.subr.bf16.mxu0 0
  %862 = vmatpush1.bf16.msra.mxu0 0
  %863 = vmatprep.subr.bf16.mxu0 0
  %864 = vmatpush1.bf16.msra.mxu0 0
  %865 = vmatprep.subr.bf16.mxu0 0
  %866 = vmatpush1.bf16.msra.mxu0 0
  %867 = vmatprep.subr.bf16.mxu0 0
  %868 = vmatpush1.bf16.msra.mxu0 0
  %869 = vmatprep.subr.bf16.mxu0 0
  %870 = vmatpush1.bf16.msra.mxu0 0
  %871 = vmatprep.subr.bf16.mxu0 0
  %872 = vmatpush1.bf16.msra.mxu0 0
  %873 = vmatprep.subr.bf16.mxu0 0
  %874 = vmatpush1.bf16.msra.mxu0 0
  %875 = vmatprep.subr.bf16.mxu0 0
  %876 = vmatpush1.bf16.msra.mxu0 0
  %877 = vmatprep.subr.bf16.mxu0 0
  %878 = vmatpush1.bf16.msra.mxu0 0
  %879 = vmatprep.subr.bf16.mxu0 0
  %880 = vmatpush1.bf16.msra.mxu0 0
  %881 = vmatprep.subr.bf16.mxu0 0
  %882 = vmatpush1.bf16.msra.mxu0 0
  %883 = vmatprep.mubr.bf16.mxu0 0
  %884 = vmatmul.mubr.bf16.gmra.mrb[0].mxu0 %v416
  %v885 = vpop.f32.mrb[0].mxu0
  %v886 = vadd.f32 0.0, %v885
  %v887 = vpop.f32.mrb[0].mxu0
  %v888 = vadd.f32 0.0, %v887
  %v889 = vpop.f32.mrb[0].mxu0
  %v890 = vadd.f32 0.0, %v889
  %v891 = vpop.f32.mrb[0].mxu0
  %v892 = vadd.f32 0.0, %v891
  %893 = vmatprep.mubr.bf16.mxu0 0
  %894 = vmatmul.mubr.bf16.gmra.mrb[0].mxu0 %v419
  %v895 = vpop.f32.mrb[0].mxu0
  %v896 = vadd.f32 0.0, %v895
  %v897 = vpop.f32.mrb[0].mxu0
  %v898 = vadd.f32 0.0, %v897
  %v899 = vpop.f32.mrb[0].mxu0
  %v900 = vadd.f32 0.0, %v899
  %v901 = vpop.f32.mrb[0].mxu0
  %v902 = vadd.f32 0.0, %v901
  %903 = vmatprep.mubr.bf16.mxu0 0
  %904 = vmatmul.mubr.bf16.gmra.mrb[0].mxu0 %v422
  %v905 = vpop.f32.mrb[0].mxu0
  %v906 = vadd.f32 0.0, %v905
  %v907 = vpop.f32.mrb[0].mxu0
  %v908 = vadd.f32 0.0, %v907
  %v909 = vpop.f32.mrb[0].mxu0
  %v910 = vpop.f32.mrb[0].mxu0
  %911 = vdwg.mxu0
  %912 = vst [vmem:[%s2] sm:$0xff] %v459
  %913 = vst [vmem:[%s2 + $0x8] sm:$0xff] %v461
  %914 = vst [vmem:[%s2 + $0x10] sm:$0xff] %v520
  %915 = vst [vmem:[%s2 + $0x18] sm:$0xff] %v522
  %916 = vst [vmem:[%s2 + $0x20] sm:$0xff] %v581
  %917 = vst [vmem:[%s2 + $0x28] sm:$0xff] %v583
  %918 = vst [vmem:[%s2 + $0x30] sm:$0xff] %v642
  %919 = vst [vmem:[%s2 + $0x38] sm:$0xff] %v644
  %920 = vst [vmem:[%s2 + $0x40] sm:$0xff] %v703
  %921 = vst [vmem:[%s2 + $0x48] sm:$0xff] %v705
  %922 = vst [vmem:[%s2 + $0x50] sm:$0xff] %v764
  %923 = vst [vmem:[%s2 + $0x58] sm:$0xff] %v766
  %924 = vst [vmem:[%s2 + $0x60] sm:$0xff] %v825
  %925 = vst [vmem:[%s2 + $0x68] sm:$0xff] %v827
  %926 = vst [vmem:[%s2 + $0x70] sm:$0xff] %v886
  %927 = vst [vmem:[%s2 + $0x78] sm:$0xff] %v888
  %928 = vst [vmem:[%s2 + $0x80] sm:$0xff] %v463
  %929 = vst [vmem:[%s2 + $0x88] sm:$0xff] %v465
  %930 = vst [vmem:[%s2 + $0x90] sm:$0xff] %v524
  %931 = vst [vmem:[%s2 + $0x98] sm:$0xff] %v526
  %932 = vst [vmem:[%s2 + $0xa0] sm:$0xff] %v585
  %933 = vst [vmem:[%s2 + $0xa8] sm:$0xff] %v587
  %934 = vst [vmem:[%s2 + $0xb0] sm:$0xff] %v646
  %935 = vst [vmem:[%s2 + $0xb8] sm:$0xff] %v648
  %936 = vst [vmem:[%s2 + $0xc0] sm:$0xff] %v707
  %937 = vst [vmem:[%s2 + $0xc8] sm:$0xff] %v709
  %938 = vst [vmem:[%s2 + $0xd0] sm:$0xff] %v768
  %939 = vst [vmem:[%s2 + $0xd8] sm:$0xff] %v770
  %940 = vst [vmem:[%s2 + $0xe0] sm:$0xff] %v829
  %941 = vst [vmem:[%s2 + $0xe8] sm:$0xff] %v831
  %942 = vst [vmem:[%s2 + $0xf0] sm:$0xff] %v890
  %943 = vst [vmem:[%s2 + $0xf8] sm:$0xff] %v892
  %944 = vst [vmem:[%s2 + $0x100] sm:$0xff] %v469
  %945 = vst [vmem:[%s2 + $0x108] sm:$0xff] %v471
  %946 = vst [vmem:[%s2 + $0x110] sm:$0xff] %v530
  %947 = vst [vmem:[%s2 + $0x118] sm:$0xff] %v532
  %948 = vst [vmem:[%s2 + $0x120] sm:$0xff] %v591
  %949 = vst [vmem:[%s2 + $0x128] sm:$0xff] %v593
  %950 = vst [vmem:[%s2 + $0x130] sm:$0xff] %v652
  %951 = vst [vmem:[%s2 + $0x138] sm:$0xff] %v654
  %952 = vst [vmem:[%s2 + $0x140] sm:$0xff] %v713
  %953 = vst [vmem:[%s2 + $0x148] sm:$0xff] %v715
  %954 = vst [vmem:[%s2 + $0x150] sm:$0xff] %v774
  %955 = vst [vmem:[%s2 + $0x158] sm:$0xff] %v776
  %956 = vst [vmem:[%s2 + $0x160] sm:$0xff] %v835
  %957 = vst [vmem:[%s2 + $0x168] sm:$0xff] %v837
  %958 = vst [vmem:[%s2 + $0x170] sm:$0xff] %v896
  %959 = vst [vmem:[%s2 + $0x178] sm:$0xff] %v898
  %960 = vst [vmem:[%s2 + $0x180] sm:$0xff] %v473
  %961 = vst [vmem:[%s2 + $0x188] sm:$0xff] %v475
  %962 = vst [vmem:[%s2 + $0x190] sm:$0xff] %v534
  %963 = vst [vmem:[%s2 + $0x198] sm:$0xff] %v536
  %964 = vst [vmem:[%s2 + $0x1a0] sm:$0xff] %v595
  %965 = vst [vmem:[%s2 + $0x1a8] sm:$0xff] %v597
  %966 = vst [vmem:[%s2 + $0x1b0] sm:$0xff] %v656
  %967 = vst [vmem:[%s2 + $0x1b8] sm:$0xff] %v658
  %968 = vst [vmem:[%s2 + $0x1c0] sm:$0xff] %v717
  %969 = vst [vmem:[%s2 + $0x1c8] sm:$0xff] %v719
  %970 = vst [vmem:[%s2 + $0x1d0] sm:$0xff] %v778
  %971 = vst [vmem:[%s2 + $0x1d8] sm:$0xff] %v780
  %972 = vst [vmem:[%s2 + $0x1e0] sm:$0xff] %v839
  %973 = vst [vmem:[%s2 + $0x1e8] sm:$0xff] %v841
  %974 = vst [vmem:[%s2 + $0x1f0] sm:$0xff] %v900
  %975 = vst [vmem:[%s2 + $0x1f8] sm:$0xff] %v902
  %976 = vst [vmem:[%s2 + $0x200] sm:$0xff] %v479
  %977 = vst [vmem:[%s2 + $0x208] sm:$0xff] %v481
  %978 = vst [vmem:[%s2 + $0x210] sm:$0xff] %v540
  %979 = vst [vmem:[%s2 + $0x218] sm:$0xff] %v542
  %980 = vst [vmem:[%s2 + $0x220] sm:$0xff] %v601
  %981 = vst [vmem:[%s2 + $0x228] sm:$0xff] %v603
  %982 = vst [vmem:[%s2 + $0x230] sm:$0xff] %v662
  %983 = vst [vmem:[%s2 + $0x238] sm:$0xff] %v664
  %984 = vst [vmem:[%s2 + $0x240] sm:$0xff] %v723
  %985 = vst [vmem:[%s2 + $0x248] sm:$0xff] %v725
  %986 = vst [vmem:[%s2 + $0x250] sm:$0xff] %v784
  %987 = vst [vmem:[%s2 + $0x258] sm:$0xff] %v786
  %988 = vst [vmem:[%s2 + $0x260] sm:$0xff] %v845
  %989 = vst [vmem:[%s2 + $0x268] sm:$0xff] %v847
  %990 = vst [vmem:[%s2 + $0x270] sm:$0xff] %v906
  %991 = vst [vmem:[%s2 + $0x278] sm:$0xff] %v908
  // Predicated region
  $region10: #{ddn_fcos3d_forward.17} parent=0 // pred_check
    _
  $region11: #{ddn_fcos3d_forward.17} parent=0 // pred_check_branch
    %993 = sbr.rel (0) target = $region13
  $region12: #{ddn_fcos3d_forward.17} parent=0 // pred_region
    _
  $region13: #{ddn_fcos3d_forward.17} parent=0 // pred_fallthru
    _
  // Predicated region
  $region14: #{ddn_fcos3d_forward.17} parent=0 // pred_check
    _
  $region15: #{ddn_fcos3d_forward.17} parent=0 // pred_check_branch
    %995 = sbr.rel (0) target = $region17
  $region16: #{ddn_fcos3d_forward.17} parent=0 // pred_region
    _
  $region17: #{ddn_fcos3d_forward.17} parent=0 // pred_fallthru
    _

</llo_original>
